<compile_context>
chip_gen: v6e
topology: v6e:2x2x1
jax: 0.10.0
libtpu: 0.0.40
codegen_flags: <defaults>
</compile_context>

<pallas_src>
import functools
import math

import jax
import jax.numpy as jnp
from jax import lax
from jax.experimental import pallas as pl
from jax.experimental.pallas import tpu as pltpu


_LANE = 128
_VMEM_LIMIT = 32 * 1024 * 1024   # fits v5e scoped VMEM, well under v7x's 64 MiB


def _round_up(x, m):
    return ((x + m - 1) // m) * m


def _pick_tile(n, k):
    """Largest point-tile TN (divisor of n, multiple of 8) with TN*k <= ~1024."""
    target = max(8, 1024 // max(k, 1))
    for t in (512, 256, 128, 64, 32, 16, 8):
        if t <= target and n % t == 0:
            return t
    return n


def _pick_row_tile(n):
    for t in (512, 256, 128, 64, 32, 16, 8):
        if n % t == 0:
            return t
    return n


# ----------------------------------------------------------------------------
# Kernel 1: pairwise "distance"  d[i,j] = 2<xi,xj> - ||xi||^2 - ||xj||^2
# (= -||xi - xj||^2, exactly what GET_h_index builds before topk)
# Row norms (1, N) are plain-JAX layout plumbing passed in; the per-tile
# column norms are a cheap lane reduce of the resident tile (no degenerate
# (1,C)x(C,N) matmul). Kept in f32 because of the cancellation concern.
# ----------------------------------------------------------------------------
def _pairwise_kernel(x_ref, sq_ref, o_ref, *, ti):
    # x_ref: (1, N, Cp)   sq_ref: (1, 1, N)   o_ref: (1, ti, N)
    i_start = pl.multiple_of(pl.program_id(1) * ti, ti)
    x_all = x_ref[0]                                      # (N, Cp)
    x_i = x_ref[0, pl.ds(i_start, ti), :]                 # (ti, Cp)
    inner = lax.dot_general(x_i, x_all, (((1,), (1,)), ((), ())),
                            preferred_element_type=jnp.float32)   # (ti, N)
    sq_i = jnp.sum(x_i * x_i, axis=-1, keepdims=True)             # (ti, 1)
    o_ref[0] = 2.0 * inner - sq_i - sq_ref[0]


def pairwise_distance(x_pad, sq_row):
    B, N, Cp = x_pad.shape
    ti = _pick_row_tile(N)
    return pl.pallas_call(
        functools.partial(_pairwise_kernel, ti=ti),
        out_shape=jax.ShapeDtypeStruct((B, N, N), jnp.float32),
        grid=(B, N // ti),
        in_specs=[
            pl.BlockSpec((1, N, Cp), lambda b, i: (b, 0, 0)),
            pl.BlockSpec((1, 1, N), lambda b, i: (b, 0, 0)),
        ],
        out_specs=pl.BlockSpec((1, ti, N), lambda b, i: (b, i, 0)),
        compiler_params=pltpu.CompilerParams(
            dimension_semantics=("parallel", "parallel"),
            vmem_limit_bytes=_VMEM_LIMIT),
    )(x_pad, sq_row)


# ----------------------------------------------------------------------------
# Kernel 2: fused  gather -> hyper-edge build -> HM head -> sigmoid gate
# ----------------------------------------------------------------------------
_GELU_C = math.sqrt(2.0 / math.pi)


def _gelu(x):
    # TODO(synk): PyTorch nn.GELU() defaults to the exact erf form; the tanh
    # approximation (abs err ~1e-3) is used since erf has no robust Mosaic
    # lowering. Runs on the EUP slot.
    return 0.5 * x * (1.0 + jnp.tanh(_GELU_C * (x + 0.044715 * x * x * x)))


def _hm_kernel(x_ref, idx_ref, w1a_ref, w1b_ref, w2_ref, w3_ref,
               b1_ref, b2_ref, b3_ref, o_ref, *, k, tn):
    # x_ref: (1, N, Cp)   idx_ref: (1, tn*k, 1) int32   o_ref: (1, tn, Cp)
    _, n, cp = x_ref.shape
    tnk = tn * k
    x_all = x_ref[0]                                      # (N, Cp) f32

    # --- fused neighbour gather: one-hot(idx) @ x  (MXU, exact in f32) ------
    col = lax.broadcasted_iota(jnp.int32, (tnk, n), 1)
    g_oh = (col == idx_ref[0]).astype(jnp.float32)        # (tnk, N) 0/1
    h_nb = jnp.dot(g_oh, x_all, preferred_element_type=jnp.float32)   # (tnk, Cp)

    # --- hyper-edge features h*(x-h), built on-chip (no h_cat in HBM) -------
    i_start = pl.multiple_of(pl.program_id(1) * tn, tn)
    x_tile = x_ref[0, pl.ds(i_start, tn), :]              # (tn, Cp) f32
    h3 = h_nb.reshape(tn, k, cp)
    prod = (h3 * (x_tile[:, None, :] - h3)).reshape(tnk, cp)

    dt = w1a_ref.dtype   # bf16 matmul operands, f32 accumulation
    # conv1(2C->C)+BN+GELU, with the channel concat split as x@W1a + prod@W1b
    # (x@W1a is per-point, broadcast over the k neighbours).
    y_x = jnp.dot(x_tile.astype(dt), w1a_ref[...],
                  preferred_element_type=jnp.float32)                 # (tn, Cp)
    y_p = jnp.dot(prod.astype(dt), w1b_ref[...],
                  preferred_element_type=jnp.float32) + b1_ref[...]   # (tnk, Cp)
    y = _gelu(y_p.reshape(tn, k, cp) + y_x[:, None, :])               # (tn,k,Cp)

    # conv2(C->C)+BN+GELU
    y = jnp.dot(y.reshape(tnk, cp).astype(dt), w2_ref[...],
                preferred_element_type=jnp.float32) + b2_ref[...]
    y = _gelu(y)

    # AdaptiveAvgPool2d((None,1)): mean over k  (the 1/k is folded into w3)
    pooled = jnp.sum(y.reshape(tn, k, cp), axis=1)                    # (tn, Cp)

    # conv3(C->C)
    gate = jnp.dot(pooled.astype(dt), w3_ref[...],
                   preferred_element_type=jnp.float32) + b3_ref[...]

    # features * sigmoid(out)   (element-wise kept in f32: v5e-safe)
    o_ref[0] = x_tile * jax.nn.sigmoid(gate)


def hm_gate(x_pad, idx_col, w1a, w1b, w2, w3, b1, b2, b3, *, k):
    B, N, Cp = x_pad.shape
    tn = _pick_tile(N, k)
    tnk = tn * k

    def _const(shape):
        nd = len(shape)
        return pl.BlockSpec(shape, lambda b, i, _nd=nd: (0,) * _nd)

    return pl.pallas_call(
        functools.partial(_hm_kernel, k=k, tn=tn),
        out_shape=jax.ShapeDtypeStruct((B, N, Cp), jnp.float32),
        grid=(B, N // tn),
        in_specs=[
            pl.BlockSpec((1, N, Cp), lambda b, i: (b, 0, 0)),     # gather source
            pl.BlockSpec((1, tnk, 1), lambda b, i: (b, i, 0)),    # neighbour ids
            _const((Cp, Cp)), _const((Cp, Cp)),
            _const((Cp, Cp)), _const((Cp, Cp)),
            _const((1, Cp)), _const((1, Cp)), _const((1, Cp)),
        ],
        out_specs=pl.BlockSpec((1, tn, Cp), lambda b, i: (b, i, 0)),
        compiler_params=pltpu.CompilerParams(
            dimension_semantics=("parallel", "parallel"),
            vmem_limit_bytes=_VMEM_LIMIT),
    )(x_pad, idx_col, w1a, w1b, w2, w3, b1, b2, b3)


# ----------------------------------------------------------------------------
# Parameters (deterministic init) mirroring the PyTorch module (eval mode).
# Conv2d 1x1 weights stored as (Cin, Cout) so the kernel computes x @ W + b.
# ----------------------------------------------------------------------------
def init_params(key, in_channel):
    C = in_channel
    ks = jax.random.split(key, 6)

    def conv_w(kk, cin, cout):
        return jax.random.normal(kk, (cin, cout), jnp.float32) / jnp.sqrt(cin)

    zeros = jnp.zeros((C,), jnp.float32)
    ones = jnp.ones((C,), jnp.float32)
    return dict(
        w1=conv_w(ks[0], 2 * C, C),
        b1=0.01 * jax.random.normal(ks[1], (C,), jnp.float32),
        w2=conv_w(ks[2], C, C),
        b2=0.01 * jax.random.normal(ks[3], (C,), jnp.float32),
        w3=conv_w(ks[4], C, C),
        b3=0.01 * jax.random.normal(ks[5], (C,), jnp.float32),
        bn1_gamma=ones, bn1_beta=zeros, bn1_mean=zeros, bn1_var=ones,
        bn2_gamma=ones, bn2_beta=zeros, bn2_mean=zeros, bn2_var=ones,
    )


def _prepare_hm_params(params, C, Cp, k, matmul_dtype, eps=1e-5):
    """Fold eval-mode BN and the K-mean's 1/K into the 1x1 convs, zero-pad
    channels to the lane width Cp, split w1 into the x / h*(x-h) halves, and
    cast the matmul operands to `matmul_dtype` (biases stay f32)."""
    s1 = params["bn1_gamma"] / jnp.sqrt(params["bn1_var"] + eps)
    s2 = params["bn2_gamma"] / jnp.sqrt(params["bn2_var"] + eps)
    w1 = params["w1"] * s1[None, :]
    b1 = (params["b1"] - params["bn1_mean"]) * s1 + params["bn1_beta"]
    w2 = params["w2"] * s2[None, :]
    b2 = (params["b2"] - params["bn2_mean"]) * s2 + params["bn2_beta"]
    w3 = params["w3"] * (1.0 / k)     # fold the mean-over-K
    b3 = params["b3"]

    def pad_w(w):
        cin, cout = w.shape
        return jnp.pad(w, ((0, Cp - cin), (0, Cp - cout))).astype(matmul_dtype)

    def pad_b(b):
        return jnp.pad(b, (0, Cp - b.shape[0])).astype(jnp.float32)[None, :]

    return (pad_w(w1[:C]), pad_w(w1[C:]), pad_w(w2), pad_w(w3),
            pad_b(b1), pad_b(b2), pad_b(b3))


# ----------------------------------------------------------------------------
# Forward pass (mirrors DHM_layer.forward)
# ----------------------------------------------------------------------------
def dhm_forward(features, params, knn_num, matmul_dtype=jnp.bfloat16):
    # features: (B, C, N, 1), NCHW like the PyTorch module
    B, C, N, _ = features.shape
    k = knn_num
    Cp = _round_up(C, _LANE)

    # channel-last, zero-padded channels (inert for norms / matmuls / gate)
    x_t = jnp.transpose(features[..., 0], (0, 2, 1))              # (B, N, C)
    x_pad = jnp.pad(x_t, ((0, 0), (0, 0), (0, Cp - C)))            # (B, N, Cp)

    # GET_h_index: -||xi-xj||^2 (Pallas) + top-k neighbour ids (plain JAX)
    sq_row = jnp.sum(x_t * x_t, axis=-1)[:, None, :]               # (B, 1, N)
    pdist = pairwise_distance(x_pad, sq_row)                       # (B, N, N)
    _, idx = lax.top_k(pdist, k)                                   # (B, N, k)
    idx_col = idx.reshape(B, N * k, 1)                             # wrapper-side reshape

    # heper_construt + HM head + sigmoid gate, fully fused in one Pallas kernel
    w1a, w1b, w2, w3, b1, b2, b3 = _prepare_hm_params(
        params, C, Cp, k, matmul_dtype)
    out_pad = hm_gate(x_pad, idx_col, w1a, w1b, w2, w3, b1, b2, b3, k=k)

    out = out_pad[..., :C]                                         # drop channel pad
    return jnp.transpose(out, (0, 2, 1))[..., None]                # (B, C, N, 1)


if __name__ == "__main__":
    # small test shapes consistent with the module: in_channel=32, knn_num=8
    B, C, N, K = 2, 32, 128, 8
    key = jax.random.PRNGKey(0)
    kf, kp = jax.random.split(key)
    features = jax.random.normal(kf, (B, C, N, 1), jnp.float32)
    params = init_params(kp, C)

    fwd = jax.jit(functools.partial(dhm_forward, knn_num=K))
    out = fwd(features, params)
    out = jax.block_until_ready(out)
    assert out.shape == (B, C, N, 1) and out.dtype == jnp.float32
    assert bool(jnp.all(jnp.isfinite(out)))
    print("KERNEL_OK")
</pallas_src>

<mosaic_0001>
module attributes {stable_mosaic.version = 11 : i64} {
  func.func @_pairwise_kernel(%arg0: i32, %arg1: i32, %arg2: memref<1x128x128xf32, #tpu.memory_space<vmem>>, %arg3: memref<1x1x128xf32, #tpu.memory_space<vmem>>, %arg4: memref<1x128x128xf32, #tpu.memory_space<vmem>>) attributes {dimension_semantics = [#tpu.dimension_semantics<parallel>, #tpu.dimension_semantics<parallel>], iteration_bounds = array<i64: 2, 1>, scalar_prefetch = 0 : i64, scratch_operands = 0 : i64, tpu.core_type = #tpu.core_type<tc>, window_params = [{transform_indices = @transform_0, window_bounds = array<i64: 1, 128, 128>}, {transform_indices = @transform_1, window_bounds = array<i64: 1, 1, 128>}, {transform_indices = @transform_2, window_bounds = array<i64: 1, 128, 128>}]} {
    %c128_i32 = arith.constant 128 : i32
    %0 = arith.muli %arg1, %c128_i32 : i32
    %1 = tpu.assume_multiple %0, 128 : i32
    %c0 = arith.constant 0 : index
    %c0_0 = arith.constant 0 : index
    %c0_1 = arith.constant 0 : index
    %2 = vector.load %arg2[%c0, %c0_0, %c0_1] : memref<1x128x128xf32, #tpu.memory_space<vmem>>, vector<1x128x128xf32>
    %3 = vector.shape_cast %2 : vector<1x128x128xf32> to vector<128x128xf32>
    %c0_2 = arith.constant 0 : index
    %4 = arith.index_cast %1 : i32 to index
    %c0_3 = arith.constant 0 : index
    %5 = vector.load %arg2[%c0_2, %4, %c0_3] : memref<1x128x128xf32, #tpu.memory_space<vmem>>, vector<1x128x128xf32>
    %6 = vector.shape_cast %5 : vector<1x128x128xf32> to vector<128x128xf32>
    %cst = arith.constant dense<0.000000e+00> : vector<128x128xf32>
    %7 = tpu.matmul %6, %3, %cst {dimension_numbers = #tpu.dot_dimension_numbers<[1], [1], [0], [0], [0, 0, 1, 0], [], []>} : vector<128x128xf32>, vector<128x128xf32>, vector<128x128xf32> -> vector<128x128xf32>
    %8 = arith.mulf %6, %6 : vector<128x128xf32>
    %cst_4 = arith.constant dense<0.000000e+00> : vector<128xf32>
    %9 = vector.multi_reduction <add>, %8, %cst_4 [1] : vector<128x128xf32> to vector<128xf32>
    %10 = vector.shape_cast %9 : vector<128xf32> to vector<128x1xf32>
    %cst_5 = arith.constant 2.000000e+00 : f32
    %11 = vector.broadcast %cst_5 : f32 to vector<128x128xf32>
    %12 = arith.mulf %11, %7 : vector<128x128xf32>
    %13 = vector.broadcast %10 : vector<128x1xf32> to vector<128x128xf32>
    %14 = arith.subf %12, %13 : vector<128x128xf32>
    %c0_6 = arith.constant 0 : index
    %c0_7 = arith.constant 0 : index
    %c0_8 = arith.constant 0 : index
    %15 = vector.load %arg3[%c0_6, %c0_7, %c0_8] : memref<1x1x128xf32, #tpu.memory_space<vmem>>, vector<1x1x128xf32>
    %16 = vector.shape_cast %15 : vector<1x1x128xf32> to vector<1x128xf32>
    %17 = vector.broadcast %16 : vector<1x128xf32> to vector<128x128xf32>
    %18 = arith.subf %14, %17 : vector<128x128xf32>
    %c0_9 = arith.constant 0 : index
    %c0_10 = arith.constant 0 : index
    %c0_11 = arith.constant 0 : index
    %19 = vector.load %arg4[%c0_9, %c0_10, %c0_11] : memref<1x128x128xf32, #tpu.memory_space<vmem>>, vector<1x128x128xf32>
    %20 = vector.shape_cast %19 : vector<1x128x128xf32> to vector<128x128xf32>
    %21 = vector.shape_cast %18 : vector<128x128xf32> to vector<1x128x128xf32>
    tpu.vector_store %arg4[%c0_9, %c0_10, %c0_11], %21 {strides = array<i32>} : memref<1x128x128xf32, #tpu.memory_space<vmem>>, vector<1x128x128xf32>,
    return
  }
  func.func @transform_0(%arg0: i32, %arg1: i32) -> (i32, i32, i32) {
    %c0_i32 = arith.constant 0 : i32
    %c0_i32_0 = arith.constant 0 : i32
    %c0_i32_1 = arith.constant 0 : i32
    return %arg0, %c0_i32, %c0_i32_0 : i32, i32, i32
  }
  func.func @transform_1(%arg0: i32, %arg1: i32) -> (i32, i32, i32) {
    %c0_i32 = arith.constant 0 : i32
    %c0_i32_0 = arith.constant 0 : i32
    %c0_i32_1 = arith.constant 0 : i32
    return %arg0, %c0_i32, %c0_i32_0 : i32, i32, i32
  }
  func.func @transform_2(%arg0: i32, %arg1: i32) -> (i32, i32, i32) {
    %c0_i32 = arith.constant 0 : i32
    %c0_i32_0 = arith.constant 0 : i32
    return %arg0, %arg1, %c0_i32 : i32, i32, i32
  }
}

module attributes {stable_mosaic.version = 11 : i64} {
  func.func @_hm_kernel(%arg0: i32, %arg1: i32, %arg2: memref<1x128x128xf32, #tpu.memory_space<vmem>>, %arg3: memref<1x1024x1xi32, #tpu.memory_space<vmem>>, %arg4: memref<128x128xbf16, #tpu.memory_space<vmem>>, %arg5: memref<128x128xbf16, #tpu.memory_space<vmem>>, %arg6: memref<128x128xbf16, #tpu.memory_space<vmem>>, %arg7: memref<128x128xbf16, #tpu.memory_space<vmem>>, %arg8: memref<1x128xf32, #tpu.memory_space<vmem>>, %arg9: memref<1x128xf32, #tpu.memory_space<vmem>>, %arg10: memref<1x128xf32, #tpu.memory_space<vmem>>, %arg11: memref<1x128x128xf32, #tpu.memory_space<vmem>>) attributes {dimension_semantics = [#tpu.dimension_semantics<parallel>, #tpu.dimension_semantics<parallel>], iteration_bounds = array<i64: 2, 1>, scalar_prefetch = 0 : i64, scratch_operands = 0 : i64, tpu.core_type = #tpu.core_type<tc>, window_params = [{transform_indices = @transform_0, window_bounds = array<i64: 1, 128, 128>}, {transform_indices = @transform_1, window_bounds = array<i64: 1, 1024, 1>}, {pipeline_mode = #tpu.pipeline_mode<synchronous>, transform_indices = @transform_2, window_bounds = array<i64: 128, 128>}, {pipeline_mode = #tpu.pipeline_mode<synchronous>, transform_indices = @transform_3, window_bounds = array<i64: 128, 128>}, {pipeline_mode = #tpu.pipeline_mode<synchronous>, transform_indices = @transform_4, window_bounds = array<i64: 128, 128>}, {pipeline_mode = #tpu.pipeline_mode<synchronous>, transform_indices = @transform_5, window_bounds = array<i64: 128, 128>}, {pipeline_mode = #tpu.pipeline_mode<synchronous>, transform_indices = @transform_6, window_bounds = array<i64: 1, 128>}, {pipeline_mode = #tpu.pipeline_mode<synchronous>, transform_indices = @transform_7, window_bounds = array<i64: 1, 128>}, {pipeline_mode = #tpu.pipeline_mode<synchronous>, transform_indices = @transform_8, window_bounds = array<i64: 1, 128>}, {transform_indices = @transform_9, window_bounds = array<i64: 1, 128, 128>}]} {
    %c0 = arith.constant 0 : index
    %c0_0 = arith.constant 0 : index
    %c0_1 = arith.constant 0 : index
    %0 = vector.load %arg2[%c0, %c0_0, %c0_1] : memref<1x128x128xf32, #tpu.memory_space<vmem>>, vector<1x128x128xf32>
    %1 = vector.shape_cast %0 : vector<1x128x128xf32> to vector<128x128xf32>
    %2 = tpu.iota {dimensions = array<i32: 1>} : vector<1024x128xi32>
    %c0_2 = arith.constant 0 : index
    %c0_3 = arith.constant 0 : index
    %c0_4 = arith.constant 0 : index
    %3 = vector.load %arg3[%c0_2, %c0_3, %c0_4] : memref<1x1024x1xi32, #tpu.memory_space<vmem>>, vector<1x1024x1xi32>
    %4 = vector.shape_cast %3 : vector<1x1024x1xi32> to vector<1024x1xi32>
    %5 = vector.broadcast %4 : vector<1024x1xi32> to vector<1024x128xi32>
    %6 = arith.cmpi eq, %2, %5 : vector<1024x128xi32>
    %7 = arith.extui %6 : vector<1024x128xi1> to vector<1024x128xi32>
    %8 = arith.sitofp %7 : vector<1024x128xi32> to vector<1024x128xf32>
    %cst = arith.constant dense<0.000000e+00> : vector<1024x128xf32>
    %9 = tpu.matmul %8, %1, %cst {dimension_numbers = #tpu.dot_dimension_numbers<[1], [0], [0], [1], [0, 0, 1, 1], [], []>} : vector<1024x128xf32>, vector<128x128xf32>, vector<1024x128xf32> -> vector<1024x128xf32>
    %c128_i32 = arith.constant 128 : i32
    %10 = arith.muli %arg1, %c128_i32 : i32
    %11 = tpu.assume_multiple %10, 128 : i32
    %c0_5 = arith.constant 0 : index
    %12 = arith.index_cast %11 : i32 to index
    %c0_6 = arith.constant 0 : index
    %13 = vector.load %arg2[%c0_5, %12, %c0_6] : memref<1x128x128xf32, #tpu.memory_space<vmem>>, vector<1x128x128xf32>
    %14 = vector.shape_cast %13 : vector<1x128x128xf32> to vector<128x128xf32>
    %15 = vector.shape_cast %9 : vector<1024x128xf32> to vector<128x8x128xf32>
    %16 = vector.shape_cast %14 : vector<128x128xf32> to vector<128x1x128xf32>
    %17 = vector.broadcast %16 : vector<128x1x128xf32> to vector<128x8x128xf32>
    %18 = arith.subf %17, %15 : vector<128x8x128xf32>
    %19 = arith.mulf %15, %18 : vector<128x8x128xf32>
    %20 = vector.shape_cast %19 : vector<128x8x128xf32> to vector<1024x128xf32>
    %21 = arith.truncf %14 : vector<128x128xf32> to vector<128x128xbf16>
    %c0_7 = arith.constant 0 : index
    %c0_8 = arith.constant 0 : index
    %22 = vector.load %arg4[%c0_7, %c0_8] : memref<128x128xbf16, #tpu.memory_space<vmem>>, vector<128x128xbf16>
    %cst_9 = arith.constant dense<0.000000e+00> : vector<128x128xf32>
    %23 = tpu.matmul %21, %22, %cst_9 {dimension_numbers = #tpu.dot_dimension_numbers<[1], [0], [0], [1], [0, 0, 1, 1], [], []>} : vector<128x128xbf16>, vector<128x128xbf16>, vector<128x128xf32> -> vector<128x128xf32>
    %24 = arith.truncf %20 : vector<1024x128xf32> to vector<1024x128xbf16>
    %c0_10 = arith.constant 0 : index
    %c0_11 = arith.constant 0 : index
    %25 = vector.load %arg5[%c0_10, %c0_11] : memref<128x128xbf16, #tpu.memory_space<vmem>>, vector<128x128xbf16>
    %cst_12 = arith.constant dense<0.000000e+00> : vector<1024x128xf32>
    %26 = tpu.matmul %24, %25, %cst_12 {dimension_numbers = #tpu.dot_dimension_numbers<[1], [0], [0], [1], [0, 0, 1, 1], [], []>} : vector<1024x128xbf16>, vector<128x128xbf16>, vector<1024x128xf32> -> vector<1024x128xf32>
    %c0_13 = arith.constant 0 : index
    %c0_14 = arith.constant 0 : index
    %27 = vector.load %arg8[%c0_13, %c0_14] : memref<1x128xf32, #tpu.memory_space<vmem>>, vector<1x128xf32>
    %28 = vector.broadcast %27 : vector<1x128xf32> to vector<1024x128xf32>
    %29 = arith.addf %26, %28 : vector<1024x128xf32>
    %30 = vector.shape_cast %29 : vector<1024x128xf32> to vector<128x8x128xf32>
    %31 = vector.shape_cast %23 : vector<128x128xf32> to vector<128x1x128xf32>
    %32 = vector.broadcast %31 : vector<128x1x128xf32> to vector<128x8x128xf32>
    %33 = arith.addf %30, %32 : vector<128x8x128xf32>
    %cst_15 = arith.constant 5.000000e-01 : f32
    %34 = vector.broadcast %cst_15 : f32 to vector<128x8x128xf32>
    %35 = arith.mulf %34, %33 : vector<128x8x128xf32>
    %cst_16 = arith.constant 4.471500e-02 : f32
    %36 = vector.broadcast %cst_16 : f32 to vector<128x8x128xf32>
    %37 = arith.mulf %36, %33 : vector<128x8x128xf32>
    %38 = arith.mulf %37, %33 : vector<128x8x128xf32>
    %39 = arith.mulf %38, %33 : vector<128x8x128xf32>
    %40 = arith.addf %33, %39 : vector<128x8x128xf32>
    %cst_17 = arith.constant 0.797884583 : f32
    %41 = vector.broadcast %cst_17 : f32 to vector<128x8x128xf32>
    %42 = arith.mulf %41, %40 : vector<128x8x128xf32>
    %43 = math.tanh %42 : vector<128x8x128xf32>
    %cst_18 = arith.constant 1.000000e+00 : f32
    %44 = vector.broadcast %cst_18 : f32 to vector<128x8x128xf32>
    %45 = arith.addf %44, %43 : vector<128x8x128xf32>
    %46 = arith.mulf %35, %45 : vector<128x8x128xf32>
    %47 = vector.shape_cast %46 : vector<128x8x128xf32> to vector<1024x128xf32>
    %48 = arith.truncf %47 : vector<1024x128xf32> to vector<1024x128xbf16>
    %c0_19 = arith.constant 0 : index
    %c0_20 = arith.constant 0 : index
    %49 = vector.load %arg6[%c0_19, %c0_20] : memref<128x128xbf16, #tpu.memory_space<vmem>>, vector<128x128xbf16>
    %cst_21 = arith.constant dense<0.000000e+00> : vector<1024x128xf32>
    %50 = tpu.matmul %48, %49, %cst_21 {dimension_numbers = #tpu.dot_dimension_numbers<[1], [0], [0], [1], [0, 0, 1, 1], [], []>} : vector<1024x128xbf16>, vector<128x128xbf16>, vector<1024x128xf32> -> vector<1024x128xf32>
    %c0_22 = arith.constant 0 : index
    %c0_23 = arith.constant 0 : index
    %51 = vector.load %arg9[%c0_22, %c0_23] : memref<1x128xf32, #tpu.memory_space<vmem>>, vector<1x128xf32>
    %52 = vector.broadcast %51 : vector<1x128xf32> to vector<1024x128xf32>
    %53 = arith.addf %50, %52 : vector<1024x128xf32>
    %cst_24 = arith.constant 5.000000e-01 : f32
    %54 = vector.broadcast %cst_24 : f32 to vector<1024x128xf32>
    %55 = arith.mulf %54, %53 : vector<1024x128xf32>
    %cst_25 = arith.constant 4.471500e-02 : f32
    %56 = vector.broadcast %cst_25 : f32 to vector<1024x128xf32>
    %57 = arith.mulf %56, %53 : vector<1024x128xf32>
    %58 = arith.mulf %57, %53 : vector<1024x128xf32>
    %59 = arith.mulf %58, %53 : vector<1024x128xf32>
    %60 = arith.addf %53, %59 : vector<1024x128xf32>
    %cst_26 = arith.constant 0.797884583 : f32
    %61 = vector.broadcast %cst_26 : f32 to vector<1024x128xf32>
    %62 = arith.mulf %61, %60 : vector<1024x128xf32>
    %63 = math.tanh %62 : vector<1024x128xf32>
    %cst_27 = arith.constant 1.000000e+00 : f32
    %64 = vector.broadcast %cst_27 : f32 to vector<1024x128xf32>
    %65 = arith.addf %64, %63 : vector<1024x128xf32>
    %66 = arith.mulf %55, %65 : vector<1024x128xf32>
    %67 = vector.shape_cast %66 : vector<1024x128xf32> to vector<128x8x128xf32>
    %cst_28 = arith.constant dense<0.000000e+00> : vector<128x128xf32>
    %68 = vector.multi_reduction <add>, %67, %cst_28 [1] : vector<128x8x128xf32> to vector<128x128xf32>
    %69 = arith.truncf %68 : vector<128x128xf32> to vector<128x128xbf16>
    %c0_29 = arith.constant 0 : index
    %c0_30 = arith.constant 0 : index
    %70 = vector.load %arg7[%c0_29, %c0_30] : memref<128x128xbf16, #tpu.memory_space<vmem>>, vector<128x128xbf16>
    %cst_31 = arith.constant dense<0.000000e+00> : vector<128x128xf32>
    %71 = tpu.matmul %69, %70, %cst_31 {dimension_numbers = #tpu.dot_dimension_numbers<[1], [0], [0], [1], [0, 0, 1, 1], [], []>} : vector<128x128xbf16>, vector<128x128xbf16>, vector<128x128xf32> -> vector<128x128xf32>
    %c0_32 = arith.constant 0 : index
    %c0_33 = arith.constant 0 : index
    %72 = vector.load %arg10[%c0_32, %c0_33] : memref<1x128xf32, #tpu.memory_space<vmem>>, vector<1x128xf32>
    %73 = vector.broadcast %72 : vector<1x128xf32> to vector<128x128xf32>
    %74 = arith.addf %71, %73 : vector<128x128xf32>
    %75 = arith.negf %74 : vector<128x128xf32>
    %76 = math.exp %75 : vector<128x128xf32>
    %cst_34 = arith.constant 1.000000e+00 : f32
    %77 = vector.broadcast %cst_34 : f32 to vector<128x128xf32>
    %78 = arith.addf %77, %76 : vector<128x128xf32>
    %79 = arith.divf %77, %78 : vector<128x128xf32>
    %80 = arith.mulf %14, %79 : vector<128x128xf32>
    %c0_35 = arith.constant 0 : index
    %c0_36 = arith.constant 0 : index
    %c0_37 = arith.constant 0 : index
    %81 = vector.load %arg11[%c0_35, %c0_36, %c0_37] : memref<1x128x128xf32, #tpu.memory_space<vmem>>, vector<1x128x128xf32>
    %82 = vector.shape_cast %81 : vector<1x128x128xf32> to vector<128x128xf32>
    %83 = vector.shape_cast %80 : vector<128x128xf32> to vector<1x128x128xf32>
    tpu.vector_store %arg11[%c0_35, %c0_36, %c0_37], %83 {strides = array<i32>} : memref<1x128x128xf32, #tpu.memory_space<vmem>>, vector<1x128x128xf32>,
    return
  }
  func.func @transform_0(%arg0: i32, %arg1: i32) -> (i32, i32, i32) {
    %c0_i32 = arith.constant 0 : i32
    %c0_i32_0 = arith.constant 0 : i32
    %c0_i32_1 = arith.constant 0 : i32
    return %arg0, %c0_i32, %c0_i32_0 : i32, i32, i32
  }
  func.func @transform_1(%arg0: i32, %arg1: i32) -> (i32, i32, i32) {
    %c0_i32 = arith.constant 0 : i32
    %c0_i32_0 = arith.constant 0 : i32
    return %arg0, %arg1, %c0_i32 : i32, i32, i32
  }
  func.func @transform_2(%arg0: i32, %arg1: i32) -> (i32, i32) {
    %c0_i32 = arith.constant 0 : i32
    %c0_i32_0 = arith.constant 0 : i32
    %c0_i32_1 = arith.constant 0 : i32
    return %c0_i32, %c0_i32_0 : i32, i32
  }
  func.func @transform_3(%arg0: i32, %arg1: i32) -> (i32, i32) {
    %c0_i32 = arith.constant 0 : i32
    %c0_i32_0 = arith.constant 0 : i32
    %c0_i32_1 = arith.constant 0 : i32
    return %c0_i32, %c0_i32_0 : i32, i32
  }
  func.func @transform_4(%arg0: i32, %arg1: i32) -> (i32, i32) {
    %c0_i32 = arith.constant 0 : i32
    %c0_i32_0 = arith.constant 0 : i32
    %c0_i32_1 = arith.constant 0 : i32
    return %c0_i32, %c0_i32_0 : i32, i32
  }
  func.func @transform_5(%arg0: i32, %arg1: i32) -> (i32, i32) {
    %c0_i32 = arith.constant 0 : i32
    %c0_i32_0 = arith.constant 0 : i32
    %c0_i32_1 = arith.constant 0 : i32
    return %c0_i32, %c0_i32_0 : i32, i32
  }
  func.func @transform_6(%arg0: i32, %arg1: i32) -> (i32, i32) {
    %c0_i32 = arith.constant 0 : i32
    %c0_i32_0 = arith.constant 0 : i32
    %c0_i32_1 = arith.constant 0 : i32
    return %c0_i32, %c0_i32_0 : i32, i32
  }
  func.func @transform_7(%arg0: i32, %arg1: i32) -> (i32, i32) {
    %c0_i32 = arith.constant 0 : i32
    %c0_i32_0 = arith.constant 0 : i32
    %c0_i32_1 = arith.constant 0 : i32
    return %c0_i32, %c0_i32_0 : i32, i32
  }
  func.func @transform_8(%arg0: i32, %arg1: i32) -> (i32, i32) {
    %c0_i32 = arith.constant 0 : i32
    %c0_i32_0 = arith.constant 0 : i32
    %c0_i32_1 = arith.constant 0 : i32
    return %c0_i32, %c0_i32_0 : i32, i32
  }
  func.func @transform_9(%arg0: i32, %arg1: i32) -> (i32, i32, i32) {
    %c0_i32 = arith.constant 0 : i32
    %c0_i32_0 = arith.constant 0 : i32
    return %arg0, %arg1, %c0_i32 : i32, i32, i32
  }
}

</mosaic_0001>

<llo_original>
// kernel: dhm_forward.2
$region0: #{dhm_forward.2}
  #allocation0 [shape = 'u32[]', space=smem, size = 0x4, offset = 0x4, fixed_abs, tag = 'smem constant byte address 0x4 - core index']
  #allocation1 [shape = 'u32[144,128]{1,0:T(1,128)}', space=vmem, size = 0x12000, scoped, tag = 'internal scratch']
  %s0 = inlined_call_operand.vmem [shape: f32[2,128,128], index: 0, kind: input, shape index: {}]
  %s1 = inlined_call_operand.vmem [shape: f32[2,1,128], index: 1, kind: input, shape index: {}]
  %s2 = inlined_call_operand.vmem [shape: f32[2,128,128], index: 2, kind: output, shape index: {}]
  %s3 = sld [smem:[#allocation0]]
  $region41: #{dhm_forward.2} parent=0
    _
  %s5 = ssub.s32 1, %s3
  %s6 = scalar_select 0, %s5, %s3
  loop: start=0, step=1, limit=4
  $region2: #{dhm_forward.2} parent=0 // loop_pre_header
    _
  $region3: #{dhm_forward.2} parent=0 // loop_header
    %s8 = sphi 0, %s12
    %p9 = scmp.ge.s32.totalorder %s8, 4
    %s15 = sphi 0, %s27
    %s16 = sphi 0, %s23
    %s17 = sphi 0, %s15
    %s18 = sphi 0, %s16
    %s19 = sphi 0, %s17
    %s20 = sphi 0, %s18
    %s30 = sphi 0, %s32
    %s33 = sphi 0, %s30
    %s34 = sphi 0, %s33
    %s50 = sphi 0, %s34
    %s56 = sphi 0, %s58
    %s59 = sphi 0, %s56
    %s60 = sphi 0, %s59
    %s76 = sphi 0, %s60
    %s84 = sphi 0, %s86
    %s87 = sphi 0, %s84
    %s88 = sphi 0, %s87
    %s104 = sphi 0, %s88
  $region4: #{dhm_forward.2} parent=0 // loop_header_branch
    %11 = sbr.rel (%p9) target = $region8
  $region5: #{dhm_forward.2} parent=0 // loop_body
    %s13 = ssub.s32 %s8, 1
    %s14 = ssub.s32 %s8, 2
    %s21 = sadd.s32 1, %s16
    %p22 = scmp.ge.s32.totalorder %s21, 1
    %s23 = scalar_select %p22, 0, %s21
    %s24 = sadd.s32 1, %s15
    %s25 = scalar_select %p22, %s24, %s15
    %p26 = scmp.ge.s32.totalorder %s25, 2
    %s27 = scalar_select %p26, 0, %s25
    %s28 = ssub.s32 %s15, %s27
    %p29 = scmp.eq.s32.totalorder %s28, 0
    %s31 = sadd.s32 %s30, 1
    %s32 = scalar_select %p29, %s30, %s31
    %p35 = pneg %p29
    %p36 = scmp.eq.s32.totalorder %s8, 1
    %p37 = por %p35, %p36
    %p38 = scmp.ne.s32.totalorder %s30, %s33
    %p39 = scmp.eq.s32.totalorder %s8, 0
    %p40 = por %p38, %p39
    %p41 = scmp.ne.s32.totalorder %s30, %s33
    %p42 = scmp.eq.s32.totalorder %s13, 1
    %p43 = por %p41, %p42
    %p44 = scmp.ne.s32.totalorder %s33, %s34
    %p45 = scmp.eq.s32.totalorder %s13, 0
    %p46 = por %p44, %p45
    %p47 = scmp.ne.s32.totalorder %s33, %s34
    %p48 = scmp.eq.s32.totalorder %s14, 1
    %p49 = por %p47, %p48
    %p51 = scmp.ne.s32.totalorder %s34, %s50
    %p52 = scmp.eq.s32.totalorder %s14, 0
    %p53 = por %p51, %p52
    %s54 = ssub.s32 %s15, %s27
    %p55 = scmp.eq.s32.totalorder %s54, 0
    %s57 = sadd.s32 %s56, 1
    %s58 = scalar_select %p55, %s56, %s57
    %p61 = pneg %p55
    %p62 = scmp.eq.s32.totalorder %s8, 1
    %p63 = por %p61, %p62
    %p64 = scmp.ne.s32.totalorder %s56, %s59
    %p65 = scmp.eq.s32.totalorder %s8, 0
    %p66 = por %p64, %p65
    %p67 = scmp.ne.s32.totalorder %s56, %s59
    %p68 = scmp.eq.s32.totalorder %s13, 1
    %p69 = por %p67, %p68
    %p70 = scmp.ne.s32.totalorder %s59, %s60
    %p71 = scmp.eq.s32.totalorder %s13, 0
    %p72 = por %p70, %p71
    %p73 = scmp.ne.s32.totalorder %s59, %s60
    %p74 = scmp.eq.s32.totalorder %s14, 1
    %p75 = por %p73, %p74
    %p77 = scmp.ne.s32.totalorder %s60, %s76
    %p78 = scmp.eq.s32.totalorder %s14, 0
    %p79 = por %p77, %p78
    %s80 = ssub.s32 %s15, %s27
    %s81 = ssub.s32 %s16, %s23
    %s82 = sor.u32 %s80, %s81
    %p83 = scmp.eq.s32.totalorder %s82, 0
    %s85 = sadd.s32 %s84, 1
    %s86 = scalar_select %p83, %s84, %s85
    %p89 = pneg %p83
    %p90 = scmp.eq.s32.totalorder %s8, 1
    %p91 = por %p89, %p90
    %p92 = scmp.ne.s32.totalorder %s84, %s87
    %p93 = scmp.eq.s32.totalorder %s8, 0
    %p94 = por %p92, %p93
    %p95 = scmp.ne.s32.totalorder %s84, %s87
    %p96 = scmp.eq.s32.totalorder %s13, 1
    %p97 = por %p95, %p96
    %p98 = scmp.ne.s32.totalorder %s87, %s88
    %p99 = scmp.eq.s32.totalorder %s13, 0
    %p100 = por %p98, %p99
    %p101 = scmp.ne.s32.totalorder %s87, %s88
    %p102 = scmp.eq.s32.totalorder %s14, 1
    %p103 = por %p101, %p102
    %p105 = scmp.ne.s32.totalorder %s88, %s104
    %p106 = scmp.eq.s32.totalorder %s14, 0
    %p107 = por %p105, %p106
    %p108 = scmp.le.s32.totalorder 1, %s8
    %p109 = scmp.lt.s32.totalorder %s8, 3
    %p110 = pnand %p108, %p109
    %p111 = pneg %p110
    // Predicated region
    $region9: #{dhm_forward.2} parent=5 // pred_check
      _
    $region10: #{dhm_forward.2} parent=5 // pred_check_branch
      %113 = sbr.rel (%p110) target = $region12
    $region11: #{dhm_forward.2} parent=5 // pred_region
      %s114 = ssub.s32 %s8, 1
    $region12: #{dhm_forward.2} parent=5 // pred_fallthru
      _
    %p115 = scmp.lt.s32.totalorder %s8, 2
    // Predicated region
    $region13: #{dhm_forward.2} parent=5 // pred_check
      %p116 = pneg %p115
    $region14: #{dhm_forward.2} parent=5 // pred_check_branch
      %118 = sbr.rel (%p116) target = $region16
    $region15: #{dhm_forward.2} parent=5 // pred_region
      // Predicated region
      $region17: #{dhm_forward.2} parent=15 // pred_check
        %p119 = pneg %p40
      $region18: #{dhm_forward.2} parent=15 // pred_check_branch
        %121 = sbr.rel (%p119) target = $region20
      $region19: #{dhm_forward.2} parent=15 // pred_region
        %p122 = scmp.lt.s32.totalorder %s15, 1
        %s123 = scalar_select %p122, %s15, 1
        %s124 = smul.addr %s123, 16
        %s125 = smul.addr %s124, 8
        %s126 = scalar_lea.vmem %s0, %s125
      $region20: #{dhm_forward.2} parent=15 // pred_fallthru
        _
      // Predicated region
      $region21: #{dhm_forward.2} parent=15 // pred_check
        %p127 = pneg %p66
      $region22: #{dhm_forward.2} parent=15 // pred_check_branch
        %129 = sbr.rel (%p127) target = $region24
      $region23: #{dhm_forward.2} parent=15 // pred_region
        %p130 = scmp.lt.s32.totalorder %s15, 1
        %s131 = scalar_select %p130, %s15, 1
        %s132 = scalar_lea.vmem %s1, %s131
      $region24: #{dhm_forward.2} parent=15 // pred_fallthru
        _
    $region16: #{dhm_forward.2} parent=5 // pred_fallthru
      _
    %p133 = scmp.le.s32.totalorder 1, %s8
    %p134 = scmp.lt.s32.totalorder %s8, 3
    %p135 = pnand %p133, %p134
    %p136 = pneg %p135
    // Predicated region
    $region25: #{dhm_forward.2} parent=5 // pred_check
      _
    $region26: #{dhm_forward.2} parent=5 // pred_check_branch
      %138 = sbr.rel (%p135) target = $region28
    $region27: #{dhm_forward.2} parent=5 // pred_region
      %s139 = ssub.s32 %s8, 1
      %p140 = scmp.lt.s32.totalorder %s17, 1
      %s141 = scalar_select %p140, %s17, 1
      %s142 = smul.addr %s141, 16
      %s143 = smul.addr %s142, 8
      %s144 = scalar_lea.vmem %s0, %s143
      %p145 = pneg %p46
      %p146 = pneg %p43
      %p147 = scmp.lt.s32.totalorder %s17, 1
      %s148 = scalar_select %p147, %s17, 1
      %s149 = scalar_lea.vmem %s1, %s148
      %p150 = pneg %p72
      %p151 = pneg %p69
      %p152 = pneg %p100
      %p153 = pneg %p97
      %s154 = smul.u32 16, %s18
      %p155 = scmp.lt.s32.totalorder %s17, 1
      %s156 = scalar_select %p155, %s17, 1
      %p157 = scmp.lt.s32.totalorder %s154, 15
      %s158 = scalar_select %p157, %s154, 15
      %s159 = smul.addr %s156, 16
      %s160 = sadd.s32 %s158, %s159
      %s161 = smul.addr %s160, 8
      %s162 = scalar_lea.vmem %s2, %s161
      %p163 = scmp.lt.s32.totalorder %s17, 1
      %s164 = scalar_select %p163, %s17, 1
      %s165 = smul.addr %s164, 16
      %s166 = smul.addr %s165, 8
      %s167 = scalar_lea.vmem %s0, %s166
      %p168 = scmp.lt.s32.totalorder %s17, 1
      %s169 = scalar_select %p168, %s17, 1
      %s170 = scalar_lea.vmem %s1, %s169
      %s171 = smul.u32 16, %s18
      %p172 = scmp.lt.s32.totalorder %s17, 1
      %s173 = scalar_select %p172, %s17, 1
      %p174 = scmp.lt.s32.totalorder %s171, 15
      %s175 = scalar_select %p174, %s171, 15
      %s176 = smul.addr %s173, 16
      %s177 = sadd.s32 %s175, %s176
      %s178 = smul.addr %s177, 8
      %s179 = scalar_lea.vmem %s2, %s178
      %s180 = smul.u32 16, %s18
      %s181 = smul.u32 %s18, 128
      %v182 = vld [vmem:[%s167] sm:$0xff]
      %v183 = vld [vmem:[%s167 + $0x8] sm:$0xff]
      %v184 = vld [vmem:[%s167 + $0x10] sm:$0xff]
      %v185 = vld [vmem:[%s167 + $0x18] sm:$0xff]
      %v186 = vld [vmem:[%s167 + $0x20] sm:$0xff]
      %v187 = vld [vmem:[%s167 + $0x28] sm:$0xff]
      %v188 = vld [vmem:[%s167 + $0x30] sm:$0xff]
      %v189 = vld [vmem:[%s167 + $0x38] sm:$0xff]
      %v190 = vld [vmem:[%s167 + $0x40] sm:$0xff]
      %v191 = vld [vmem:[%s167 + $0x48] sm:$0xff]
      %v192 = vld [vmem:[%s167 + $0x50] sm:$0xff]
      %v193 = vld [vmem:[%s167 + $0x58] sm:$0xff]
      %v194 = vld [vmem:[%s167 + $0x60] sm:$0xff]
      %v195 = vld [vmem:[%s167 + $0x68] sm:$0xff]
      %v196 = vld [vmem:[%s167 + $0x70] sm:$0xff]
      %v197 = vld [vmem:[%s167 + $0x78] sm:$0xff]
      %s198 = scalar_lea.vmem %s167, %s181
      %v199 = vld [vmem:[%s198] sm:$0xff]
      %v200 = vld [vmem:[%s198 + $0x8] sm:$0xff]
      %v201 = vld [vmem:[%s198 + $0x10] sm:$0xff]
      %v202 = vld [vmem:[%s198 + $0x18] sm:$0xff]
      %v203 = vld [vmem:[%s198 + $0x20] sm:$0xff]
      %v204 = vld [vmem:[%s198 + $0x28] sm:$0xff]
      %v205 = vld [vmem:[%s198 + $0x30] sm:$0xff]
      %v206 = vld [vmem:[%s198 + $0x38] sm:$0xff]
      %v207 = vld [vmem:[%s198 + $0x40] sm:$0xff]
      %v208 = vld [vmem:[%s198 + $0x48] sm:$0xff]
      %v209 = vld [vmem:[%s198 + $0x50] sm:$0xff]
      %v210 = vld [vmem:[%s198 + $0x58] sm:$0xff]
      %v211 = vld [vmem:[%s198 + $0x60] sm:$0xff]
      %v212 = vld [vmem:[%s198 + $0x68] sm:$0xff]
      %v213 = vld [vmem:[%s198 + $0x70] sm:$0xff]
      %v214 = vld [vmem:[%s198 + $0x78] sm:$0xff]
      %215 = vmatprep.subr.mxu0 0.0
      %216 = vmatpush1.xpose.msra.mxu0 %v197
      %217 = vmatprep.subr.mxu0 0.0
      %218 = vmatpush1.xpose.msra.mxu0 %v196
      %219 = vmatprep.subr.mxu0 0.0
      %220 = vmatpush1.xpose.msra.mxu0 %v195
      %221 = vmatprep.subr.mxu0 0.0
      %222 = vmatpush1.xpose.msra.mxu0 %v194
      %223 = vmatprep.subr.mxu0 0.0
      %224 = vmatpush1.xpose.msra.mxu0 %v193
      %225 = vmatprep.subr.mxu0 0.0
      %226 = vmatpush1.xpose.msra.mxu0 %v192
      %227 = vmatprep.subr.mxu0 0.0
      %228 = vmatpush1.xpose.msra.mxu0 %v191
      %229 = vmatprep.subr.mxu0 0.0
      %230 = vmatpush1.xpose.msra.mxu0 %v190
      %231 = vmatprep.subr.mxu0 0.0
      %232 = vmatpush1.xpose.msra.mxu0 %v189
      %233 = vmatprep.subr.mxu0 0.0
      %234 = vmatpush1.xpose.msra.mxu0 %v188
      %235 = vmatprep.subr.mxu0 0.0
      %236 = vmatpush1.xpose.msra.mxu0 %v187
      %237 = vmatprep.subr.mxu0 0.0
      %238 = vmatpush1.xpose.msra.mxu0 %v186
      %239 = vmatprep.subr.mxu0 0.0
      %240 = vmatpush1.xpose.msra.mxu0 %v185
      %241 = vmatprep.subr.mxu0 0.0
      %242 = vmatpush1.xpose.msra.mxu0 %v184
      %243 = vmatprep.subr.mxu0 0.0
      %244 = vmatpush1.xpose.msra.mxu0 %v183
      %245 = vmatprep.subr.mxu0 0.0
      %246 = vmatpush1.xpose.msra.mxu0 %v182
      %247 = vmatprep.subr.mxu0 0.0
      %248 = vmatpush2.xpose.msra.mxu0 0.0
      %249 = vmatprep.subr.mxu0 0.0
      %250 = vmatpush2.xpose.msra.mxu0 0.0
      %251 = vmatprep.subr.mxu0 0.0
      %252 = vmatpush2.xpose.msra.mxu0 0.0
      %253 = vmatprep.subr.mxu0 0.0
      %254 = vmatpush2.xpose.msra.mxu0 0.0
      %255 = vmatprep.subr.mxu0 0.0
      %256 = vmatpush2.xpose.msra.mxu0 0.0
      %257 = vmatprep.subr.mxu0 0.0
      %258 = vmatpush2.xpose.msra.mxu0 0.0
      %259 = vmatprep.subr.mxu0 0.0
      %260 = vmatpush2.xpose.msra.mxu0 0.0
      %261 = vmatprep.subr.mxu0 0.0
      %262 = vmatpush2.xpose.msra.mxu0 0.0
      %263 = vmatprep.subr.mxu0 0.0
      %264 = vmatpush2.xpose.msra.mxu0 0.0
      %265 = vmatprep.subr.mxu0 0.0
      %266 = vmatpush2.xpose.msra.mxu0 0.0
      %267 = vmatprep.subr.mxu0 0.0
      %268 = vmatpush2.xpose.msra.mxu0 0.0
      %269 = vmatprep.subr.mxu0 0.0
      %270 = vmatpush2.xpose.msra.mxu0 0.0
      %271 = vmatprep.subr.mxu0 0.0
      %272 = vmatpush2.xpose.msra.mxu0 0.0
      %273 = vmatprep.subr.mxu0 0.0
      %274 = vmatpush2.xpose.msra.mxu0 0.0
      %275 = vmatprep.subr.mxu0 0.0
      %276 = vmatpush2.xpose.msra.mxu0 0.0
      %277 = vmatprep.subr.mxu0 0.0
      %278 = vmatpush2.xpose.msra.mxu0 0.0
      %279 = vmatprep.mubr.f32.mxu0 0.0
      %280 = vmatmul.mubr.f32.gmra.mxu0 %v199
      %v281 = vpop.f32.mrf.mxu0
      %v282 = vadd.f32 0.0, %v281
      %v283 = vpop.f32.mrf.mxu0
      %284 = vmatprep.mubr.f32.mxu0 0.0
      %285 = vmatmul.mubr.f32.gmra.mxu0 %v200
      %v286 = vpop.f32.mrf.mxu0
      %v287 = vadd.f32 0.0, %v286
      %v288 = vpop.f32.mrf.mxu0
      %289 = vmatprep.mubr.f32.mxu0 0.0
      %290 = vmatmul.mubr.f32.gmra.mxu0 %v201
      %v291 = vpop.f32.mrf.mxu0
      %v292 = vadd.f32 0.0, %v291
      %v293 = vpop.f32.mrf.mxu0
      %294 = vmatprep.mubr.f32.mxu0 0.0
      %295 = vmatmul.mubr.f32.gmra.mxu0 %v202
      %v296 = vpop.f32.mrf.mxu0
      %v297 = vadd.f32 0.0, %v296
      %v298 = vpop.f32.mrf.mxu0
      %299 = vmatprep.mubr.f32.mxu0 0.0
      %300 = vmatmul.mubr.f32.gmra.mxu0 %v203
      %v301 = vpop.f32.mrf.mxu0
      %v302 = vadd.f32 0.0, %v301
      %v303 = vpop.f32.mrf.mxu0
      %304 = vmatprep.mubr.f32.mxu0 0.0
      %305 = vmatmul.mubr.f32.gmra.mxu0 %v204
      %v306 = vpop.f32.mrf.mxu0
      %v307 = vadd.f32 0.0, %v306
      %v308 = vpop.f32.mrf.mxu0
      %309 = vmatprep.mubr.f32.mxu0 0.0
      %310 = vmatmul.mubr.f32.gmra.mxu0 %v205
      %v311 = vpop.f32.mrf.mxu0
      %v312 = vadd.f32 0.0, %v311
      %v313 = vpop.f32.mrf.mxu0
      %314 = vmatprep.mubr.f32.mxu0 0.0
      %315 = vmatmul.mubr.f32.gmra.mxu0 %v206
      %v316 = vpop.f32.mrf.mxu0
      %v317 = vadd.f32 0.0, %v316
      %v318 = vpop.f32.mrf.mxu0
      %319 = vmatprep.mubr.f32.mxu0 0.0
      %320 = vmatmul.mubr.f32.gmra.mxu0 %v207
      %v321 = vpop.f32.mrf.mxu0
      %v322 = vadd.f32 0.0, %v321
      %v323 = vpop.f32.mrf.mxu0
      %324 = vmatprep.mubr.f32.mxu0 0.0
      %325 = vmatmul.mubr.f32.gmra.mxu0 %v208
      %v326 = vpop.f32.mrf.mxu0
      %v327 = vadd.f32 0.0, %v326
      %v328 = vpop.f32.mrf.mxu0
      %329 = vmatprep.mubr.f32.mxu0 0.0
      %330 = vmatmul.mubr.f32.gmra.mxu0 %v209
      %v331 = vpop.f32.mrf.mxu0
      %v332 = vadd.f32 0.0, %v331
      %v333 = vpop.f32.mrf.mxu0
      %334 = vmatprep.mubr.f32.mxu0 0.0
      %335 = vmatmul.mubr.f32.gmra.mxu0 %v210
      %v336 = vpop.f32.mrf.mxu0
      %v337 = vadd.f32 0.0, %v336
      %v338 = vpop.f32.mrf.mxu0
      %339 = vmatprep.mubr.f32.mxu0 0.0
      %340 = vmatmul.mubr.f32.gmra.mxu0 %v211
      %v341 = vpop.f32.mrf.mxu0
      %v342 = vadd.f32 0.0, %v341
      %v343 = vpop.f32.mrf.mxu0
      %344 = vmatprep.mubr.f32.mxu0 0.0
      %345 = vmatmul.mubr.f32.gmra.mxu0 %v212
      %v346 = vpop.f32.mrf.mxu0
      %v347 = vadd.f32 0.0, %v346
      %v348 = vpop.f32.mrf.mxu0
      %349 = vmatprep.mubr.f32.mxu0 0.0
      %350 = vmatmul.mubr.f32.gmra.mxu0 %v213
      %v351 = vpop.f32.mrf.mxu0
      %v352 = vadd.f32 0.0, %v351
      %v353 = vpop.f32.mrf.mxu0
      %354 = vmatprep.mubr.f32.mxu0 0.0
      %355 = vmatmul.mubr.f32.gmra.mxu0 %v214
      %v356 = vpop.f32.mrf.mxu0
      %v357 = vadd.f32 0.0, %v356
      %v358 = vpop.f32.mrf.mxu0
      %359 = vdwg.mxu0
      %v360 = vmul.f32 %v199, %v199
      %v361 = vmul.f32 %v200, %v200
      %v362 = vmul.f32 %v201, %v201
      %v363 = vmul.f32 %v202, %v202
      %v364 = vmul.f32 %v203, %v203
      %v365 = vmul.f32 %v204, %v204
      %v366 = vmul.f32 %v205, %v205
      %v367 = vmul.f32 %v206, %v206
      %v368 = vmul.f32 %v207, %v207
      %v369 = vmul.f32 %v208, %v208
      %v370 = vmul.f32 %v209, %v209
      %v371 = vmul.f32 %v210, %v210
      %v372 = vmul.f32 %v211, %v211
      %v373 = vmul.f32 %v212, %v212
      %v374 = vmul.f32 %v213, %v213
      %v375 = vmul.f32 %v214, %v214
      %376 = vadd.xlane.f32.xlu0 %v360
      %v377 = vpop.xlane.xlu0 %376
      %378 = vadd.xlane.f32.xlu0 %v361
      %v379 = vpop.xlane.xlu0 %378
      %380 = vadd.xlane.f32.xlu0 %v362
      %v381 = vpop.xlane.xlu0 %380
      %382 = vadd.xlane.f32.xlu0 %v363
      %v383 = vpop.xlane.xlu0 %382
      %384 = vadd.xlane.f32.xlu0 %v364
      %v385 = vpop.xlane.xlu0 %384
      %386 = vadd.xlane.f32.xlu0 %v365
      %v387 = vpop.xlane.xlu0 %386
      %388 = vadd.xlane.f32.xlu0 %v366
      %v389 = vpop.xlane.xlu0 %388
      %390 = vadd.xlane.f32.xlu0 %v367
      %v391 = vpop.xlane.xlu0 %390
      %392 = vadd.xlane.f32.xlu0 %v368
      %v393 = vpop.xlane.xlu0 %392
      %394 = vadd.xlane.f32.xlu0 %v369
      %v395 = vpop.xlane.xlu0 %394
      %396 = vadd.xlane.f32.xlu0 %v370
      %v397 = vpop.xlane.xlu0 %396
      %398 = vadd.xlane.f32.xlu0 %v371
      %v399 = vpop.xlane.xlu0 %398
      %400 = vadd.xlane.f32.xlu0 %v372
      %v401 = vpop.xlane.xlu0 %400
      %402 = vadd.xlane.f32.xlu0 %v373
      %v403 = vpop.xlane.xlu0 %402
      %404 = vadd.xlane.f32.xlu0 %v374
      %v405 = vpop.xlane.xlu0 %404
      %406 = vadd.xlane.f32.xlu0 %v375
      %v407 = vpop.xlane.xlu0 %406
      %v408 = vmul.f32 %v282, 2.0
      %v409 = vmul.f32 %v287, 2.0
      %v410 = vmul.f32 %v292, 2.0
      %v411 = vmul.f32 %v297, 2.0
      %v412 = vmul.f32 %v302, 2.0
      %v413 = vmul.f32 %v307, 2.0
      %v414 = vmul.f32 %v312, 2.0
      %v415 = vmul.f32 %v317, 2.0
      %v416 = vmul.f32 %v322, 2.0
      %v417 = vmul.f32 %v327, 2.0
      %v418 = vmul.f32 %v332, 2.0
      %v419 = vmul.f32 %v337, 2.0
      %v420 = vmul.f32 %v342, 2.0
      %v421 = vmul.f32 %v347, 2.0
      %v422 = vmul.f32 %v352, 2.0
      %v423 = vmul.f32 %v357, 2.0
      %v424 = vsub.f32 %v408, %v377
      %v425 = vsub.f32 %v409, %v379
      %v426 = vsub.f32 %v410, %v381
      %v427 = vsub.f32 %v411, %v383
      %v428 = vsub.f32 %v412, %v385
      %v429 = vsub.f32 %v413, %v387
      %v430 = vsub.f32 %v414, %v389
      %v431 = vsub.f32 %v415, %v391
      %v432 = vsub.f32 %v416, %v393
      %v433 = vsub.f32 %v417, %v395
      %v434 = vsub.f32 %v418, %v397
      %v435 = vsub.f32 %v419, %v399
      %v436 = vsub.f32 %v420, %v401
      %v437 = vsub.f32 %v421, %v403
      %v438 = vsub.f32 %v422, %v405
      %v439 = vsub.f32 %v423, %v407
      %v440 = vld [vmem:[%s170] sm:$0x1]
      %v442 = vlaneseq
      %v443 = vshrl.u32 %v442, 7
      %v444 = vsub.s32 0, %v443
      %v445 = vrot.slane %v440, %v444
      %v447 = vsub.f32 %v424, %v445
      %v448 = vsub.f32 %v425, %v445
      %v449 = vsub.f32 %v426, %v445
      %v450 = vsub.f32 %v427, %v445
      %v451 = vsub.f32 %v428, %v445
      %v452 = vsub.f32 %v429, %v445
      %v453 = vsub.f32 %v430, %v445
      %v454 = vsub.f32 %v431, %v445
      %v455 = vsub.f32 %v432, %v445
      %v456 = vsub.f32 %v433, %v445
      %v457 = vsub.f32 %v434, %v445
      %v458 = vsub.f32 %v435, %v445
      %v459 = vsub.f32 %v436, %v445
      %v460 = vsub.f32 %v437, %v445
      %v461 = vsub.f32 %v438, %v445
      %v462 = vsub.f32 %v439, %v445
      %463 = vst [vmem:[%s179] sm:$0xff] %v447
      %464 = vst [vmem:[%s179 + $0x8] sm:$0xff] %v448
      %465 = vst [vmem:[%s179 + $0x10] sm:$0xff] %v449
      %466 = vst [vmem:[%s179 + $0x18] sm:$0xff] %v450
      %467 = vst [vmem:[%s179 + $0x20] sm:$0xff] %v451
      %468 = vst [vmem:[%s179 + $0x28] sm:$0xff] %v452
      %469 = vst [vmem:[%s179 + $0x30] sm:$0xff] %v453
      %470 = vst [vmem:[%s179 + $0x38] sm:$0xff] %v454
      %471 = vst [vmem:[%s179 + $0x40] sm:$0xff] %v455
      %472 = vst [vmem:[%s179 + $0x48] sm:$0xff] %v456
      %473 = vst [vmem:[%s179 + $0x50] sm:$0xff] %v457
      %474 = vst [vmem:[%s179 + $0x58] sm:$0xff] %v458
      %475 = vst [vmem:[%s179 + $0x60] sm:$0xff] %v459
      %476 = vst [vmem:[%s179 + $0x68] sm:$0xff] %v460
      %477 = vst [vmem:[%s179 + $0x70] sm:$0xff] %v461
      %478 = vst [vmem:[%s179 + $0x78] sm:$0xff] %v462
      %s479 = smul.u32 16, %s18
      %p480 = scmp.lt.s32.totalorder %s17, 1
      %s481 = scalar_select %p480, %s17, 1
      %p482 = scmp.lt.s32.totalorder %s479, 15
      %s483 = scalar_select %p482, %s479, 15
      %s484 = smul.addr %s481, 16
      %s485 = sadd.s32 %s483, %s484
      %s486 = smul.addr %s485, 8
      %s487 = scalar_lea.vmem %s2, %s486
      // Predicated region
      $region29: #{dhm_forward.2} parent=27 // pred_check
        %p488 = pneg %p97
      $region30: #{dhm_forward.2} parent=27 // pred_check_branch
        %490 = sbr.rel (%p488) target = $region32
      $region31: #{dhm_forward.2} parent=27 // pred_region
        %s491 = smul.u32 16, %s18
      $region32: #{dhm_forward.2} parent=27 // pred_fallthru
        _
    $region28: #{dhm_forward.2} parent=5 // pred_fallthru
      _
    %p492 = scmp.le.s32.totalorder 2, %s8
    // Predicated region
    $region33: #{dhm_forward.2} parent=5 // pred_check
      %p493 = pneg %p492
    $region34: #{dhm_forward.2} parent=5 // pred_check_branch
      %495 = sbr.rel (%p493) target = $region36
    $region35: #{dhm_forward.2} parent=5 // pred_region
      %s496 = ssub.s32 %s8, 2
      // Predicated region
      $region37: #{dhm_forward.2} parent=35 // pred_check
        %p497 = pneg %p103
      $region38: #{dhm_forward.2} parent=35 // pred_check_branch
        %499 = sbr.rel (%p497) target = $region40
      $region39: #{dhm_forward.2} parent=35 // pred_region
        %s500 = smul.u32 16, %s20
        %p501 = scmp.lt.s32.totalorder %s19, 1
        %s502 = scalar_select %p501, %s19, 1
        %p503 = scmp.lt.s32.totalorder %s500, 15
        %s504 = scalar_select %p503, %s500, 15
        %s505 = smul.addr %s502, 16
        %s506 = sadd.s32 %s504, %s505
        %s507 = smul.addr %s506, 8
        %s508 = scalar_lea.vmem %s2, %s507
      $region40: #{dhm_forward.2} parent=35 // pred_fallthru
        _
    $region36: #{dhm_forward.2} parent=5 // pred_fallthru
      _
  $region6: #{dhm_forward.2} parent=0 // loop_footer
    %s12 = sadd.s32 1, %s8
  $region7: #{dhm_forward.2} parent=0 // loop_footer_branch
    %7 = sbr.rel target = $region3
  $region8: #{dhm_forward.2} parent=0 // loop_exit
    _

// kernel: dhm_forward.3
$region0: #{dhm_forward.3}
  #allocation0 [shape = 'u32[]', space=smem, size = 0x4, offset = 0x4, fixed_abs, tag = 'smem constant byte address 0x4 - core index']
  #allocation1 [shape = 'u32[144,128]{1,0:T(1,128)}', space=vmem, size = 0x12000, scoped, tag = 'internal scratch']
  %s0 = inlined_call_operand.vmem [shape: f32[2,128,128], index: 0, kind: input, shape index: {}]
  %s1 = inlined_call_operand.vmem [shape: s32[2,1024,1], index: 1, kind: input, shape index: {}]
  %s2 = inlined_call_operand.vmem [shape: bf16[128,128], index: 2, kind: input, shape index: {}]
  %s3 = inlined_call_operand.vmem [shape: bf16[128,128], index: 3, kind: input, shape index: {}]
  %s4 = inlined_call_operand.vmem [shape: bf16[128,128], index: 4, kind: input, shape index: {}]
  %s5 = inlined_call_operand.vmem [shape: bf16[128,128], index: 5, kind: input, shape index: {}]
  %s6 = inlined_call_operand.vmem [shape: f32[1,128], index: 6, kind: input, shape index: {}]
  %s7 = inlined_call_operand.vmem [shape: f32[1,128], index: 7, kind: input, shape index: {}]
  %s8 = inlined_call_operand.vmem [shape: f32[1,128], index: 8, kind: input, shape index: {}]
  %s9 = inlined_call_operand.vmem [shape: f32[2,128,128], index: 9, kind: output, shape index: {}]
  %s10 = sld [smem:[#allocation0]]
  $region69: #{dhm_forward.3} parent=0
    _
  %s12 = ssub.s32 1, %s10
  %s13 = scalar_select 0, %s12, %s10
  loop: start=0, step=1, limit=4
  $region2: #{dhm_forward.3} parent=0 // loop_pre_header
    _
  $region3: #{dhm_forward.3} parent=0 // loop_header
    %s15 = sphi 0, %s19
    %p16 = scmp.ge.s32.totalorder %s15, 4
    %s22 = sphi 0, %s34
    %s23 = sphi 0, %s30
    %s24 = sphi 0, %s22
    %s25 = sphi 0, %s23
    %s26 = sphi 0, %s24
    %s27 = sphi 0, %s25
    %s37 = sphi 0, %s39
    %s40 = sphi 0, %s37
    %s41 = sphi 0, %s40
    %s57 = sphi 0, %s41
    %s65 = sphi 0, %s67
    %s68 = sphi 0, %s65
    %s69 = sphi 0, %s68
    %s85 = sphi 0, %s69
    %s89 = sphi 0, %s89
    %s91 = sphi 0, %s89
    %s92 = sphi 0, %s91
    %s106 = sphi 0, %s92
    %s110 = sphi 0, %s110
    %s112 = sphi 0, %s110
    %s113 = sphi 0, %s112
    %s127 = sphi 0, %s113
    %s131 = sphi 0, %s131
    %s133 = sphi 0, %s131
    %s134 = sphi 0, %s133
    %s148 = sphi 0, %s134
    %s152 = sphi 0, %s152
    %s154 = sphi 0, %s152
    %s155 = sphi 0, %s154
    %s169 = sphi 0, %s155
    %s173 = sphi 0, %s173
    %s175 = sphi 0, %s173
    %s176 = sphi 0, %s175
    %s190 = sphi 0, %s176
    %s194 = sphi 0, %s194
    %s196 = sphi 0, %s194
    %s197 = sphi 0, %s196
    %s211 = sphi 0, %s197
    %s215 = sphi 0, %s215
    %s217 = sphi 0, %s215
    %s218 = sphi 0, %s217
    %s232 = sphi 0, %s218
    %s240 = sphi 0, %s242
    %s243 = sphi 0, %s240
    %s244 = sphi 0, %s243
    %s260 = sphi 0, %s244
  $region4: #{dhm_forward.3} parent=0 // loop_header_branch
    %18 = sbr.rel (%p16) target = $region8
  $region5: #{dhm_forward.3} parent=0 // loop_body
    %s20 = ssub.s32 %s15, 1
    %s21 = ssub.s32 %s15, 2
    %s28 = sadd.s32 1, %s23
    %p29 = scmp.ge.s32.totalorder %s28, 1
    %s30 = scalar_select %p29, 0, %s28
    %s31 = sadd.s32 1, %s22
    %s32 = scalar_select %p29, %s31, %s22
    %p33 = scmp.ge.s32.totalorder %s32, 2
    %s34 = scalar_select %p33, 0, %s32
    %s35 = ssub.s32 %s22, %s34
    %p36 = scmp.eq.s32.totalorder %s35, 0
    %s38 = sadd.s32 %s37, 1
    %s39 = scalar_select %p36, %s37, %s38
    %p42 = pneg %p36
    %p43 = scmp.eq.s32.totalorder %s15, 1
    %p44 = por %p42, %p43
    %p45 = scmp.ne.s32.totalorder %s37, %s40
    %p46 = scmp.eq.s32.totalorder %s15, 0
    %p47 = por %p45, %p46
    %p48 = scmp.ne.s32.totalorder %s37, %s40
    %p49 = scmp.eq.s32.totalorder %s20, 1
    %p50 = por %p48, %p49
    %p51 = scmp.ne.s32.totalorder %s40, %s41
    %p52 = scmp.eq.s32.totalorder %s20, 0
    %p53 = por %p51, %p52
    %p54 = scmp.ne.s32.totalorder %s40, %s41
    %p55 = scmp.eq.s32.totalorder %s21, 1
    %p56 = por %p54, %p55
    %p58 = scmp.ne.s32.totalorder %s41, %s57
    %p59 = scmp.eq.s32.totalorder %s21, 0
    %p60 = por %p58, %p59
    %s61 = ssub.s32 %s22, %s34
    %s62 = ssub.s32 %s23, %s30
    %s63 = sor.u32 %s61, %s62
    %p64 = scmp.eq.s32.totalorder %s63, 0
    %s66 = sadd.s32 %s65, 1
    %s67 = scalar_select %p64, %s65, %s66
    %p70 = pneg %p64
    %p71 = scmp.eq.s32.totalorder %s15, 1
    %p72 = por %p70, %p71
    %p73 = scmp.ne.s32.totalorder %s65, %s68
    %p74 = scmp.eq.s32.totalorder %s15, 0
    %p75 = por %p73, %p74
    %p76 = scmp.ne.s32.totalorder %s65, %s68
    %p77 = scmp.eq.s32.totalorder %s20, 1
    %p78 = por %p76, %p77
    %p79 = scmp.ne.s32.totalorder %s68, %s69
    %p80 = scmp.eq.s32.totalorder %s20, 0
    %p81 = por %p79, %p80
    %p82 = scmp.ne.s32.totalorder %s68, %s69
    %p83 = scmp.eq.s32.totalorder %s21, 1
    %p84 = por %p82, %p83
    %p86 = scmp.ne.s32.totalorder %s69, %s85
    %p87 = scmp.eq.s32.totalorder %s21, 0
    %p88 = por %p86, %p87
    %s90 = sadd.s32 %s89, 1
    %p93 = scmp.eq.s32.totalorder %s15, 1
    %p94 = scmp.ne.s32.totalorder %s89, %s91
    %p95 = scmp.eq.s32.totalorder %s15, 0
    %p96 = por %p94, %p95
    %p97 = scmp.ne.s32.totalorder %s89, %s91
    %p98 = scmp.eq.s32.totalorder %s20, 1
    %p99 = por %p97, %p98
    %p100 = scmp.ne.s32.totalorder %s91, %s92
    %p101 = scmp.eq.s32.totalorder %s20, 0
    %p102 = por %p100, %p101
    %p103 = scmp.ne.s32.totalorder %s91, %s92
    %p104 = scmp.eq.s32.totalorder %s21, 1
    %p105 = por %p103, %p104
    %p107 = scmp.ne.s32.totalorder %s92, %s106
    %p108 = scmp.eq.s32.totalorder %s21, 0
    %p109 = por %p107, %p108
    %s111 = sadd.s32 %s110, 1
    %p114 = scmp.eq.s32.totalorder %s15, 1
    %p115 = scmp.ne.s32.totalorder %s110, %s112
    %p116 = scmp.eq.s32.totalorder %s15, 0
    %p117 = por %p115, %p116
    %p118 = scmp.ne.s32.totalorder %s110, %s112
    %p119 = scmp.eq.s32.totalorder %s20, 1
    %p120 = por %p118, %p119
    %p121 = scmp.ne.s32.totalorder %s112, %s113
    %p122 = scmp.eq.s32.totalorder %s20, 0
    %p123 = por %p121, %p122
    %p124 = scmp.ne.s32.totalorder %s112, %s113
    %p125 = scmp.eq.s32.totalorder %s21, 1
    %p126 = por %p124, %p125
    %p128 = scmp.ne.s32.totalorder %s113, %s127
    %p129 = scmp.eq.s32.totalorder %s21, 0
    %p130 = por %p128, %p129
    %s132 = sadd.s32 %s131, 1
    %p135 = scmp.eq.s32.totalorder %s15, 1
    %p136 = scmp.ne.s32.totalorder %s131, %s133
    %p137 = scmp.eq.s32.totalorder %s15, 0
    %p138 = por %p136, %p137
    %p139 = scmp.ne.s32.totalorder %s131, %s133
    %p140 = scmp.eq.s32.totalorder %s20, 1
    %p141 = por %p139, %p140
    %p142 = scmp.ne.s32.totalorder %s133, %s134
    %p143 = scmp.eq.s32.totalorder %s20, 0
    %p144 = por %p142, %p143
    %p145 = scmp.ne.s32.totalorder %s133, %s134
    %p146 = scmp.eq.s32.totalorder %s21, 1
    %p147 = por %p145, %p146
    %p149 = scmp.ne.s32.totalorder %s134, %s148
    %p150 = scmp.eq.s32.totalorder %s21, 0
    %p151 = por %p149, %p150
    %s153 = sadd.s32 %s152, 1
    %p156 = scmp.eq.s32.totalorder %s15, 1
    %p157 = scmp.ne.s32.totalorder %s152, %s154
    %p158 = scmp.eq.s32.totalorder %s15, 0
    %p159 = por %p157, %p158
    %p160 = scmp.ne.s32.totalorder %s152, %s154
    %p161 = scmp.eq.s32.totalorder %s20, 1
    %p162 = por %p160, %p161
    %p163 = scmp.ne.s32.totalorder %s154, %s155
    %p164 = scmp.eq.s32.totalorder %s20, 0
    %p165 = por %p163, %p164
    %p166 = scmp.ne.s32.totalorder %s154, %s155
    %p167 = scmp.eq.s32.totalorder %s21, 1
    %p168 = por %p166, %p167
    %p170 = scmp.ne.s32.totalorder %s155, %s169
    %p171 = scmp.eq.s32.totalorder %s21, 0
    %p172 = por %p170, %p171
    %s174 = sadd.s32 %s173, 1
    %p177 = scmp.eq.s32.totalorder %s15, 1
    %p178 = scmp.ne.s32.totalorder %s173, %s175
    %p179 = scmp.eq.s32.totalorder %s15, 0
    %p180 = por %p178, %p179
    %p181 = scmp.ne.s32.totalorder %s173, %s175
    %p182 = scmp.eq.s32.totalorder %s20, 1
    %p183 = por %p181, %p182
    %p184 = scmp.ne.s32.totalorder %s175, %s176
    %p185 = scmp.eq.s32.totalorder %s20, 0
    %p186 = por %p184, %p185
    %p187 = scmp.ne.s32.totalorder %s175, %s176
    %p188 = scmp.eq.s32.totalorder %s21, 1
    %p189 = por %p187, %p188
    %p191 = scmp.ne.s32.totalorder %s176, %s190
    %p192 = scmp.eq.s32.totalorder %s21, 0
    %p193 = por %p191, %p192
    %s195 = sadd.s32 %s194, 1
    %p198 = scmp.eq.s32.totalorder %s15, 1
    %p199 = scmp.ne.s32.totalorder %s194, %s196
    %p200 = scmp.eq.s32.totalorder %s15, 0
    %p201 = por %p199, %p200
    %p202 = scmp.ne.s32.totalorder %s194, %s196
    %p203 = scmp.eq.s32.totalorder %s20, 1
    %p204 = por %p202, %p203
    %p205 = scmp.ne.s32.totalorder %s196, %s197
    %p206 = scmp.eq.s32.totalorder %s20, 0
    %p207 = por %p205, %p206
    %p208 = scmp.ne.s32.totalorder %s196, %s197
    %p209 = scmp.eq.s32.totalorder %s21, 1
    %p210 = por %p208, %p209
    %p212 = scmp.ne.s32.totalorder %s197, %s211
    %p213 = scmp.eq.s32.totalorder %s21, 0
    %p214 = por %p212, %p213
    %s216 = sadd.s32 %s215, 1
    %p219 = scmp.eq.s32.totalorder %s15, 1
    %p220 = scmp.ne.s32.totalorder %s215, %s217
    %p221 = scmp.eq.s32.totalorder %s15, 0
    %p222 = por %p220, %p221
    %p223 = scmp.ne.s32.totalorder %s215, %s217
    %p224 = scmp.eq.s32.totalorder %s20, 1
    %p225 = por %p223, %p224
    %p226 = scmp.ne.s32.totalorder %s217, %s218
    %p227 = scmp.eq.s32.totalorder %s20, 0
    %p228 = por %p226, %p227
    %p229 = scmp.ne.s32.totalorder %s217, %s218
    %p230 = scmp.eq.s32.totalorder %s21, 1
    %p231 = por %p229, %p230
    %p233 = scmp.ne.s32.totalorder %s218, %s232
    %p234 = scmp.eq.s32.totalorder %s21, 0
    %p235 = por %p233, %p234
    %s236 = ssub.s32 %s22, %s34
    %s237 = ssub.s32 %s23, %s30
    %s238 = sor.u32 %s236, %s237
    %p239 = scmp.eq.s32.totalorder %s238, 0
    %s241 = sadd.s32 %s240, 1
    %s242 = scalar_select %p239, %s240, %s241
    %p245 = pneg %p239
    %p246 = scmp.eq.s32.totalorder %s15, 1
    %p247 = por %p245, %p246
    %p248 = scmp.ne.s32.totalorder %s240, %s243
    %p249 = scmp.eq.s32.totalorder %s15, 0
    %p250 = por %p248, %p249
    %p251 = scmp.ne.s32.totalorder %s240, %s243
    %p252 = scmp.eq.s32.totalorder %s20, 1
    %p253 = por %p251, %p252
    %p254 = scmp.ne.s32.totalorder %s243, %s244
    %p255 = scmp.eq.s32.totalorder %s20, 0
    %p256 = por %p254, %p255
    %p257 = scmp.ne.s32.totalorder %s243, %s244
    %p258 = scmp.eq.s32.totalorder %s21, 1
    %p259 = por %p257, %p258
    %p261 = scmp.ne.s32.totalorder %s244, %s260
    %p262 = scmp.eq.s32.totalorder %s21, 0
    %p263 = por %p261, %p262
    %p264 = scmp.le.s32.totalorder 1, %s15
    %p265 = scmp.lt.s32.totalorder %s15, 3
    %p266 = pnand %p264, %p265
    %p267 = pneg %p266
    // Predicated region
    $region9: #{dhm_forward.3} parent=5 // pred_check
      _
    $region10: #{dhm_forward.3} parent=5 // pred_check_branch
      %269 = sbr.rel (%p266) target = $region12
    $region11: #{dhm_forward.3} parent=5 // pred_region
      %s270 = ssub.s32 %s15, 1
      // Predicated region
      $region13: #{dhm_forward.3} parent=11 // pred_check
        %p271 = pneg %p102
      $region14: #{dhm_forward.3} parent=11 // pred_check_branch
        %273 = sbr.rel (%p271) target = $region16
      $region15: #{dhm_forward.3} parent=11 // pred_region
        _
      $region16: #{dhm_forward.3} parent=11 // pred_fallthru
        _
      // Predicated region
      $region17: #{dhm_forward.3} parent=11 // pred_check
        %p274 = pneg %p123
      $region18: #{dhm_forward.3} parent=11 // pred_check_branch
        %276 = sbr.rel (%p274) target = $region20
      $region19: #{dhm_forward.3} parent=11 // pred_region
        _
      $region20: #{dhm_forward.3} parent=11 // pred_fallthru
        _
      // Predicated region
      $region21: #{dhm_forward.3} parent=11 // pred_check
        %p277 = pneg %p144
      $region22: #{dhm_forward.3} parent=11 // pred_check_branch
        %279 = sbr.rel (%p277) target = $region24
      $region23: #{dhm_forward.3} parent=11 // pred_region
        _
      $region24: #{dhm_forward.3} parent=11 // pred_fallthru
        _
      // Predicated region
      $region25: #{dhm_forward.3} parent=11 // pred_check
        %p280 = pneg %p165
      $region26: #{dhm_forward.3} parent=11 // pred_check_branch
        %282 = sbr.rel (%p280) target = $region28
      $region27: #{dhm_forward.3} parent=11 // pred_region
        _
      $region28: #{dhm_forward.3} parent=11 // pred_fallthru
        _
      // Predicated region
      $region29: #{dhm_forward.3} parent=11 // pred_check
        %p283 = pneg %p186
      $region30: #{dhm_forward.3} parent=11 // pred_check_branch
        %285 = sbr.rel (%p283) target = $region32
      $region31: #{dhm_forward.3} parent=11 // pred_region
        _
      $region32: #{dhm_forward.3} parent=11 // pred_fallthru
        _
      // Predicated region
      $region33: #{dhm_forward.3} parent=11 // pred_check
        %p286 = pneg %p207
      $region34: #{dhm_forward.3} parent=11 // pred_check_branch
        %288 = sbr.rel (%p286) target = $region36
      $region35: #{dhm_forward.3} parent=11 // pred_region
        _
      $region36: #{dhm_forward.3} parent=11 // pred_fallthru
        _
      // Predicated region
      $region37: #{dhm_forward.3} parent=11 // pred_check
        %p289 = pneg %p228
      $region38: #{dhm_forward.3} parent=11 // pred_check_branch
        %291 = sbr.rel (%p289) target = $region40
      $region39: #{dhm_forward.3} parent=11 // pred_region
        _
      $region40: #{dhm_forward.3} parent=11 // pred_fallthru
        _
    $region12: #{dhm_forward.3} parent=5 // pred_fallthru
      _
    %p292 = scmp.lt.s32.totalorder %s15, 2
    // Predicated region
    $region41: #{dhm_forward.3} parent=5 // pred_check
      %p293 = pneg %p292
    $region42: #{dhm_forward.3} parent=5 // pred_check_branch
      %295 = sbr.rel (%p293) target = $region44
    $region43: #{dhm_forward.3} parent=5 // pred_region
      // Predicated region
      $region45: #{dhm_forward.3} parent=43 // pred_check
        %p296 = pneg %p47
      $region46: #{dhm_forward.3} parent=43 // pred_check_branch
        %298 = sbr.rel (%p296) target = $region48
      $region47: #{dhm_forward.3} parent=43 // pred_region
        %p299 = scmp.lt.s32.totalorder %s22, 1
        %s300 = scalar_select %p299, %s22, 1
        %s301 = smul.addr %s300, 16
        %s302 = smul.addr %s301, 8
        %s303 = scalar_lea.vmem %s0, %s302
      $region48: #{dhm_forward.3} parent=43 // pred_fallthru
        _
      // Predicated region
      $region49: #{dhm_forward.3} parent=43 // pred_check
        %p304 = pneg %p75
      $region50: #{dhm_forward.3} parent=43 // pred_check_branch
        %306 = sbr.rel (%p304) target = $region52
      $region51: #{dhm_forward.3} parent=43 // pred_region
        %s307 = smul.u32 128, %s23
        %p308 = scmp.lt.s32.totalorder %s22, 1
        %s309 = scalar_select %p308, %s22, 1
        %p310 = scmp.lt.s32.totalorder %s307, 127
        %s311 = scalar_select %p310, %s307, 127
        %s312 = smul.addr %s309, 128
        %s313 = sadd.s32 %s311, %s312
        %s314 = smul.addr %s313, 8
        %s315 = scalar_lea.vmem %s1, %s314
        %s316 = smul.u32 128, %s23
      $region52: #{dhm_forward.3} parent=43 // pred_fallthru
        _
    $region44: #{dhm_forward.3} parent=5 // pred_fallthru
      _
    %p317 = scmp.le.s32.totalorder 1, %s15
    %p318 = scmp.lt.s32.totalorder %s15, 3
    %p319 = pnand %p317, %p318
    %p320 = pneg %p319
    // Predicated region
    $region53: #{dhm_forward.3} parent=5 // pred_check
      _
    $region54: #{dhm_forward.3} parent=5 // pred_check_branch
      %322 = sbr.rel (%p319) target = $region56
    $region55: #{dhm_forward.3} parent=5 // pred_region
      %s323 = ssub.s32 %s15, 1
      %p324 = scmp.lt.s32.totalorder %s24, 1
      %s325 = scalar_select %p324, %s24, 1
      %s326 = smul.addr %s325, 16
      %s327 = smul.addr %s326, 8
      %s328 = scalar_lea.vmem %s0, %s327
      %p329 = pneg %p53
      %p330 = pneg %p50
      %s331 = smul.u32 128, %s25
      %p332 = scmp.lt.s32.totalorder %s24, 1
      %s333 = scalar_select %p332, %s24, 1
      %p334 = scmp.lt.s32.totalorder %s331, 127
      %s335 = scalar_select %p334, %s331, 127
      %s336 = smul.addr %s333, 128
      %s337 = sadd.s32 %s335, %s336
      %s338 = smul.addr %s337, 8
      %s339 = scalar_lea.vmem %s1, %s338
      %p340 = pneg %p81
      %p341 = pneg %p78
      %p342 = pneg %p102
      %p343 = pneg %p99
      %p344 = pneg %p123
      %p345 = pneg %p120
      %p346 = pneg %p144
      %p347 = pneg %p141
      %p348 = pneg %p165
      %p349 = pneg %p162
      %p350 = pneg %p186
      %p351 = pneg %p183
      %p352 = pneg %p207
      %p353 = pneg %p204
      %p354 = pneg %p228
      %p355 = pneg %p225
      %p356 = pneg %p256
      %p357 = pneg %p253
      %s358 = smul.u32 16, %s25
      %p359 = scmp.lt.s32.totalorder %s24, 1
      %s360 = scalar_select %p359, %s24, 1
      %p361 = scmp.lt.s32.totalorder %s358, 15
      %s362 = scalar_select %p361, %s358, 15
      %s363 = smul.addr %s360, 16
      %s364 = sadd.s32 %s362, %s363
      %s365 = smul.addr %s364, 8
      %s366 = scalar_lea.vmem %s9, %s365
      %p367 = scmp.lt.s32.totalorder %s24, 1
      %s368 = scalar_select %p367, %s24, 1
      %s369 = smul.addr %s368, 16
      %s370 = smul.addr %s369, 8
      %s371 = scalar_lea.vmem %s0, %s370
      %s372 = smul.u32 128, %s25
      %p373 = scmp.lt.s32.totalorder %s24, 1
      %s374 = scalar_select %p373, %s24, 1
      %p375 = scmp.lt.s32.totalorder %s372, 127
      %s376 = scalar_select %p375, %s372, 127
      %s377 = smul.addr %s374, 128
      %s378 = sadd.s32 %s376, %s377
      %s379 = smul.addr %s378, 8
      %s380 = scalar_lea.vmem %s1, %s379
      %s381 = smul.u32 128, %s25
      %s382 = smul.u32 16, %s25
      %p383 = scmp.lt.s32.totalorder %s24, 1
      %s384 = scalar_select %p383, %s24, 1
      %p385 = scmp.lt.s32.totalorder %s382, 15
      %s386 = scalar_select %p385, %s382, 15
      %s387 = smul.addr %s384, 16
      %s388 = sadd.s32 %s386, %s387
      %s389 = smul.addr %s388, 8
      %s390 = scalar_lea.vmem %s9, %s389
      %s391 = smul.u32 16, %s25
      %v393 = vld [vmem:[%s371] sm:$0xff]
      %v394 = vld [vmem:[%s371 + $0x8] sm:$0xff]
      %v395 = vld [vmem:[%s371 + $0x10] sm:$0xff]
      %v396 = vld [vmem:[%s371 + $0x18] sm:$0xff]
      %v397 = vld [vmem:[%s371 + $0x20] sm:$0xff]
      %v398 = vld [vmem:[%s371 + $0x28] sm:$0xff]
      %v399 = vld [vmem:[%s371 + $0x30] sm:$0xff]
      %v400 = vld [vmem:[%s371 + $0x38] sm:$0xff]
      %v401 = vld [vmem:[%s371 + $0x40] sm:$0xff]
      %v402 = vld [vmem:[%s371 + $0x48] sm:$0xff]
      %v403 = vld [vmem:[%s371 + $0x50] sm:$0xff]
      %v404 = vld [vmem:[%s371 + $0x58] sm:$0xff]
      %v405 = vld [vmem:[%s371 + $0x60] sm:$0xff]
      %v406 = vld [vmem:[%s371 + $0x68] sm:$0xff]
      %v407 = vld [vmem:[%s371 + $0x70] sm:$0xff]
      %v408 = vld [vmem:[%s371 + $0x78] sm:$0xff]
      %v409 = vlaneseq
      %v410 = vand.u32 %v409, 127
      %v411 = vld [vmem:[%s380] sm:$0xff]
      %v412 = vld [vmem:[%s380 + $0x8] sm:$0xff]
      %v413 = vld [vmem:[%s380 + $0x10] sm:$0xff]
      %v414 = vld [vmem:[%s380 + $0x18] sm:$0xff]
      %v415 = vld [vmem:[%s380 + $0x20] sm:$0xff]
      %v416 = vld [vmem:[%s380 + $0x28] sm:$0xff]
      %v417 = vld [vmem:[%s380 + $0x30] sm:$0xff]
      %v418 = vld [vmem:[%s380 + $0x38] sm:$0xff]
      %v419 = vld [vmem:[%s380 + $0x40] sm:$0xff]
      %v420 = vld [vmem:[%s380 + $0x48] sm:$0xff]
      %v421 = vld [vmem:[%s380 + $0x50] sm:$0xff]
      %v422 = vld [vmem:[%s380 + $0x58] sm:$0xff]
      %v423 = vld [vmem:[%s380 + $0x60] sm:$0xff]
      %v424 = vld [vmem:[%s380 + $0x68] sm:$0xff]
      %v425 = vld [vmem:[%s380 + $0x70] sm:$0xff]
      %v426 = vld [vmem:[%s380 + $0x78] sm:$0xff]
      %v427 = vld [vmem:[%s380 + $0x80] sm:$0xff]
      %v428 = vld [vmem:[%s380 + $0x88] sm:$0xff]
      %v429 = vld [vmem:[%s380 + $0x90] sm:$0xff]
      %v430 = vld [vmem:[%s380 + $0x98] sm:$0xff]
      %v431 = vld [vmem:[%s380 + $0xa0] sm:$0xff]
      %v432 = vld [vmem:[%s380 + $0xa8] sm:$0xff]
      %v433 = vld [vmem:[%s380 + $0xb0] sm:$0xff]
      %v434 = vld [vmem:[%s380 + $0xb8] sm:$0xff]
      %v435 = vld [vmem:[%s380 + $0xc0] sm:$0xff]
      %v436 = vld [vmem:[%s380 + $0xc8] sm:$0xff]
      %v437 = vld [vmem:[%s380 + $0xd0] sm:$0xff]
      %v438 = vld [vmem:[%s380 + $0xd8] sm:$0xff]
      %v439 = vld [vmem:[%s380 + $0xe0] sm:$0xff]
      %v440 = vld [vmem:[%s380 + $0xe8] sm:$0xff]
      %v441 = vld [vmem:[%s380 + $0xf0] sm:$0xff]
      %v442 = vld [vmem:[%s380 + $0xf8] sm:$0xff]
      %v443 = vld [vmem:[%s380 + $0x100] sm:$0xff]
      %v444 = vld [vmem:[%s380 + $0x108] sm:$0xff]
      %v445 = vld [vmem:[%s380 + $0x110] sm:$0xff]
      %v446 = vld [vmem:[%s380 + $0x118] sm:$0xff]
      %v447 = vld [vmem:[%s380 + $0x120] sm:$0xff]
      %v448 = vld [vmem:[%s380 + $0x128] sm:$0xff]
      %v449 = vld [vmem:[%s380 + $0x130] sm:$0xff]
      %v450 = vld [vmem:[%s380 + $0x138] sm:$0xff]
      %v451 = vld [vmem:[%s380 + $0x140] sm:$0xff]
      %v452 = vld [vmem:[%s380 + $0x148] sm:$0xff]
      %v453 = vld [vmem:[%s380 + $0x150] sm:$0xff]
      %v454 = vld [vmem:[%s380 + $0x158] sm:$0xff]
      %v455 = vld [vmem:[%s380 + $0x160] sm:$0xff]
      %v456 = vld [vmem:[%s380 + $0x168] sm:$0xff]
      %v457 = vld [vmem:[%s380 + $0x170] sm:$0xff]
      %v458 = vld [vmem:[%s380 + $0x178] sm:$0xff]
      %v459 = vld [vmem:[%s380 + $0x180] sm:$0xff]
      %v460 = vld [vmem:[%s380 + $0x188] sm:$0xff]
      %v461 = vld [vmem:[%s380 + $0x190] sm:$0xff]
      %v462 = vld [vmem:[%s380 + $0x198] sm:$0xff]
      %v463 = vld [vmem:[%s380 + $0x1a0] sm:$0xff]
      %v464 = vld [vmem:[%s380 + $0x1a8] sm:$0xff]
      %v465 = vld [vmem:[%s380 + $0x1b0] sm:$0xff]
      %v466 = vld [vmem:[%s380 + $0x1b8] sm:$0xff]
      %v467 = vld [vmem:[%s380 + $0x1c0] sm:$0xff]
      %v468 = vld [vmem:[%s380 + $0x1c8] sm:$0xff]
      %v469 = vld [vmem:[%s380 + $0x1d0] sm:$0xff]
      %v470 = vld [vmem:[%s380 + $0x1d8] sm:$0xff]
      %v471 = vld [vmem:[%s380 + $0x1e0] sm:$0xff]
      %v472 = vld [vmem:[%s380 + $0x1e8] sm:$0xff]
      %v473 = vld [vmem:[%s380 + $0x1f0] sm:$0xff]
      %v474 = vld [vmem:[%s380 + $0x1f8] sm:$0xff]
      %v475 = vld [vmem:[%s380 + $0x200] sm:$0xff]
      %v476 = vld [vmem:[%s380 + $0x208] sm:$0xff]
      %v477 = vld [vmem:[%s380 + $0x210] sm:$0xff]
      %v478 = vld [vmem:[%s380 + $0x218] sm:$0xff]
      %v479 = vld [vmem:[%s380 + $0x220] sm:$0xff]
      %v480 = vld [vmem:[%s380 + $0x228] sm:$0xff]
      %v481 = vld [vmem:[%s380 + $0x230] sm:$0xff]
      %v482 = vld [vmem:[%s380 + $0x238] sm:$0xff]
      %v483 = vld [vmem:[%s380 + $0x240] sm:$0xff]
      %v484 = vld [vmem:[%s380 + $0x248] sm:$0xff]
      %v485 = vld [vmem:[%s380 + $0x250] sm:$0xff]
      %v486 = vld [vmem:[%s380 + $0x258] sm:$0xff]
      %v487 = vld [vmem:[%s380 + $0x260] sm:$0xff]
      %v488 = vld [vmem:[%s380 + $0x268] sm:$0xff]
      %v489 = vld [vmem:[%s380 + $0x270] sm:$0xff]
      %v490 = vld [vmem:[%s380 + $0x278] sm:$0xff]
      %v491 = vld [vmem:[%s380 + $0x280] sm:$0xff]
      %v492 = vld [vmem:[%s380 + $0x288] sm:$0xff]
      %v493 = vld [vmem:[%s380 + $0x290] sm:$0xff]
      %v494 = vld [vmem:[%s380 + $0x298] sm:$0xff]
      %v495 = vld [vmem:[%s380 + $0x2a0] sm:$0xff]
      %v496 = vld [vmem:[%s380 + $0x2a8] sm:$0xff]
      %v497 = vld [vmem:[%s380 + $0x2b0] sm:$0xff]
      %v498 = vld [vmem:[%s380 + $0x2b8] sm:$0xff]
      %v499 = vld [vmem:[%s380 + $0x2c0] sm:$0xff]
      %v500 = vld [vmem:[%s380 + $0x2c8] sm:$0xff]
      %v501 = vld [vmem:[%s380 + $0x2d0] sm:$0xff]
      %v502 = vld [vmem:[%s380 + $0x2d8] sm:$0xff]
      %v503 = vld [vmem:[%s380 + $0x2e0] sm:$0xff]
      %v504 = vld [vmem:[%s380 + $0x2e8] sm:$0xff]
      %v505 = vld [vmem:[%s380 + $0x2f0] sm:$0xff]
      %v506 = vld [vmem:[%s380 + $0x2f8] sm:$0xff]
      %v507 = vld [vmem:[%s380 + $0x300] sm:$0xff]
      %v508 = vld [vmem:[%s380 + $0x308] sm:$0xff]
      %v509 = vld [vmem:[%s380 + $0x310] sm:$0xff]
      %v510 = vld [vmem:[%s380 + $0x318] sm:$0xff]
      %v511 = vld [vmem:[%s380 + $0x320] sm:$0xff]
      %v512 = vld [vmem:[%s380 + $0x328] sm:$0xff]
      %v513 = vld [vmem:[%s380 + $0x330] sm:$0xff]
      %v514 = vld [vmem:[%s380 + $0x338] sm:$0xff]
      %v515 = vld [vmem:[%s380 + $0x340] sm:$0xff]
      %v516 = vld [vmem:[%s380 + $0x348] sm:$0xff]
      %v517 = vld [vmem:[%s380 + $0x350] sm:$0xff]
      %v518 = vld [vmem:[%s380 + $0x358] sm:$0xff]
      %v519 = vld [vmem:[%s380 + $0x360] sm:$0xff]
      %v520 = vld [vmem:[%s380 + $0x368] sm:$0xff]
      %v521 = vld [vmem:[%s380 + $0x370] sm:$0xff]
      %v522 = vld [vmem:[%s380 + $0x378] sm:$0xff]
      %v523 = vld [vmem:[%s380 + $0x380] sm:$0xff]
      %v524 = vld [vmem:[%s380 + $0x388] sm:$0xff]
      %v525 = vld [vmem:[%s380 + $0x390] sm:$0xff]
      %v526 = vld [vmem:[%s380 + $0x398] sm:$0xff]
      %v527 = vld [vmem:[%s380 + $0x3a0] sm:$0xff]
      %v528 = vld [vmem:[%s380 + $0x3a8] sm:$0xff]
      %v529 = vld [vmem:[%s380 + $0x3b0] sm:$0xff]
      %v530 = vld [vmem:[%s380 + $0x3b8] sm:$0xff]
      %v531 = vld [vmem:[%s380 + $0x3c0] sm:$0xff]
      %v532 = vld [vmem:[%s380 + $0x3c8] sm:$0xff]
      %v533 = vld [vmem:[%s380 + $0x3d0] sm:$0xff]
      %v534 = vld [vmem:[%s380 + $0x3d8] sm:$0xff]
      %v535 = vld [vmem:[%s380 + $0x3e0] sm:$0xff]
      %v536 = vld [vmem:[%s380 + $0x3e8] sm:$0xff]
      %v537 = vld [vmem:[%s380 + $0x3f0] sm:$0xff]
      %v538 = vld [vmem:[%s380 + $0x3f8] sm:$0xff]
      %539 = vset.pattern.permute.xlu0 0
      %540 = vperm.xlu0 %539, %v411
      %v541 = vpop.permute.xlu0 %540
      %542 = vset.pattern.permute.xlu0 0
      %543 = vperm.xlu0 %542, %v412
      %v544 = vpop.permute.xlu0 %543
      %545 = vset.pattern.permute.xlu0 0
      %546 = vperm.xlu0 %545, %v413
      %v547 = vpop.permute.xlu0 %546
      %548 = vset.pattern.permute.xlu0 0
      %549 = vperm.xlu0 %548, %v414
      %v550 = vpop.permute.xlu0 %549
      %551 = vset.pattern.permute.xlu0 0
      %552 = vperm.xlu0 %551, %v415
      %v553 = vpop.permute.xlu0 %552
      %554 = vset.pattern.permute.xlu0 0
      %555 = vperm.xlu0 %554, %v416
      %v556 = vpop.permute.xlu0 %555
      %557 = vset.pattern.permute.xlu0 0
      %558 = vperm.xlu0 %557, %v417
      %v559 = vpop.permute.xlu0 %558
      %560 = vset.pattern.permute.xlu0 0
      %561 = vperm.xlu0 %560, %v418
      %v562 = vpop.permute.xlu0 %561
      %563 = vset.pattern.permute.xlu0 0
      %564 = vperm.xlu0 %563, %v419
      %v565 = vpop.permute.xlu0 %564
      %566 = vset.pattern.permute.xlu0 0
      %567 = vperm.xlu0 %566, %v420
      %v568 = vpop.permute.xlu0 %567
      %569 = vset.pattern.permute.xlu0 0
      %570 = vperm.xlu0 %569, %v421
      %v571 = vpop.permute.xlu0 %570
      %572 = vset.pattern.permute.xlu0 0
      %573 = vperm.xlu0 %572, %v422
      %v574 = vpop.permute.xlu0 %573
      %575 = vset.pattern.permute.xlu0 0
      %576 = vperm.xlu0 %575, %v423
      %v577 = vpop.permute.xlu0 %576
      %578 = vset.pattern.permute.xlu0 0
      %579 = vperm.xlu0 %578, %v424
      %v580 = vpop.permute.xlu0 %579
      %581 = vset.pattern.permute.xlu0 0
      %582 = vperm.xlu0 %581, %v425
      %v583 = vpop.permute.xlu0 %582
      %584 = vset.pattern.permute.xlu0 0
      %585 = vperm.xlu0 %584, %v426
      %v586 = vpop.permute.xlu0 %585
      %587 = vset.pattern.permute.xlu0 0
      %588 = vperm.xlu0 %587, %v427
      %v589 = vpop.permute.xlu0 %588
      %590 = vset.pattern.permute.xlu0 0
      %591 = vperm.xlu0 %590, %v428
      %v592 = vpop.permute.xlu0 %591
      %593 = vset.pattern.permute.xlu0 0
      %594 = vperm.xlu0 %593, %v429
      %v595 = vpop.permute.xlu0 %594
      %596 = vset.pattern.permute.xlu0 0
      %597 = vperm.xlu0 %596, %v430
      %v598 = vpop.permute.xlu0 %597
      %599 = vset.pattern.permute.xlu0 0
      %600 = vperm.xlu0 %599, %v431
      %v601 = vpop.permute.xlu0 %600
      %602 = vset.pattern.permute.xlu0 0
      %603 = vperm.xlu0 %602, %v432
      %v604 = vpop.permute.xlu0 %603
      %605 = vset.pattern.permute.xlu0 0
      %606 = vperm.xlu0 %605, %v433
      %v607 = vpop.permute.xlu0 %606
      %608 = vset.pattern.permute.xlu0 0
      %609 = vperm.xlu0 %608, %v434
      %v610 = vpop.permute.xlu0 %609
      %611 = vset.pattern.permute.xlu0 0
      %612 = vperm.xlu0 %611, %v435
      %v613 = vpop.permute.xlu0 %612
      %614 = vset.pattern.permute.xlu0 0
      %615 = vperm.xlu0 %614, %v436
      %v616 = vpop.permute.xlu0 %615
      %617 = vset.pattern.permute.xlu0 0
      %618 = vperm.xlu0 %617, %v437
      %v619 = vpop.permute.xlu0 %618
      %620 = vset.pattern.permute.xlu0 0
      %621 = vperm.xlu0 %620, %v438
      %v622 = vpop.permute.xlu0 %621
      %623 = vset.pattern.permute.xlu0 0
      %624 = vperm.xlu0 %623, %v439
      %v625 = vpop.permute.xlu0 %624
      %626 = vset.pattern.permute.xlu0 0
      %627 = vperm.xlu0 %626, %v440
      %v628 = vpop.permute.xlu0 %627
      %629 = vset.pattern.permute.xlu0 0
      %630 = vperm.xlu0 %629, %v441
      %v631 = vpop.permute.xlu0 %630
      %632 = vset.pattern.permute.xlu0 0
      %633 = vperm.xlu0 %632, %v442
      %v634 = vpop.permute.xlu0 %633
      %635 = vset.pattern.permute.xlu0 0
      %636 = vperm.xlu0 %635, %v443
      %v637 = vpop.permute.xlu0 %636
      %638 = vset.pattern.permute.xlu0 0
      %639 = vperm.xlu0 %638, %v444
      %v640 = vpop.permute.xlu0 %639
      %641 = vset.pattern.permute.xlu0 0
      %642 = vperm.xlu0 %641, %v445
      %v643 = vpop.permute.xlu0 %642
      %644 = vset.pattern.permute.xlu0 0
      %645 = vperm.xlu0 %644, %v446
      %v646 = vpop.permute.xlu0 %645
      %647 = vset.pattern.permute.xlu0 0
      %648 = vperm.xlu0 %647, %v447
      %v649 = vpop.permute.xlu0 %648
      %650 = vset.pattern.permute.xlu0 0
      %651 = vperm.xlu0 %650, %v448
      %v652 = vpop.permute.xlu0 %651
      %653 = vset.pattern.permute.xlu0 0
      %654 = vperm.xlu0 %653, %v449
      %v655 = vpop.permute.xlu0 %654
      %656 = vset.pattern.permute.xlu0 0
      %657 = vperm.xlu0 %656, %v450
      %v658 = vpop.permute.xlu0 %657
      %659 = vset.pattern.permute.xlu0 0
      %660 = vperm.xlu0 %659, %v451
      %v661 = vpop.permute.xlu0 %660
      %662 = vset.pattern.permute.xlu0 0
      %663 = vperm.xlu0 %662, %v452
      %v664 = vpop.permute.xlu0 %663
      %665 = vset.pattern.permute.xlu0 0
      %666 = vperm.xlu0 %665, %v453
      %v667 = vpop.permute.xlu0 %666
      %668 = vset.pattern.permute.xlu0 0
      %669 = vperm.xlu0 %668, %v454
      %v670 = vpop.permute.xlu0 %669
      %671 = vset.pattern.permute.xlu0 0
      %672 = vperm.xlu0 %671, %v455
      %v673 = vpop.permute.xlu0 %672
      %674 = vset.pattern.permute.xlu0 0
      %675 = vperm.xlu0 %674, %v456
      %v676 = vpop.permute.xlu0 %675
      %677 = vset.pattern.permute.xlu0 0
      %678 = vperm.xlu0 %677, %v457
      %v679 = vpop.permute.xlu0 %678
      %680 = vset.pattern.permute.xlu0 0
      %681 = vperm.xlu0 %680, %v458
      %v682 = vpop.permute.xlu0 %681
      %683 = vset.pattern.permute.xlu0 0
      %684 = vperm.xlu0 %683, %v459
      %v685 = vpop.permute.xlu0 %684
      %686 = vset.pattern.permute.xlu0 0
      %687 = vperm.xlu0 %686, %v460
      %v688 = vpop.permute.xlu0 %687
      %689 = vset.pattern.permute.xlu0 0
      %690 = vperm.xlu0 %689, %v461
      %v691 = vpop.permute.xlu0 %690
      %692 = vset.pattern.permute.xlu0 0
      %693 = vperm.xlu0 %692, %v462
      %v694 = vpop.permute.xlu0 %693
      %695 = vset.pattern.permute.xlu0 0
      %696 = vperm.xlu0 %695, %v463
      %v697 = vpop.permute.xlu0 %696
      %698 = vset.pattern.permute.xlu0 0
      %699 = vperm.xlu0 %698, %v464
      %v700 = vpop.permute.xlu0 %699
      %701 = vset.pattern.permute.xlu0 0
      %702 = vperm.xlu0 %701, %v465
      %v703 = vpop.permute.xlu0 %702
      %704 = vset.pattern.permute.xlu0 0
      %705 = vperm.xlu0 %704, %v466
      %v706 = vpop.permute.xlu0 %705
      %707 = vset.pattern.permute.xlu0 0
      %708 = vperm.xlu0 %707, %v467
      %v709 = vpop.permute.xlu0 %708
      %710 = vset.pattern.permute.xlu0 0
      %711 = vperm.xlu0 %710, %v468
      %v712 = vpop.permute.xlu0 %711
      %713 = vset.pattern.permute.xlu0 0
      %714 = vperm.xlu0 %713, %v469
      %v715 = vpop.permute.xlu0 %714
      %716 = vset.pattern.permute.xlu0 0
      %717 = vperm.xlu0 %716, %v470
      %v718 = vpop.permute.xlu0 %717
      %719 = vset.pattern.permute.xlu0 0
      %720 = vperm.xlu0 %719, %v471
      %v721 = vpop.permute.xlu0 %720
      %722 = vset.pattern.permute.xlu0 0
      %723 = vperm.xlu0 %722, %v472
      %v724 = vpop.permute.xlu0 %723
      %725 = vset.pattern.permute.xlu0 0
      %726 = vperm.xlu0 %725, %v473
      %v727 = vpop.permute.xlu0 %726
      %728 = vset.pattern.permute.xlu0 0
      %729 = vperm.xlu0 %728, %v474
      %v730 = vpop.permute.xlu0 %729
      %731 = vset.pattern.permute.xlu0 0
      %732 = vperm.xlu0 %731, %v475
      %v733 = vpop.permute.xlu0 %732
      %734 = vset.pattern.permute.xlu0 0
      %735 = vperm.xlu0 %734, %v476
      %v736 = vpop.permute.xlu0 %735
      %737 = vset.pattern.permute.xlu0 0
      %738 = vperm.xlu0 %737, %v477
      %v739 = vpop.permute.xlu0 %738
      %740 = vset.pattern.permute.xlu0 0
      %741 = vperm.xlu0 %740, %v478
      %v742 = vpop.permute.xlu0 %741
      %743 = vset.pattern.permute.xlu0 0
      %744 = vperm.xlu0 %743, %v479
      %v745 = vpop.permute.xlu0 %744
      %746 = vset.pattern.permute.xlu0 0
      %747 = vperm.xlu0 %746, %v480
      %v748 = vpop.permute.xlu0 %747
      %749 = vset.pattern.permute.xlu0 0
      %750 = vperm.xlu0 %749, %v481
      %v751 = vpop.permute.xlu0 %750
      %752 = vset.pattern.permute.xlu0 0
      %753 = vperm.xlu0 %752, %v482
      %v754 = vpop.permute.xlu0 %753
      %755 = vset.pattern.permute.xlu0 0
      %756 = vperm.xlu0 %755, %v483
      %v757 = vpop.permute.xlu0 %756
      %758 = vset.pattern.permute.xlu0 0
      %759 = vperm.xlu0 %758, %v484
      %v760 = vpop.permute.xlu0 %759
      %761 = vset.pattern.permute.xlu0 0
      %762 = vperm.xlu0 %761, %v485
      %v763 = vpop.permute.xlu0 %762
      %764 = vset.pattern.permute.xlu0 0
      %765 = vperm.xlu0 %764, %v486
      %v766 = vpop.permute.xlu0 %765
      %767 = vset.pattern.permute.xlu0 0
      %768 = vperm.xlu0 %767, %v487
      %v769 = vpop.permute.xlu0 %768
      %770 = vset.pattern.permute.xlu0 0
      %771 = vperm.xlu0 %770, %v488
      %v772 = vpop.permute.xlu0 %771
      %773 = vset.pattern.permute.xlu0 0
      %774 = vperm.xlu0 %773, %v489
      %v775 = vpop.permute.xlu0 %774
      %776 = vset.pattern.permute.xlu0 0
      %777 = vperm.xlu0 %776, %v490
      %v778 = vpop.permute.xlu0 %777
      %779 = vset.pattern.permute.xlu0 0
      %780 = vperm.xlu0 %779, %v491
      %v781 = vpop.permute.xlu0 %780
      %782 = vset.pattern.permute.xlu0 0
      %783 = vperm.xlu0 %782, %v492
      %v784 = vpop.permute.xlu0 %783
      %785 = vset.pattern.permute.xlu0 0
      %786 = vperm.xlu0 %785, %v493
      %v787 = vpop.permute.xlu0 %786
      %788 = vset.pattern.permute.xlu0 0
      %789 = vperm.xlu0 %788, %v494
      %v790 = vpop.permute.xlu0 %789
      %791 = vset.pattern.permute.xlu0 0
      %792 = vperm.xlu0 %791, %v495
      %v793 = vpop.permute.xlu0 %792
      %794 = vset.pattern.permute.xlu0 0
      %795 = vperm.xlu0 %794, %v496
      %v796 = vpop.permute.xlu0 %795
      %797 = vset.pattern.permute.xlu0 0
      %798 = vperm.xlu0 %797, %v497
      %v799 = vpop.permute.xlu0 %798
      %800 = vset.pattern.permute.xlu0 0
      %801 = vperm.xlu0 %800, %v498
      %v802 = vpop.permute.xlu0 %801
      %803 = vset.pattern.permute.xlu0 0
      %804 = vperm.xlu0 %803, %v499
      %v805 = vpop.permute.xlu0 %804
      %806 = vset.pattern.permute.xlu0 0
      %807 = vperm.xlu0 %806, %v500
      %v808 = vpop.permute.xlu0 %807
      %809 = vset.pattern.permute.xlu0 0
      %810 = vperm.xlu0 %809, %v501
      %v811 = vpop.permute.xlu0 %810
      %812 = vset.pattern.permute.xlu0 0
      %813 = vperm.xlu0 %812, %v502
      %v814 = vpop.permute.xlu0 %813
      %815 = vset.pattern.permute.xlu0 0
      %816 = vperm.xlu0 %815, %v503
      %v817 = vpop.permute.xlu0 %816
      %818 = vset.pattern.permute.xlu0 0
      %819 = vperm.xlu0 %818, %v504
      %v820 = vpop.permute.xlu0 %819
      %821 = vset.pattern.permute.xlu0 0
      %822 = vperm.xlu0 %821, %v505
      %v823 = vpop.permute.xlu0 %822
      %824 = vset.pattern.permute.xlu0 0
      %825 = vperm.xlu0 %824, %v506
      %v826 = vpop.permute.xlu0 %825
      %827 = vset.pattern.permute.xlu0 0
      %828 = vperm.xlu0 %827, %v507
      %v829 = vpop.permute.xlu0 %828
      %830 = vset.pattern.permute.xlu0 0
      %831 = vperm.xlu0 %830, %v508
      %v832 = vpop.permute.xlu0 %831
      %833 = vset.pattern.permute.xlu0 0
      %834 = vperm.xlu0 %833, %v509
      %v835 = vpop.permute.xlu0 %834
      %836 = vset.pattern.permute.xlu0 0
      %837 = vperm.xlu0 %836, %v510
      %v838 = vpop.permute.xlu0 %837
      %839 = vset.pattern.permute.xlu0 0
      %840 = vperm.xlu0 %839, %v511
      %v841 = vpop.permute.xlu0 %840
      %842 = vset.pattern.permute.xlu0 0
      %843 = vperm.xlu0 %842, %v512
      %v844 = vpop.permute.xlu0 %843
      %845 = vset.pattern.permute.xlu0 0
      %846 = vperm.xlu0 %845, %v513
      %v847 = vpop.permute.xlu0 %846
      %848 = vset.pattern.permute.xlu0 0
      %849 = vperm.xlu0 %848, %v514
      %v850 = vpop.permute.xlu0 %849
      %851 = vset.pattern.permute.xlu0 0
      %852 = vperm.xlu0 %851, %v515
      %v853 = vpop.permute.xlu0 %852
      %854 = vset.pattern.permute.xlu0 0
      %855 = vperm.xlu0 %854, %v516
      %v856 = vpop.permute.xlu0 %855
      %857 = vset.pattern.permute.xlu0 0
      %858 = vperm.xlu0 %857, %v517
      %v859 = vpop.permute.xlu0 %858
      %860 = vset.pattern.permute.xlu0 0
      %861 = vperm.xlu0 %860, %v518
      %v862 = vpop.permute.xlu0 %861
      %863 = vset.pattern.permute.xlu0 0
      %864 = vperm.xlu0 %863, %v519
      %v865 = vpop.permute.xlu0 %864
      %866 = vset.pattern.permute.xlu0 0
      %867 = vperm.xlu0 %866, %v520
      %v868 = vpop.permute.xlu0 %867
      %869 = vset.pattern.permute.xlu0 0
      %870 = vperm.xlu0 %869, %v521
      %v871 = vpop.permute.xlu0 %870
      %872 = vset.pattern.permute.xlu0 0
      %873 = vperm.xlu0 %872, %v522
      %v874 = vpop.permute.xlu0 %873
      %875 = vset.pattern.permute.xlu0 0
      %876 = vperm.xlu0 %875, %v523
      %v877 = vpop.permute.xlu0 %876
      %878 = vset.pattern.permute.xlu0 0
      %879 = vperm.xlu0 %878, %v524
      %v880 = vpop.permute.xlu0 %879
      %881 = vset.pattern.permute.xlu0 0
      %882 = vperm.xlu0 %881, %v525
      %v883 = vpop.permute.xlu0 %882
      %884 = vset.pattern.permute.xlu0 0
      %885 = vperm.xlu0 %884, %v526
      %v886 = vpop.permute.xlu0 %885
      %887 = vset.pattern.permute.xlu0 0
      %888 = vperm.xlu0 %887, %v527
      %v889 = vpop.permute.xlu0 %888
      %890 = vset.pattern.permute.xlu0 0
      %891 = vperm.xlu0 %890, %v528
      %v892 = vpop.permute.xlu0 %891
      %893 = vset.pattern.permute.xlu0 0
      %894 = vperm.xlu0 %893, %v529
      %v895 = vpop.permute.xlu0 %894
      %896 = vset.pattern.permute.xlu0 0
      %897 = vperm.xlu0 %896, %v530
      %v898 = vpop.permute.xlu0 %897
      %899 = vset.pattern.permute.xlu0 0
      %900 = vperm.xlu0 %899, %v531
      %v901 = vpop.permute.xlu0 %900
      %902 = vset.pattern.permute.xlu0 0
      %903 = vperm.xlu0 %902, %v532
      %v904 = vpop.permute.xlu0 %903
      %905 = vset.pattern.permute.xlu0 0
      %906 = vperm.xlu0 %905, %v533
      %v907 = vpop.permute.xlu0 %906
      %908 = vset.pattern.permute.xlu0 0
      %909 = vperm.xlu0 %908, %v534
      %v910 = vpop.permute.xlu0 %909
      %911 = vset.pattern.permute.xlu0 0
      %912 = vperm.xlu0 %911, %v535
      %v913 = vpop.permute.xlu0 %912
      %914 = vset.pattern.permute.xlu0 0
      %915 = vperm.xlu0 %914, %v536
      %v916 = vpop.permute.xlu0 %915
      %917 = vset.pattern.permute.xlu0 0
      %918 = vperm.xlu0 %917, %v537
      %v919 = vpop.permute.xlu0 %918
      %920 = vset.pattern.permute.xlu0 0
      %921 = vperm.xlu0 %920, %v538
      %v922 = vpop.permute.xlu0 %921
      %vm923 = vcmp.eq.s32.totalorder %v410, %v541
      %vm924 = vcmp.eq.s32.totalorder %v410, %v544
      %vm925 = vcmp.eq.s32.totalorder %v410, %v547
      %vm926 = vcmp.eq.s32.totalorder %v410, %v550
      %vm927 = vcmp.eq.s32.totalorder %v410, %v553
      %vm928 = vcmp.eq.s32.totalorder %v410, %v556
      %vm929 = vcmp.eq.s32.totalorder %v410, %v559
      %vm930 = vcmp.eq.s32.totalorder %v410, %v562
      %vm931 = vcmp.eq.s32.totalorder %v410, %v565
      %vm932 = vcmp.eq.s32.totalorder %v410, %v568
      %vm933 = vcmp.eq.s32.totalorder %v410, %v571
      %vm934 = vcmp.eq.s32.totalorder %v410, %v574
      %vm935 = vcmp.eq.s32.totalorder %v410, %v577
      %vm936 = vcmp.eq.s32.totalorder %v410, %v580
      %vm937 = vcmp.eq.s32.totalorder %v410, %v583
      %vm938 = vcmp.eq.s32.totalorder %v410, %v586
      %vm939 = vcmp.eq.s32.totalorder %v410, %v589
      %vm940 = vcmp.eq.s32.totalorder %v410, %v592
      %vm941 = vcmp.eq.s32.totalorder %v410, %v595
      %vm942 = vcmp.eq.s32.totalorder %v410, %v598
      %vm943 = vcmp.eq.s32.totalorder %v410, %v601
      %vm944 = vcmp.eq.s32.totalorder %v410, %v604
      %vm945 = vcmp.eq.s32.totalorder %v410, %v607
      %vm946 = vcmp.eq.s32.totalorder %v410, %v610
      %vm947 = vcmp.eq.s32.totalorder %v410, %v613
      %vm948 = vcmp.eq.s32.totalorder %v410, %v616
      %vm949 = vcmp.eq.s32.totalorder %v410, %v619
      %vm950 = vcmp.eq.s32.totalorder %v410, %v622
      %vm951 = vcmp.eq.s32.totalorder %v410, %v625
      %vm952 = vcmp.eq.s32.totalorder %v410, %v628
      %vm953 = vcmp.eq.s32.totalorder %v410, %v631
      %vm954 = vcmp.eq.s32.totalorder %v410, %v634
      %vm955 = vcmp.eq.s32.totalorder %v410, %v637
      %vm956 = vcmp.eq.s32.totalorder %v410, %v640
      %vm957 = vcmp.eq.s32.totalorder %v410, %v643
      %vm958 = vcmp.eq.s32.totalorder %v410, %v646
      %vm959 = vcmp.eq.s32.totalorder %v410, %v649
      %vm960 = vcmp.eq.s32.totalorder %v410, %v652
      %vm961 = vcmp.eq.s32.totalorder %v410, %v655
      %vm962 = vcmp.eq.s32.totalorder %v410, %v658
      %vm963 = vcmp.eq.s32.totalorder %v410, %v661
      %vm964 = vcmp.eq.s32.totalorder %v410, %v664
      %vm965 = vcmp.eq.s32.totalorder %v410, %v667
      %vm966 = vcmp.eq.s32.totalorder %v410, %v670
      %vm967 = vcmp.eq.s32.totalorder %v410, %v673
      %vm968 = vcmp.eq.s32.totalorder %v410, %v676
      %vm969 = vcmp.eq.s32.totalorder %v410, %v679
      %vm970 = vcmp.eq.s32.totalorder %v410, %v682
      %vm971 = vcmp.eq.s32.totalorder %v410, %v685
      %vm972 = vcmp.eq.s32.totalorder %v410, %v688
      %vm973 = vcmp.eq.s32.totalorder %v410, %v691
      %vm974 = vcmp.eq.s32.totalorder %v410, %v694
      %vm975 = vcmp.eq.s32.totalorder %v410, %v697
      %vm976 = vcmp.eq.s32.totalorder %v410, %v700
      %vm977 = vcmp.eq.s32.totalorder %v410, %v703
      %vm978 = vcmp.eq.s32.totalorder %v410, %v706
      %vm979 = vcmp.eq.s32.totalorder %v410, %v709
      %vm980 = vcmp.eq.s32.totalorder %v410, %v712
      %vm981 = vcmp.eq.s32.totalorder %v410, %v715
      %vm982 = vcmp.eq.s32.totalorder %v410, %v718
      %vm983 = vcmp.eq.s32.totalorder %v410, %v721
      %vm984 = vcmp.eq.s32.totalorder %v410, %v724
      %vm985 = vcmp.eq.s32.totalorder %v410, %v727
      %vm986 = vcmp.eq.s32.totalorder %v410, %v730
      %vm987 = vcmp.eq.s32.totalorder %v410, %v733
      %vm988 = vcmp.eq.s32.totalorder %v410, %v736
      %vm989 = vcmp.eq.s32.totalorder %v410, %v739
      %vm990 = vcmp.eq.s32.totalorder %v410, %v742
      %vm991 = vcmp.eq.s32.totalorder %v410, %v745
      %vm992 = vcmp.eq.s32.totalorder %v410, %v748
      %vm993 = vcmp.eq.s32.totalorder %v410, %v751
      %vm994 = vcmp.eq.s32.totalorder %v410, %v754
      %vm995 = vcmp.eq.s32.totalorder %v410, %v757
      %vm996 = vcmp.eq.s32.totalorder %v410, %v760
      %vm997 = vcmp.eq.s32.totalorder %v410, %v763
      %vm998 = vcmp.eq.s32.totalorder %v410, %v766
      %vm999 = vcmp.eq.s32.totalorder %v410, %v769
      %vm1000 = vcmp.eq.s32.totalorder %v410, %v772
      %vm1001 = vcmp.eq.s32.totalorder %v410, %v775
      %vm1002 = vcmp.eq.s32.totalorder %v410, %v778
      %vm1003 = vcmp.eq.s32.totalorder %v410, %v781
      %vm1004 = vcmp.eq.s32.totalorder %v410, %v784
      %vm1005 = vcmp.eq.s32.totalorder %v410, %v787
      %vm1006 = vcmp.eq.s32.totalorder %v410, %v790
      %vm1007 = vcmp.eq.s32.totalorder %v410, %v793
      %vm1008 = vcmp.eq.s32.totalorder %v410, %v796
      %vm1009 = vcmp.eq.s32.totalorder %v410, %v799
      %vm1010 = vcmp.eq.s32.totalorder %v410, %v802
      %vm1011 = vcmp.eq.s32.totalorder %v410, %v805
      %vm1012 = vcmp.eq.s32.totalorder %v410, %v808
      %vm1013 = vcmp.eq.s32.totalorder %v410, %v811
      %vm1014 = vcmp.eq.s32.totalorder %v410, %v814
      %vm1015 = vcmp.eq.s32.totalorder %v410, %v817
      %vm1016 = vcmp.eq.s32.totalorder %v410, %v820
      %vm1017 = vcmp.eq.s32.totalorder %v410, %v823
      %vm1018 = vcmp.eq.s32.totalorder %v410, %v826
      %vm1019 = vcmp.eq.s32.totalorder %v410, %v829
      %vm1020 = vcmp.eq.s32.totalorder %v410, %v832
      %vm1021 = vcmp.eq.s32.totalorder %v410, %v835
      %vm1022 = vcmp.eq.s32.totalorder %v410, %v838
      %vm1023 = vcmp.eq.s32.totalorder %v410, %v841
      %vm1024 = vcmp.eq.s32.totalorder %v410, %v844
      %vm1025 = vcmp.eq.s32.totalorder %v410, %v847
      %vm1026 = vcmp.eq.s32.totalorder %v410, %v850
      %vm1027 = vcmp.eq.s32.totalorder %v410, %v853
      %vm1028 = vcmp.eq.s32.totalorder %v410, %v856
      %vm1029 = vcmp.eq.s32.totalorder %v410, %v859
      %vm1030 = vcmp.eq.s32.totalorder %v410, %v862
      %vm1031 = vcmp.eq.s32.totalorder %v410, %v865
      %vm1032 = vcmp.eq.s32.totalorder %v410, %v868
      %vm1033 = vcmp.eq.s32.totalorder %v410, %v871
      %vm1034 = vcmp.eq.s32.totalorder %v410, %v874
      %vm1035 = vcmp.eq.s32.totalorder %v410, %v877
      %vm1036 = vcmp.eq.s32.totalorder %v410, %v880
      %vm1037 = vcmp.eq.s32.totalorder %v410, %v883
      %vm1038 = vcmp.eq.s32.totalorder %v410, %v886
      %vm1039 = vcmp.eq.s32.totalorder %v410, %v889
      %vm1040 = vcmp.eq.s32.totalorder %v410, %v892
      %vm1041 = vcmp.eq.s32.totalorder %v410, %v895
      %vm1042 = vcmp.eq.s32.totalorder %v410, %v898
      %vm1043 = vcmp.eq.s32.totalorder %v410, %v901
      %vm1044 = vcmp.eq.s32.totalorder %v410, %v904
      %vm1045 = vcmp.eq.s32.totalorder %v410, %v907
      %vm1046 = vcmp.eq.s32.totalorder %v410, %v910
      %vm1047 = vcmp.eq.s32.totalorder %v410, %v913
      %vm1048 = vcmp.eq.s32.totalorder %v410, %v916
      %vm1049 = vcmp.eq.s32.totalorder %v410, %v919
      %vm1050 = vcmp.eq.s32.totalorder %v410, %v922
      %v1051 = vsel %vm923, 1, 0
      %v1052 = vsel %vm924, 1, 0
      %v1053 = vsel %vm925, 1, 0
      %v1054 = vsel %vm926, 1, 0
      %v1055 = vsel %vm927, 1, 0
      %v1056 = vsel %vm928, 1, 0
      %v1057 = vsel %vm929, 1, 0
      %v1058 = vsel %vm930, 1, 0
      %v1059 = vsel %vm931, 1, 0
      %v1060 = vsel %vm932, 1, 0
      %v1061 = vsel %vm933, 1, 0
      %v1062 = vsel %vm934, 1, 0
      %v1063 = vsel %vm935, 1, 0
      %v1064 = vsel %vm936, 1, 0
      %v1065 = vsel %vm937, 1, 0
      %v1066 = vsel %vm938, 1, 0
      %v1067 = vsel %vm939, 1, 0
      %v1068 = vsel %vm940, 1, 0
      %v1069 = vsel %vm941, 1, 0
      %v1070 = vsel %vm942, 1, 0
      %v1071 = vsel %vm943, 1, 0
      %v1072 = vsel %vm944, 1, 0
      %v1073 = vsel %vm945, 1, 0
      %v1074 = vsel %vm946, 1, 0
      %v1075 = vsel %vm947, 1, 0
      %v1076 = vsel %vm948, 1, 0
      %v1077 = vsel %vm949, 1, 0
      %v1078 = vsel %vm950, 1, 0
      %v1079 = vsel %vm951, 1, 0
      %v1080 = vsel %vm952, 1, 0
      %v1081 = vsel %vm953, 1, 0
      %v1082 = vsel %vm954, 1, 0
      %v1083 = vsel %vm955, 1, 0
      %v1084 = vsel %vm956, 1, 0
      %v1085 = vsel %vm957, 1, 0
      %v1086 = vsel %vm958, 1, 0
      %v1087 = vsel %vm959, 1, 0
      %v1088 = vsel %vm960, 1, 0
      %v1089 = vsel %vm961, 1, 0
      %v1090 = vsel %vm962, 1, 0
      %v1091 = vsel %vm963, 1, 0
      %v1092 = vsel %vm964, 1, 0
      %v1093 = vsel %vm965, 1, 0
      %v1094 = vsel %vm966, 1, 0
      %v1095 = vsel %vm967, 1, 0
      %v1096 = vsel %vm968, 1, 0
      %v1097 = vsel %vm969, 1, 0
      %v1098 = vsel %vm970, 1, 0
      %v1099 = vsel %vm971, 1, 0
      %v1100 = vsel %vm972, 1, 0
      %v1101 = vsel %vm973, 1, 0
      %v1102 = vsel %vm974, 1, 0
      %v1103 = vsel %vm975, 1, 0
      %v1104 = vsel %vm976, 1, 0
      %v1105 = vsel %vm977, 1, 0
      %v1106 = vsel %vm978, 1, 0
      %v1107 = vsel %vm979, 1, 0
      %v1108 = vsel %vm980, 1, 0
      %v1109 = vsel %vm981, 1, 0
      %v1110 = vsel %vm982, 1, 0
      %v1111 = vsel %vm983, 1, 0
      %v1112 = vsel %vm984, 1, 0
      %v1113 = vsel %vm985, 1, 0
      %v1114 = vsel %vm986, 1, 0
      %v1115 = vsel %vm987, 1, 0
      %v1116 = vsel %vm988, 1, 0
      %v1117 = vsel %vm989, 1, 0
      %v1118 = vsel %vm990, 1, 0
      %v1119 = vsel %vm991, 1, 0
      %v1120 = vsel %vm992, 1, 0
      %v1121 = vsel %vm993, 1, 0
      %v1122 = vsel %vm994, 1, 0
      %v1123 = vsel %vm995, 1, 0
      %v1124 = vsel %vm996, 1, 0
      %v1125 = vsel %vm997, 1, 0
      %v1126 = vsel %vm998, 1, 0
      %v1127 = vsel %vm999, 1, 0
      %v1128 = vsel %vm1000, 1, 0
      %v1129 = vsel %vm1001, 1, 0
      %v1130 = vsel %vm1002, 1, 0
      %v1131 = vsel %vm1003, 1, 0
      %v1132 = vsel %vm1004, 1, 0
      %v1133 = vsel %vm1005, 1, 0
      %v1134 = vsel %vm1006, 1, 0
      %v1135 = vsel %vm1007, 1, 0
      %v1136 = vsel %vm1008, 1, 0
      %v1137 = vsel %vm1009, 1, 0
      %v1138 = vsel %vm1010, 1, 0
      %v1139 = vsel %vm1011, 1, 0
      %v1140 = vsel %vm1012, 1, 0
      %v1141 = vsel %vm1013, 1, 0
      %v1142 = vsel %vm1014, 1, 0
      %v1143 = vsel %vm1015, 1, 0
      %v1144 = vsel %vm1016, 1, 0
      %v1145 = vsel %vm1017, 1, 0
      %v1146 = vsel %vm1018, 1, 0
      %v1147 = vsel %vm1019, 1, 0
      %v1148 = vsel %vm1020, 1, 0
      %v1149 = vsel %vm1021, 1, 0
      %v1150 = vsel %vm1022, 1, 0
      %v1151 = vsel %vm1023, 1, 0
      %v1152 = vsel %vm1024, 1, 0
      %v1153 = vsel %vm1025, 1, 0
      %v1154 = vsel %vm1026, 1, 0
      %v1155 = vsel %vm1027, 1, 0
      %v1156 = vsel %vm1028, 1, 0
      %v1157 = vsel %vm1029, 1, 0
      %v1158 = vsel %vm1030, 1, 0
      %v1159 = vsel %vm1031, 1, 0
      %v1160 = vsel %vm1032, 1, 0
      %v1161 = vsel %vm1033, 1, 0
      %v1162 = vsel %vm1034, 1, 0
      %v1163 = vsel %vm1035, 1, 0
      %v1164 = vsel %vm1036, 1, 0
      %v1165 = vsel %vm1037, 1, 0
      %v1166 = vsel %vm1038, 1, 0
      %v1167 = vsel %vm1039, 1, 0
      %v1168 = vsel %vm1040, 1, 0
      %v1169 = vsel %vm1041, 1, 0
      %v1170 = vsel %vm1042, 1, 0
      %v1171 = vsel %vm1043, 1, 0
      %v1172 = vsel %vm1044, 1, 0
      %v1173 = vsel %vm1045, 1, 0
      %v1174 = vsel %vm1046, 1, 0
      %v1175 = vsel %vm1047, 1, 0
      %v1176 = vsel %vm1048, 1, 0
      %v1177 = vsel %vm1049, 1, 0
      %v1178 = vsel %vm1050, 1, 0
      %v1179 = vcvt.s32.f32 %v1051
      %v1180 = vcvt.s32.f32 %v1052
      %v1181 = vcvt.s32.f32 %v1053
      %v1182 = vcvt.s32.f32 %v1054
      %v1183 = vcvt.s32.f32 %v1055
      %v1184 = vcvt.s32.f32 %v1056
      %v1185 = vcvt.s32.f32 %v1057
      %v1186 = vcvt.s32.f32 %v1058
      %v1187 = vcvt.s32.f32 %v1059
      %v1188 = vcvt.s32.f32 %v1060
      %v1189 = vcvt.s32.f32 %v1061
      %v1190 = vcvt.s32.f32 %v1062
      %v1191 = vcvt.s32.f32 %v1063
      %v1192 = vcvt.s32.f32 %v1064
      %v1193 = vcvt.s32.f32 %v1065
      %v1194 = vcvt.s32.f32 %v1066
      %v1195 = vcvt.s32.f32 %v1067
      %v1196 = vcvt.s32.f32 %v1068
      %v1197 = vcvt.s32.f32 %v1069
      %v1198 = vcvt.s32.f32 %v1070
      %v1199 = vcvt.s32.f32 %v1071
      %v1200 = vcvt.s32.f32 %v1072
      %v1201 = vcvt.s32.f32 %v1073
      %v1202 = vcvt.s32.f32 %v1074
      %v1203 = vcvt.s32.f32 %v1075
      %v1204 = vcvt.s32.f32 %v1076
      %v1205 = vcvt.s32.f32 %v1077
      %v1206 = vcvt.s32.f32 %v1078
      %v1207 = vcvt.s32.f32 %v1079
      %v1208 = vcvt.s32.f32 %v1080
      %v1209 = vcvt.s32.f32 %v1081
      %v1210 = vcvt.s32.f32 %v1082
      %v1211 = vcvt.s32.f32 %v1083
      %v1212 = vcvt.s32.f32 %v1084
      %v1213 = vcvt.s32.f32 %v1085
      %v1214 = vcvt.s32.f32 %v1086
      %v1215 = vcvt.s32.f32 %v1087
      %v1216 = vcvt.s32.f32 %v1088
      %v1217 = vcvt.s32.f32 %v1089
      %v1218 = vcvt.s32.f32 %v1090
      %v1219 = vcvt.s32.f32 %v1091
      %v1220 = vcvt.s32.f32 %v1092
      %v1221 = vcvt.s32.f32 %v1093
      %v1222 = vcvt.s32.f32 %v1094
      %v1223 = vcvt.s32.f32 %v1095
      %v1224 = vcvt.s32.f32 %v1096
      %v1225 = vcvt.s32.f32 %v1097
      %v1226 = vcvt.s32.f32 %v1098
      %v1227 = vcvt.s32.f32 %v1099
      %v1228 = vcvt.s32.f32 %v1100
      %v1229 = vcvt.s32.f32 %v1101
      %v1230 = vcvt.s32.f32 %v1102
      %v1231 = vcvt.s32.f32 %v1103
      %v1232 = vcvt.s32.f32 %v1104
      %v1233 = vcvt.s32.f32 %v1105
      %v1234 = vcvt.s32.f32 %v1106
      %v1235 = vcvt.s32.f32 %v1107
      %v1236 = vcvt.s32.f32 %v1108
      %v1237 = vcvt.s32.f32 %v1109
      %v1238 = vcvt.s32.f32 %v1110
      %v1239 = vcvt.s32.f32 %v1111
      %v1240 = vcvt.s32.f32 %v1112
      %v1241 = vcvt.s32.f32 %v1113
      %v1242 = vcvt.s32.f32 %v1114
      %v1243 = vcvt.s32.f32 %v1115
      %v1244 = vcvt.s32.f32 %v1116
      %v1245 = vcvt.s32.f32 %v1117
      %v1246 = vcvt.s32.f32 %v1118
      %v1247 = vcvt.s32.f32 %v1119
      %v1248 = vcvt.s32.f32 %v1120
      %v1249 = vcvt.s32.f32 %v1121
      %v1250 = vcvt.s32.f32 %v1122
      %v1251 = vcvt.s32.f32 %v1123
      %v1252 = vcvt.s32.f32 %v1124
      %v1253 = vcvt.s32.f32 %v1125
      %v1254 = vcvt.s32.f32 %v1126
      %v1255 = vcvt.s32.f32 %v1127
      %v1256 = vcvt.s32.f32 %v1128
      %v1257 = vcvt.s32.f32 %v1129
      %v1258 = vcvt.s32.f32 %v1130
      %v1259 = vcvt.s32.f32 %v1131
      %v1260 = vcvt.s32.f32 %v1132
      %v1261 = vcvt.s32.f32 %v1133
      %v1262 = vcvt.s32.f32 %v1134
      %v1263 = vcvt.s32.f32 %v1135
      %v1264 = vcvt.s32.f32 %v1136
      %v1265 = vcvt.s32.f32 %v1137
      %v1266 = vcvt.s32.f32 %v1138
      %v1267 = vcvt.s32.f32 %v1139
      %v1268 = vcvt.s32.f32 %v1140
      %v1269 = vcvt.s32.f32 %v1141
      %v1270 = vcvt.s32.f32 %v1142
      %v1271 = vcvt.s32.f32 %v1143
      %v1272 = vcvt.s32.f32 %v1144
      %v1273 = vcvt.s32.f32 %v1145
      %v1274 = vcvt.s32.f32 %v1146
      %v1275 = vcvt.s32.f32 %v1147
      %v1276 = vcvt.s32.f32 %v1148
      %v1277 = vcvt.s32.f32 %v1149
      %v1278 = vcvt.s32.f32 %v1150
      %v1279 = vcvt.s32.f32 %v1151
      %v1280 = vcvt.s32.f32 %v1152
      %v1281 = vcvt.s32.f32 %v1153
      %v1282 = vcvt.s32.f32 %v1154
      %v1283 = vcvt.s32.f32 %v1155
      %v1284 = vcvt.s32.f32 %v1156
      %v1285 = vcvt.s32.f32 %v1157
      %v1286 = vcvt.s32.f32 %v1158
      %v1287 = vcvt.s32.f32 %v1159
      %v1288 = vcvt.s32.f32 %v1160
      %v1289 = vcvt.s32.f32 %v1161
      %v1290 = vcvt.s32.f32 %v1162
      %v1291 = vcvt.s32.f32 %v1163
      %v1292 = vcvt.s32.f32 %v1164
      %v1293 = vcvt.s32.f32 %v1165
      %v1294 = vcvt.s32.f32 %v1166
      %v1295 = vcvt.s32.f32 %v1167
      %v1296 = vcvt.s32.f32 %v1168
      %v1297 = vcvt.s32.f32 %v1169
      %v1298 = vcvt.s32.f32 %v1170
      %v1299 = vcvt.s32.f32 %v1171
      %v1300 = vcvt.s32.f32 %v1172
      %v1301 = vcvt.s32.f32 %v1173
      %v1302 = vcvt.s32.f32 %v1174
      %v1303 = vcvt.s32.f32 %v1175
      %v1304 = vcvt.s32.f32 %v1176
      %v1305 = vcvt.s32.f32 %v1177
      %v1306 = vcvt.s32.f32 %v1178
      %1307 = vmatprep.subr.mxu0 0.0
      %1308 = vmatpush1.msra.mxu0 %v408
      %1309 = vmatprep.subr.mxu0 0.0
      %1310 = vmatpush1.msra.mxu0 %v407
      %1311 = vmatprep.subr.mxu0 0.0
      %1312 = vmatpush1.msra.mxu0 %v406
      %1313 = vmatprep.subr.mxu0 0.0
      %1314 = vmatpush1.msra.mxu0 %v405
      %1315 = vmatprep.subr.mxu0 0.0
      %1316 = vmatpush1.msra.mxu0 %v404
      %1317 = vmatprep.subr.mxu0 0.0
      %1318 = vmatpush1.msra.mxu0 %v403
      %1319 = vmatprep.subr.mxu0 0.0
      %1320 = vmatpush1.msra.mxu0 %v402
      %1321 = vmatprep.subr.mxu0 0.0
      %1322 = vmatpush1.msra.mxu0 %v401
      %1323 = vmatprep.subr.mxu0 0.0
      %1324 = vmatpush1.msra.mxu0 %v400
      %1325 = vmatprep.subr.mxu0 0.0
      %1326 = vmatpush1.msra.mxu0 %v399
      %1327 = vmatprep.subr.mxu0 0.0
      %1328 = vmatpush1.msra.mxu0 %v398
      %1329 = vmatprep.subr.mxu0 0.0
      %1330 = vmatpush1.msra.mxu0 %v397
      %1331 = vmatprep.subr.mxu0 0.0
      %1332 = vmatpush1.msra.mxu0 %v396
      %1333 = vmatprep.subr.mxu0 0.0
      %1334 = vmatpush1.msra.mxu0 %v395
      %1335 = vmatprep.subr.mxu0 0.0
      %1336 = vmatpush1.msra.mxu0 %v394
      %1337 = vmatprep.subr.mxu0 0.0
      %1338 = vmatpush1.msra.mxu0 %v393
      %1339 = vmatprep.subr.mxu0 0.0
      %1340 = vmatpush2.msra.mxu0 0.0
      %1341 = vmatprep.subr.mxu0 0.0
      %1342 = vmatpush2.msra.mxu0 0.0
      %1343 = vmatprep.subr.mxu0 0.0
      %1344 = vmatpush2.msra.mxu0 0.0
      %1345 = vmatprep.subr.mxu0 0.0
      %1346 = vmatpush2.msra.mxu0 0.0
      %1347 = vmatprep.subr.mxu0 0.0
      %1348 = vmatpush2.msra.mxu0 0.0
      %1349 = vmatprep.subr.mxu0 0.0
      %1350 = vmatpush2.msra.mxu0 0.0
      %1351 = vmatprep.subr.mxu0 0.0
      %1352 = vmatpush2.msra.mxu0 0.0
      %1353 = vmatprep.subr.mxu0 0.0
      %1354 = vmatpush2.msra.mxu0 0.0
      %1355 = vmatprep.subr.mxu0 0.0
      %1356 = vmatpush2.msra.mxu0 0.0
      %1357 = vmatprep.subr.mxu0 0.0
      %1358 = vmatpush2.msra.mxu0 0.0
      %1359 = vmatprep.subr.mxu0 0.0
      %1360 = vmatpush2.msra.mxu0 0.0
      %1361 = vmatprep.subr.mxu0 0.0
      %1362 = vmatpush2.msra.mxu0 0.0
      %1363 = vmatprep.subr.mxu0 0.0
      %1364 = vmatpush2.msra.mxu0 0.0
      %1365 = vmatprep.subr.mxu0 0.0
      %1366 = vmatpush2.msra.mxu0 0.0
      %1367 = vmatprep.subr.mxu0 0.0
      %1368 = vmatpush2.msra.mxu0 0.0
      %1369 = vmatprep.subr.mxu0 0.0
      %1370 = vmatpush2.msra.mxu0 0.0
      %1371 = vmatprep.mubr.f32.mxu0 0.0
      %1372 = vmatmul.mubr.f32.gmra.mxu0 %v1179
      %v1373 = vpop.f32.mrf.mxu0
      %v1374 = vadd.f32 0.0, %v1373
      %v1375 = vpop.f32.mrf.mxu0
      %1376 = vmatprep.mubr.f32.mxu0 0.0
      %1377 = vmatmul.mubr.f32.gmra.mxu0 %v1180
      %v1378 = vpop.f32.mrf.mxu0
      %v1379 = vadd.f32 0.0, %v1378
      %v1380 = vpop.f32.mrf.mxu0
      %1381 = vmatprep.mubr.f32.mxu0 0.0
      %1382 = vmatmul.mubr.f32.gmra.mxu0 %v1181
      %v1383 = vpop.f32.mrf.mxu0
      %v1384 = vadd.f32 0.0, %v1383
      %v1385 = vpop.f32.mrf.mxu0
      %1386 = vmatprep.mubr.f32.mxu0 0.0
      %1387 = vmatmul.mubr.f32.gmra.mxu0 %v1182
      %v1388 = vpop.f32.mrf.mxu0
      %v1389 = vadd.f32 0.0, %v1388
      %v1390 = vpop.f32.mrf.mxu0
      %1391 = vmatprep.mubr.f32.mxu0 0.0
      %1392 = vmatmul.mubr.f32.gmra.mxu0 %v1183
      %v1393 = vpop.f32.mrf.mxu0
      %v1394 = vadd.f32 0.0, %v1393
      %v1395 = vpop.f32.mrf.mxu0
      %1396 = vmatprep.mubr.f32.mxu0 0.0
      %1397 = vmatmul.mubr.f32.gmra.mxu0 %v1184
      %v1398 = vpop.f32.mrf.mxu0
      %v1399 = vadd.f32 0.0, %v1398
      %v1400 = vpop.f32.mrf.mxu0
      %1401 = vmatprep.mubr.f32.mxu0 0.0
      %1402 = vmatmul.mubr.f32.gmra.mxu0 %v1185
      %v1403 = vpop.f32.mrf.mxu0
      %v1404 = vadd.f32 0.0, %v1403
      %v1405 = vpop.f32.mrf.mxu0
      %1406 = vmatprep.mubr.f32.mxu0 0.0
      %1407 = vmatmul.mubr.f32.gmra.mxu0 %v1186
      %v1408 = vpop.f32.mrf.mxu0
      %v1409 = vadd.f32 0.0, %v1408
      %v1410 = vpop.f32.mrf.mxu0
      %1411 = vmatprep.mubr.f32.mxu0 0.0
      %1412 = vmatmul.mubr.f32.gmra.mxu0 %v1187
      %v1413 = vpop.f32.mrf.mxu0
      %v1414 = vadd.f32 0.0, %v1413
      %v1415 = vpop.f32.mrf.mxu0
      %1416 = vmatprep.mubr.f32.mxu0 0.0
      %1417 = vmatmul.mubr.f32.gmra.mxu0 %v1188
      %v1418 = vpop.f32.mrf.mxu0
      %v1419 = vadd.f32 0.0, %v1418
      %v1420 = vpop.f32.mrf.mxu0
      %1421 = vmatprep.mubr.f32.mxu0 0.0
      %1422 = vmatmul.mubr.f32.gmra.mxu0 %v1189
      %v1423 = vpop.f32.mrf.mxu0
      %v1424 = vadd.f32 0.0, %v1423
      %v1425 = vpop.f32.mrf.mxu0
      %1426 = vmatprep.mubr.f32.mxu0 0.0
      %1427 = vmatmul.mubr.f32.gmra.mxu0 %v1190
      %v1428 = vpop.f32.mrf.mxu0
      %v1429 = vadd.f32 0.0, %v1428
      %v1430 = vpop.f32.mrf.mxu0
      %1431 = vmatprep.mubr.f32.mxu0 0.0
      %1432 = vmatmul.mubr.f32.gmra.mxu0 %v1191
      %v1433 = vpop.f32.mrf.mxu0
      %v1434 = vadd.f32 0.0, %v1433
      %v1435 = vpop.f32.mrf.mxu0
      %1436 = vmatprep.mubr.f32.mxu0 0.0
      %1437 = vmatmul.mubr.f32.gmra.mxu0 %v1192
      %v1438 = vpop.f32.mrf.mxu0
      %v1439 = vadd.f32 0.0, %v1438
      %v1440 = vpop.f32.mrf.mxu0
      %1441 = vmatprep.mubr.f32.mxu0 0.0
      %1442 = vmatmul.mubr.f32.gmra.mxu0 %v1193
      %v1443 = vpop.f32.mrf.mxu0
      %v1444 = vadd.f32 0.0, %v1443
      %v1445 = vpop.f32.mrf.mxu0
      %1446 = vmatprep.mubr.f32.mxu0 0.0
      %1447 = vmatmul.mubr.f32.gmra.mxu0 %v1194
      %v1448 = vpop.f32.mrf.mxu0
      %v1449 = vadd.f32 0.0, %v1448
      %v1450 = vpop.f32.mrf.mxu0
      %1451 = vmatprep.mubr.f32.mxu0 0.0
      %1452 = vmatmul.mubr.f32.gmra.mxu0 %v1195
      %v1453 = vpop.f32.mrf.mxu0
      %v1454 = vadd.f32 0.0, %v1453
      %v1455 = vpop.f32.mrf.mxu0
      %1456 = vmatprep.mubr.f32.mxu0 0.0
      %1457 = vmatmul.mubr.f32.gmra.mxu0 %v1196
      %v1458 = vpop.f32.mrf.mxu0
      %v1459 = vadd.f32 0.0, %v1458
      %v1460 = vpop.f32.mrf.mxu0
      %1461 = vmatprep.mubr.f32.mxu0 0.0
      %1462 = vmatmul.mubr.f32.gmra.mxu0 %v1197
      %v1463 = vpop.f32.mrf.mxu0
      %v1464 = vadd.f32 0.0, %v1463
      %v1465 = vpop.f32.mrf.mxu0
      %1466 = vmatprep.mubr.f32.mxu0 0.0
      %1467 = vmatmul.mubr.f32.gmra.mxu0 %v1198
      %v1468 = vpop.f32.mrf.mxu0
      %v1469 = vadd.f32 0.0, %v1468
      %v1470 = vpop.f32.mrf.mxu0
      %1471 = vmatprep.mubr.f32.mxu0 0.0
      %1472 = vmatmul.mubr.f32.gmra.mxu0 %v1199
      %v1473 = vpop.f32.mrf.mxu0
      %v1474 = vadd.f32 0.0, %v1473
      %v1475 = vpop.f32.mrf.mxu0
      %1476 = vmatprep.mubr.f32.mxu0 0.0
      %1477 = vmatmul.mubr.f32.gmra.mxu0 %v1200
      %v1478 = vpop.f32.mrf.mxu0
      %v1479 = vadd.f32 0.0, %v1478
      %v1480 = vpop.f32.mrf.mxu0
      %1481 = vmatprep.mubr.f32.mxu0 0.0
      %1482 = vmatmul.mubr.f32.gmra.mxu0 %v1201
      %v1483 = vpop.f32.mrf.mxu0
      %v1484 = vadd.f32 0.0, %v1483
      %v1485 = vpop.f32.mrf.mxu0
      %1486 = vmatprep.mubr.f32.mxu0 0.0
      %1487 = vmatmul.mubr.f32.gmra.mxu0 %v1202
      %v1488 = vpop.f32.mrf.mxu0
      %v1489 = vadd.f32 0.0, %v1488
      %v1490 = vpop.f32.mrf.mxu0
      %1491 = vmatprep.mubr.f32.mxu0 0.0
      %1492 = vmatmul.mubr.f32.gmra.mxu0 %v1203
      %v1493 = vpop.f32.mrf.mxu0
      %v1494 = vadd.f32 0.0, %v1493
      %v1495 = vpop.f32.mrf.mxu0
      %1496 = vmatprep.mubr.f32.mxu0 0.0
      %1497 = vmatmul.mubr.f32.gmra.mxu0 %v1204
      %v1498 = vpop.f32.mrf.mxu0
      %v1499 = vadd.f32 0.0, %v1498
      %v1500 = vpop.f32.mrf.mxu0
      %1501 = vmatprep.mubr.f32.mxu0 0.0
      %1502 = vmatmul.mubr.f32.gmra.mxu0 %v1205
      %v1503 = vpop.f32.mrf.mxu0
      %v1504 = vadd.f32 0.0, %v1503
      %v1505 = vpop.f32.mrf.mxu0
      %1506 = vmatprep.mubr.f32.mxu0 0.0
      %1507 = vmatmul.mubr.f32.gmra.mxu0 %v1206
      %v1508 = vpop.f32.mrf.mxu0
      %v1509 = vadd.f32 0.0, %v1508
      %v1510 = vpop.f32.mrf.mxu0
      %1511 = vmatprep.mubr.f32.mxu0 0.0
      %1512 = vmatmul.mubr.f32.gmra.mxu0 %v1207
      %v1513 = vpop.f32.mrf.mxu0
      %v1514 = vadd.f32 0.0, %v1513
      %v1515 = vpop.f32.mrf.mxu0
      %1516 = vmatprep.mubr.f32.mxu0 0.0
      %1517 = vmatmul.mubr.f32.gmra.mxu0 %v1208
      %v1518 = vpop.f32.mrf.mxu0
      %v1519 = vadd.f32 0.0, %v1518
      %v1520 = vpop.f32.mrf.mxu0
      %1521 = vmatprep.mubr.f32.mxu0 0.0
      %1522 = vmatmul.mubr.f32.gmra.mxu0 %v1209
      %v1523 = vpop.f32.mrf.mxu0
      %v1524 = vadd.f32 0.0, %v1523
      %v1525 = vpop.f32.mrf.mxu0
      %1526 = vmatprep.mubr.f32.mxu0 0.0
      %1527 = vmatmul.mubr.f32.gmra.mxu0 %v1210
      %v1528 = vpop.f32.mrf.mxu0
      %v1529 = vadd.f32 0.0, %v1528
      %v1530 = vpop.f32.mrf.mxu0
      %1531 = vmatprep.mubr.f32.mxu0 0.0
      %1532 = vmatmul.mubr.f32.gmra.mxu0 %v1211
      %v1533 = vpop.f32.mrf.mxu0
      %v1534 = vadd.f32 0.0, %v1533
      %v1535 = vpop.f32.mrf.mxu0
      %1536 = vmatprep.mubr.f32.mxu0 0.0
      %1537 = vmatmul.mubr.f32.gmra.mxu0 %v1212
      %v1538 = vpop.f32.mrf.mxu0
      %v1539 = vadd.f32 0.0, %v1538
      %v1540 = vpop.f32.mrf.mxu0
      %1541 = vmatprep.mubr.f32.mxu0 0.0
      %1542 = vmatmul.mubr.f32.gmra.mxu0 %v1213
      %v1543 = vpop.f32.mrf.mxu0
      %v1544 = vadd.f32 0.0, %v1543
      %v1545 = vpop.f32.mrf.mxu0
      %1546 = vmatprep.mubr.f32.mxu0 0.0
      %1547 = vmatmul.mubr.f32.gmra.mxu0 %v1214
      %v1548 = vpop.f32.mrf.mxu0
      %v1549 = vadd.f32 0.0, %v1548
      %v1550 = vpop.f32.mrf.mxu0
      %1551 = vmatprep.mubr.f32.mxu0 0.0
      %1552 = vmatmul.mubr.f32.gmra.mxu0 %v1215
      %v1553 = vpop.f32.mrf.mxu0
      %v1554 = vadd.f32 0.0, %v1553
      %v1555 = vpop.f32.mrf.mxu0
      %1556 = vmatprep.mubr.f32.mxu0 0.0
      %1557 = vmatmul.mubr.f32.gmra.mxu0 %v1216
      %v1558 = vpop.f32.mrf.mxu0
      %v1559 = vadd.f32 0.0, %v1558
      %v1560 = vpop.f32.mrf.mxu0
      %1561 = vmatprep.mubr.f32.mxu0 0.0
      %1562 = vmatmul.mubr.f32.gmra.mxu0 %v1217
      %v1563 = vpop.f32.mrf.mxu0
      %v1564 = vadd.f32 0.0, %v1563
      %v1565 = vpop.f32.mrf.mxu0
      %1566 = vmatprep.mubr.f32.mxu0 0.0
      %1567 = vmatmul.mubr.f32.gmra.mxu0 %v1218
      %v1568 = vpop.f32.mrf.mxu0
      %v1569 = vadd.f32 0.0, %v1568
      %v1570 = vpop.f32.mrf.mxu0
      %1571 = vmatprep.mubr.f32.mxu0 0.0
      %1572 = vmatmul.mubr.f32.gmra.mxu0 %v1219
      %v1573 = vpop.f32.mrf.mxu0
      %v1574 = vadd.f32 0.0, %v1573
      %v1575 = vpop.f32.mrf.mxu0
      %1576 = vmatprep.mubr.f32.mxu0 0.0
      %1577 = vmatmul.mubr.f32.gmra.mxu0 %v1220
      %v1578 = vpop.f32.mrf.mxu0
      %v1579 = vadd.f32 0.0, %v1578
      %v1580 = vpop.f32.mrf.mxu0
      %1581 = vmatprep.mubr.f32.mxu0 0.0
      %1582 = vmatmul.mubr.f32.gmra.mxu0 %v1221
      %v1583 = vpop.f32.mrf.mxu0
      %v1584 = vadd.f32 0.0, %v1583
      %v1585 = vpop.f32.mrf.mxu0
      %1586 = vmatprep.mubr.f32.mxu0 0.0
      %1587 = vmatmul.mubr.f32.gmra.mxu0 %v1222
      %v1588 = vpop.f32.mrf.mxu0
      %v1589 = vadd.f32 0.0, %v1588
      %v1590 = vpop.f32.mrf.mxu0
      %1591 = vmatprep.mubr.f32.mxu0 0.0
      %1592 = vmatmul.mubr.f32.gmra.mxu0 %v1223
      %v1593 = vpop.f32.mrf.mxu0
      %v1594 = vadd.f32 0.0, %v1593
      %v1595 = vpop.f32.mrf.mxu0
      %1596 = vmatprep.mubr.f32.mxu0 0.0
      %1597 = vmatmul.mubr.f32.gmra.mxu0 %v1224
      %v1598 = vpop.f32.mrf.mxu0
      %v1599 = vadd.f32 0.0, %v1598
      %v1600 = vpop.f32.mrf.mxu0
      %1601 = vmatprep.mubr.f32.mxu0 0.0
      %1602 = vmatmul.mubr.f32.gmra.mxu0 %v1225
      %v1603 = vpop.f32.mrf.mxu0
      %v1604 = vadd.f32 0.0, %v1603
      %v1605 = vpop.f32.mrf.mxu0
      %1606 = vmatprep.mubr.f32.mxu0 0.0
      %1607 = vmatmul.mubr.f32.gmra.mxu0 %v1226
      %v1608 = vpop.f32.mrf.mxu0
      %v1609 = vadd.f32 0.0, %v1608
      %v1610 = vpop.f32.mrf.mxu0
      %1611 = vmatprep.mubr.f32.mxu0 0.0
      %1612 = vmatmul.mubr.f32.gmra.mxu0 %v1227
      %v1613 = vpop.f32.mrf.mxu0
      %v1614 = vadd.f32 0.0, %v1613
      %v1615 = vpop.f32.mrf.mxu0
      %1616 = vmatprep.mubr.f32.mxu0 0.0
      %1617 = vmatmul.mubr.f32.gmra.mxu0 %v1228
      %v1618 = vpop.f32.mrf.mxu0
      %v1619 = vadd.f32 0.0, %v1618
      %v1620 = vpop.f32.mrf.mxu0
      %1621 = vmatprep.mubr.f32.mxu0 0.0
      %1622 = vmatmul.mubr.f32.gmra.mxu0 %v1229
      %v1623 = vpop.f32.mrf.mxu0
      %v1624 = vadd.f32 0.0, %v1623
      %v1625 = vpop.f32.mrf.mxu0
      %1626 = vmatprep.mubr.f32.mxu0 0.0
      %1627 = vmatmul.mubr.f32.gmra.mxu0 %v1230
      %v1628 = vpop.f32.mrf.mxu0
      %v1629 = vadd.f32 0.0, %v1628
      %v1630 = vpop.f32.mrf.mxu0
      %1631 = vmatprep.mubr.f32.mxu0 0.0
      %1632 = vmatmul.mubr.f32.gmra.mxu0 %v1231
      %v1633 = vpop.f32.mrf.mxu0
      %v1634 = vadd.f32 0.0, %v1633
      %v1635 = vpop.f32.mrf.mxu0
      %1636 = vmatprep.mubr.f32.mxu0 0.0
      %1637 = vmatmul.mubr.f32.gmra.mxu0 %v1232
      %v1638 = vpop.f32.mrf.mxu0
      %v1639 = vadd.f32 0.0, %v1638
      %v1640 = vpop.f32.mrf.mxu0
      %1641 = vmatprep.mubr.f32.mxu0 0.0
      %1642 = vmatmul.mubr.f32.gmra.mxu0 %v1233
      %v1643 = vpop.f32.mrf.mxu0
      %v1644 = vadd.f32 0.0, %v1643
      %v1645 = vpop.f32.mrf.mxu0
      %1646 = vmatprep.mubr.f32.mxu0 0.0
      %1647 = vmatmul.mubr.f32.gmra.mxu0 %v1234
      %v1648 = vpop.f32.mrf.mxu0
      %v1649 = vadd.f32 0.0, %v1648
      %v1650 = vpop.f32.mrf.mxu0
      %1651 = vmatprep.mubr.f32.mxu0 0.0
      %1652 = vmatmul.mubr.f32.gmra.mxu0 %v1235
      %v1653 = vpop.f32.mrf.mxu0
      %v1654 = vadd.f32 0.0, %v1653
      %v1655 = vpop.f32.mrf.mxu0
      %1656 = vmatprep.mubr.f32.mxu0 0.0
      %1657 = vmatmul.mubr.f32.gmra.mxu0 %v1236
      %v1658 = vpop.f32.mrf.mxu0
      %v1659 = vadd.f32 0.0, %v1658
      %v1660 = vpop.f32.mrf.mxu0
      %1661 = vmatprep.mubr.f32.mxu0 0.0
      %1662 = vmatmul.mubr.f32.gmra.mxu0 %v1237
      %v1663 = vpop.f32.mrf.mxu0
      %v1664 = vadd.f32 0.0, %v1663
      %v1665 = vpop.f32.mrf.mxu0
      %1666 = vmatprep.mubr.f32.mxu0 0.0
      %1667 = vmatmul.mubr.f32.gmra.mxu0 %v1238
      %v1668 = vpop.f32.mrf.mxu0
      %v1669 = vadd.f32 0.0, %v1668
      %v1670 = vpop.f32.mrf.mxu0
      %1671 = vmatprep.mubr.f32.mxu0 0.0
      %1672 = vmatmul.mubr.f32.gmra.mxu0 %v1239
      %v1673 = vpop.f32.mrf.mxu0
      %v1674 = vadd.f32 0.0, %v1673
      %v1675 = vpop.f32.mrf.mxu0
      %1676 = vmatprep.mubr.f32.mxu0 0.0
      %1677 = vmatmul.mubr.f32.gmra.mxu0 %v1240
      %v1678 = vpop.f32.mrf.mxu0
      %v1679 = vadd.f32 0.0, %v1678
      %v1680 = vpop.f32.mrf.mxu0
      %1681 = vmatprep.mubr.f32.mxu0 0.0
      %1682 = vmatmul.mubr.f32.gmra.mxu0 %v1241
      %v1683 = vpop.f32.mrf.mxu0
      %v1684 = vadd.f32 0.0, %v1683
      %v1685 = vpop.f32.mrf.mxu0
      %1686 = vmatprep.mubr.f32.mxu0 0.0
      %1687 = vmatmul.mubr.f32.gmra.mxu0 %v1242
      %v1688 = vpop.f32.mrf.mxu0
      %v1689 = vadd.f32 0.0, %v1688
      %v1690 = vpop.f32.mrf.mxu0
      %1691 = vmatprep.mubr.f32.mxu0 0.0
      %1692 = vmatmul.mubr.f32.gmra.mxu0 %v1243
      %v1693 = vpop.f32.mrf.mxu0
      %v1694 = vadd.f32 0.0, %v1693
      %v1695 = vpop.f32.mrf.mxu0
      %1696 = vmatprep.mubr.f32.mxu0 0.0
      %1697 = vmatmul.mubr.f32.gmra.mxu0 %v1244
      %v1698 = vpop.f32.mrf.mxu0
      %v1699 = vadd.f32 0.0, %v1698
      %v1700 = vpop.f32.mrf.mxu0
      %1701 = vmatprep.mubr.f32.mxu0 0.0
      %1702 = vmatmul.mubr.f32.gmra.mxu0 %v1245
      %v1703 = vpop.f32.mrf.mxu0
      %v1704 = vadd.f32 0.0, %v1703
      %v1705 = vpop.f32.mrf.mxu0
      %1706 = vmatprep.mubr.f32.mxu0 0.0
      %1707 = vmatmul.mubr.f32.gmra.mxu0 %v1246
      %v1708 = vpop.f32.mrf.mxu0
      %v1709 = vadd.f32 0.0, %v1708
      %v1710 = vpop.f32.mrf.mxu0
      %1711 = vmatprep.mubr.f32.mxu0 0.0
      %1712 = vmatmul.mubr.f32.gmra.mxu0 %v1247
      %v1713 = vpop.f32.mrf.mxu0
      %v1714 = vadd.f32 0.0, %v1713
      %v1715 = vpop.f32.mrf.mxu0
      %1716 = vmatprep.mubr.f32.mxu0 0.0
      %1717 = vmatmul.mubr.f32.gmra.mxu0 %v1248
      %v1718 = vpop.f32.mrf.mxu0
      %v1719 = vadd.f32 0.0, %v1718
      %v1720 = vpop.f32.mrf.mxu0
      %1721 = vmatprep.mubr.f32.mxu0 0.0
      %1722 = vmatmul.mubr.f32.gmra.mxu0 %v1249
      %v1723 = vpop.f32.mrf.mxu0
      %v1724 = vadd.f32 0.0, %v1723
      %v1725 = vpop.f32.mrf.mxu0
      %1726 = vmatprep.mubr.f32.mxu0 0.0
      %1727 = vmatmul.mubr.f32.gmra.mxu0 %v1250
      %v1728 = vpop.f32.mrf.mxu0
      %v1729 = vadd.f32 0.0, %v1728
      %v1730 = vpop.f32.mrf.mxu0
      %1731 = vmatprep.mubr.f32.mxu0 0.0
      %1732 = vmatmul.mubr.f32.gmra.mxu0 %v1251
      %v1733 = vpop.f32.mrf.mxu0
      %v1734 = vadd.f32 0.0, %v1733
      %v1735 = vpop.f32.mrf.mxu0
      %1736 = vmatprep.mubr.f32.mxu0 0.0
      %1737 = vmatmul.mubr.f32.gmra.mxu0 %v1252
      %v1738 = vpop.f32.mrf.mxu0
      %v1739 = vadd.f32 0.0, %v1738
      %v1740 = vpop.f32.mrf.mxu0
      %1741 = vmatprep.mubr.f32.mxu0 0.0
      %1742 = vmatmul.mubr.f32.gmra.mxu0 %v1253
      %v1743 = vpop.f32.mrf.mxu0
      %v1744 = vadd.f32 0.0, %v1743
      %v1745 = vpop.f32.mrf.mxu0
      %1746 = vmatprep.mubr.f32.mxu0 0.0
      %1747 = vmatmul.mubr.f32.gmra.mxu0 %v1254
      %v1748 = vpop.f32.mrf.mxu0
      %v1749 = vadd.f32 0.0, %v1748
      %v1750 = vpop.f32.mrf.mxu0
      %1751 = vmatprep.mubr.f32.mxu0 0.0
      %1752 = vmatmul.mubr.f32.gmra.mxu0 %v1255
      %v1753 = vpop.f32.mrf.mxu0
      %v1754 = vadd.f32 0.0, %v1753
      %v1755 = vpop.f32.mrf.mxu0
      %1756 = vmatprep.mubr.f32.mxu0 0.0
      %1757 = vmatmul.mubr.f32.gmra.mxu0 %v1256
      %v1758 = vpop.f32.mrf.mxu0
      %v1759 = vadd.f32 0.0, %v1758
      %v1760 = vpop.f32.mrf.mxu0
      %1761 = vmatprep.mubr.f32.mxu0 0.0
      %1762 = vmatmul.mubr.f32.gmra.mxu0 %v1257
      %v1763 = vpop.f32.mrf.mxu0
      %v1764 = vadd.f32 0.0, %v1763
      %v1765 = vpop.f32.mrf.mxu0
      %1766 = vmatprep.mubr.f32.mxu0 0.0
      %1767 = vmatmul.mubr.f32.gmra.mxu0 %v1258
      %v1768 = vpop.f32.mrf.mxu0
      %v1769 = vadd.f32 0.0, %v1768
      %v1770 = vpop.f32.mrf.mxu0
      %1771 = vmatprep.mubr.f32.mxu0 0.0
      %1772 = vmatmul.mubr.f32.gmra.mxu0 %v1259
      %v1773 = vpop.f32.mrf.mxu0
      %v1774 = vadd.f32 0.0, %v1773
      %v1775 = vpop.f32.mrf.mxu0
      %1776 = vmatprep.mubr.f32.mxu0 0.0
      %1777 = vmatmul.mubr.f32.gmra.mxu0 %v1260
      %v1778 = vpop.f32.mrf.mxu0
      %v1779 = vadd.f32 0.0, %v1778
      %v1780 = vpop.f32.mrf.mxu0
      %1781 = vmatprep.mubr.f32.mxu0 0.0
      %1782 = vmatmul.mubr.f32.gmra.mxu0 %v1261
      %v1783 = vpop.f32.mrf.mxu0
      %v1784 = vadd.f32 0.0, %v1783
      %v1785 = vpop.f32.mrf.mxu0
      %1786 = vmatprep.mubr.f32.mxu0 0.0
      %1787 = vmatmul.mubr.f32.gmra.mxu0 %v1262
      %v1788 = vpop.f32.mrf.mxu0
      %v1789 = vadd.f32 0.0, %v1788
      %v1790 = vpop.f32.mrf.mxu0
      %1791 = vmatprep.mubr.f32.mxu0 0.0
      %1792 = vmatmul.mubr.f32.gmra.mxu0 %v1263
      %v1793 = vpop.f32.mrf.mxu0
      %v1794 = vadd.f32 0.0, %v1793
      %v1795 = vpop.f32.mrf.mxu0
      %1796 = vmatprep.mubr.f32.mxu0 0.0
      %1797 = vmatmul.mubr.f32.gmra.mxu0 %v1264
      %v1798 = vpop.f32.mrf.mxu0
      %v1799 = vadd.f32 0.0, %v1798
      %v1800 = vpop.f32.mrf.mxu0
      %1801 = vmatprep.mubr.f32.mxu0 0.0
      %1802 = vmatmul.mubr.f32.gmra.mxu0 %v1265
      %v1803 = vpop.f32.mrf.mxu0
      %v1804 = vadd.f32 0.0, %v1803
      %v1805 = vpop.f32.mrf.mxu0
      %1806 = vmatprep.mubr.f32.mxu0 0.0
      %1807 = vmatmul.mubr.f32.gmra.mxu0 %v1266
      %v1808 = vpop.f32.mrf.mxu0
      %v1809 = vadd.f32 0.0, %v1808
      %v1810 = vpop.f32.mrf.mxu0
      %1811 = vmatprep.mubr.f32.mxu0 0.0
      %1812 = vmatmul.mubr.f32.gmra.mxu0 %v1267
      %v1813 = vpop.f32.mrf.mxu0
      %v1814 = vadd.f32 0.0, %v1813
      %v1815 = vpop.f32.mrf.mxu0
      %1816 = vmatprep.mubr.f32.mxu0 0.0
      %1817 = vmatmul.mubr.f32.gmra.mxu0 %v1268
      %v1818 = vpop.f32.mrf.mxu0
      %v1819 = vadd.f32 0.0, %v1818
      %v1820 = vpop.f32.mrf.mxu0
      %1821 = vmatprep.mubr.f32.mxu0 0.0
      %1822 = vmatmul.mubr.f32.gmra.mxu0 %v1269
      %v1823 = vpop.f32.mrf.mxu0
      %v1824 = vadd.f32 0.0, %v1823
      %v1825 = vpop.f32.mrf.mxu0
      %1826 = vmatprep.mubr.f32.mxu0 0.0
      %1827 = vmatmul.mubr.f32.gmra.mxu0 %v1270
      %v1828 = vpop.f32.mrf.mxu0
      %v1829 = vadd.f32 0.0, %v1828
      %v1830 = vpop.f32.mrf.mxu0
      %1831 = vmatprep.mubr.f32.mxu0 0.0
      %1832 = vmatmul.mubr.f32.gmra.mxu0 %v1271
      %v1833 = vpop.f32.mrf.mxu0
      %v1834 = vadd.f32 0.0, %v1833
      %v1835 = vpop.f32.mrf.mxu0
      %1836 = vmatprep.mubr.f32.mxu0 0.0
      %1837 = vmatmul.mubr.f32.gmra.mxu0 %v1272
      %v1838 = vpop.f32.mrf.mxu0
      %v1839 = vadd.f32 0.0, %v1838
      %v1840 = vpop.f32.mrf.mxu0
      %1841 = vmatprep.mubr.f32.mxu0 0.0
      %1842 = vmatmul.mubr.f32.gmra.mxu0 %v1273
      %v1843 = vpop.f32.mrf.mxu0
      %v1844 = vadd.f32 0.0, %v1843
      %v1845 = vpop.f32.mrf.mxu0
      %1846 = vmatprep.mubr.f32.mxu0 0.0
      %1847 = vmatmul.mubr.f32.gmra.mxu0 %v1274
      %v1848 = vpop.f32.mrf.mxu0
      %v1849 = vadd.f32 0.0, %v1848
      %v1850 = vpop.f32.mrf.mxu0
      %1851 = vmatprep.mubr.f32.mxu0 0.0
      %1852 = vmatmul.mubr.f32.gmra.mxu0 %v1275
      %v1853 = vpop.f32.mrf.mxu0
      %v1854 = vadd.f32 0.0, %v1853
      %v1855 = vpop.f32.mrf.mxu0
      %1856 = vmatprep.mubr.f32.mxu0 0.0
      %1857 = vmatmul.mubr.f32.gmra.mxu0 %v1276
      %v1858 = vpop.f32.mrf.mxu0
      %v1859 = vadd.f32 0.0, %v1858
      %v1860 = vpop.f32.mrf.mxu0
      %1861 = vmatprep.mubr.f32.mxu0 0.0
      %1862 = vmatmul.mubr.f32.gmra.mxu0 %v1277
      %v1863 = vpop.f32.mrf.mxu0
      %v1864 = vadd.f32 0.0, %v1863
      %v1865 = vpop.f32.mrf.mxu0
      %1866 = vmatprep.mubr.f32.mxu0 0.0
      %1867 = vmatmul.mubr.f32.gmra.mxu0 %v1278
      %v1868 = vpop.f32.mrf.mxu0
      %v1869 = vadd.f32 0.0, %v1868
      %v1870 = vpop.f32.mrf.mxu0
      %1871 = vmatprep.mubr.f32.mxu0 0.0
      %1872 = vmatmul.mubr.f32.gmra.mxu0 %v1279
      %v1873 = vpop.f32.mrf.mxu0
      %v1874 = vadd.f32 0.0, %v1873
      %v1875 = vpop.f32.mrf.mxu0
      %1876 = vmatprep.mubr.f32.mxu0 0.0
      %1877 = vmatmul.mubr.f32.gmra.mxu0 %v1280
      %v1878 = vpop.f32.mrf.mxu0
      %v1879 = vadd.f32 0.0, %v1878
      %v1880 = vpop.f32.mrf.mxu0
      %1881 = vmatprep.mubr.f32.mxu0 0.0
      %1882 = vmatmul.mubr.f32.gmra.mxu0 %v1281
      %v1883 = vpop.f32.mrf.mxu0
      %v1884 = vadd.f32 0.0, %v1883
      %v1885 = vpop.f32.mrf.mxu0
      %1886 = vmatprep.mubr.f32.mxu0 0.0
      %1887 = vmatmul.mubr.f32.gmra.mxu0 %v1282
      %v1888 = vpop.f32.mrf.mxu0
      %v1889 = vadd.f32 0.0, %v1888
      %v1890 = vpop.f32.mrf.mxu0
      %1891 = vmatprep.mubr.f32.mxu0 0.0
      %1892 = vmatmul.mubr.f32.gmra.mxu0 %v1283
      %v1893 = vpop.f32.mrf.mxu0
      %v1894 = vadd.f32 0.0, %v1893
      %v1895 = vpop.f32.mrf.mxu0
      %1896 = vmatprep.mubr.f32.mxu0 0.0
      %1897 = vmatmul.mubr.f32.gmra.mxu0 %v1284
      %v1898 = vpop.f32.mrf.mxu0
      %v1899 = vadd.f32 0.0, %v1898
      %v1900 = vpop.f32.mrf.mxu0
      %1901 = vmatprep.mubr.f32.mxu0 0.0
      %1902 = vmatmul.mubr.f32.gmra.mxu0 %v1285
      %v1903 = vpop.f32.mrf.mxu0
      %v1904 = vadd.f32 0.0, %v1903
      %v1905 = vpop.f32.mrf.mxu0
      %1906 = vmatprep.mubr.f32.mxu0 0.0
      %1907 = vmatmul.mubr.f32.gmra.mxu0 %v1286
      %v1908 = vpop.f32.mrf.mxu0
      %v1909 = vadd.f32 0.0, %v1908
      %v1910 = vpop.f32.mrf.mxu0
      %1911 = vmatprep.mubr.f32.mxu0 0.0
      %1912 = vmatmul.mubr.f32.gmra.mxu0 %v1287
      %v1913 = vpop.f32.mrf.mxu0
      %v1914 = vadd.f32 0.0, %v1913
      %v1915 = vpop.f32.mrf.mxu0
      %1916 = vmatprep.mubr.f32.mxu0 0.0
      %1917 = vmatmul.mubr.f32.gmra.mxu0 %v1288
      %v1918 = vpop.f32.mrf.mxu0
      %v1919 = vadd.f32 0.0, %v1918
      %v1920 = vpop.f32.mrf.mxu0
      %1921 = vmatprep.mubr.f32.mxu0 0.0
      %1922 = vmatmul.mubr.f32.gmra.mxu0 %v1289
      %v1923 = vpop.f32.mrf.mxu0
      %v1924 = vadd.f32 0.0, %v1923
      %v1925 = vpop.f32.mrf.mxu0
      %1926 = vmatprep.mubr.f32.mxu0 0.0
      %1927 = vmatmul.mubr.f32.gmra.mxu0 %v1290
      %v1928 = vpop.f32.mrf.mxu0
      %v1929 = vadd.f32 0.0, %v1928
      %v1930 = vpop.f32.mrf.mxu0
      %1931 = vmatprep.mubr.f32.mxu0 0.0
      %1932 = vmatmul.mubr.f32.gmra.mxu0 %v1291
      %v1933 = vpop.f32.mrf.mxu0
      %v1934 = vadd.f32 0.0, %v1933
      %v1935 = vpop.f32.mrf.mxu0
      %1936 = vmatprep.mubr.f32.mxu0 0.0
      %1937 = vmatmul.mubr.f32.gmra.mxu0 %v1292
      %v1938 = vpop.f32.mrf.mxu0
      %v1939 = vadd.f32 0.0, %v1938
      %v1940 = vpop.f32.mrf.mxu0
      %1941 = vmatprep.mubr.f32.mxu0 0.0
      %1942 = vmatmul.mubr.f32.gmra.mxu0 %v1293
      %v1943 = vpop.f32.mrf.mxu0
      %v1944 = vadd.f32 0.0, %v1943
      %v1945 = vpop.f32.mrf.mxu0
      %1946 = vmatprep.mubr.f32.mxu0 0.0
      %1947 = vmatmul.mubr.f32.gmra.mxu0 %v1294
      %v1948 = vpop.f32.mrf.mxu0
      %v1949 = vadd.f32 0.0, %v1948
      %v1950 = vpop.f32.mrf.mxu0
      %1951 = vmatprep.mubr.f32.mxu0 0.0
      %1952 = vmatmul.mubr.f32.gmra.mxu0 %v1295
      %v1953 = vpop.f32.mrf.mxu0
      %v1954 = vadd.f32 0.0, %v1953
      %v1955 = vpop.f32.mrf.mxu0
      %1956 = vmatprep.mubr.f32.mxu0 0.0
      %1957 = vmatmul.mubr.f32.gmra.mxu0 %v1296
      %v1958 = vpop.f32.mrf.mxu0
      %v1959 = vadd.f32 0.0, %v1958
      %v1960 = vpop.f32.mrf.mxu0
      %1961 = vmatprep.mubr.f32.mxu0 0.0
      %1962 = vmatmul.mubr.f32.gmra.mxu0 %v1297
      %v1963 = vpop.f32.mrf.mxu0
      %v1964 = vadd.f32 0.0, %v1963
      %v1965 = vpop.f32.mrf.mxu0
      %1966 = vmatprep.mubr.f32.mxu0 0.0
      %1967 = vmatmul.mubr.f32.gmra.mxu0 %v1298
      %v1968 = vpop.f32.mrf.mxu0
      %v1969 = vadd.f32 0.0, %v1968
      %v1970 = vpop.f32.mrf.mxu0
      %1971 = vmatprep.mubr.f32.mxu0 0.0
      %1972 = vmatmul.mubr.f32.gmra.mxu0 %v1299
      %v1973 = vpop.f32.mrf.mxu0
      %v1974 = vadd.f32 0.0, %v1973
      %v1975 = vpop.f32.mrf.mxu0
      %1976 = vmatprep.mubr.f32.mxu0 0.0
      %1977 = vmatmul.mubr.f32.gmra.mxu0 %v1300
      %v1978 = vpop.f32.mrf.mxu0
      %v1979 = vadd.f32 0.0, %v1978
      %v1980 = vpop.f32.mrf.mxu0
      %1981 = vmatprep.mubr.f32.mxu0 0.0
      %1982 = vmatmul.mubr.f32.gmra.mxu0 %v1301
      %v1983 = vpop.f32.mrf.mxu0
      %v1984 = vadd.f32 0.0, %v1983
      %v1985 = vpop.f32.mrf.mxu0
      %1986 = vmatprep.mubr.f32.mxu0 0.0
      %1987 = vmatmul.mubr.f32.gmra.mxu0 %v1302
      %v1988 = vpop.f32.mrf.mxu0
      %v1989 = vadd.f32 0.0, %v1988
      %v1990 = vpop.f32.mrf.mxu0
      %1991 = vmatprep.mubr.f32.mxu0 0.0
      %1992 = vmatmul.mubr.f32.gmra.mxu0 %v1303
      %v1993 = vpop.f32.mrf.mxu0
      %v1994 = vadd.f32 0.0, %v1993
      %v1995 = vpop.f32.mrf.mxu0
      %1996 = vmatprep.mubr.f32.mxu0 0.0
      %1997 = vmatmul.mubr.f32.gmra.mxu0 %v1304
      %v1998 = vpop.f32.mrf.mxu0
      %v1999 = vadd.f32 0.0, %v1998
      %v2000 = vpop.f32.mrf.mxu0
      %2001 = vmatprep.mubr.f32.mxu0 0.0
      %2002 = vmatmul.mubr.f32.gmra.mxu0 %v1305
      %v2003 = vpop.f32.mrf.mxu0
      %v2004 = vadd.f32 0.0, %v2003
      %v2005 = vpop.f32.mrf.mxu0
      %2006 = vmatprep.mubr.f32.mxu0 0.0
      %2007 = vmatmul.mubr.f32.gmra.mxu0 %v1306
      %v2008 = vpop.f32.mrf.mxu0
      %v2009 = vadd.f32 0.0, %v2008
      %v2010 = vpop.f32.mrf.mxu0
      %2011 = vdwg.mxu0
      %s2012 = smul.u32 %s25, 128
      %s2013 = scalar_lea.vmem %s371, %s2012
      %v2014 = vld [vmem:[%s2013] sm:$0xff]
      %v2015 = vld [vmem:[%s2013 + $0x8] sm:$0xff]
      %v2016 = vld [vmem:[%s2013 + $0x10] sm:$0xff]
      %v2017 = vld [vmem:[%s2013 + $0x18] sm:$0xff]
      %v2018 = vld [vmem:[%s2013 + $0x20] sm:$0xff]
      %v2019 = vld [vmem:[%s2013 + $0x28] sm:$0xff]
      %v2020 = vld [vmem:[%s2013 + $0x30] sm:$0xff]
      %v2021 = vld [vmem:[%s2013 + $0x38] sm:$0xff]
      %v2022 = vld [vmem:[%s2013 + $0x40] sm:$0xff]
      %v2023 = vld [vmem:[%s2013 + $0x48] sm:$0xff]
      %v2024 = vld [vmem:[%s2013 + $0x50] sm:$0xff]
      %v2025 = vld [vmem:[%s2013 + $0x58] sm:$0xff]
      %v2026 = vld [vmem:[%s2013 + $0x60] sm:$0xff]
      %v2027 = vld [vmem:[%s2013 + $0x68] sm:$0xff]
      %v2028 = vld [vmem:[%s2013 + $0x70] sm:$0xff]
      %v2029 = vld [vmem:[%s2013 + $0x78] sm:$0xff]
      %v2046 = vcombine.high %v2014, %v2014
      %v2048 = vunpack.c.l.s4 1966171168
      %v2049 = vunpack.c.0.s8 %v2048
      %v2050 = vlaneseq
      %v2051 = vshrl.u32 %v2050, 7
      %v2052 = vsub.s32 %v2049, %v2051
      %v2053 = vrot.slane %v2014, %v2052
      %v2055 = vunpack.c.l.s4 1966171168
      %v2056 = vunpack.c.0.s8 %v2055
      %v2057 = vlaneseq
      %v2058 = vshrl.u32 %v2057, 7
      %v2059 = vsub.s32 %v2056, %v2058
      %v2060 = vrot.slane %v2046, %v2059
      %v2061 = vcombine.high %v2053, %v2053
      %v2062 = vcombine.high %v2060, %v2060
      %v2064 = vunpack.c.l.s4 1966171168
      %v2065 = vunpack.c.0.s8 %v2064
      %v2066 = vlaneseq
      %v2067 = vshrl.u32 %v2066, 7
      %v2068 = vsub.s32 %v2065, %v2067
      %v2069 = vrot.slane %v2053, %v2068
      %v2071 = vunpack.c.l.s4 1966171168
      %v2072 = vunpack.c.0.s8 %v2071
      %v2073 = vlaneseq
      %v2074 = vshrl.u32 %v2073, 7
      %v2075 = vsub.s32 %v2072, %v2074
      %v2076 = vrot.slane %v2060, %v2075
      %v2078 = vunpack.c.l.s4 1966171168
      %v2079 = vunpack.c.0.s8 %v2078
      %v2080 = vlaneseq
      %v2081 = vshrl.u32 %v2080, 7
      %v2082 = vsub.s32 %v2079, %v2081
      %v2083 = vrot.slane %v2061, %v2082
      %v2085 = vunpack.c.l.s4 1966171168
      %v2086 = vunpack.c.0.s8 %v2085
      %v2087 = vlaneseq
      %v2088 = vshrl.u32 %v2087, 7
      %v2089 = vsub.s32 %v2086, %v2088
      %v2090 = vrot.slane %v2062, %v2089
      %v2091 = vcombine.high %v2069, %v2069
      %v2092 = vcombine.high %v2076, %v2076
      %v2093 = vcombine.high %v2083, %v2083
      %v2094 = vcombine.high %v2090, %v2090
      %v2095 = vcombine.high %v2015, %v2015
      %v2097 = vunpack.c.l.s4 1966171168
      %v2098 = vunpack.c.0.s8 %v2097
      %v2099 = vlaneseq
      %v2100 = vshrl.u32 %v2099, 7
      %v2101 = vsub.s32 %v2098, %v2100
      %v2102 = vrot.slane %v2015, %v2101
      %v2104 = vunpack.c.l.s4 1966171168
      %v2105 = vunpack.c.0.s8 %v2104
      %v2106 = vlaneseq
      %v2107 = vshrl.u32 %v2106, 7
      %v2108 = vsub.s32 %v2105, %v2107
      %v2109 = vrot.slane %v2095, %v2108
      %v2110 = vcombine.high %v2102, %v2102
      %v2111 = vcombine.high %v2109, %v2109
      %v2113 = vunpack.c.l.s4 1966171168
      %v2114 = vunpack.c.0.s8 %v2113
      %v2115 = vlaneseq
      %v2116 = vshrl.u32 %v2115, 7
      %v2117 = vsub.s32 %v2114, %v2116
      %v2118 = vrot.slane %v2102, %v2117
      %v2120 = vunpack.c.l.s4 1966171168
      %v2121 = vunpack.c.0.s8 %v2120
      %v2122 = vlaneseq
      %v2123 = vshrl.u32 %v2122, 7
      %v2124 = vsub.s32 %v2121, %v2123
      %v2125 = vrot.slane %v2109, %v2124
      %v2127 = vunpack.c.l.s4 1966171168
      %v2128 = vunpack.c.0.s8 %v2127
      %v2129 = vlaneseq
      %v2130 = vshrl.u32 %v2129, 7
      %v2131 = vsub.s32 %v2128, %v2130
      %v2132 = vrot.slane %v2110, %v2131
      %v2134 = vunpack.c.l.s4 1966171168
      %v2135 = vunpack.c.0.s8 %v2134
      %v2136 = vlaneseq
      %v2137 = vshrl.u32 %v2136, 7
      %v2138 = vsub.s32 %v2135, %v2137
      %v2139 = vrot.slane %v2111, %v2138
      %v2140 = vcombine.high %v2118, %v2118
      %v2141 = vcombine.high %v2125, %v2125
      %v2142 = vcombine.high %v2132, %v2132
      %v2143 = vcombine.high %v2139, %v2139
      %v2144 = vcombine.high %v2016, %v2016
      %v2146 = vunpack.c.l.s4 1966171168
      %v2147 = vunpack.c.0.s8 %v2146
      %v2148 = vlaneseq
      %v2149 = vshrl.u32 %v2148, 7
      %v2150 = vsub.s32 %v2147, %v2149
      %v2151 = vrot.slane %v2016, %v2150
      %v2153 = vunpack.c.l.s4 1966171168
      %v2154 = vunpack.c.0.s8 %v2153
      %v2155 = vlaneseq
      %v2156 = vshrl.u32 %v2155, 7
      %v2157 = vsub.s32 %v2154, %v2156
      %v2158 = vrot.slane %v2144, %v2157
      %v2159 = vcombine.high %v2151, %v2151
      %v2160 = vcombine.high %v2158, %v2158
      %v2162 = vunpack.c.l.s4 1966171168
      %v2163 = vunpack.c.0.s8 %v2162
      %v2164 = vlaneseq
      %v2165 = vshrl.u32 %v2164, 7
      %v2166 = vsub.s32 %v2163, %v2165
      %v2167 = vrot.slane %v2151, %v2166
      %v2169 = vunpack.c.l.s4 1966171168
      %v2170 = vunpack.c.0.s8 %v2169
      %v2171 = vlaneseq
      %v2172 = vshrl.u32 %v2171, 7
      %v2173 = vsub.s32 %v2170, %v2172
      %v2174 = vrot.slane %v2158, %v2173
      %v2176 = vunpack.c.l.s4 1966171168
      %v2177 = vunpack.c.0.s8 %v2176
      %v2178 = vlaneseq
      %v2179 = vshrl.u32 %v2178, 7
      %v2180 = vsub.s32 %v2177, %v2179
      %v2181 = vrot.slane %v2159, %v2180
      %v2183 = vunpack.c.l.s4 1966171168
      %v2184 = vunpack.c.0.s8 %v2183
      %v2185 = vlaneseq
      %v2186 = vshrl.u32 %v2185, 7
      %v2187 = vsub.s32 %v2184, %v2186
      %v2188 = vrot.slane %v2160, %v2187
      %v2189 = vcombine.high %v2167, %v2167
      %v2190 = vcombine.high %v2174, %v2174
      %v2191 = vcombine.high %v2181, %v2181
      %v2192 = vcombine.high %v2188, %v2188
      %v2193 = vcombine.high %v2017, %v2017
      %v2195 = vunpack.c.l.s4 1966171168
      %v2196 = vunpack.c.0.s8 %v2195
      %v2197 = vlaneseq
      %v2198 = vshrl.u32 %v2197, 7
      %v2199 = vsub.s32 %v2196, %v2198
      %v2200 = vrot.slane %v2017, %v2199
      %v2202 = vunpack.c.l.s4 1966171168
      %v2203 = vunpack.c.0.s8 %v2202
      %v2204 = vlaneseq
      %v2205 = vshrl.u32 %v2204, 7
      %v2206 = vsub.s32 %v2203, %v2205
      %v2207 = vrot.slane %v2193, %v2206
      %v2208 = vcombine.high %v2200, %v2200
      %v2209 = vcombine.high %v2207, %v2207
      %v2211 = vunpack.c.l.s4 1966171168
      %v2212 = vunpack.c.0.s8 %v2211
      %v2213 = vlaneseq
      %v2214 = vshrl.u32 %v2213, 7
      %v2215 = vsub.s32 %v2212, %v2214
      %v2216 = vrot.slane %v2200, %v2215
      %v2218 = vunpack.c.l.s4 1966171168
      %v2219 = vunpack.c.0.s8 %v2218
      %v2220 = vlaneseq
      %v2221 = vshrl.u32 %v2220, 7
      %v2222 = vsub.s32 %v2219, %v2221
      %v2223 = vrot.slane %v2207, %v2222
      %v2225 = vunpack.c.l.s4 1966171168
      %v2226 = vunpack.c.0.s8 %v2225
      %v2227 = vlaneseq
      %v2228 = vshrl.u32 %v2227, 7
      %v2229 = vsub.s32 %v2226, %v2228
      %v2230 = vrot.slane %v2208, %v2229
      %v2232 = vunpack.c.l.s4 1966171168
      %v2233 = vunpack.c.0.s8 %v2232
      %v2234 = vlaneseq
      %v2235 = vshrl.u32 %v2234, 7
      %v2236 = vsub.s32 %v2233, %v2235
      %v2237 = vrot.slane %v2209, %v2236
      %v2238 = vcombine.high %v2216, %v2216
      %v2239 = vcombine.high %v2223, %v2223
      %v2240 = vcombine.high %v2230, %v2230
      %v2241 = vcombine.high %v2237, %v2237
      %v2242 = vcombine.high %v2018, %v2018
      %v2244 = vunpack.c.l.s4 1966171168
      %v2245 = vunpack.c.0.s8 %v2244
      %v2246 = vlaneseq
      %v2247 = vshrl.u32 %v2246, 7
      %v2248 = vsub.s32 %v2245, %v2247
      %v2249 = vrot.slane %v2018, %v2248
      %v2251 = vunpack.c.l.s4 1966171168
      %v2252 = vunpack.c.0.s8 %v2251
      %v2253 = vlaneseq
      %v2254 = vshrl.u32 %v2253, 7
      %v2255 = vsub.s32 %v2252, %v2254
      %v2256 = vrot.slane %v2242, %v2255
      %v2257 = vcombine.high %v2249, %v2249
      %v2258 = vcombine.high %v2256, %v2256
      %v2260 = vunpack.c.l.s4 1966171168
      %v2261 = vunpack.c.0.s8 %v2260
      %v2262 = vlaneseq
      %v2263 = vshrl.u32 %v2262, 7
      %v2264 = vsub.s32 %v2261, %v2263
      %v2265 = vrot.slane %v2249, %v2264
      %v2267 = vunpack.c.l.s4 1966171168
      %v2268 = vunpack.c.0.s8 %v2267
      %v2269 = vlaneseq
      %v2270 = vshrl.u32 %v2269, 7
      %v2271 = vsub.s32 %v2268, %v2270
      %v2272 = vrot.slane %v2256, %v2271
      %v2274 = vunpack.c.l.s4 1966171168
      %v2275 = vunpack.c.0.s8 %v2274
      %v2276 = vlaneseq
      %v2277 = vshrl.u32 %v2276, 7
      %v2278 = vsub.s32 %v2275, %v2277
      %v2279 = vrot.slane %v2257, %v2278
      %v2281 = vunpack.c.l.s4 1966171168
      %v2282 = vunpack.c.0.s8 %v2281
      %v2283 = vlaneseq
      %v2284 = vshrl.u32 %v2283, 7
      %v2285 = vsub.s32 %v2282, %v2284
      %v2286 = vrot.slane %v2258, %v2285
      %v2287 = vcombine.high %v2265, %v2265
      %v2288 = vcombine.high %v2272, %v2272
      %v2289 = vcombine.high %v2279, %v2279
      %v2290 = vcombine.high %v2286, %v2286
      %v2291 = vcombine.high %v2019, %v2019
      %v2293 = vunpack.c.l.s4 1966171168
      %v2294 = vunpack.c.0.s8 %v2293
      %v2295 = vlaneseq
      %v2296 = vshrl.u32 %v2295, 7
      %v2297 = vsub.s32 %v2294, %v2296
      %v2298 = vrot.slane %v2019, %v2297
      %v2300 = vunpack.c.l.s4 1966171168
      %v2301 = vunpack.c.0.s8 %v2300
      %v2302 = vlaneseq
      %v2303 = vshrl.u32 %v2302, 7
      %v2304 = vsub.s32 %v2301, %v2303
      %v2305 = vrot.slane %v2291, %v2304
      %v2306 = vcombine.high %v2298, %v2298
      %v2307 = vcombine.high %v2305, %v2305
      %v2309 = vunpack.c.l.s4 1966171168
      %v2310 = vunpack.c.0.s8 %v2309
      %v2311 = vlaneseq
      %v2312 = vshrl.u32 %v2311, 7
      %v2313 = vsub.s32 %v2310, %v2312
      %v2314 = vrot.slane %v2298, %v2313
      %v2316 = vunpack.c.l.s4 1966171168
      %v2317 = vunpack.c.0.s8 %v2316
      %v2318 = vlaneseq
      %v2319 = vshrl.u32 %v2318, 7
      %v2320 = vsub.s32 %v2317, %v2319
      %v2321 = vrot.slane %v2305, %v2320
      %v2323 = vunpack.c.l.s4 1966171168
      %v2324 = vunpack.c.0.s8 %v2323
      %v2325 = vlaneseq
      %v2326 = vshrl.u32 %v2325, 7
      %v2327 = vsub.s32 %v2324, %v2326
      %v2328 = vrot.slane %v2306, %v2327
      %v2330 = vunpack.c.l.s4 1966171168
      %v2331 = vunpack.c.0.s8 %v2330
      %v2332 = vlaneseq
      %v2333 = vshrl.u32 %v2332, 7
      %v2334 = vsub.s32 %v2331, %v2333
      %v2335 = vrot.slane %v2307, %v2334
      %v2336 = vcombine.high %v2314, %v2314
      %v2337 = vcombine.high %v2321, %v2321
      %v2338 = vcombine.high %v2328, %v2328
      %v2339 = vcombine.high %v2335, %v2335
      %v2340 = vcombine.high %v2020, %v2020
      %v2342 = vunpack.c.l.s4 1966171168
      %v2343 = vunpack.c.0.s8 %v2342
      %v2344 = vlaneseq
      %v2345 = vshrl.u32 %v2344, 7
      %v2346 = vsub.s32 %v2343, %v2345
      %v2347 = vrot.slane %v2020, %v2346
      %v2349 = vunpack.c.l.s4 1966171168
      %v2350 = vunpack.c.0.s8 %v2349
      %v2351 = vlaneseq
      %v2352 = vshrl.u32 %v2351, 7
      %v2353 = vsub.s32 %v2350, %v2352
      %v2354 = vrot.slane %v2340, %v2353
      %v2355 = vcombine.high %v2347, %v2347
      %v2356 = vcombine.high %v2354, %v2354
      %v2358 = vunpack.c.l.s4 1966171168
      %v2359 = vunpack.c.0.s8 %v2358
      %v2360 = vlaneseq
      %v2361 = vshrl.u32 %v2360, 7
      %v2362 = vsub.s32 %v2359, %v2361
      %v2363 = vrot.slane %v2347, %v2362
      %v2365 = vunpack.c.l.s4 1966171168
      %v2366 = vunpack.c.0.s8 %v2365
      %v2367 = vlaneseq
      %v2368 = vshrl.u32 %v2367, 7
      %v2369 = vsub.s32 %v2366, %v2368
      %v2370 = vrot.slane %v2354, %v2369
      %v2372 = vunpack.c.l.s4 1966171168
      %v2373 = vunpack.c.0.s8 %v2372
      %v2374 = vlaneseq
      %v2375 = vshrl.u32 %v2374, 7
      %v2376 = vsub.s32 %v2373, %v2375
      %v2377 = vrot.slane %v2355, %v2376
      %v2379 = vunpack.c.l.s4 1966171168
      %v2380 = vunpack.c.0.s8 %v2379
      %v2381 = vlaneseq
      %v2382 = vshrl.u32 %v2381, 7
      %v2383 = vsub.s32 %v2380, %v2382
      %v2384 = vrot.slane %v2356, %v2383
      %v2385 = vcombine.high %v2363, %v2363
      %v2386 = vcombine.high %v2370, %v2370
      %v2387 = vcombine.high %v2377, %v2377
      %v2388 = vcombine.high %v2384, %v2384
      %v2389 = vcombine.high %v2021, %v2021
      %v2391 = vunpack.c.l.s4 1966171168
      %v2392 = vunpack.c.0.s8 %v2391
      %v2393 = vlaneseq
      %v2394 = vshrl.u32 %v2393, 7
      %v2395 = vsub.s32 %v2392, %v2394
      %v2396 = vrot.slane %v2021, %v2395
      %v2398 = vunpack.c.l.s4 1966171168
      %v2399 = vunpack.c.0.s8 %v2398
      %v2400 = vlaneseq
      %v2401 = vshrl.u32 %v2400, 7
      %v2402 = vsub.s32 %v2399, %v2401
      %v2403 = vrot.slane %v2389, %v2402
      %v2404 = vcombine.high %v2396, %v2396
      %v2405 = vcombine.high %v2403, %v2403
      %v2407 = vunpack.c.l.s4 1966171168
      %v2408 = vunpack.c.0.s8 %v2407
      %v2409 = vlaneseq
      %v2410 = vshrl.u32 %v2409, 7
      %v2411 = vsub.s32 %v2408, %v2410
      %v2412 = vrot.slane %v2396, %v2411
      %v2414 = vunpack.c.l.s4 1966171168
      %v2415 = vunpack.c.0.s8 %v2414
      %v2416 = vlaneseq
      %v2417 = vshrl.u32 %v2416, 7
      %v2418 = vsub.s32 %v2415, %v2417
      %v2419 = vrot.slane %v2403, %v2418
      %v2421 = vunpack.c.l.s4 1966171168
      %v2422 = vunpack.c.0.s8 %v2421
      %v2423 = vlaneseq
      %v2424 = vshrl.u32 %v2423, 7
      %v2425 = vsub.s32 %v2422, %v2424
      %v2426 = vrot.slane %v2404, %v2425
      %v2428 = vunpack.c.l.s4 1966171168
      %v2429 = vunpack.c.0.s8 %v2428
      %v2430 = vlaneseq
      %v2431 = vshrl.u32 %v2430, 7
      %v2432 = vsub.s32 %v2429, %v2431
      %v2433 = vrot.slane %v2405, %v2432
      %v2434 = vcombine.high %v2412, %v2412
      %v2435 = vcombine.high %v2419, %v2419
      %v2436 = vcombine.high %v2426, %v2426
      %v2437 = vcombine.high %v2433, %v2433
      %v2438 = vcombine.high %v2022, %v2022
      %v2440 = vunpack.c.l.s4 1966171168
      %v2441 = vunpack.c.0.s8 %v2440
      %v2442 = vlaneseq
      %v2443 = vshrl.u32 %v2442, 7
      %v2444 = vsub.s32 %v2441, %v2443
      %v2445 = vrot.slane %v2022, %v2444
      %v2447 = vunpack.c.l.s4 1966171168
      %v2448 = vunpack.c.0.s8 %v2447
      %v2449 = vlaneseq
      %v2450 = vshrl.u32 %v2449, 7
      %v2451 = vsub.s32 %v2448, %v2450
      %v2452 = vrot.slane %v2438, %v2451
      %v2453 = vcombine.high %v2445, %v2445
      %v2454 = vcombine.high %v2452, %v2452
      %v2456 = vunpack.c.l.s4 1966171168
      %v2457 = vunpack.c.0.s8 %v2456
      %v2458 = vlaneseq
      %v2459 = vshrl.u32 %v2458, 7
      %v2460 = vsub.s32 %v2457, %v2459
      %v2461 = vrot.slane %v2445, %v2460
      %v2463 = vunpack.c.l.s4 1966171168
      %v2464 = vunpack.c.0.s8 %v2463
      %v2465 = vlaneseq
      %v2466 = vshrl.u32 %v2465, 7
      %v2467 = vsub.s32 %v2464, %v2466
      %v2468 = vrot.slane %v2452, %v2467
      %v2470 = vunpack.c.l.s4 1966171168
      %v2471 = vunpack.c.0.s8 %v2470
      %v2472 = vlaneseq
      %v2473 = vshrl.u32 %v2472, 7
      %v2474 = vsub.s32 %v2471, %v2473
      %v2475 = vrot.slane %v2453, %v2474
      %v2477 = vunpack.c.l.s4 1966171168
      %v2478 = vunpack.c.0.s8 %v2477
      %v2479 = vlaneseq
      %v2480 = vshrl.u32 %v2479, 7
      %v2481 = vsub.s32 %v2478, %v2480
      %v2482 = vrot.slane %v2454, %v2481
      %v2483 = vcombine.high %v2461, %v2461
      %v2484 = vcombine.high %v2468, %v2468
      %v2485 = vcombine.high %v2475, %v2475
      %v2486 = vcombine.high %v2482, %v2482
      %v2487 = vcombine.high %v2023, %v2023
      %v2489 = vunpack.c.l.s4 1966171168
      %v2490 = vunpack.c.0.s8 %v2489
      %v2491 = vlaneseq
      %v2492 = vshrl.u32 %v2491, 7
      %v2493 = vsub.s32 %v2490, %v2492
      %v2494 = vrot.slane %v2023, %v2493
      %v2496 = vunpack.c.l.s4 1966171168
      %v2497 = vunpack.c.0.s8 %v2496
      %v2498 = vlaneseq
      %v2499 = vshrl.u32 %v2498, 7
      %v2500 = vsub.s32 %v2497, %v2499
      %v2501 = vrot.slane %v2487, %v2500
      %v2502 = vcombine.high %v2494, %v2494
      %v2503 = vcombine.high %v2501, %v2501
      %v2505 = vunpack.c.l.s4 1966171168
      %v2506 = vunpack.c.0.s8 %v2505
      %v2507 = vlaneseq
      %v2508 = vshrl.u32 %v2507, 7
      %v2509 = vsub.s32 %v2506, %v2508
      %v2510 = vrot.slane %v2494, %v2509
      %v2512 = vunpack.c.l.s4 1966171168
      %v2513 = vunpack.c.0.s8 %v2512
      %v2514 = vlaneseq
      %v2515 = vshrl.u32 %v2514, 7
      %v2516 = vsub.s32 %v2513, %v2515
      %v2517 = vrot.slane %v2501, %v2516
      %v2519 = vunpack.c.l.s4 1966171168
      %v2520 = vunpack.c.0.s8 %v2519
      %v2521 = vlaneseq
      %v2522 = vshrl.u32 %v2521, 7
      %v2523 = vsub.s32 %v2520, %v2522
      %v2524 = vrot.slane %v2502, %v2523
      %v2526 = vunpack.c.l.s4 1966171168
      %v2527 = vunpack.c.0.s8 %v2526
      %v2528 = vlaneseq
      %v2529 = vshrl.u32 %v2528, 7
      %v2530 = vsub.s32 %v2527, %v2529
      %v2531 = vrot.slane %v2503, %v2530
      %v2532 = vcombine.high %v2510, %v2510
      %v2533 = vcombine.high %v2517, %v2517
      %v2534 = vcombine.high %v2524, %v2524
      %v2535 = vcombine.high %v2531, %v2531
      %v2536 = vcombine.high %v2024, %v2024
      %v2538 = vunpack.c.l.s4 1966171168
      %v2539 = vunpack.c.0.s8 %v2538
      %v2540 = vlaneseq
      %v2541 = vshrl.u32 %v2540, 7
      %v2542 = vsub.s32 %v2539, %v2541
      %v2543 = vrot.slane %v2024, %v2542
      %v2545 = vunpack.c.l.s4 1966171168
      %v2546 = vunpack.c.0.s8 %v2545
      %v2547 = vlaneseq
      %v2548 = vshrl.u32 %v2547, 7
      %v2549 = vsub.s32 %v2546, %v2548
      %v2550 = vrot.slane %v2536, %v2549
      %v2551 = vcombine.high %v2543, %v2543
      %v2552 = vcombine.high %v2550, %v2550
      %v2554 = vunpack.c.l.s4 1966171168
      %v2555 = vunpack.c.0.s8 %v2554
      %v2556 = vlaneseq
      %v2557 = vshrl.u32 %v2556, 7
      %v2558 = vsub.s32 %v2555, %v2557
      %v2559 = vrot.slane %v2543, %v2558
      %v2561 = vunpack.c.l.s4 1966171168
      %v2562 = vunpack.c.0.s8 %v2561
      %v2563 = vlaneseq
      %v2564 = vshrl.u32 %v2563, 7
      %v2565 = vsub.s32 %v2562, %v2564
      %v2566 = vrot.slane %v2550, %v2565
      %v2568 = vunpack.c.l.s4 1966171168
      %v2569 = vunpack.c.0.s8 %v2568
      %v2570 = vlaneseq
      %v2571 = vshrl.u32 %v2570, 7
      %v2572 = vsub.s32 %v2569, %v2571
      %v2573 = vrot.slane %v2551, %v2572
      %v2575 = vunpack.c.l.s4 1966171168
      %v2576 = vunpack.c.0.s8 %v2575
      %v2577 = vlaneseq
      %v2578 = vshrl.u32 %v2577, 7
      %v2579 = vsub.s32 %v2576, %v2578
      %v2580 = vrot.slane %v2552, %v2579
      %v2581 = vcombine.high %v2559, %v2559
      %v2582 = vcombine.high %v2566, %v2566
      %v2583 = vcombine.high %v2573, %v2573
      %v2584 = vcombine.high %v2580, %v2580
      %v2585 = vcombine.high %v2025, %v2025
      %v2587 = vunpack.c.l.s4 1966171168
      %v2588 = vunpack.c.0.s8 %v2587
      %v2589 = vlaneseq
      %v2590 = vshrl.u32 %v2589, 7
      %v2591 = vsub.s32 %v2588, %v2590
      %v2592 = vrot.slane %v2025, %v2591
      %v2594 = vunpack.c.l.s4 1966171168
      %v2595 = vunpack.c.0.s8 %v2594
      %v2596 = vlaneseq
      %v2597 = vshrl.u32 %v2596, 7
      %v2598 = vsub.s32 %v2595, %v2597
      %v2599 = vrot.slane %v2585, %v2598
      %v2600 = vcombine.high %v2592, %v2592
      %v2601 = vcombine.high %v2599, %v2599
      %v2603 = vunpack.c.l.s4 1966171168
      %v2604 = vunpack.c.0.s8 %v2603
      %v2605 = vlaneseq
      %v2606 = vshrl.u32 %v2605, 7
      %v2607 = vsub.s32 %v2604, %v2606
      %v2608 = vrot.slane %v2592, %v2607
      %v2610 = vunpack.c.l.s4 1966171168
      %v2611 = vunpack.c.0.s8 %v2610
      %v2612 = vlaneseq
      %v2613 = vshrl.u32 %v2612, 7
      %v2614 = vsub.s32 %v2611, %v2613
      %v2615 = vrot.slane %v2599, %v2614
      %v2617 = vunpack.c.l.s4 1966171168
      %v2618 = vunpack.c.0.s8 %v2617
      %v2619 = vlaneseq
      %v2620 = vshrl.u32 %v2619, 7
      %v2621 = vsub.s32 %v2618, %v2620
      %v2622 = vrot.slane %v2600, %v2621
      %v2624 = vunpack.c.l.s4 1966171168
      %v2625 = vunpack.c.0.s8 %v2624
      %v2626 = vlaneseq
      %v2627 = vshrl.u32 %v2626, 7
      %v2628 = vsub.s32 %v2625, %v2627
      %v2629 = vrot.slane %v2601, %v2628
      %v2630 = vcombine.high %v2608, %v2608
      %v2631 = vcombine.high %v2615, %v2615
      %v2632 = vcombine.high %v2622, %v2622
      %v2633 = vcombine.high %v2629, %v2629
      %v2634 = vcombine.high %v2026, %v2026
      %v2636 = vunpack.c.l.s4 1966171168
      %v2637 = vunpack.c.0.s8 %v2636
      %v2638 = vlaneseq
      %v2639 = vshrl.u32 %v2638, 7
      %v2640 = vsub.s32 %v2637, %v2639
      %v2641 = vrot.slane %v2026, %v2640
      %v2643 = vunpack.c.l.s4 1966171168
      %v2644 = vunpack.c.0.s8 %v2643
      %v2645 = vlaneseq
      %v2646 = vshrl.u32 %v2645, 7
      %v2647 = vsub.s32 %v2644, %v2646
      %v2648 = vrot.slane %v2634, %v2647
      %v2649 = vcombine.high %v2641, %v2641
      %v2650 = vcombine.high %v2648, %v2648
      %v2652 = vunpack.c.l.s4 1966171168
      %v2653 = vunpack.c.0.s8 %v2652
      %v2654 = vlaneseq
      %v2655 = vshrl.u32 %v2654, 7
      %v2656 = vsub.s32 %v2653, %v2655
      %v2657 = vrot.slane %v2641, %v2656
      %v2659 = vunpack.c.l.s4 1966171168
      %v2660 = vunpack.c.0.s8 %v2659
      %v2661 = vlaneseq
      %v2662 = vshrl.u32 %v2661, 7
      %v2663 = vsub.s32 %v2660, %v2662
      %v2664 = vrot.slane %v2648, %v2663
      %v2666 = vunpack.c.l.s4 1966171168
      %v2667 = vunpack.c.0.s8 %v2666
      %v2668 = vlaneseq
      %v2669 = vshrl.u32 %v2668, 7
      %v2670 = vsub.s32 %v2667, %v2669
      %v2671 = vrot.slane %v2649, %v2670
      %v2673 = vunpack.c.l.s4 1966171168
      %v2674 = vunpack.c.0.s8 %v2673
      %v2675 = vlaneseq
      %v2676 = vshrl.u32 %v2675, 7
      %v2677 = vsub.s32 %v2674, %v2676
      %v2678 = vrot.slane %v2650, %v2677
      %v2679 = vcombine.high %v2657, %v2657
      %v2680 = vcombine.high %v2664, %v2664
      %v2681 = vcombine.high %v2671, %v2671
      %v2682 = vcombine.high %v2678, %v2678
      %v2683 = vcombine.high %v2027, %v2027
      %v2685 = vunpack.c.l.s4 1966171168
      %v2686 = vunpack.c.0.s8 %v2685
      %v2687 = vlaneseq
      %v2688 = vshrl.u32 %v2687, 7
      %v2689 = vsub.s32 %v2686, %v2688
      %v2690 = vrot.slane %v2027, %v2689
      %v2692 = vunpack.c.l.s4 1966171168
      %v2693 = vunpack.c.0.s8 %v2692
      %v2694 = vlaneseq
      %v2695 = vshrl.u32 %v2694, 7
      %v2696 = vsub.s32 %v2693, %v2695
      %v2697 = vrot.slane %v2683, %v2696
      %v2698 = vcombine.high %v2690, %v2690
      %v2699 = vcombine.high %v2697, %v2697
      %v2701 = vunpack.c.l.s4 1966171168
      %v2702 = vunpack.c.0.s8 %v2701
      %v2703 = vlaneseq
      %v2704 = vshrl.u32 %v2703, 7
      %v2705 = vsub.s32 %v2702, %v2704
      %v2706 = vrot.slane %v2690, %v2705
      %v2708 = vunpack.c.l.s4 1966171168
      %v2709 = vunpack.c.0.s8 %v2708
      %v2710 = vlaneseq
      %v2711 = vshrl.u32 %v2710, 7
      %v2712 = vsub.s32 %v2709, %v2711
      %v2713 = vrot.slane %v2697, %v2712
      %v2715 = vunpack.c.l.s4 1966171168
      %v2716 = vunpack.c.0.s8 %v2715
      %v2717 = vlaneseq
      %v2718 = vshrl.u32 %v2717, 7
      %v2719 = vsub.s32 %v2716, %v2718
      %v2720 = vrot.slane %v2698, %v2719
      %v2722 = vunpack.c.l.s4 1966171168
      %v2723 = vunpack.c.0.s8 %v2722
      %v2724 = vlaneseq
      %v2725 = vshrl.u32 %v2724, 7
      %v2726 = vsub.s32 %v2723, %v2725
      %v2727 = vrot.slane %v2699, %v2726
      %v2728 = vcombine.high %v2706, %v2706
      %v2729 = vcombine.high %v2713, %v2713
      %v2730 = vcombine.high %v2720, %v2720
      %v2731 = vcombine.high %v2727, %v2727
      %v2732 = vcombine.high %v2028, %v2028
      %v2734 = vunpack.c.l.s4 1966171168
      %v2735 = vunpack.c.0.s8 %v2734
      %v2736 = vlaneseq
      %v2737 = vshrl.u32 %v2736, 7
      %v2738 = vsub.s32 %v2735, %v2737
      %v2739 = vrot.slane %v2028, %v2738
      %v2741 = vunpack.c.l.s4 1966171168
      %v2742 = vunpack.c.0.s8 %v2741
      %v2743 = vlaneseq
      %v2744 = vshrl.u32 %v2743, 7
      %v2745 = vsub.s32 %v2742, %v2744
      %v2746 = vrot.slane %v2732, %v2745
      %v2747 = vcombine.high %v2739, %v2739
      %v2748 = vcombine.high %v2746, %v2746
      %v2750 = vunpack.c.l.s4 1966171168
      %v2751 = vunpack.c.0.s8 %v2750
      %v2752 = vlaneseq
      %v2753 = vshrl.u32 %v2752, 7
      %v2754 = vsub.s32 %v2751, %v2753
      %v2755 = vrot.slane %v2739, %v2754
      %v2757 = vunpack.c.l.s4 1966171168
      %v2758 = vunpack.c.0.s8 %v2757
      %v2759 = vlaneseq
      %v2760 = vshrl.u32 %v2759, 7
      %v2761 = vsub.s32 %v2758, %v2760
      %v2762 = vrot.slane %v2746, %v2761
      %v2764 = vunpack.c.l.s4 1966171168
      %v2765 = vunpack.c.0.s8 %v2764
      %v2766 = vlaneseq
      %v2767 = vshrl.u32 %v2766, 7
      %v2768 = vsub.s32 %v2765, %v2767
      %v2769 = vrot.slane %v2747, %v2768
      %v2771 = vunpack.c.l.s4 1966171168
      %v2772 = vunpack.c.0.s8 %v2771
      %v2773 = vlaneseq
      %v2774 = vshrl.u32 %v2773, 7
      %v2775 = vsub.s32 %v2772, %v2774
      %v2776 = vrot.slane %v2748, %v2775
      %v2777 = vcombine.high %v2755, %v2755
      %v2778 = vcombine.high %v2762, %v2762
      %v2779 = vcombine.high %v2769, %v2769
      %v2780 = vcombine.high %v2776, %v2776
      %v2781 = vcombine.high %v2029, %v2029
      %v2783 = vunpack.c.l.s4 1966171168
      %v2784 = vunpack.c.0.s8 %v2783
      %v2785 = vlaneseq
      %v2786 = vshrl.u32 %v2785, 7
      %v2787 = vsub.s32 %v2784, %v2786
      %v2788 = vrot.slane %v2029, %v2787
      %v2790 = vunpack.c.l.s4 1966171168
      %v2791 = vunpack.c.0.s8 %v2790
      %v2792 = vlaneseq
      %v2793 = vshrl.u32 %v2792, 7
      %v2794 = vsub.s32 %v2791, %v2793
      %v2795 = vrot.slane %v2781, %v2794
      %v2796 = vcombine.high %v2788, %v2788
      %v2797 = vcombine.high %v2795, %v2795
      %v2799 = vunpack.c.l.s4 1966171168
      %v2800 = vunpack.c.0.s8 %v2799
      %v2801 = vlaneseq
      %v2802 = vshrl.u32 %v2801, 7
      %v2803 = vsub.s32 %v2800, %v2802
      %v2804 = vrot.slane %v2788, %v2803
      %v2806 = vunpack.c.l.s4 1966171168
      %v2807 = vunpack.c.0.s8 %v2806
      %v2808 = vlaneseq
      %v2809 = vshrl.u32 %v2808, 7
      %v2810 = vsub.s32 %v2807, %v2809
      %v2811 = vrot.slane %v2795, %v2810
      %v2813 = vunpack.c.l.s4 1966171168
      %v2814 = vunpack.c.0.s8 %v2813
      %v2815 = vlaneseq
      %v2816 = vshrl.u32 %v2815, 7
      %v2817 = vsub.s32 %v2814, %v2816
      %v2818 = vrot.slane %v2796, %v2817
      %v2820 = vunpack.c.l.s4 1966171168
      %v2821 = vunpack.c.0.s8 %v2820
      %v2822 = vlaneseq
      %v2823 = vshrl.u32 %v2822, 7
      %v2824 = vsub.s32 %v2821, %v2823
      %v2825 = vrot.slane %v2797, %v2824
      %v2826 = vcombine.high %v2804, %v2804
      %v2827 = vcombine.high %v2811, %v2811
      %v2828 = vcombine.high %v2818, %v2818
      %v2829 = vcombine.high %v2825, %v2825
      %v2830 = vlaneseq
      %v2831 = vshrl.u32 %v2830, 7
      %v2832 = vsub.s32 0, %v2831
      %v2833 = vrot.slane %v2069, %v2832
      %v2834 = vlaneseq
      %v2835 = vshrl.u32 %v2834, 7
      %v2836 = vsub.s32 0, %v2835
      %v2837 = vrot.slane %v2083, %v2836
      %v2838 = vlaneseq
      %v2839 = vshrl.u32 %v2838, 7
      %v2840 = vsub.s32 0, %v2839
      %v2841 = vrot.slane %v2091, %v2840
      %v2842 = vlaneseq
      %v2843 = vshrl.u32 %v2842, 7
      %v2844 = vsub.s32 0, %v2843
      %v2845 = vrot.slane %v2093, %v2844
      %v2846 = vlaneseq
      %v2847 = vshrl.u32 %v2846, 7
      %v2848 = vsub.s32 0, %v2847
      %v2849 = vrot.slane %v2076, %v2848
      %v2850 = vlaneseq
      %v2851 = vshrl.u32 %v2850, 7
      %v2852 = vsub.s32 0, %v2851
      %v2853 = vrot.slane %v2090, %v2852
      %v2854 = vlaneseq
      %v2855 = vshrl.u32 %v2854, 7
      %v2856 = vsub.s32 0, %v2855
      %v2857 = vrot.slane %v2092, %v2856
      %v2858 = vlaneseq
      %v2859 = vshrl.u32 %v2858, 7
      %v2860 = vsub.s32 0, %v2859
      %v2861 = vrot.slane %v2094, %v2860
      %v2862 = vlaneseq
      %v2863 = vshrl.u32 %v2862, 7
      %v2864 = vsub.s32 0, %v2863
      %v2865 = vrot.slane %v2118, %v2864
      %v2866 = vlaneseq
      %v2867 = vshrl.u32 %v2866, 7
      %v2868 = vsub.s32 0, %v2867
      %v2869 = vrot.slane %v2132, %v2868
      %v2870 = vlaneseq
      %v2871 = vshrl.u32 %v2870, 7
      %v2872 = vsub.s32 0, %v2871
      %v2873 = vrot.slane %v2140, %v2872
      %v2874 = vlaneseq
      %v2875 = vshrl.u32 %v2874, 7
      %v2876 = vsub.s32 0, %v2875
      %v2877 = vrot.slane %v2142, %v2876
      %v2878 = vlaneseq
      %v2879 = vshrl.u32 %v2878, 7
      %v2880 = vsub.s32 0, %v2879
      %v2881 = vrot.slane %v2125, %v2880
      %v2882 = vlaneseq
      %v2883 = vshrl.u32 %v2882, 7
      %v2884 = vsub.s32 0, %v2883
      %v2885 = vrot.slane %v2139, %v2884
      %v2886 = vlaneseq
      %v2887 = vshrl.u32 %v2886, 7
      %v2888 = vsub.s32 0, %v2887
      %v2889 = vrot.slane %v2141, %v2888
      %v2890 = vlaneseq
      %v2891 = vshrl.u32 %v2890, 7
      %v2892 = vsub.s32 0, %v2891
      %v2893 = vrot.slane %v2143, %v2892
      %v2894 = vlaneseq
      %v2895 = vshrl.u32 %v2894, 7
      %v2896 = vsub.s32 0, %v2895
      %v2897 = vrot.slane %v2167, %v2896
      %v2898 = vlaneseq
      %v2899 = vshrl.u32 %v2898, 7
      %v2900 = vsub.s32 0, %v2899
      %v2901 = vrot.slane %v2181, %v2900
      %v2902 = vlaneseq
      %v2903 = vshrl.u32 %v2902, 7
      %v2904 = vsub.s32 0, %v2903
      %v2905 = vrot.slane %v2189, %v2904
      %v2906 = vlaneseq
      %v2907 = vshrl.u32 %v2906, 7
      %v2908 = vsub.s32 0, %v2907
      %v2909 = vrot.slane %v2191, %v2908
      %v2910 = vlaneseq
      %v2911 = vshrl.u32 %v2910, 7
      %v2912 = vsub.s32 0, %v2911
      %v2913 = vrot.slane %v2174, %v2912
      %v2914 = vlaneseq
      %v2915 = vshrl.u32 %v2914, 7
      %v2916 = vsub.s32 0, %v2915
      %v2917 = vrot.slane %v2188, %v2916
      %v2918 = vlaneseq
      %v2919 = vshrl.u32 %v2918, 7
      %v2920 = vsub.s32 0, %v2919
      %v2921 = vrot.slane %v2190, %v2920
      %v2922 = vlaneseq
      %v2923 = vshrl.u32 %v2922, 7
      %v2924 = vsub.s32 0, %v2923
      %v2925 = vrot.slane %v2192, %v2924
      %v2926 = vlaneseq
      %v2927 = vshrl.u32 %v2926, 7
      %v2928 = vsub.s32 0, %v2927
      %v2929 = vrot.slane %v2216, %v2928
      %v2930 = vlaneseq
      %v2931 = vshrl.u32 %v2930, 7
      %v2932 = vsub.s32 0, %v2931
      %v2933 = vrot.slane %v2230, %v2932
      %v2934 = vlaneseq
      %v2935 = vshrl.u32 %v2934, 7
      %v2936 = vsub.s32 0, %v2935
      %v2937 = vrot.slane %v2238, %v2936
      %v2938 = vlaneseq
      %v2939 = vshrl.u32 %v2938, 7
      %v2940 = vsub.s32 0, %v2939
      %v2941 = vrot.slane %v2240, %v2940
      %v2942 = vlaneseq
      %v2943 = vshrl.u32 %v2942, 7
      %v2944 = vsub.s32 0, %v2943
      %v2945 = vrot.slane %v2223, %v2944
      %v2946 = vlaneseq
      %v2947 = vshrl.u32 %v2946, 7
      %v2948 = vsub.s32 0, %v2947
      %v2949 = vrot.slane %v2237, %v2948
      %v2950 = vlaneseq
      %v2951 = vshrl.u32 %v2950, 7
      %v2952 = vsub.s32 0, %v2951
      %v2953 = vrot.slane %v2239, %v2952
      %v2954 = vlaneseq
      %v2955 = vshrl.u32 %v2954, 7
      %v2956 = vsub.s32 0, %v2955
      %v2957 = vrot.slane %v2241, %v2956
      %v2958 = vlaneseq
      %v2959 = vshrl.u32 %v2958, 7
      %v2960 = vsub.s32 0, %v2959
      %v2961 = vrot.slane %v2265, %v2960
      %v2962 = vlaneseq
      %v2963 = vshrl.u32 %v2962, 7
      %v2964 = vsub.s32 0, %v2963
      %v2965 = vrot.slane %v2279, %v2964
      %v2966 = vlaneseq
      %v2967 = vshrl.u32 %v2966, 7
      %v2968 = vsub.s32 0, %v2967
      %v2969 = vrot.slane %v2287, %v2968
      %v2970 = vlaneseq
      %v2971 = vshrl.u32 %v2970, 7
      %v2972 = vsub.s32 0, %v2971
      %v2973 = vrot.slane %v2289, %v2972
      %v2974 = vlaneseq
      %v2975 = vshrl.u32 %v2974, 7
      %v2976 = vsub.s32 0, %v2975
      %v2977 = vrot.slane %v2272, %v2976
      %v2978 = vlaneseq
      %v2979 = vshrl.u32 %v2978, 7
      %v2980 = vsub.s32 0, %v2979
      %v2981 = vrot.slane %v2286, %v2980
      %v2982 = vlaneseq
      %v2983 = vshrl.u32 %v2982, 7
      %v2984 = vsub.s32 0, %v2983
      %v2985 = vrot.slane %v2288, %v2984
      %v2986 = vlaneseq
      %v2987 = vshrl.u32 %v2986, 7
      %v2988 = vsub.s32 0, %v2987
      %v2989 = vrot.slane %v2290, %v2988
      %v2990 = vlaneseq
      %v2991 = vshrl.u32 %v2990, 7
      %v2992 = vsub.s32 0, %v2991
      %v2993 = vrot.slane %v2314, %v2992
      %v2994 = vlaneseq
      %v2995 = vshrl.u32 %v2994, 7
      %v2996 = vsub.s32 0, %v2995
      %v2997 = vrot.slane %v2328, %v2996
      %v2998 = vlaneseq
      %v2999 = vshrl.u32 %v2998, 7
      %v3000 = vsub.s32 0, %v2999
      %v3001 = vrot.slane %v2336, %v3000
      %v3002 = vlaneseq
      %v3003 = vshrl.u32 %v3002, 7
      %v3004 = vsub.s32 0, %v3003
      %v3005 = vrot.slane %v2338, %v3004
      %v3006 = vlaneseq
      %v3007 = vshrl.u32 %v3006, 7
      %v3008 = vsub.s32 0, %v3007
      %v3009 = vrot.slane %v2321, %v3008
      %v3010 = vlaneseq
      %v3011 = vshrl.u32 %v3010, 7
      %v3012 = vsub.s32 0, %v3011
      %v3013 = vrot.slane %v2335, %v3012
      %v3014 = vlaneseq
      %v3015 = vshrl.u32 %v3014, 7
      %v3016 = vsub.s32 0, %v3015
      %v3017 = vrot.slane %v2337, %v3016
      %v3018 = vlaneseq
      %v3019 = vshrl.u32 %v3018, 7
      %v3020 = vsub.s32 0, %v3019
      %v3021 = vrot.slane %v2339, %v3020
      %v3022 = vlaneseq
      %v3023 = vshrl.u32 %v3022, 7
      %v3024 = vsub.s32 0, %v3023
      %v3025 = vrot.slane %v2363, %v3024
      %v3026 = vlaneseq
      %v3027 = vshrl.u32 %v3026, 7
      %v3028 = vsub.s32 0, %v3027
      %v3029 = vrot.slane %v2377, %v3028
      %v3030 = vlaneseq
      %v3031 = vshrl.u32 %v3030, 7
      %v3032 = vsub.s32 0, %v3031
      %v3033 = vrot.slane %v2385, %v3032
      %v3034 = vlaneseq
      %v3035 = vshrl.u32 %v3034, 7
      %v3036 = vsub.s32 0, %v3035
      %v3037 = vrot.slane %v2387, %v3036
      %v3038 = vlaneseq
      %v3039 = vshrl.u32 %v3038, 7
      %v3040 = vsub.s32 0, %v3039
      %v3041 = vrot.slane %v2370, %v3040
      %v3042 = vlaneseq
      %v3043 = vshrl.u32 %v3042, 7
      %v3044 = vsub.s32 0, %v3043
      %v3045 = vrot.slane %v2384, %v3044
      %v3046 = vlaneseq
      %v3047 = vshrl.u32 %v3046, 7
      %v3048 = vsub.s32 0, %v3047
      %v3049 = vrot.slane %v2386, %v3048
      %v3050 = vlaneseq
      %v3051 = vshrl.u32 %v3050, 7
      %v3052 = vsub.s32 0, %v3051
      %v3053 = vrot.slane %v2388, %v3052
      %v3054 = vlaneseq
      %v3055 = vshrl.u32 %v3054, 7
      %v3056 = vsub.s32 0, %v3055
      %v3057 = vrot.slane %v2412, %v3056
      %v3058 = vlaneseq
      %v3059 = vshrl.u32 %v3058, 7
      %v3060 = vsub.s32 0, %v3059
      %v3061 = vrot.slane %v2426, %v3060
      %v3062 = vlaneseq
      %v3063 = vshrl.u32 %v3062, 7
      %v3064 = vsub.s32 0, %v3063
      %v3065 = vrot.slane %v2434, %v3064
      %v3066 = vlaneseq
      %v3067 = vshrl.u32 %v3066, 7
      %v3068 = vsub.s32 0, %v3067
      %v3069 = vrot.slane %v2436, %v3068
      %v3070 = vlaneseq
      %v3071 = vshrl.u32 %v3070, 7
      %v3072 = vsub.s32 0, %v3071
      %v3073 = vrot.slane %v2419, %v3072
      %v3074 = vlaneseq
      %v3075 = vshrl.u32 %v3074, 7
      %v3076 = vsub.s32 0, %v3075
      %v3077 = vrot.slane %v2433, %v3076
      %v3078 = vlaneseq
      %v3079 = vshrl.u32 %v3078, 7
      %v3080 = vsub.s32 0, %v3079
      %v3081 = vrot.slane %v2435, %v3080
      %v3082 = vlaneseq
      %v3083 = vshrl.u32 %v3082, 7
      %v3084 = vsub.s32 0, %v3083
      %v3085 = vrot.slane %v2437, %v3084
      %v3086 = vlaneseq
      %v3087 = vshrl.u32 %v3086, 7
      %v3088 = vsub.s32 0, %v3087
      %v3089 = vrot.slane %v2461, %v3088
      %v3090 = vlaneseq
      %v3091 = vshrl.u32 %v3090, 7
      %v3092 = vsub.s32 0, %v3091
      %v3093 = vrot.slane %v2475, %v3092
      %v3094 = vlaneseq
      %v3095 = vshrl.u32 %v3094, 7
      %v3096 = vsub.s32 0, %v3095
      %v3097 = vrot.slane %v2483, %v3096
      %v3098 = vlaneseq
      %v3099 = vshrl.u32 %v3098, 7
      %v3100 = vsub.s32 0, %v3099
      %v3101 = vrot.slane %v2485, %v3100
      %v3102 = vlaneseq
      %v3103 = vshrl.u32 %v3102, 7
      %v3104 = vsub.s32 0, %v3103
      %v3105 = vrot.slane %v2468, %v3104
      %v3106 = vlaneseq
      %v3107 = vshrl.u32 %v3106, 7
      %v3108 = vsub.s32 0, %v3107
      %v3109 = vrot.slane %v2482, %v3108
      %v3110 = vlaneseq
      %v3111 = vshrl.u32 %v3110, 7
      %v3112 = vsub.s32 0, %v3111
      %v3113 = vrot.slane %v2484, %v3112
      %v3114 = vlaneseq
      %v3115 = vshrl.u32 %v3114, 7
      %v3116 = vsub.s32 0, %v3115
      %v3117 = vrot.slane %v2486, %v3116
      %v3118 = vlaneseq
      %v3119 = vshrl.u32 %v3118, 7
      %v3120 = vsub.s32 0, %v3119
      %v3121 = vrot.slane %v2510, %v3120
      %v3122 = vlaneseq
      %v3123 = vshrl.u32 %v3122, 7
      %v3124 = vsub.s32 0, %v3123
      %v3125 = vrot.slane %v2524, %v3124
      %v3126 = vlaneseq
      %v3127 = vshrl.u32 %v3126, 7
      %v3128 = vsub.s32 0, %v3127
      %v3129 = vrot.slane %v2532, %v3128
      %v3130 = vlaneseq
      %v3131 = vshrl.u32 %v3130, 7
      %v3132 = vsub.s32 0, %v3131
      %v3133 = vrot.slane %v2534, %v3132
      %v3134 = vlaneseq
      %v3135 = vshrl.u32 %v3134, 7
      %v3136 = vsub.s32 0, %v3135
      %v3137 = vrot.slane %v2517, %v3136
      %v3138 = vlaneseq
      %v3139 = vshrl.u32 %v3138, 7
      %v3140 = vsub.s32 0, %v3139
      %v3141 = vrot.slane %v2531, %v3140
      %v3142 = vlaneseq
      %v3143 = vshrl.u32 %v3142, 7
      %v3144 = vsub.s32 0, %v3143
      %v3145 = vrot.slane %v2533, %v3144
      %v3146 = vlaneseq
      %v3147 = vshrl.u32 %v3146, 7
      %v3148 = vsub.s32 0, %v3147
      %v3149 = vrot.slane %v2535, %v3148
      %v3150 = vlaneseq
      %v3151 = vshrl.u32 %v3150, 7
      %v3152 = vsub.s32 0, %v3151
      %v3153 = vrot.slane %v2559, %v3152
      %v3154 = vlaneseq
      %v3155 = vshrl.u32 %v3154, 7
      %v3156 = vsub.s32 0, %v3155
      %v3157 = vrot.slane %v2573, %v3156
      %v3158 = vlaneseq
      %v3159 = vshrl.u32 %v3158, 7
      %v3160 = vsub.s32 0, %v3159
      %v3161 = vrot.slane %v2581, %v3160
      %v3162 = vlaneseq
      %v3163 = vshrl.u32 %v3162, 7
      %v3164 = vsub.s32 0, %v3163
      %v3165 = vrot.slane %v2583, %v3164
      %v3166 = vlaneseq
      %v3167 = vshrl.u32 %v3166, 7
      %v3168 = vsub.s32 0, %v3167
      %v3169 = vrot.slane %v2566, %v3168
      %v3170 = vlaneseq
      %v3171 = vshrl.u32 %v3170, 7
      %v3172 = vsub.s32 0, %v3171
      %v3173 = vrot.slane %v2580, %v3172
      %v3174 = vlaneseq
      %v3175 = vshrl.u32 %v3174, 7
      %v3176 = vsub.s32 0, %v3175
      %v3177 = vrot.slane %v2582, %v3176
      %v3178 = vlaneseq
      %v3179 = vshrl.u32 %v3178, 7
      %v3180 = vsub.s32 0, %v3179
      %v3181 = vrot.slane %v2584, %v3180
      %v3182 = vlaneseq
      %v3183 = vshrl.u32 %v3182, 7
      %v3184 = vsub.s32 0, %v3183
      %v3185 = vrot.slane %v2608, %v3184
      %v3186 = vlaneseq
      %v3187 = vshrl.u32 %v3186, 7
      %v3188 = vsub.s32 0, %v3187
      %v3189 = vrot.slane %v2622, %v3188
      %v3190 = vlaneseq
      %v3191 = vshrl.u32 %v3190, 7
      %v3192 = vsub.s32 0, %v3191
      %v3193 = vrot.slane %v2630, %v3192
      %v3194 = vlaneseq
      %v3195 = vshrl.u32 %v3194, 7
      %v3196 = vsub.s32 0, %v3195
      %v3197 = vrot.slane %v2632, %v3196
      %v3198 = vlaneseq
      %v3199 = vshrl.u32 %v3198, 7
      %v3200 = vsub.s32 0, %v3199
      %v3201 = vrot.slane %v2615, %v3200
      %v3202 = vlaneseq
      %v3203 = vshrl.u32 %v3202, 7
      %v3204 = vsub.s32 0, %v3203
      %v3205 = vrot.slane %v2629, %v3204
      %v3206 = vlaneseq
      %v3207 = vshrl.u32 %v3206, 7
      %v3208 = vsub.s32 0, %v3207
      %v3209 = vrot.slane %v2631, %v3208
      %v3210 = vlaneseq
      %v3211 = vshrl.u32 %v3210, 7
      %v3212 = vsub.s32 0, %v3211
      %v3213 = vrot.slane %v2633, %v3212
      %v3214 = vlaneseq
      %v3215 = vshrl.u32 %v3214, 7
      %v3216 = vsub.s32 0, %v3215
      %v3217 = vrot.slane %v2657, %v3216
      %v3218 = vlaneseq
      %v3219 = vshrl.u32 %v3218, 7
      %v3220 = vsub.s32 0, %v3219
      %v3221 = vrot.slane %v2671, %v3220
      %v3222 = vlaneseq
      %v3223 = vshrl.u32 %v3222, 7
      %v3224 = vsub.s32 0, %v3223
      %v3225 = vrot.slane %v2679, %v3224
      %v3226 = vlaneseq
      %v3227 = vshrl.u32 %v3226, 7
      %v3228 = vsub.s32 0, %v3227
      %v3229 = vrot.slane %v2681, %v3228
      %v3230 = vlaneseq
      %v3231 = vshrl.u32 %v3230, 7
      %v3232 = vsub.s32 0, %v3231
      %v3233 = vrot.slane %v2664, %v3232
      %v3234 = vlaneseq
      %v3235 = vshrl.u32 %v3234, 7
      %v3236 = vsub.s32 0, %v3235
      %v3237 = vrot.slane %v2678, %v3236
      %v3238 = vlaneseq
      %v3239 = vshrl.u32 %v3238, 7
      %v3240 = vsub.s32 0, %v3239
      %v3241 = vrot.slane %v2680, %v3240
      %v3242 = vlaneseq
      %v3243 = vshrl.u32 %v3242, 7
      %v3244 = vsub.s32 0, %v3243
      %v3245 = vrot.slane %v2682, %v3244
      %v3246 = vlaneseq
      %v3247 = vshrl.u32 %v3246, 7
      %v3248 = vsub.s32 0, %v3247
      %v3249 = vrot.slane %v2706, %v3248
      %v3250 = vlaneseq
      %v3251 = vshrl.u32 %v3250, 7
      %v3252 = vsub.s32 0, %v3251
      %v3253 = vrot.slane %v2720, %v3252
      %v3254 = vlaneseq
      %v3255 = vshrl.u32 %v3254, 7
      %v3256 = vsub.s32 0, %v3255
      %v3257 = vrot.slane %v2728, %v3256
      %v3258 = vlaneseq
      %v3259 = vshrl.u32 %v3258, 7
      %v3260 = vsub.s32 0, %v3259
      %v3261 = vrot.slane %v2730, %v3260
      %v3262 = vlaneseq
      %v3263 = vshrl.u32 %v3262, 7
      %v3264 = vsub.s32 0, %v3263
      %v3265 = vrot.slane %v2713, %v3264
      %v3266 = vlaneseq
      %v3267 = vshrl.u32 %v3266, 7
      %v3268 = vsub.s32 0, %v3267
      %v3269 = vrot.slane %v2727, %v3268
      %v3270 = vlaneseq
      %v3271 = vshrl.u32 %v3270, 7
      %v3272 = vsub.s32 0, %v3271
      %v3273 = vrot.slane %v2729, %v3272
      %v3274 = vlaneseq
      %v3275 = vshrl.u32 %v3274, 7
      %v3276 = vsub.s32 0, %v3275
      %v3277 = vrot.slane %v2731, %v3276
      %v3278 = vlaneseq
      %v3279 = vshrl.u32 %v3278, 7
      %v3280 = vsub.s32 0, %v3279
      %v3281 = vrot.slane %v2755, %v3280
      %v3282 = vlaneseq
      %v3283 = vshrl.u32 %v3282, 7
      %v3284 = vsub.s32 0, %v3283
      %v3285 = vrot.slane %v2769, %v3284
      %v3286 = vlaneseq
      %v3287 = vshrl.u32 %v3286, 7
      %v3288 = vsub.s32 0, %v3287
      %v3289 = vrot.slane %v2777, %v3288
      %v3290 = vlaneseq
      %v3291 = vshrl.u32 %v3290, 7
      %v3292 = vsub.s32 0, %v3291
      %v3293 = vrot.slane %v2779, %v3292
      %v3294 = vlaneseq
      %v3295 = vshrl.u32 %v3294, 7
      %v3296 = vsub.s32 0, %v3295
      %v3297 = vrot.slane %v2762, %v3296
      %v3298 = vlaneseq
      %v3299 = vshrl.u32 %v3298, 7
      %v3300 = vsub.s32 0, %v3299
      %v3301 = vrot.slane %v2776, %v3300
      %v3302 = vlaneseq
      %v3303 = vshrl.u32 %v3302, 7
      %v3304 = vsub.s32 0, %v3303
      %v3305 = vrot.slane %v2778, %v3304
      %v3306 = vlaneseq
      %v3307 = vshrl.u32 %v3306, 7
      %v3308 = vsub.s32 0, %v3307
      %v3309 = vrot.slane %v2780, %v3308
      %v3310 = vlaneseq
      %v3311 = vshrl.u32 %v3310, 7
      %v3312 = vsub.s32 0, %v3311
      %v3313 = vrot.slane %v2804, %v3312
      %v3314 = vlaneseq
      %v3315 = vshrl.u32 %v3314, 7
      %v3316 = vsub.s32 0, %v3315
      %v3317 = vrot.slane %v2818, %v3316
      %v3318 = vlaneseq
      %v3319 = vshrl.u32 %v3318, 7
      %v3320 = vsub.s32 0, %v3319
      %v3321 = vrot.slane %v2826, %v3320
      %v3322 = vlaneseq
      %v3323 = vshrl.u32 %v3322, 7
      %v3324 = vsub.s32 0, %v3323
      %v3325 = vrot.slane %v2828, %v3324
      %v3326 = vlaneseq
      %v3327 = vshrl.u32 %v3326, 7
      %v3328 = vsub.s32 0, %v3327
      %v3329 = vrot.slane %v2811, %v3328
      %v3330 = vlaneseq
      %v3331 = vshrl.u32 %v3330, 7
      %v3332 = vsub.s32 0, %v3331
      %v3333 = vrot.slane %v2825, %v3332
      %v3334 = vlaneseq
      %v3335 = vshrl.u32 %v3334, 7
      %v3336 = vsub.s32 0, %v3335
      %v3337 = vrot.slane %v2827, %v3336
      %v3338 = vlaneseq
      %v3339 = vshrl.u32 %v3338, 7
      %v3340 = vsub.s32 0, %v3339
      %v3341 = vrot.slane %v2829, %v3340
      %v3470 = vsub.f32 %v2833, %v1374
      %v3471 = vsub.f32 %v2837, %v1379
      %v3472 = vsub.f32 %v2841, %v1384
      %v3473 = vsub.f32 %v2845, %v1389
      %v3474 = vsub.f32 %v2849, %v1394
      %v3475 = vsub.f32 %v2853, %v1399
      %v3476 = vsub.f32 %v2857, %v1404
      %v3477 = vsub.f32 %v2861, %v1409
      %v3478 = vsub.f32 %v2865, %v1414
      %v3479 = vsub.f32 %v2869, %v1419
      %v3480 = vsub.f32 %v2873, %v1424
      %v3481 = vsub.f32 %v2877, %v1429
      %v3482 = vsub.f32 %v2881, %v1434
      %v3483 = vsub.f32 %v2885, %v1439
      %v3484 = vsub.f32 %v2889, %v1444
      %v3485 = vsub.f32 %v2893, %v1449
      %v3486 = vsub.f32 %v2897, %v1454
      %v3487 = vsub.f32 %v2901, %v1459
      %v3488 = vsub.f32 %v2905, %v1464
      %v3489 = vsub.f32 %v2909, %v1469
      %v3490 = vsub.f32 %v2913, %v1474
      %v3491 = vsub.f32 %v2917, %v1479
      %v3492 = vsub.f32 %v2921, %v1484
      %v3493 = vsub.f32 %v2925, %v1489
      %v3494 = vsub.f32 %v2929, %v1494
      %v3495 = vsub.f32 %v2933, %v1499
      %v3496 = vsub.f32 %v2937, %v1504
      %v3497 = vsub.f32 %v2941, %v1509
      %v3498 = vsub.f32 %v2945, %v1514
      %v3499 = vsub.f32 %v2949, %v1519
      %v3500 = vsub.f32 %v2953, %v1524
      %v3501 = vsub.f32 %v2957, %v1529
      %v3502 = vsub.f32 %v2961, %v1534
      %v3503 = vsub.f32 %v2965, %v1539
      %v3504 = vsub.f32 %v2969, %v1544
      %v3505 = vsub.f32 %v2973, %v1549
      %v3506 = vsub.f32 %v2977, %v1554
      %v3507 = vsub.f32 %v2981, %v1559
      %v3508 = vsub.f32 %v2985, %v1564
      %v3509 = vsub.f32 %v2989, %v1569
      %v3510 = vsub.f32 %v2993, %v1574
      %v3511 = vsub.f32 %v2997, %v1579
      %v3512 = vsub.f32 %v3001, %v1584
      %v3513 = vsub.f32 %v3005, %v1589
      %v3514 = vsub.f32 %v3009, %v1594
      %v3515 = vsub.f32 %v3013, %v1599
      %v3516 = vsub.f32 %v3017, %v1604
      %v3517 = vsub.f32 %v3021, %v1609
      %v3518 = vsub.f32 %v3025, %v1614
      %v3519 = vsub.f32 %v3029, %v1619
      %v3520 = vsub.f32 %v3033, %v1624
      %v3521 = vsub.f32 %v3037, %v1629
      %v3522 = vsub.f32 %v3041, %v1634
      %v3523 = vsub.f32 %v3045, %v1639
      %v3524 = vsub.f32 %v3049, %v1644
      %v3525 = vsub.f32 %v3053, %v1649
      %v3526 = vsub.f32 %v3057, %v1654
      %v3527 = vsub.f32 %v3061, %v1659
      %v3528 = vsub.f32 %v3065, %v1664
      %v3529 = vsub.f32 %v3069, %v1669
      %v3530 = vsub.f32 %v3073, %v1674
      %v3531 = vsub.f32 %v3077, %v1679
      %v3532 = vsub.f32 %v3081, %v1684
      %v3533 = vsub.f32 %v3085, %v1689
      %v3534 = vsub.f32 %v3089, %v1694
      %v3535 = vsub.f32 %v3093, %v1699
      %v3536 = vsub.f32 %v3097, %v1704
      %v3537 = vsub.f32 %v3101, %v1709
      %v3538 = vsub.f32 %v3105, %v1714
      %v3539 = vsub.f32 %v3109, %v1719
      %v3540 = vsub.f32 %v3113, %v1724
      %v3541 = vsub.f32 %v3117, %v1729
      %v3542 = vsub.f32 %v3121, %v1734
      %v3543 = vsub.f32 %v3125, %v1739
      %v3544 = vsub.f32 %v3129, %v1744
      %v3545 = vsub.f32 %v3133, %v1749
      %v3546 = vsub.f32 %v3137, %v1754
      %v3547 = vsub.f32 %v3141, %v1759
      %v3548 = vsub.f32 %v3145, %v1764
      %v3549 = vsub.f32 %v3149, %v1769
      %v3550 = vsub.f32 %v3153, %v1774
      %v3551 = vsub.f32 %v3157, %v1779
      %v3552 = vsub.f32 %v3161, %v1784
      %v3553 = vsub.f32 %v3165, %v1789
      %v3554 = vsub.f32 %v3169, %v1794
      %v3555 = vsub.f32 %v3173, %v1799
      %v3556 = vsub.f32 %v3177, %v1804
      %v3557 = vsub.f32 %v3181, %v1809
      %v3558 = vsub.f32 %v3185, %v1814
      %v3559 = vsub.f32 %v3189, %v1819
      %v3560 = vsub.f32 %v3193, %v1824
      %v3561 = vsub.f32 %v3197, %v1829
      %v3562 = vsub.f32 %v3201, %v1834
      %v3563 = vsub.f32 %v3205, %v1839
      %v3564 = vsub.f32 %v3209, %v1844
      %v3565 = vsub.f32 %v3213, %v1849
      %v3566 = vsub.f32 %v3217, %v1854
      %v3567 = vsub.f32 %v3221, %v1859
      %v3568 = vsub.f32 %v3225, %v1864
      %v3569 = vsub.f32 %v3229, %v1869
      %v3570 = vsub.f32 %v3233, %v1874
      %v3571 = vsub.f32 %v3237, %v1879
      %v3572 = vsub.f32 %v3241, %v1884
      %v3573 = vsub.f32 %v3245, %v1889
      %v3574 = vsub.f32 %v3249, %v1894
      %v3575 = vsub.f32 %v3253, %v1899
      %v3576 = vsub.f32 %v3257, %v1904
      %v3577 = vsub.f32 %v3261, %v1909
      %v3578 = vsub.f32 %v3265, %v1914
      %v3579 = vsub.f32 %v3269, %v1919
      %v3580 = vsub.f32 %v3273, %v1924
      %v3581 = vsub.f32 %v3277, %v1929
      %v3582 = vsub.f32 %v3281, %v1934
      %v3583 = vsub.f32 %v3285, %v1939
      %v3584 = vsub.f32 %v3289, %v1944
      %v3585 = vsub.f32 %v3293, %v1949
      %v3586 = vsub.f32 %v3297, %v1954
      %v3587 = vsub.f32 %v3301, %v1959
      %v3588 = vsub.f32 %v3305, %v1964
      %v3589 = vsub.f32 %v3309, %v1969
      %v3590 = vsub.f32 %v3313, %v1974
      %v3591 = vsub.f32 %v3317, %v1979
      %v3592 = vsub.f32 %v3321, %v1984
      %v3593 = vsub.f32 %v3325, %v1989
      %v3594 = vsub.f32 %v3329, %v1994
      %v3595 = vsub.f32 %v3333, %v1999
      %v3596 = vsub.f32 %v3337, %v2004
      %v3597 = vsub.f32 %v3341, %v2009
      %v3598 = vmul.f32 %v1374, %v3470
      %v3599 = vmul.f32 %v1379, %v3471
      %v3600 = vmul.f32 %v1384, %v3472
      %v3601 = vmul.f32 %v1389, %v3473
      %v3602 = vmul.f32 %v1394, %v3474
      %v3603 = vmul.f32 %v1399, %v3475
      %v3604 = vmul.f32 %v1404, %v3476
      %v3605 = vmul.f32 %v1409, %v3477
      %v3606 = vmul.f32 %v1414, %v3478
      %v3607 = vmul.f32 %v1419, %v3479
      %v3608 = vmul.f32 %v1424, %v3480
      %v3609 = vmul.f32 %v1429, %v3481
      %v3610 = vmul.f32 %v1434, %v3482
      %v3611 = vmul.f32 %v1439, %v3483
      %v3612 = vmul.f32 %v1444, %v3484
      %v3613 = vmul.f32 %v1449, %v3485
      %v3614 = vmul.f32 %v1454, %v3486
      %v3615 = vmul.f32 %v1459, %v3487
      %v3616 = vmul.f32 %v1464, %v3488
      %v3617 = vmul.f32 %v1469, %v3489
      %v3618 = vmul.f32 %v1474, %v3490
      %v3619 = vmul.f32 %v1479, %v3491
      %v3620 = vmul.f32 %v1484, %v3492
      %v3621 = vmul.f32 %v1489, %v3493
      %v3622 = vmul.f32 %v1494, %v3494
      %v3623 = vmul.f32 %v1499, %v3495
      %v3624 = vmul.f32 %v1504, %v3496
      %v3625 = vmul.f32 %v1509, %v3497
      %v3626 = vmul.f32 %v1514, %v3498
      %v3627 = vmul.f32 %v1519, %v3499
      %v3628 = vmul.f32 %v1524, %v3500
      %v3629 = vmul.f32 %v1529, %v3501
      %v3630 = vmul.f32 %v1534, %v3502
      %v3631 = vmul.f32 %v1539, %v3503
      %v3632 = vmul.f32 %v1544, %v3504
      %v3633 = vmul.f32 %v1549, %v3505
      %v3634 = vmul.f32 %v1554, %v3506
      %v3635 = vmul.f32 %v1559, %v3507
      %v3636 = vmul.f32 %v1564, %v3508
      %v3637 = vmul.f32 %v1569, %v3509
      %v3638 = vmul.f32 %v1574, %v3510
      %v3639 = vmul.f32 %v1579, %v3511
      %v3640 = vmul.f32 %v1584, %v3512
      %v3641 = vmul.f32 %v1589, %v3513
      %v3642 = vmul.f32 %v1594, %v3514
      %v3643 = vmul.f32 %v1599, %v3515
      %v3644 = vmul.f32 %v1604, %v3516
      %v3645 = vmul.f32 %v1609, %v3517
      %v3646 = vmul.f32 %v1614, %v3518
      %v3647 = vmul.f32 %v1619, %v3519
      %v3648 = vmul.f32 %v1624, %v3520
      %v3649 = vmul.f32 %v1629, %v3521
      %v3650 = vmul.f32 %v1634, %v3522
      %v3651 = vmul.f32 %v1639, %v3523
      %v3652 = vmul.f32 %v1644, %v3524
      %v3653 = vmul.f32 %v1649, %v3525
      %v3654 = vmul.f32 %v1654, %v3526
      %v3655 = vmul.f32 %v1659, %v3527
      %v3656 = vmul.f32 %v1664, %v3528
      %v3657 = vmul.f32 %v1669, %v3529
      %v3658 = vmul.f32 %v1674, %v3530
      %v3659 = vmul.f32 %v1679, %v3531
      %v3660 = vmul.f32 %v1684, %v3532
      %v3661 = vmul.f32 %v1689, %v3533
      %v3662 = vmul.f32 %v1694, %v3534
      %v3663 = vmul.f32 %v1699, %v3535
      %v3664 = vmul.f32 %v1704, %v3536
      %v3665 = vmul.f32 %v1709, %v3537
      %v3666 = vmul.f32 %v1714, %v3538
      %v3667 = vmul.f32 %v1719, %v3539
      %v3668 = vmul.f32 %v1724, %v3540
      %v3669 = vmul.f32 %v1729, %v3541
      %v3670 = vmul.f32 %v1734, %v3542
      %v3671 = vmul.f32 %v1739, %v3543
      %v3672 = vmul.f32 %v1744, %v3544
      %v3673 = vmul.f32 %v1749, %v3545
      %v3674 = vmul.f32 %v1754, %v3546
      %v3675 = vmul.f32 %v1759, %v3547
      %v3676 = vmul.f32 %v1764, %v3548
      %v3677 = vmul.f32 %v1769, %v3549
      %v3678 = vmul.f32 %v1774, %v3550
      %v3679 = vmul.f32 %v1779, %v3551
      %v3680 = vmul.f32 %v1784, %v3552
      %v3681 = vmul.f32 %v1789, %v3553
      %v3682 = vmul.f32 %v1794, %v3554
      %v3683 = vmul.f32 %v1799, %v3555
      %v3684 = vmul.f32 %v1804, %v3556
      %v3685 = vmul.f32 %v1809, %v3557
      %v3686 = vmul.f32 %v1814, %v3558
      %v3687 = vmul.f32 %v1819, %v3559
      %v3688 = vmul.f32 %v1824, %v3560
      %v3689 = vmul.f32 %v1829, %v3561
      %v3690 = vmul.f32 %v1834, %v3562
      %v3691 = vmul.f32 %v1839, %v3563
      %v3692 = vmul.f32 %v1844, %v3564
      %v3693 = vmul.f32 %v1849, %v3565
      %v3694 = vmul.f32 %v1854, %v3566
      %v3695 = vmul.f32 %v1859, %v3567
      %v3696 = vmul.f32 %v1864, %v3568
      %v3697 = vmul.f32 %v1869, %v3569
      %v3698 = vmul.f32 %v1874, %v3570
      %v3699 = vmul.f32 %v1879, %v3571
      %v3700 = vmul.f32 %v1884, %v3572
      %v3701 = vmul.f32 %v1889, %v3573
      %v3702 = vmul.f32 %v1894, %v3574
      %v3703 = vmul.f32 %v1899, %v3575
      %v3704 = vmul.f32 %v1904, %v3576
      %v3705 = vmul.f32 %v1909, %v3577
      %v3706 = vmul.f32 %v1914, %v3578
      %v3707 = vmul.f32 %v1919, %v3579
      %v3708 = vmul.f32 %v1924, %v3580
      %v3709 = vmul.f32 %v1929, %v3581
      %v3710 = vmul.f32 %v1934, %v3582
      %v3711 = vmul.f32 %v1939, %v3583
      %v3712 = vmul.f32 %v1944, %v3584
      %v3713 = vmul.f32 %v1949, %v3585
      %v3714 = vmul.f32 %v1954, %v3586
      %v3715 = vmul.f32 %v1959, %v3587
      %v3716 = vmul.f32 %v1964, %v3588
      %v3717 = vmul.f32 %v1969, %v3589
      %v3718 = vmul.f32 %v1974, %v3590
      %v3719 = vmul.f32 %v1979, %v3591
      %v3720 = vmul.f32 %v1984, %v3592
      %v3721 = vmul.f32 %v1989, %v3593
      %v3722 = vmul.f32 %v1994, %v3594
      %v3723 = vmul.f32 %v1999, %v3595
      %v3724 = vmul.f32 %v2004, %v3596
      %v3725 = vmul.f32 %v2009, %v3597
      %v3726 = vpack.c.bf16 %v2015, %v2014
      %v3727 = vpack.c.bf16 %v2017, %v2016
      %v3728 = vpack.c.bf16 %v2019, %v2018
      %v3729 = vpack.c.bf16 %v2021, %v2020
      %v3730 = vpack.c.bf16 %v2023, %v2022
      %v3731 = vpack.c.bf16 %v2025, %v2024
      %v3732 = vpack.c.bf16 %v2027, %v2026
      %v3733 = vpack.c.bf16 %v2029, %v2028
      %v3734 = vld [vmem:[%s2] sm:$0xf]
      %v3735 = vld [vmem:[%s2 + $0x4] sm:$0xf]
      %v3736 = vld [vmem:[%s2 + $0x8] sm:$0xf]
      %v3737 = vld [vmem:[%s2 + $0xc] sm:$0xf]
      %v3738 = vld [vmem:[%s2 + $0x10] sm:$0xf]
      %v3739 = vld [vmem:[%s2 + $0x14] sm:$0xf]
      %v3740 = vld [vmem:[%s2 + $0x18] sm:$0xf]
      %v3741 = vld [vmem:[%s2 + $0x1c] sm:$0xf]
      %v3742 = vld [vmem:[%s2 + $0x20] sm:$0xf]
      %v3743 = vld [vmem:[%s2 + $0x24] sm:$0xf]
      %v3744 = vld [vmem:[%s2 + $0x28] sm:$0xf]
      %v3745 = vld [vmem:[%s2 + $0x2c] sm:$0xf]
      %v3746 = vld [vmem:[%s2 + $0x30] sm:$0xf]
      %v3747 = vld [vmem:[%s2 + $0x34] sm:$0xf]
      %v3748 = vld [vmem:[%s2 + $0x38] sm:$0xf]
      %v3749 = vld [vmem:[%s2 + $0x3c] sm:$0xf]
      %v3766 = vunpack.c.l.b16 %v3734
      %v3767 = vunpack.c.l.b16 %v3735
      %v3768 = vunpack.c.l.b16 %v3736
      %v3769 = vunpack.c.l.b16 %v3737
      %v3770 = vunpack.c.l.b16 %v3738
      %v3771 = vunpack.c.l.b16 %v3739
      %v3772 = vunpack.c.l.b16 %v3740
      %v3773 = vunpack.c.l.b16 %v3741
      %v3774 = vunpack.c.l.b16 %v3742
      %v3775 = vunpack.c.l.b16 %v3743
      %v3776 = vunpack.c.l.b16 %v3744
      %v3777 = vunpack.c.l.b16 %v3745
      %v3778 = vunpack.c.l.b16 %v3746
      %v3779 = vunpack.c.l.b16 %v3747
      %v3780 = vunpack.c.l.b16 %v3748
      %v3781 = vunpack.c.l.b16 %v3749
      %v3782 = vpack.c.b16 %v3767, %v3766
      %v3783 = vpack.c.b16 %v3769, %v3768
      %v3784 = vpack.c.b16 %v3771, %v3770
      %v3785 = vpack.c.b16 %v3773, %v3772
      %v3786 = vpack.c.b16 %v3775, %v3774
      %v3787 = vpack.c.b16 %v3777, %v3776
      %v3788 = vpack.c.b16 %v3779, %v3778
      %v3789 = vpack.c.b16 %v3781, %v3780
      %3798 = vmatprep.subr.bf16.mxu0 0
      %3799 = vmatpush1.bf16.msra.mxu0 %v3789
      %3800 = vmatprep.subr.bf16.mxu0 0
      %3801 = vmatpush1.bf16.msra.mxu0 %v3788
      %3802 = vmatprep.subr.bf16.mxu0 0
      %3803 = vmatpush1.bf16.msra.mxu0 %v3787
      %3804 = vmatprep.subr.bf16.mxu0 0
      %3805 = vmatpush1.bf16.msra.mxu0 %v3786
      %3806 = vmatprep.subr.bf16.mxu0 0
      %3807 = vmatpush1.bf16.msra.mxu0 %v3785
      %3808 = vmatprep.subr.bf16.mxu0 0
      %3809 = vmatpush1.bf16.msra.mxu0 %v3784
      %3810 = vmatprep.subr.bf16.mxu0 0
      %3811 = vmatpush1.bf16.msra.mxu0 %v3783
      %3812 = vmatprep.subr.bf16.mxu0 0
      %3813 = vmatpush1.bf16.msra.mxu0 %v3782
      %3814 = vmatprep.subr.bf16.mxu0 0
      %3815 = vmatpush2.bf16.msra.mxu0 0
      %3816 = vmatprep.subr.bf16.mxu0 0
      %3817 = vmatpush2.bf16.msra.mxu0 0
      %3818 = vmatprep.subr.bf16.mxu0 0
      %3819 = vmatpush2.bf16.msra.mxu0 0
      %3820 = vmatprep.subr.bf16.mxu0 0
      %3821 = vmatpush2.bf16.msra.mxu0 0
      %3822 = vmatprep.subr.bf16.mxu0 0
      %3823 = vmatpush2.bf16.msra.mxu0 0
      %3824 = vmatprep.subr.bf16.mxu0 0
      %3825 = vmatpush2.bf16.msra.mxu0 0
      %3826 = vmatprep.subr.bf16.mxu0 0
      %3827 = vmatpush2.bf16.msra.mxu0 0
      %3828 = vmatprep.subr.bf16.mxu0 0
      %3829 = vmatpush2.bf16.msra.mxu0 0
      %3830 = vmatprep.mubr.bf16.mxu0 0
      %3831 = vmatmul.mubr.bf16.gmra.mxu0 %v3726
      %v3832 = vpop.f32.mrf.mxu0
      %v3833 = vadd.f32 0.0, %v3832
      %v3834 = vpop.f32.mrf.mxu0
      %v3835 = vpop.f32.mrf.mxu0
      %v3836 = vadd.f32 0.0, %v3835
      %v3837 = vpop.f32.mrf.mxu0
      %3838 = vmatprep.mubr.bf16.mxu0 0
      %3839 = vmatmul.mubr.bf16.gmra.mxu0 %v3727
      %v3840 = vpop.f32.mrf.mxu0
      %v3841 = vadd.f32 0.0, %v3840
      %v3842 = vpop.f32.mrf.mxu0
      %v3843 = vpop.f32.mrf.mxu0
      %v3844 = vadd.f32 0.0, %v3843
      %v3845 = vpop.f32.mrf.mxu0
      %3846 = vmatprep.mubr.bf16.mxu0 0
      %3847 = vmatmul.mubr.bf16.gmra.mxu0 %v3728
      %v3848 = vpop.f32.mrf.mxu0
      %v3849 = vadd.f32 0.0, %v3848
      %v3850 = vpop.f32.mrf.mxu0
      %v3851 = vpop.f32.mrf.mxu0
      %v3852 = vadd.f32 0.0, %v3851
      %v3853 = vpop.f32.mrf.mxu0
      %3854 = vmatprep.mubr.bf16.mxu0 0
      %3855 = vmatmul.mubr.bf16.gmra.mxu0 %v3729
      %v3856 = vpop.f32.mrf.mxu0
      %v3857 = vadd.f32 0.0, %v3856
      %v3858 = vpop.f32.mrf.mxu0
      %v3859 = vpop.f32.mrf.mxu0
      %v3860 = vadd.f32 0.0, %v3859
      %v3861 = vpop.f32.mrf.mxu0
      %3862 = vmatprep.mubr.bf16.mxu0 0
      %3863 = vmatmul.mubr.bf16.gmra.mxu0 %v3730
      %v3864 = vpop.f32.mrf.mxu0
      %v3865 = vadd.f32 0.0, %v3864
      %v3866 = vpop.f32.mrf.mxu0
      %v3867 = vpop.f32.mrf.mxu0
      %v3868 = vadd.f32 0.0, %v3867
      %v3869 = vpop.f32.mrf.mxu0
      %3870 = vmatprep.mubr.bf16.mxu0 0
      %3871 = vmatmul.mubr.bf16.gmra.mxu0 %v3731
      %v3872 = vpop.f32.mrf.mxu0
      %v3873 = vadd.f32 0.0, %v3872
      %v3874 = vpop.f32.mrf.mxu0
      %v3875 = vpop.f32.mrf.mxu0
      %v3876 = vadd.f32 0.0, %v3875
      %v3877 = vpop.f32.mrf.mxu0
      %3878 = vmatprep.mubr.bf16.mxu0 0
      %3879 = vmatmul.mubr.bf16.gmra.mxu0 %v3732
      %v3880 = vpop.f32.mrf.mxu0
      %v3881 = vadd.f32 0.0, %v3880
      %v3882 = vpop.f32.mrf.mxu0
      %v3883 = vpop.f32.mrf.mxu0
      %v3884 = vadd.f32 0.0, %v3883
      %v3885 = vpop.f32.mrf.mxu0
      %3886 = vmatprep.mubr.bf16.mxu0 0
      %3887 = vmatmul.mubr.bf16.gmra.mxu0 %v3733
      %v3888 = vpop.f32.mrf.mxu0
      %v3889 = vadd.f32 0.0, %v3888
      %v3890 = vpop.f32.mrf.mxu0
      %v3891 = vpop.f32.mrf.mxu0
      %v3892 = vadd.f32 0.0, %v3891
      %v3893 = vpop.f32.mrf.mxu0
      %3894 = vdwg.mxu0
      %v3895 = vpack.c.bf16 %v3599, %v3598
      %v3896 = vpack.c.bf16 %v3601, %v3600
      %v3897 = vpack.c.bf16 %v3603, %v3602
      %v3898 = vpack.c.bf16 %v3605, %v3604
      %v3899 = vpack.c.bf16 %v3607, %v3606
      %v3900 = vpack.c.bf16 %v3609, %v3608
      %v3901 = vpack.c.bf16 %v3611, %v3610
      %v3902 = vpack.c.bf16 %v3613, %v3612
      %v3903 = vpack.c.bf16 %v3615, %v3614
      %v3904 = vpack.c.bf16 %v3617, %v3616
      %v3905 = vpack.c.bf16 %v3619, %v3618
      %v3906 = vpack.c.bf16 %v3621, %v3620
      %v3907 = vpack.c.bf16 %v3623, %v3622
      %v3908 = vpack.c.bf16 %v3625, %v3624
      %v3909 = vpack.c.bf16 %v3627, %v3626
      %v3910 = vpack.c.bf16 %v3629, %v3628
      %v3911 = vpack.c.bf16 %v3631, %v3630
      %v3912 = vpack.c.bf16 %v3633, %v3632
      %v3913 = vpack.c.bf16 %v3635, %v3634
      %v3914 = vpack.c.bf16 %v3637, %v3636
      %v3915 = vpack.c.bf16 %v3639, %v3638
      %v3916 = vpack.c.bf16 %v3641, %v3640
      %v3917 = vpack.c.bf16 %v3643, %v3642
      %v3918 = vpack.c.bf16 %v3645, %v3644
      %v3919 = vpack.c.bf16 %v3647, %v3646
      %v3920 = vpack.c.bf16 %v3649, %v3648
      %v3921 = vpack.c.bf16 %v3651, %v3650
      %v3922 = vpack.c.bf16 %v3653, %v3652
      %v3923 = vpack.c.bf16 %v3655, %v3654
      %v3924 = vpack.c.bf16 %v3657, %v3656
      %v3925 = vpack.c.bf16 %v3659, %v3658
      %v3926 = vpack.c.bf16 %v3661, %v3660
      %v3927 = vpack.c.bf16 %v3663, %v3662
      %v3928 = vpack.c.bf16 %v3665, %v3664
      %v3929 = vpack.c.bf16 %v3667, %v3666
      %v3930 = vpack.c.bf16 %v3669, %v3668
      %v3931 = vpack.c.bf16 %v3671, %v3670
      %v3932 = vpack.c.bf16 %v3673, %v3672
      %v3933 = vpack.c.bf16 %v3675, %v3674
      %v3934 = vpack.c.bf16 %v3677, %v3676
      %v3935 = vpack.c.bf16 %v3679, %v3678
      %v3936 = vpack.c.bf16 %v3681, %v3680
      %v3937 = vpack.c.bf16 %v3683, %v3682
      %v3938 = vpack.c.bf16 %v3685, %v3684
      %v3939 = vpack.c.bf16 %v3687, %v3686
      %v3940 = vpack.c.bf16 %v3689, %v3688
      %v3941 = vpack.c.bf16 %v3691, %v3690
      %v3942 = vpack.c.bf16 %v3693, %v3692
      %v3943 = vpack.c.bf16 %v3695, %v3694
      %v3944 = vpack.c.bf16 %v3697, %v3696
      %v3945 = vpack.c.bf16 %v3699, %v3698
      %v3946 = vpack.c.bf16 %v3701, %v3700
      %v3947 = vpack.c.bf16 %v3703, %v3702
      %v3948 = vpack.c.bf16 %v3705, %v3704
      %v3949 = vpack.c.bf16 %v3707, %v3706
      %v3950 = vpack.c.bf16 %v3709, %v3708
      %v3951 = vpack.c.bf16 %v3711, %v3710
      %v3952 = vpack.c.bf16 %v3713, %v3712
      %v3953 = vpack.c.bf16 %v3715, %v3714
      %v3954 = vpack.c.bf16 %v3717, %v3716
      %v3955 = vpack.c.bf16 %v3719, %v3718
      %v3956 = vpack.c.bf16 %v3721, %v3720
      %v3957 = vpack.c.bf16 %v3723, %v3722
      %v3958 = vpack.c.bf16 %v3725, %v3724
      %v3959 = vld [vmem:[%s3] sm:$0xf]
      %v3960 = vld [vmem:[%s3 + $0x4] sm:$0xf]
      %v3961 = vld [vmem:[%s3 + $0x8] sm:$0xf]
      %v3962 = vld [vmem:[%s3 + $0xc] sm:$0xf]
      %v3963 = vld [vmem:[%s3 + $0x10] sm:$0xf]
      %v3964 = vld [vmem:[%s3 + $0x14] sm:$0xf]
      %v3965 = vld [vmem:[%s3 + $0x18] sm:$0xf]
      %v3966 = vld [vmem:[%s3 + $0x1c] sm:$0xf]
      %v3967 = vld [vmem:[%s3 + $0x20] sm:$0xf]
      %v3968 = vld [vmem:[%s3 + $0x24] sm:$0xf]
      %v3969 = vld [vmem:[%s3 + $0x28] sm:$0xf]
      %v3970 = vld [vmem:[%s3 + $0x2c] sm:$0xf]
      %v3971 = vld [vmem:[%s3 + $0x30] sm:$0xf]
      %v3972 = vld [vmem:[%s3 + $0x34] sm:$0xf]
      %v3973 = vld [vmem:[%s3 + $0x38] sm:$0xf]
      %v3974 = vld [vmem:[%s3 + $0x3c] sm:$0xf]
      %v3975 = vld [vmem:[%s6] sm:$0x1]
      %v3977 = vlaneseq
      %v3978 = vshrl.u32 %v3977, 7
      %v3979 = vsub.s32 0, %v3978
      %v3980 = vrot.slane %v3975, %v3979
      %v3998 = vunpack.c.l.b16 %v3959
      %v3999 = vunpack.c.l.b16 %v3960
      %v4000 = vunpack.c.l.b16 %v3961
      %v4001 = vunpack.c.l.b16 %v3962
      %v4002 = vunpack.c.l.b16 %v3963
      %v4003 = vunpack.c.l.b16 %v3964
      %v4004 = vunpack.c.l.b16 %v3965
      %v4005 = vunpack.c.l.b16 %v3966
      %v4006 = vunpack.c.l.b16 %v3967
      %v4007 = vunpack.c.l.b16 %v3968
      %v4008 = vunpack.c.l.b16 %v3969
      %v4009 = vunpack.c.l.b16 %v3970
      %v4010 = vunpack.c.l.b16 %v3971
      %v4011 = vunpack.c.l.b16 %v3972
      %v4012 = vunpack.c.l.b16 %v3973
      %v4013 = vunpack.c.l.b16 %v3974
      %v4014 = vpack.c.b16 %v3999, %v3998
      %v4015 = vpack.c.b16 %v4001, %v4000
      %v4016 = vpack.c.b16 %v4003, %v4002
      %v4017 = vpack.c.b16 %v4005, %v4004
      %v4018 = vpack.c.b16 %v4007, %v4006
      %v4019 = vpack.c.b16 %v4009, %v4008
      %v4020 = vpack.c.b16 %v4011, %v4010
      %v4021 = vpack.c.b16 %v4013, %v4012
      %4030 = vmatprep.subr.bf16.mxu0 0
      %4031 = vmatpush1.bf16.msra.mxu0 %v4021
      %4032 = vmatprep.subr.bf16.mxu0 0
      %4033 = vmatpush1.bf16.msra.mxu0 %v4020
      %4034 = vmatprep.subr.bf16.mxu0 0
      %4035 = vmatpush1.bf16.msra.mxu0 %v4019
      %4036 = vmatprep.subr.bf16.mxu0 0
      %4037 = vmatpush1.bf16.msra.mxu0 %v4018
      %4038 = vmatprep.subr.bf16.mxu0 0
      %4039 = vmatpush1.bf16.msra.mxu0 %v4017
      %4040 = vmatprep.subr.bf16.mxu0 0
      %4041 = vmatpush1.bf16.msra.mxu0 %v4016
      %4042 = vmatprep.subr.bf16.mxu0 0
      %4043 = vmatpush1.bf16.msra.mxu0 %v4015
      %4044 = vmatprep.subr.bf16.mxu0 0
      %4045 = vmatpush1.bf16.msra.mxu0 %v4014
      %4046 = vmatprep.subr.bf16.mxu0 0
      %4047 = vmatpush2.bf16.msra.mxu0 0
      %4048 = vmatprep.subr.bf16.mxu0 0
      %4049 = vmatpush2.bf16.msra.mxu0 0
      %4050 = vmatprep.subr.bf16.mxu0 0
      %4051 = vmatpush2.bf16.msra.mxu0 0
      %4052 = vmatprep.subr.bf16.mxu0 0
      %4053 = vmatpush2.bf16.msra.mxu0 0
      %4054 = vmatprep.subr.bf16.mxu0 0
      %4055 = vmatpush2.bf16.msra.mxu0 0
      %4056 = vmatprep.subr.bf16.mxu0 0
      %4057 = vmatpush2.bf16.msra.mxu0 0
      %4058 = vmatprep.subr.bf16.mxu0 0
      %4059 = vmatpush2.bf16.msra.mxu0 0
      %4060 = vmatprep.subr.bf16.mxu0 0
      %4061 = vmatpush2.bf16.msra.mxu0 0
      %4062 = vmatprep.mubr.bf16.mxu0 0
      %4063 = vmatmul.mubr.bf16.gmra.mxu0 %v3895
      %v4064 = vpop.f32.mrf.mxu0
      %v4065 = vadd.f32 %v3980, %v4064
      %v4066 = vpop.f32.mrf.mxu0
      %v4067 = vpop.f32.mrf.mxu0
      %v4068 = vadd.f32 %v3980, %v4067
      %v4069 = vpop.f32.mrf.mxu0
      %4070 = vmatprep.mubr.bf16.mxu0 0
      %4071 = vmatmul.mubr.bf16.gmra.mxu0 %v3896
      %v4072 = vpop.f32.mrf.mxu0
      %v4073 = vadd.f32 %v3980, %v4072
      %v4074 = vpop.f32.mrf.mxu0
      %v4075 = vpop.f32.mrf.mxu0
      %v4076 = vadd.f32 %v3980, %v4075
      %v4077 = vpop.f32.mrf.mxu0
      %4078 = vmatprep.mubr.bf16.mxu0 0
      %4079 = vmatmul.mubr.bf16.gmra.mxu0 %v3897
      %v4080 = vpop.f32.mrf.mxu0
      %v4081 = vadd.f32 %v3980, %v4080
      %v4082 = vpop.f32.mrf.mxu0
      %v4083 = vpop.f32.mrf.mxu0
      %v4084 = vadd.f32 %v3980, %v4083
      %v4085 = vpop.f32.mrf.mxu0
      %4086 = vmatprep.mubr.bf16.mxu0 0
      %4087 = vmatmul.mubr.bf16.gmra.mxu0 %v3898
      %v4088 = vpop.f32.mrf.mxu0
      %v4089 = vadd.f32 %v3980, %v4088
      %v4090 = vpop.f32.mrf.mxu0
      %v4091 = vpop.f32.mrf.mxu0
      %v4092 = vadd.f32 %v3980, %v4091
      %v4093 = vpop.f32.mrf.mxu0
      %4094 = vmatprep.mubr.bf16.mxu0 0
      %4095 = vmatmul.mubr.bf16.gmra.mxu0 %v3899
      %v4096 = vpop.f32.mrf.mxu0
      %v4097 = vadd.f32 %v3980, %v4096
      %v4098 = vpop.f32.mrf.mxu0
      %v4099 = vpop.f32.mrf.mxu0
      %v4100 = vadd.f32 %v3980, %v4099
      %v4101 = vpop.f32.mrf.mxu0
      %4102 = vmatprep.mubr.bf16.mxu0 0
      %4103 = vmatmul.mubr.bf16.gmra.mxu0 %v3900
      %v4104 = vpop.f32.mrf.mxu0
      %v4105 = vadd.f32 %v3980, %v4104
      %v4106 = vpop.f32.mrf.mxu0
      %v4107 = vpop.f32.mrf.mxu0
      %v4108 = vadd.f32 %v3980, %v4107
      %v4109 = vpop.f32.mrf.mxu0
      %4110 = vmatprep.mubr.bf16.mxu0 0
      %4111 = vmatmul.mubr.bf16.gmra.mxu0 %v3901
      %v4112 = vpop.f32.mrf.mxu0
      %v4113 = vadd.f32 %v3980, %v4112
      %v4114 = vpop.f32.mrf.mxu0
      %v4115 = vpop.f32.mrf.mxu0
      %v4116 = vadd.f32 %v3980, %v4115
      %v4117 = vpop.f32.mrf.mxu0
      %4118 = vmatprep.mubr.bf16.mxu0 0
      %4119 = vmatmul.mubr.bf16.gmra.mxu0 %v3902
      %v4120 = vpop.f32.mrf.mxu0
      %v4121 = vadd.f32 %v3980, %v4120
      %v4122 = vpop.f32.mrf.mxu0
      %v4123 = vpop.f32.mrf.mxu0
      %v4124 = vadd.f32 %v3980, %v4123
      %v4125 = vpop.f32.mrf.mxu0
      %4126 = vmatprep.mubr.bf16.mxu0 0
      %4127 = vmatmul.mubr.bf16.gmra.mxu0 %v3903
      %v4128 = vpop.f32.mrf.mxu0
      %v4129 = vadd.f32 %v3980, %v4128
      %v4130 = vpop.f32.mrf.mxu0
      %v4131 = vpop.f32.mrf.mxu0
      %v4132 = vadd.f32 %v3980, %v4131
      %v4133 = vpop.f32.mrf.mxu0
      %4134 = vmatprep.mubr.bf16.mxu0 0
      %4135 = vmatmul.mubr.bf16.gmra.mxu0 %v3904
      %v4136 = vpop.f32.mrf.mxu0
      %v4137 = vadd.f32 %v3980, %v4136
      %v4138 = vpop.f32.mrf.mxu0
      %v4139 = vpop.f32.mrf.mxu0
      %v4140 = vadd.f32 %v3980, %v4139
      %v4141 = vpop.f32.mrf.mxu0
      %4142 = vmatprep.mubr.bf16.mxu0 0
      %4143 = vmatmul.mubr.bf16.gmra.mxu0 %v3905
      %v4144 = vpop.f32.mrf.mxu0
      %v4145 = vadd.f32 %v3980, %v4144
      %v4146 = vpop.f32.mrf.mxu0
      %v4147 = vpop.f32.mrf.mxu0
      %v4148 = vadd.f32 %v3980, %v4147
      %v4149 = vpop.f32.mrf.mxu0
      %4150 = vmatprep.mubr.bf16.mxu0 0
      %4151 = vmatmul.mubr.bf16.gmra.mxu0 %v3906
      %v4152 = vpop.f32.mrf.mxu0
      %v4153 = vadd.f32 %v3980, %v4152
      %v4154 = vpop.f32.mrf.mxu0
      %v4155 = vpop.f32.mrf.mxu0
      %v4156 = vadd.f32 %v3980, %v4155
      %v4157 = vpop.f32.mrf.mxu0
      %4158 = vmatprep.mubr.bf16.mxu0 0
      %4159 = vmatmul.mubr.bf16.gmra.mxu0 %v3907
      %v4160 = vpop.f32.mrf.mxu0
      %v4161 = vadd.f32 %v3980, %v4160
      %v4162 = vpop.f32.mrf.mxu0
      %v4163 = vpop.f32.mrf.mxu0
      %v4164 = vadd.f32 %v3980, %v4163
      %v4165 = vpop.f32.mrf.mxu0
      %4166 = vmatprep.mubr.bf16.mxu0 0
      %4167 = vmatmul.mubr.bf16.gmra.mxu0 %v3908
      %v4168 = vpop.f32.mrf.mxu0
      %v4169 = vadd.f32 %v3980, %v4168
      %v4170 = vpop.f32.mrf.mxu0
      %v4171 = vpop.f32.mrf.mxu0
      %v4172 = vadd.f32 %v3980, %v4171
      %v4173 = vpop.f32.mrf.mxu0
      %4174 = vmatprep.mubr.bf16.mxu0 0
      %4175 = vmatmul.mubr.bf16.gmra.mxu0 %v3909
      %v4176 = vpop.f32.mrf.mxu0
      %v4177 = vadd.f32 %v3980, %v4176
      %v4178 = vpop.f32.mrf.mxu0
      %v4179 = vpop.f32.mrf.mxu0
      %v4180 = vadd.f32 %v3980, %v4179
      %v4181 = vpop.f32.mrf.mxu0
      %4182 = vmatprep.mubr.bf16.mxu0 0
      %4183 = vmatmul.mubr.bf16.gmra.mxu0 %v3910
      %v4184 = vpop.f32.mrf.mxu0
      %v4185 = vadd.f32 %v3980, %v4184
      %v4186 = vpop.f32.mrf.mxu0
      %v4187 = vpop.f32.mrf.mxu0
      %v4188 = vadd.f32 %v3980, %v4187
      %v4189 = vpop.f32.mrf.mxu0
      %4190 = vmatprep.mubr.bf16.mxu0 0
      %4191 = vmatmul.mubr.bf16.gmra.mxu0 %v3911
      %v4192 = vpop.f32.mrf.mxu0
      %v4193 = vadd.f32 %v3980, %v4192
      %v4194 = vpop.f32.mrf.mxu0
      %v4195 = vpop.f32.mrf.mxu0
      %v4196 = vadd.f32 %v3980, %v4195
      %v4197 = vpop.f32.mrf.mxu0
      %4198 = vmatprep.mubr.bf16.mxu0 0
      %4199 = vmatmul.mubr.bf16.gmra.mxu0 %v3912
      %v4200 = vpop.f32.mrf.mxu0
      %v4201 = vadd.f32 %v3980, %v4200
      %v4202 = vpop.f32.mrf.mxu0
      %v4203 = vpop.f32.mrf.mxu0
      %v4204 = vadd.f32 %v3980, %v4203
      %v4205 = vpop.f32.mrf.mxu0
      %4206 = vmatprep.mubr.bf16.mxu0 0
      %4207 = vmatmul.mubr.bf16.gmra.mxu0 %v3913
      %v4208 = vpop.f32.mrf.mxu0
      %v4209 = vadd.f32 %v3980, %v4208
      %v4210 = vpop.f32.mrf.mxu0
      %v4211 = vpop.f32.mrf.mxu0
      %v4212 = vadd.f32 %v3980, %v4211
      %v4213 = vpop.f32.mrf.mxu0
      %4214 = vmatprep.mubr.bf16.mxu0 0
      %4215 = vmatmul.mubr.bf16.gmra.mxu0 %v3914
      %v4216 = vpop.f32.mrf.mxu0
      %v4217 = vadd.f32 %v3980, %v4216
      %v4218 = vpop.f32.mrf.mxu0
      %v4219 = vpop.f32.mrf.mxu0
      %v4220 = vadd.f32 %v3980, %v4219
      %v4221 = vpop.f32.mrf.mxu0
      %4222 = vmatprep.mubr.bf16.mxu0 0
      %4223 = vmatmul.mubr.bf16.gmra.mxu0 %v3915
      %v4224 = vpop.f32.mrf.mxu0
      %v4225 = vadd.f32 %v3980, %v4224
      %v4226 = vpop.f32.mrf.mxu0
      %v4227 = vpop.f32.mrf.mxu0
      %v4228 = vadd.f32 %v3980, %v4227
      %v4229 = vpop.f32.mrf.mxu0
      %4230 = vmatprep.mubr.bf16.mxu0 0
      %4231 = vmatmul.mubr.bf16.gmra.mxu0 %v3916
      %v4232 = vpop.f32.mrf.mxu0
      %v4233 = vadd.f32 %v3980, %v4232
      %v4234 = vpop.f32.mrf.mxu0
      %v4235 = vpop.f32.mrf.mxu0
      %v4236 = vadd.f32 %v3980, %v4235
      %v4237 = vpop.f32.mrf.mxu0
      %4238 = vmatprep.mubr.bf16.mxu0 0
      %4239 = vmatmul.mubr.bf16.gmra.mxu0 %v3917
      %v4240 = vpop.f32.mrf.mxu0
      %v4241 = vadd.f32 %v3980, %v4240
      %v4242 = vpop.f32.mrf.mxu0
      %v4243 = vpop.f32.mrf.mxu0
      %v4244 = vadd.f32 %v3980, %v4243
      %v4245 = vpop.f32.mrf.mxu0
      %4246 = vmatprep.mubr.bf16.mxu0 0
      %4247 = vmatmul.mubr.bf16.gmra.mxu0 %v3918
      %v4248 = vpop.f32.mrf.mxu0
      %v4249 = vadd.f32 %v3980, %v4248
      %v4250 = vpop.f32.mrf.mxu0
      %v4251 = vpop.f32.mrf.mxu0
      %v4252 = vadd.f32 %v3980, %v4251
      %v4253 = vpop.f32.mrf.mxu0
      %4254 = vmatprep.mubr.bf16.mxu0 0
      %4255 = vmatmul.mubr.bf16.gmra.mxu0 %v3919
      %v4256 = vpop.f32.mrf.mxu0
      %v4257 = vadd.f32 %v3980, %v4256
      %v4258 = vpop.f32.mrf.mxu0
      %v4259 = vpop.f32.mrf.mxu0
      %v4260 = vadd.f32 %v3980, %v4259
      %v4261 = vpop.f32.mrf.mxu0
      %4262 = vmatprep.mubr.bf16.mxu0 0
      %4263 = vmatmul.mubr.bf16.gmra.mxu0 %v3920
      %v4264 = vpop.f32.mrf.mxu0
      %v4265 = vadd.f32 %v3980, %v4264
      %v4266 = vpop.f32.mrf.mxu0
      %v4267 = vpop.f32.mrf.mxu0
      %v4268 = vadd.f32 %v3980, %v4267
      %v4269 = vpop.f32.mrf.mxu0
      %4270 = vmatprep.mubr.bf16.mxu0 0
      %4271 = vmatmul.mubr.bf16.gmra.mxu0 %v3921
      %v4272 = vpop.f32.mrf.mxu0
      %v4273 = vadd.f32 %v3980, %v4272
      %v4274 = vpop.f32.mrf.mxu0
      %v4275 = vpop.f32.mrf.mxu0
      %v4276 = vadd.f32 %v3980, %v4275
      %v4277 = vpop.f32.mrf.mxu0
      %4278 = vmatprep.mubr.bf16.mxu0 0
      %4279 = vmatmul.mubr.bf16.gmra.mxu0 %v3922
      %v4280 = vpop.f32.mrf.mxu0
      %v4281 = vadd.f32 %v3980, %v4280
      %v4282 = vpop.f32.mrf.mxu0
      %v4283 = vpop.f32.mrf.mxu0
      %v4284 = vadd.f32 %v3980, %v4283
      %v4285 = vpop.f32.mrf.mxu0
      %4286 = vmatprep.mubr.bf16.mxu0 0
      %4287 = vmatmul.mubr.bf16.gmra.mxu0 %v3923
      %v4288 = vpop.f32.mrf.mxu0
      %v4289 = vadd.f32 %v3980, %v4288
      %v4290 = vpop.f32.mrf.mxu0
      %v4291 = vpop.f32.mrf.mxu0
      %v4292 = vadd.f32 %v3980, %v4291
      %v4293 = vpop.f32.mrf.mxu0
      %4294 = vmatprep.mubr.bf16.mxu0 0
      %4295 = vmatmul.mubr.bf16.gmra.mxu0 %v3924
      %v4296 = vpop.f32.mrf.mxu0
      %v4297 = vadd.f32 %v3980, %v4296
      %v4298 = vpop.f32.mrf.mxu0
      %v4299 = vpop.f32.mrf.mxu0
      %v4300 = vadd.f32 %v3980, %v4299
      %v4301 = vpop.f32.mrf.mxu0
      %4302 = vmatprep.mubr.bf16.mxu0 0
      %4303 = vmatmul.mubr.bf16.gmra.mxu0 %v3925
      %v4304 = vpop.f32.mrf.mxu0
      %v4305 = vadd.f32 %v3980, %v4304
      %v4306 = vpop.f32.mrf.mxu0
      %v4307 = vpop.f32.mrf.mxu0
      %v4308 = vadd.f32 %v3980, %v4307
      %v4309 = vpop.f32.mrf.mxu0
      %4310 = vmatprep.mubr.bf16.mxu0 0
      %4311 = vmatmul.mubr.bf16.gmra.mxu0 %v3926
      %v4312 = vpop.f32.mrf.mxu0
      %v4313 = vadd.f32 %v3980, %v4312
      %v4314 = vpop.f32.mrf.mxu0
      %v4315 = vpop.f32.mrf.mxu0
      %v4316 = vadd.f32 %v3980, %v4315
      %v4317 = vpop.f32.mrf.mxu0
      %4318 = vmatprep.mubr.bf16.mxu0 0
      %4319 = vmatmul.mubr.bf16.gmra.mxu0 %v3927
      %v4320 = vpop.f32.mrf.mxu0
      %v4321 = vadd.f32 %v3980, %v4320
      %v4322 = vpop.f32.mrf.mxu0
      %v4323 = vpop.f32.mrf.mxu0
      %v4324 = vadd.f32 %v3980, %v4323
      %v4325 = vpop.f32.mrf.mxu0
      %4326 = vmatprep.mubr.bf16.mxu0 0
      %4327 = vmatmul.mubr.bf16.gmra.mxu0 %v3928
      %v4328 = vpop.f32.mrf.mxu0
      %v4329 = vadd.f32 %v3980, %v4328
      %v4330 = vpop.f32.mrf.mxu0
      %v4331 = vpop.f32.mrf.mxu0
      %v4332 = vadd.f32 %v3980, %v4331
      %v4333 = vpop.f32.mrf.mxu0
      %4334 = vmatprep.mubr.bf16.mxu0 0
      %4335 = vmatmul.mubr.bf16.gmra.mxu0 %v3929
      %v4336 = vpop.f32.mrf.mxu0
      %v4337 = vadd.f32 %v3980, %v4336
      %v4338 = vpop.f32.mrf.mxu0
      %v4339 = vpop.f32.mrf.mxu0
      %v4340 = vadd.f32 %v3980, %v4339
      %v4341 = vpop.f32.mrf.mxu0
      %4342 = vmatprep.mubr.bf16.mxu0 0
      %4343 = vmatmul.mubr.bf16.gmra.mxu0 %v3930
      %v4344 = vpop.f32.mrf.mxu0
      %v4345 = vadd.f32 %v3980, %v4344
      %v4346 = vpop.f32.mrf.mxu0
      %v4347 = vpop.f32.mrf.mxu0
      %v4348 = vadd.f32 %v3980, %v4347
      %v4349 = vpop.f32.mrf.mxu0
      %4350 = vmatprep.mubr.bf16.mxu0 0
      %4351 = vmatmul.mubr.bf16.gmra.mxu0 %v3931
      %v4352 = vpop.f32.mrf.mxu0
      %v4353 = vadd.f32 %v3980, %v4352
      %v4354 = vpop.f32.mrf.mxu0
      %v4355 = vpop.f32.mrf.mxu0
      %v4356 = vadd.f32 %v3980, %v4355
      %v4357 = vpop.f32.mrf.mxu0
      %4358 = vmatprep.mubr.bf16.mxu0 0
      %4359 = vmatmul.mubr.bf16.gmra.mxu0 %v3932
      %v4360 = vpop.f32.mrf.mxu0
      %v4361 = vadd.f32 %v3980, %v4360
      %v4362 = vpop.f32.mrf.mxu0
      %v4363 = vpop.f32.mrf.mxu0
      %v4364 = vadd.f32 %v3980, %v4363
      %v4365 = vpop.f32.mrf.mxu0
      %4366 = vmatprep.mubr.bf16.mxu0 0
      %4367 = vmatmul.mubr.bf16.gmra.mxu0 %v3933
      %v4368 = vpop.f32.mrf.mxu0
      %v4369 = vadd.f32 %v3980, %v4368
      %v4370 = vpop.f32.mrf.mxu0
      %v4371 = vpop.f32.mrf.mxu0
      %v4372 = vadd.f32 %v3980, %v4371
      %v4373 = vpop.f32.mrf.mxu0
      %4374 = vmatprep.mubr.bf16.mxu0 0
      %4375 = vmatmul.mubr.bf16.gmra.mxu0 %v3934
      %v4376 = vpop.f32.mrf.mxu0
      %v4377 = vadd.f32 %v3980, %v4376
      %v4378 = vpop.f32.mrf.mxu0
      %v4379 = vpop.f32.mrf.mxu0
      %v4380 = vadd.f32 %v3980, %v4379
      %v4381 = vpop.f32.mrf.mxu0
      %4382 = vmatprep.mubr.bf16.mxu0 0
      %4383 = vmatmul.mubr.bf16.gmra.mxu0 %v3935
      %v4384 = vpop.f32.mrf.mxu0
      %v4385 = vadd.f32 %v3980, %v4384
      %v4386 = vpop.f32.mrf.mxu0
      %v4387 = vpop.f32.mrf.mxu0
      %v4388 = vadd.f32 %v3980, %v4387
      %v4389 = vpop.f32.mrf.mxu0
      %4390 = vmatprep.mubr.bf16.mxu0 0
      %4391 = vmatmul.mubr.bf16.gmra.mxu0 %v3936
      %v4392 = vpop.f32.mrf.mxu0
      %v4393 = vadd.f32 %v3980, %v4392
      %v4394 = vpop.f32.mrf.mxu0
      %v4395 = vpop.f32.mrf.mxu0
      %v4396 = vadd.f32 %v3980, %v4395
      %v4397 = vpop.f32.mrf.mxu0
      %4398 = vmatprep.mubr.bf16.mxu0 0
      %4399 = vmatmul.mubr.bf16.gmra.mxu0 %v3937
      %v4400 = vpop.f32.mrf.mxu0
      %v4401 = vadd.f32 %v3980, %v4400
      %v4402 = vpop.f32.mrf.mxu0
      %v4403 = vpop.f32.mrf.mxu0
      %v4404 = vadd.f32 %v3980, %v4403
      %v4405 = vpop.f32.mrf.mxu0
      %4406 = vmatprep.mubr.bf16.mxu0 0
      %4407 = vmatmul.mubr.bf16.gmra.mxu0 %v3938
      %v4408 = vpop.f32.mrf.mxu0
      %v4409 = vadd.f32 %v3980, %v4408
      %v4410 = vpop.f32.mrf.mxu0
      %v4411 = vpop.f32.mrf.mxu0
      %v4412 = vadd.f32 %v3980, %v4411
      %v4413 = vpop.f32.mrf.mxu0
      %4414 = vmatprep.mubr.bf16.mxu0 0
      %4415 = vmatmul.mubr.bf16.gmra.mxu0 %v3939
      %v4416 = vpop.f32.mrf.mxu0
      %v4417 = vadd.f32 %v3980, %v4416
      %v4418 = vpop.f32.mrf.mxu0
      %v4419 = vpop.f32.mrf.mxu0
      %v4420 = vadd.f32 %v3980, %v4419
      %v4421 = vpop.f32.mrf.mxu0
      %4422 = vmatprep.mubr.bf16.mxu0 0
      %4423 = vmatmul.mubr.bf16.gmra.mxu0 %v3940
      %v4424 = vpop.f32.mrf.mxu0
      %v4425 = vadd.f32 %v3980, %v4424
      %v4426 = vpop.f32.mrf.mxu0
      %v4427 = vpop.f32.mrf.mxu0
      %v4428 = vadd.f32 %v3980, %v4427
      %v4429 = vpop.f32.mrf.mxu0
      %4430 = vmatprep.mubr.bf16.mxu0 0
      %4431 = vmatmul.mubr.bf16.gmra.mxu0 %v3941
      %v4432 = vpop.f32.mrf.mxu0
      %v4433 = vadd.f32 %v3980, %v4432
      %v4434 = vpop.f32.mrf.mxu0
      %v4435 = vpop.f32.mrf.mxu0
      %v4436 = vadd.f32 %v3980, %v4435
      %v4437 = vpop.f32.mrf.mxu0
      %4438 = vmatprep.mubr.bf16.mxu0 0
      %4439 = vmatmul.mubr.bf16.gmra.mxu0 %v3942
      %v4440 = vpop.f32.mrf.mxu0
      %v4441 = vadd.f32 %v3980, %v4440
      %v4442 = vpop.f32.mrf.mxu0
      %v4443 = vpop.f32.mrf.mxu0
      %v4444 = vadd.f32 %v3980, %v4443
      %v4445 = vpop.f32.mrf.mxu0
      %4446 = vmatprep.mubr.bf16.mxu0 0
      %4447 = vmatmul.mubr.bf16.gmra.mxu0 %v3943
      %v4448 = vpop.f32.mrf.mxu0
      %v4449 = vadd.f32 %v3980, %v4448
      %v4450 = vpop.f32.mrf.mxu0
      %v4451 = vpop.f32.mrf.mxu0
      %v4452 = vadd.f32 %v3980, %v4451
      %v4453 = vpop.f32.mrf.mxu0
      %4454 = vmatprep.mubr.bf16.mxu0 0
      %4455 = vmatmul.mubr.bf16.gmra.mxu0 %v3944
      %v4456 = vpop.f32.mrf.mxu0
      %v4457 = vadd.f32 %v3980, %v4456
      %v4458 = vpop.f32.mrf.mxu0
      %v4459 = vpop.f32.mrf.mxu0
      %v4460 = vadd.f32 %v3980, %v4459
      %v4461 = vpop.f32.mrf.mxu0
      %4462 = vmatprep.mubr.bf16.mxu0 0
      %4463 = vmatmul.mubr.bf16.gmra.mxu0 %v3945
      %v4464 = vpop.f32.mrf.mxu0
      %v4465 = vadd.f32 %v3980, %v4464
      %v4466 = vpop.f32.mrf.mxu0
      %v4467 = vpop.f32.mrf.mxu0
      %v4468 = vadd.f32 %v3980, %v4467
      %v4469 = vpop.f32.mrf.mxu0
      %4470 = vmatprep.mubr.bf16.mxu0 0
      %4471 = vmatmul.mubr.bf16.gmra.mxu0 %v3946
      %v4472 = vpop.f32.mrf.mxu0
      %v4473 = vadd.f32 %v3980, %v4472
      %v4474 = vpop.f32.mrf.mxu0
      %v4475 = vpop.f32.mrf.mxu0
      %v4476 = vadd.f32 %v3980, %v4475
      %v4477 = vpop.f32.mrf.mxu0
      %4478 = vmatprep.mubr.bf16.mxu0 0
      %4479 = vmatmul.mubr.bf16.gmra.mxu0 %v3947
      %v4480 = vpop.f32.mrf.mxu0
      %v4481 = vadd.f32 %v3980, %v4480
      %v4482 = vpop.f32.mrf.mxu0
      %v4483 = vpop.f32.mrf.mxu0
      %v4484 = vadd.f32 %v3980, %v4483
      %v4485 = vpop.f32.mrf.mxu0
      %4486 = vmatprep.mubr.bf16.mxu0 0
      %4487 = vmatmul.mubr.bf16.gmra.mxu0 %v3948
      %v4488 = vpop.f32.mrf.mxu0
      %v4489 = vadd.f32 %v3980, %v4488
      %v4490 = vpop.f32.mrf.mxu0
      %v4491 = vpop.f32.mrf.mxu0
      %v4492 = vadd.f32 %v3980, %v4491
      %v4493 = vpop.f32.mrf.mxu0
      %4494 = vmatprep.mubr.bf16.mxu0 0
      %4495 = vmatmul.mubr.bf16.gmra.mxu0 %v3949
      %v4496 = vpop.f32.mrf.mxu0
      %v4497 = vadd.f32 %v3980, %v4496
      %v4498 = vpop.f32.mrf.mxu0
      %v4499 = vpop.f32.mrf.mxu0
      %v4500 = vadd.f32 %v3980, %v4499
      %v4501 = vpop.f32.mrf.mxu0
      %4502 = vmatprep.mubr.bf16.mxu0 0
      %4503 = vmatmul.mubr.bf16.gmra.mxu0 %v3950
      %v4504 = vpop.f32.mrf.mxu0
      %v4505 = vadd.f32 %v3980, %v4504
      %v4506 = vpop.f32.mrf.mxu0
      %v4507 = vpop.f32.mrf.mxu0
      %v4508 = vadd.f32 %v3980, %v4507
      %v4509 = vpop.f32.mrf.mxu0
      %4510 = vmatprep.mubr.bf16.mxu0 0
      %4511 = vmatmul.mubr.bf16.gmra.mxu0 %v3951
      %v4512 = vpop.f32.mrf.mxu0
      %v4513 = vadd.f32 %v3980, %v4512
      %v4514 = vpop.f32.mrf.mxu0
      %v4515 = vpop.f32.mrf.mxu0
      %v4516 = vadd.f32 %v3980, %v4515
      %v4517 = vpop.f32.mrf.mxu0
      %4518 = vmatprep.mubr.bf16.mxu0 0
      %4519 = vmatmul.mubr.bf16.gmra.mxu0 %v3952
      %v4520 = vpop.f32.mrf.mxu0
      %v4521 = vadd.f32 %v3980, %v4520
      %v4522 = vpop.f32.mrf.mxu0
      %v4523 = vpop.f32.mrf.mxu0
      %v4524 = vadd.f32 %v3980, %v4523
      %v4525 = vpop.f32.mrf.mxu0
      %4526 = vmatprep.mubr.bf16.mxu0 0
      %4527 = vmatmul.mubr.bf16.gmra.mxu0 %v3953
      %v4528 = vpop.f32.mrf.mxu0
      %v4529 = vadd.f32 %v3980, %v4528
      %v4530 = vpop.f32.mrf.mxu0
      %v4531 = vpop.f32.mrf.mxu0
      %v4532 = vadd.f32 %v3980, %v4531
      %v4533 = vpop.f32.mrf.mxu0
      %4534 = vmatprep.mubr.bf16.mxu0 0
      %4535 = vmatmul.mubr.bf16.gmra.mxu0 %v3954
      %v4536 = vpop.f32.mrf.mxu0
      %v4537 = vadd.f32 %v3980, %v4536
      %v4538 = vpop.f32.mrf.mxu0
      %v4539 = vpop.f32.mrf.mxu0
      %v4540 = vadd.f32 %v3980, %v4539
      %v4541 = vpop.f32.mrf.mxu0
      %4542 = vmatprep.mubr.bf16.mxu0 0
      %4543 = vmatmul.mubr.bf16.gmra.mxu0 %v3955
      %v4544 = vpop.f32.mrf.mxu0
      %v4545 = vadd.f32 %v3980, %v4544
      %v4546 = vpop.f32.mrf.mxu0
      %v4547 = vpop.f32.mrf.mxu0
      %v4548 = vadd.f32 %v3980, %v4547
      %v4549 = vpop.f32.mrf.mxu0
      %4550 = vmatprep.mubr.bf16.mxu0 0
      %4551 = vmatmul.mubr.bf16.gmra.mxu0 %v3956
      %v4552 = vpop.f32.mrf.mxu0
      %v4553 = vadd.f32 %v3980, %v4552
      %v4554 = vpop.f32.mrf.mxu0
      %v4555 = vpop.f32.mrf.mxu0
      %v4556 = vadd.f32 %v3980, %v4555
      %v4557 = vpop.f32.mrf.mxu0
      %4558 = vmatprep.mubr.bf16.mxu0 0
      %4559 = vmatmul.mubr.bf16.gmra.mxu0 %v3957
      %v4560 = vpop.f32.mrf.mxu0
      %v4561 = vadd.f32 %v3980, %v4560
      %v4562 = vpop.f32.mrf.mxu0
      %v4563 = vpop.f32.mrf.mxu0
      %v4564 = vadd.f32 %v3980, %v4563
      %v4565 = vpop.f32.mrf.mxu0
      %4566 = vmatprep.mubr.bf16.mxu0 0
      %4567 = vmatmul.mubr.bf16.gmra.mxu0 %v3958
      %v4568 = vpop.f32.mrf.mxu0
      %v4569 = vadd.f32 %v3980, %v4568
      %v4570 = vpop.f32.mrf.mxu0
      %v4571 = vpop.f32.mrf.mxu0
      %v4572 = vadd.f32 %v3980, %v4571
      %v4573 = vpop.f32.mrf.mxu0
      %4574 = vdwg.mxu0
      %v4591 = vcombine.high %v3833, %v3833
      %v4593 = vunpack.c.l.s4 1966171168
      %v4594 = vunpack.c.0.s8 %v4593
      %v4595 = vlaneseq
      %v4596 = vshrl.u32 %v4595, 7
      %v4597 = vsub.s32 %v4594, %v4596
      %v4598 = vrot.slane %v3833, %v4597
      %v4600 = vunpack.c.l.s4 1966171168
      %v4601 = vunpack.c.0.s8 %v4600
      %v4602 = vlaneseq
      %v4603 = vshrl.u32 %v4602, 7
      %v4604 = vsub.s32 %v4601, %v4603
      %v4605 = vrot.slane %v4591, %v4604
      %v4606 = vcombine.high %v4598, %v4598
      %v4607 = vcombine.high %v4605, %v4605
      %v4609 = vunpack.c.l.s4 1966171168
      %v4610 = vunpack.c.0.s8 %v4609
      %v4611 = vlaneseq
      %v4612 = vshrl.u32 %v4611, 7
      %v4613 = vsub.s32 %v4610, %v4612
      %v4614 = vrot.slane %v4598, %v4613
      %v4616 = vunpack.c.l.s4 1966171168
      %v4617 = vunpack.c.0.s8 %v4616
      %v4618 = vlaneseq
      %v4619 = vshrl.u32 %v4618, 7
      %v4620 = vsub.s32 %v4617, %v4619
      %v4621 = vrot.slane %v4605, %v4620
      %v4623 = vunpack.c.l.s4 1966171168
      %v4624 = vunpack.c.0.s8 %v4623
      %v4625 = vlaneseq
      %v4626 = vshrl.u32 %v4625, 7
      %v4627 = vsub.s32 %v4624, %v4626
      %v4628 = vrot.slane %v4606, %v4627
      %v4630 = vunpack.c.l.s4 1966171168
      %v4631 = vunpack.c.0.s8 %v4630
      %v4632 = vlaneseq
      %v4633 = vshrl.u32 %v4632, 7
      %v4634 = vsub.s32 %v4631, %v4633
      %v4635 = vrot.slane %v4607, %v4634
      %v4636 = vcombine.high %v4614, %v4614
      %v4637 = vcombine.high %v4621, %v4621
      %v4638 = vcombine.high %v4628, %v4628
      %v4639 = vcombine.high %v4635, %v4635
      %v4640 = vcombine.high %v3836, %v3836
      %v4642 = vunpack.c.l.s4 1966171168
      %v4643 = vunpack.c.0.s8 %v4642
      %v4644 = vlaneseq
      %v4645 = vshrl.u32 %v4644, 7
      %v4646 = vsub.s32 %v4643, %v4645
      %v4647 = vrot.slane %v3836, %v4646
      %v4649 = vunpack.c.l.s4 1966171168
      %v4650 = vunpack.c.0.s8 %v4649
      %v4651 = vlaneseq
      %v4652 = vshrl.u32 %v4651, 7
      %v4653 = vsub.s32 %v4650, %v4652
      %v4654 = vrot.slane %v4640, %v4653
      %v4655 = vcombine.high %v4647, %v4647
      %v4656 = vcombine.high %v4654, %v4654
      %v4658 = vunpack.c.l.s4 1966171168
      %v4659 = vunpack.c.0.s8 %v4658
      %v4660 = vlaneseq
      %v4661 = vshrl.u32 %v4660, 7
      %v4662 = vsub.s32 %v4659, %v4661
      %v4663 = vrot.slane %v4647, %v4662
      %v4665 = vunpack.c.l.s4 1966171168
      %v4666 = vunpack.c.0.s8 %v4665
      %v4667 = vlaneseq
      %v4668 = vshrl.u32 %v4667, 7
      %v4669 = vsub.s32 %v4666, %v4668
      %v4670 = vrot.slane %v4654, %v4669
      %v4672 = vunpack.c.l.s4 1966171168
      %v4673 = vunpack.c.0.s8 %v4672
      %v4674 = vlaneseq
      %v4675 = vshrl.u32 %v4674, 7
      %v4676 = vsub.s32 %v4673, %v4675
      %v4677 = vrot.slane %v4655, %v4676
      %v4679 = vunpack.c.l.s4 1966171168
      %v4680 = vunpack.c.0.s8 %v4679
      %v4681 = vlaneseq
      %v4682 = vshrl.u32 %v4681, 7
      %v4683 = vsub.s32 %v4680, %v4682
      %v4684 = vrot.slane %v4656, %v4683
      %v4685 = vcombine.high %v4663, %v4663
      %v4686 = vcombine.high %v4670, %v4670
      %v4687 = vcombine.high %v4677, %v4677
      %v4688 = vcombine.high %v4684, %v4684
      %v4689 = vcombine.high %v3841, %v3841
      %v4691 = vunpack.c.l.s4 1966171168
      %v4692 = vunpack.c.0.s8 %v4691
      %v4693 = vlaneseq
      %v4694 = vshrl.u32 %v4693, 7
      %v4695 = vsub.s32 %v4692, %v4694
      %v4696 = vrot.slane %v3841, %v4695
      %v4698 = vunpack.c.l.s4 1966171168
      %v4699 = vunpack.c.0.s8 %v4698
      %v4700 = vlaneseq
      %v4701 = vshrl.u32 %v4700, 7
      %v4702 = vsub.s32 %v4699, %v4701
      %v4703 = vrot.slane %v4689, %v4702
      %v4704 = vcombine.high %v4696, %v4696
      %v4705 = vcombine.high %v4703, %v4703
      %v4707 = vunpack.c.l.s4 1966171168
      %v4708 = vunpack.c.0.s8 %v4707
      %v4709 = vlaneseq
      %v4710 = vshrl.u32 %v4709, 7
      %v4711 = vsub.s32 %v4708, %v4710
      %v4712 = vrot.slane %v4696, %v4711
      %v4714 = vunpack.c.l.s4 1966171168
      %v4715 = vunpack.c.0.s8 %v4714
      %v4716 = vlaneseq
      %v4717 = vshrl.u32 %v4716, 7
      %v4718 = vsub.s32 %v4715, %v4717
      %v4719 = vrot.slane %v4703, %v4718
      %v4721 = vunpack.c.l.s4 1966171168
      %v4722 = vunpack.c.0.s8 %v4721
      %v4723 = vlaneseq
      %v4724 = vshrl.u32 %v4723, 7
      %v4725 = vsub.s32 %v4722, %v4724
      %v4726 = vrot.slane %v4704, %v4725
      %v4728 = vunpack.c.l.s4 1966171168
      %v4729 = vunpack.c.0.s8 %v4728
      %v4730 = vlaneseq
      %v4731 = vshrl.u32 %v4730, 7
      %v4732 = vsub.s32 %v4729, %v4731
      %v4733 = vrot.slane %v4705, %v4732
      %v4734 = vcombine.high %v4712, %v4712
      %v4735 = vcombine.high %v4719, %v4719
      %v4736 = vcombine.high %v4726, %v4726
      %v4737 = vcombine.high %v4733, %v4733
      %v4738 = vcombine.high %v3844, %v3844
      %v4740 = vunpack.c.l.s4 1966171168
      %v4741 = vunpack.c.0.s8 %v4740
      %v4742 = vlaneseq
      %v4743 = vshrl.u32 %v4742, 7
      %v4744 = vsub.s32 %v4741, %v4743
      %v4745 = vrot.slane %v3844, %v4744
      %v4747 = vunpack.c.l.s4 1966171168
      %v4748 = vunpack.c.0.s8 %v4747
      %v4749 = vlaneseq
      %v4750 = vshrl.u32 %v4749, 7
      %v4751 = vsub.s32 %v4748, %v4750
      %v4752 = vrot.slane %v4738, %v4751
      %v4753 = vcombine.high %v4745, %v4745
      %v4754 = vcombine.high %v4752, %v4752
      %v4756 = vunpack.c.l.s4 1966171168
      %v4757 = vunpack.c.0.s8 %v4756
      %v4758 = vlaneseq
      %v4759 = vshrl.u32 %v4758, 7
      %v4760 = vsub.s32 %v4757, %v4759
      %v4761 = vrot.slane %v4745, %v4760
      %v4763 = vunpack.c.l.s4 1966171168
      %v4764 = vunpack.c.0.s8 %v4763
      %v4765 = vlaneseq
      %v4766 = vshrl.u32 %v4765, 7
      %v4767 = vsub.s32 %v4764, %v4766
      %v4768 = vrot.slane %v4752, %v4767
      %v4770 = vunpack.c.l.s4 1966171168
      %v4771 = vunpack.c.0.s8 %v4770
      %v4772 = vlaneseq
      %v4773 = vshrl.u32 %v4772, 7
      %v4774 = vsub.s32 %v4771, %v4773
      %v4775 = vrot.slane %v4753, %v4774
      %v4777 = vunpack.c.l.s4 1966171168
      %v4778 = vunpack.c.0.s8 %v4777
      %v4779 = vlaneseq
      %v4780 = vshrl.u32 %v4779, 7
      %v4781 = vsub.s32 %v4778, %v4780
      %v4782 = vrot.slane %v4754, %v4781
      %v4783 = vcombine.high %v4761, %v4761
      %v4784 = vcombine.high %v4768, %v4768
      %v4785 = vcombine.high %v4775, %v4775
      %v4786 = vcombine.high %v4782, %v4782
      %v4787 = vcombine.high %v3849, %v3849
      %v4789 = vunpack.c.l.s4 1966171168
      %v4790 = vunpack.c.0.s8 %v4789
      %v4791 = vlaneseq
      %v4792 = vshrl.u32 %v4791, 7
      %v4793 = vsub.s32 %v4790, %v4792
      %v4794 = vrot.slane %v3849, %v4793
      %v4796 = vunpack.c.l.s4 1966171168
      %v4797 = vunpack.c.0.s8 %v4796
      %v4798 = vlaneseq
      %v4799 = vshrl.u32 %v4798, 7
      %v4800 = vsub.s32 %v4797, %v4799
      %v4801 = vrot.slane %v4787, %v4800
      %v4802 = vcombine.high %v4794, %v4794
      %v4803 = vcombine.high %v4801, %v4801
      %v4805 = vunpack.c.l.s4 1966171168
      %v4806 = vunpack.c.0.s8 %v4805
      %v4807 = vlaneseq
      %v4808 = vshrl.u32 %v4807, 7
      %v4809 = vsub.s32 %v4806, %v4808
      %v4810 = vrot.slane %v4794, %v4809
      %v4812 = vunpack.c.l.s4 1966171168
      %v4813 = vunpack.c.0.s8 %v4812
      %v4814 = vlaneseq
      %v4815 = vshrl.u32 %v4814, 7
      %v4816 = vsub.s32 %v4813, %v4815
      %v4817 = vrot.slane %v4801, %v4816
      %v4819 = vunpack.c.l.s4 1966171168
      %v4820 = vunpack.c.0.s8 %v4819
      %v4821 = vlaneseq
      %v4822 = vshrl.u32 %v4821, 7
      %v4823 = vsub.s32 %v4820, %v4822
      %v4824 = vrot.slane %v4802, %v4823
      %v4826 = vunpack.c.l.s4 1966171168
      %v4827 = vunpack.c.0.s8 %v4826
      %v4828 = vlaneseq
      %v4829 = vshrl.u32 %v4828, 7
      %v4830 = vsub.s32 %v4827, %v4829
      %v4831 = vrot.slane %v4803, %v4830
      %v4832 = vcombine.high %v4810, %v4810
      %v4833 = vcombine.high %v4817, %v4817
      %v4834 = vcombine.high %v4824, %v4824
      %v4835 = vcombine.high %v4831, %v4831
      %v4836 = vcombine.high %v3852, %v3852
      %v4838 = vunpack.c.l.s4 1966171168
      %v4839 = vunpack.c.0.s8 %v4838
      %v4840 = vlaneseq
      %v4841 = vshrl.u32 %v4840, 7
      %v4842 = vsub.s32 %v4839, %v4841
      %v4843 = vrot.slane %v3852, %v4842
      %v4845 = vunpack.c.l.s4 1966171168
      %v4846 = vunpack.c.0.s8 %v4845
      %v4847 = vlaneseq
      %v4848 = vshrl.u32 %v4847, 7
      %v4849 = vsub.s32 %v4846, %v4848
      %v4850 = vrot.slane %v4836, %v4849
      %v4851 = vcombine.high %v4843, %v4843
      %v4852 = vcombine.high %v4850, %v4850
      %v4854 = vunpack.c.l.s4 1966171168
      %v4855 = vunpack.c.0.s8 %v4854
      %v4856 = vlaneseq
      %v4857 = vshrl.u32 %v4856, 7
      %v4858 = vsub.s32 %v4855, %v4857
      %v4859 = vrot.slane %v4843, %v4858
      %v4861 = vunpack.c.l.s4 1966171168
      %v4862 = vunpack.c.0.s8 %v4861
      %v4863 = vlaneseq
      %v4864 = vshrl.u32 %v4863, 7
      %v4865 = vsub.s32 %v4862, %v4864
      %v4866 = vrot.slane %v4850, %v4865
      %v4868 = vunpack.c.l.s4 1966171168
      %v4869 = vunpack.c.0.s8 %v4868
      %v4870 = vlaneseq
      %v4871 = vshrl.u32 %v4870, 7
      %v4872 = vsub.s32 %v4869, %v4871
      %v4873 = vrot.slane %v4851, %v4872
      %v4875 = vunpack.c.l.s4 1966171168
      %v4876 = vunpack.c.0.s8 %v4875
      %v4877 = vlaneseq
      %v4878 = vshrl.u32 %v4877, 7
      %v4879 = vsub.s32 %v4876, %v4878
      %v4880 = vrot.slane %v4852, %v4879
      %v4881 = vcombine.high %v4859, %v4859
      %v4882 = vcombine.high %v4866, %v4866
      %v4883 = vcombine.high %v4873, %v4873
      %v4884 = vcombine.high %v4880, %v4880
      %v4885 = vcombine.high %v3857, %v3857
      %v4887 = vunpack.c.l.s4 1966171168
      %v4888 = vunpack.c.0.s8 %v4887
      %v4889 = vlaneseq
      %v4890 = vshrl.u32 %v4889, 7
      %v4891 = vsub.s32 %v4888, %v4890
      %v4892 = vrot.slane %v3857, %v4891
      %v4894 = vunpack.c.l.s4 1966171168
      %v4895 = vunpack.c.0.s8 %v4894
      %v4896 = vlaneseq
      %v4897 = vshrl.u32 %v4896, 7
      %v4898 = vsub.s32 %v4895, %v4897
      %v4899 = vrot.slane %v4885, %v4898
      %v4900 = vcombine.high %v4892, %v4892
      %v4901 = vcombine.high %v4899, %v4899
      %v4903 = vunpack.c.l.s4 1966171168
      %v4904 = vunpack.c.0.s8 %v4903
      %v4905 = vlaneseq
      %v4906 = vshrl.u32 %v4905, 7
      %v4907 = vsub.s32 %v4904, %v4906
      %v4908 = vrot.slane %v4892, %v4907
      %v4910 = vunpack.c.l.s4 1966171168
      %v4911 = vunpack.c.0.s8 %v4910
      %v4912 = vlaneseq
      %v4913 = vshrl.u32 %v4912, 7
      %v4914 = vsub.s32 %v4911, %v4913
      %v4915 = vrot.slane %v4899, %v4914
      %v4917 = vunpack.c.l.s4 1966171168
      %v4918 = vunpack.c.0.s8 %v4917
      %v4919 = vlaneseq
      %v4920 = vshrl.u32 %v4919, 7
      %v4921 = vsub.s32 %v4918, %v4920
      %v4922 = vrot.slane %v4900, %v4921
      %v4924 = vunpack.c.l.s4 1966171168
      %v4925 = vunpack.c.0.s8 %v4924
      %v4926 = vlaneseq
      %v4927 = vshrl.u32 %v4926, 7
      %v4928 = vsub.s32 %v4925, %v4927
      %v4929 = vrot.slane %v4901, %v4928
      %v4930 = vcombine.high %v4908, %v4908
      %v4931 = vcombine.high %v4915, %v4915
      %v4932 = vcombine.high %v4922, %v4922
      %v4933 = vcombine.high %v4929, %v4929
      %v4934 = vcombine.high %v3860, %v3860
      %v4936 = vunpack.c.l.s4 1966171168
      %v4937 = vunpack.c.0.s8 %v4936
      %v4938 = vlaneseq
      %v4939 = vshrl.u32 %v4938, 7
      %v4940 = vsub.s32 %v4937, %v4939
      %v4941 = vrot.slane %v3860, %v4940
      %v4943 = vunpack.c.l.s4 1966171168
      %v4944 = vunpack.c.0.s8 %v4943
      %v4945 = vlaneseq
      %v4946 = vshrl.u32 %v4945, 7
      %v4947 = vsub.s32 %v4944, %v4946
      %v4948 = vrot.slane %v4934, %v4947
      %v4949 = vcombine.high %v4941, %v4941
      %v4950 = vcombine.high %v4948, %v4948
      %v4952 = vunpack.c.l.s4 1966171168
      %v4953 = vunpack.c.0.s8 %v4952
      %v4954 = vlaneseq
      %v4955 = vshrl.u32 %v4954, 7
      %v4956 = vsub.s32 %v4953, %v4955
      %v4957 = vrot.slane %v4941, %v4956
      %v4959 = vunpack.c.l.s4 1966171168
      %v4960 = vunpack.c.0.s8 %v4959
      %v4961 = vlaneseq
      %v4962 = vshrl.u32 %v4961, 7
      %v4963 = vsub.s32 %v4960, %v4962
      %v4964 = vrot.slane %v4948, %v4963
      %v4966 = vunpack.c.l.s4 1966171168
      %v4967 = vunpack.c.0.s8 %v4966
      %v4968 = vlaneseq
      %v4969 = vshrl.u32 %v4968, 7
      %v4970 = vsub.s32 %v4967, %v4969
      %v4971 = vrot.slane %v4949, %v4970
      %v4973 = vunpack.c.l.s4 1966171168
      %v4974 = vunpack.c.0.s8 %v4973
      %v4975 = vlaneseq
      %v4976 = vshrl.u32 %v4975, 7
      %v4977 = vsub.s32 %v4974, %v4976
      %v4978 = vrot.slane %v4950, %v4977
      %v4979 = vcombine.high %v4957, %v4957
      %v4980 = vcombine.high %v4964, %v4964
      %v4981 = vcombine.high %v4971, %v4971
      %v4982 = vcombine.high %v4978, %v4978
      %v4983 = vcombine.high %v3865, %v3865
      %v4985 = vunpack.c.l.s4 1966171168
      %v4986 = vunpack.c.0.s8 %v4985
      %v4987 = vlaneseq
      %v4988 = vshrl.u32 %v4987, 7
      %v4989 = vsub.s32 %v4986, %v4988
      %v4990 = vrot.slane %v3865, %v4989
      %v4992 = vunpack.c.l.s4 1966171168
      %v4993 = vunpack.c.0.s8 %v4992
      %v4994 = vlaneseq
      %v4995 = vshrl.u32 %v4994, 7
      %v4996 = vsub.s32 %v4993, %v4995
      %v4997 = vrot.slane %v4983, %v4996
      %v4998 = vcombine.high %v4990, %v4990
      %v4999 = vcombine.high %v4997, %v4997
      %v5001 = vunpack.c.l.s4 1966171168
      %v5002 = vunpack.c.0.s8 %v5001
      %v5003 = vlaneseq
      %v5004 = vshrl.u32 %v5003, 7
      %v5005 = vsub.s32 %v5002, %v5004
      %v5006 = vrot.slane %v4990, %v5005
      %v5008 = vunpack.c.l.s4 1966171168
      %v5009 = vunpack.c.0.s8 %v5008
      %v5010 = vlaneseq
      %v5011 = vshrl.u32 %v5010, 7
      %v5012 = vsub.s32 %v5009, %v5011
      %v5013 = vrot.slane %v4997, %v5012
      %v5015 = vunpack.c.l.s4 1966171168
      %v5016 = vunpack.c.0.s8 %v5015
      %v5017 = vlaneseq
      %v5018 = vshrl.u32 %v5017, 7
      %v5019 = vsub.s32 %v5016, %v5018
      %v5020 = vrot.slane %v4998, %v5019
      %v5022 = vunpack.c.l.s4 1966171168
      %v5023 = vunpack.c.0.s8 %v5022
      %v5024 = vlaneseq
      %v5025 = vshrl.u32 %v5024, 7
      %v5026 = vsub.s32 %v5023, %v5025
      %v5027 = vrot.slane %v4999, %v5026
      %v5028 = vcombine.high %v5006, %v5006
      %v5029 = vcombine.high %v5013, %v5013
      %v5030 = vcombine.high %v5020, %v5020
      %v5031 = vcombine.high %v5027, %v5027
      %v5032 = vcombine.high %v3868, %v3868
      %v5034 = vunpack.c.l.s4 1966171168
      %v5035 = vunpack.c.0.s8 %v5034
      %v5036 = vlaneseq
      %v5037 = vshrl.u32 %v5036, 7
      %v5038 = vsub.s32 %v5035, %v5037
      %v5039 = vrot.slane %v3868, %v5038
      %v5041 = vunpack.c.l.s4 1966171168
      %v5042 = vunpack.c.0.s8 %v5041
      %v5043 = vlaneseq
      %v5044 = vshrl.u32 %v5043, 7
      %v5045 = vsub.s32 %v5042, %v5044
      %v5046 = vrot.slane %v5032, %v5045
      %v5047 = vcombine.high %v5039, %v5039
      %v5048 = vcombine.high %v5046, %v5046
      %v5050 = vunpack.c.l.s4 1966171168
      %v5051 = vunpack.c.0.s8 %v5050
      %v5052 = vlaneseq
      %v5053 = vshrl.u32 %v5052, 7
      %v5054 = vsub.s32 %v5051, %v5053
      %v5055 = vrot.slane %v5039, %v5054
      %v5057 = vunpack.c.l.s4 1966171168
      %v5058 = vunpack.c.0.s8 %v5057
      %v5059 = vlaneseq
      %v5060 = vshrl.u32 %v5059, 7
      %v5061 = vsub.s32 %v5058, %v5060
      %v5062 = vrot.slane %v5046, %v5061
      %v5064 = vunpack.c.l.s4 1966171168
      %v5065 = vunpack.c.0.s8 %v5064
      %v5066 = vlaneseq
      %v5067 = vshrl.u32 %v5066, 7
      %v5068 = vsub.s32 %v5065, %v5067
      %v5069 = vrot.slane %v5047, %v5068
      %v5071 = vunpack.c.l.s4 1966171168
      %v5072 = vunpack.c.0.s8 %v5071
      %v5073 = vlaneseq
      %v5074 = vshrl.u32 %v5073, 7
      %v5075 = vsub.s32 %v5072, %v5074
      %v5076 = vrot.slane %v5048, %v5075
      %v5077 = vcombine.high %v5055, %v5055
      %v5078 = vcombine.high %v5062, %v5062
      %v5079 = vcombine.high %v5069, %v5069
      %v5080 = vcombine.high %v5076, %v5076
      %v5081 = vcombine.high %v3873, %v3873
      %v5083 = vunpack.c.l.s4 1966171168
      %v5084 = vunpack.c.0.s8 %v5083
      %v5085 = vlaneseq
      %v5086 = vshrl.u32 %v5085, 7
      %v5087 = vsub.s32 %v5084, %v5086
      %v5088 = vrot.slane %v3873, %v5087
      %v5090 = vunpack.c.l.s4 1966171168
      %v5091 = vunpack.c.0.s8 %v5090
      %v5092 = vlaneseq
      %v5093 = vshrl.u32 %v5092, 7
      %v5094 = vsub.s32 %v5091, %v5093
      %v5095 = vrot.slane %v5081, %v5094
      %v5096 = vcombine.high %v5088, %v5088
      %v5097 = vcombine.high %v5095, %v5095
      %v5099 = vunpack.c.l.s4 1966171168
      %v5100 = vunpack.c.0.s8 %v5099
      %v5101 = vlaneseq
      %v5102 = vshrl.u32 %v5101, 7
      %v5103 = vsub.s32 %v5100, %v5102
      %v5104 = vrot.slane %v5088, %v5103
      %v5106 = vunpack.c.l.s4 1966171168
      %v5107 = vunpack.c.0.s8 %v5106
      %v5108 = vlaneseq
      %v5109 = vshrl.u32 %v5108, 7
      %v5110 = vsub.s32 %v5107, %v5109
      %v5111 = vrot.slane %v5095, %v5110
      %v5113 = vunpack.c.l.s4 1966171168
      %v5114 = vunpack.c.0.s8 %v5113
      %v5115 = vlaneseq
      %v5116 = vshrl.u32 %v5115, 7
      %v5117 = vsub.s32 %v5114, %v5116
      %v5118 = vrot.slane %v5096, %v5117
      %v5120 = vunpack.c.l.s4 1966171168
      %v5121 = vunpack.c.0.s8 %v5120
      %v5122 = vlaneseq
      %v5123 = vshrl.u32 %v5122, 7
      %v5124 = vsub.s32 %v5121, %v5123
      %v5125 = vrot.slane %v5097, %v5124
      %v5126 = vcombine.high %v5104, %v5104
      %v5127 = vcombine.high %v5111, %v5111
      %v5128 = vcombine.high %v5118, %v5118
      %v5129 = vcombine.high %v5125, %v5125
      %v5130 = vcombine.high %v3876, %v3876
      %v5132 = vunpack.c.l.s4 1966171168
      %v5133 = vunpack.c.0.s8 %v5132
      %v5134 = vlaneseq
      %v5135 = vshrl.u32 %v5134, 7
      %v5136 = vsub.s32 %v5133, %v5135
      %v5137 = vrot.slane %v3876, %v5136
      %v5139 = vunpack.c.l.s4 1966171168
      %v5140 = vunpack.c.0.s8 %v5139
      %v5141 = vlaneseq
      %v5142 = vshrl.u32 %v5141, 7
      %v5143 = vsub.s32 %v5140, %v5142
      %v5144 = vrot.slane %v5130, %v5143
      %v5145 = vcombine.high %v5137, %v5137
      %v5146 = vcombine.high %v5144, %v5144
      %v5148 = vunpack.c.l.s4 1966171168
      %v5149 = vunpack.c.0.s8 %v5148
      %v5150 = vlaneseq
      %v5151 = vshrl.u32 %v5150, 7
      %v5152 = vsub.s32 %v5149, %v5151
      %v5153 = vrot.slane %v5137, %v5152
      %v5155 = vunpack.c.l.s4 1966171168
      %v5156 = vunpack.c.0.s8 %v5155
      %v5157 = vlaneseq
      %v5158 = vshrl.u32 %v5157, 7
      %v5159 = vsub.s32 %v5156, %v5158
      %v5160 = vrot.slane %v5144, %v5159
      %v5162 = vunpack.c.l.s4 1966171168
      %v5163 = vunpack.c.0.s8 %v5162
      %v5164 = vlaneseq
      %v5165 = vshrl.u32 %v5164, 7
      %v5166 = vsub.s32 %v5163, %v5165
      %v5167 = vrot.slane %v5145, %v5166
      %v5169 = vunpack.c.l.s4 1966171168
      %v5170 = vunpack.c.0.s8 %v5169
      %v5171 = vlaneseq
      %v5172 = vshrl.u32 %v5171, 7
      %v5173 = vsub.s32 %v5170, %v5172
      %v5174 = vrot.slane %v5146, %v5173
      %v5175 = vcombine.high %v5153, %v5153
      %v5176 = vcombine.high %v5160, %v5160
      %v5177 = vcombine.high %v5167, %v5167
      %v5178 = vcombine.high %v5174, %v5174
      %v5179 = vcombine.high %v3881, %v3881
      %v5181 = vunpack.c.l.s4 1966171168
      %v5182 = vunpack.c.0.s8 %v5181
      %v5183 = vlaneseq
      %v5184 = vshrl.u32 %v5183, 7
      %v5185 = vsub.s32 %v5182, %v5184
      %v5186 = vrot.slane %v3881, %v5185
      %v5188 = vunpack.c.l.s4 1966171168
      %v5189 = vunpack.c.0.s8 %v5188
      %v5190 = vlaneseq
      %v5191 = vshrl.u32 %v5190, 7
      %v5192 = vsub.s32 %v5189, %v5191
      %v5193 = vrot.slane %v5179, %v5192
      %v5194 = vcombine.high %v5186, %v5186
      %v5195 = vcombine.high %v5193, %v5193
      %v5197 = vunpack.c.l.s4 1966171168
      %v5198 = vunpack.c.0.s8 %v5197
      %v5199 = vlaneseq
      %v5200 = vshrl.u32 %v5199, 7
      %v5201 = vsub.s32 %v5198, %v5200
      %v5202 = vrot.slane %v5186, %v5201
      %v5204 = vunpack.c.l.s4 1966171168
      %v5205 = vunpack.c.0.s8 %v5204
      %v5206 = vlaneseq
      %v5207 = vshrl.u32 %v5206, 7
      %v5208 = vsub.s32 %v5205, %v5207
      %v5209 = vrot.slane %v5193, %v5208
      %v5211 = vunpack.c.l.s4 1966171168
      %v5212 = vunpack.c.0.s8 %v5211
      %v5213 = vlaneseq
      %v5214 = vshrl.u32 %v5213, 7
      %v5215 = vsub.s32 %v5212, %v5214
      %v5216 = vrot.slane %v5194, %v5215
      %v5218 = vunpack.c.l.s4 1966171168
      %v5219 = vunpack.c.0.s8 %v5218
      %v5220 = vlaneseq
      %v5221 = vshrl.u32 %v5220, 7
      %v5222 = vsub.s32 %v5219, %v5221
      %v5223 = vrot.slane %v5195, %v5222
      %v5224 = vcombine.high %v5202, %v5202
      %v5225 = vcombine.high %v5209, %v5209
      %v5226 = vcombine.high %v5216, %v5216
      %v5227 = vcombine.high %v5223, %v5223
      %v5228 = vcombine.high %v3884, %v3884
      %v5230 = vunpack.c.l.s4 1966171168
      %v5231 = vunpack.c.0.s8 %v5230
      %v5232 = vlaneseq
      %v5233 = vshrl.u32 %v5232, 7
      %v5234 = vsub.s32 %v5231, %v5233
      %v5235 = vrot.slane %v3884, %v5234
      %v5237 = vunpack.c.l.s4 1966171168
      %v5238 = vunpack.c.0.s8 %v5237
      %v5239 = vlaneseq
      %v5240 = vshrl.u32 %v5239, 7
      %v5241 = vsub.s32 %v5238, %v5240
      %v5242 = vrot.slane %v5228, %v5241
      %v5243 = vcombine.high %v5235, %v5235
      %v5244 = vcombine.high %v5242, %v5242
      %v5246 = vunpack.c.l.s4 1966171168
      %v5247 = vunpack.c.0.s8 %v5246
      %v5248 = vlaneseq
      %v5249 = vshrl.u32 %v5248, 7
      %v5250 = vsub.s32 %v5247, %v5249
      %v5251 = vrot.slane %v5235, %v5250
      %v5253 = vunpack.c.l.s4 1966171168
      %v5254 = vunpack.c.0.s8 %v5253
      %v5255 = vlaneseq
      %v5256 = vshrl.u32 %v5255, 7
      %v5257 = vsub.s32 %v5254, %v5256
      %v5258 = vrot.slane %v5242, %v5257
      %v5260 = vunpack.c.l.s4 1966171168
      %v5261 = vunpack.c.0.s8 %v5260
      %v5262 = vlaneseq
      %v5263 = vshrl.u32 %v5262, 7
      %v5264 = vsub.s32 %v5261, %v5263
      %v5265 = vrot.slane %v5243, %v5264
      %v5267 = vunpack.c.l.s4 1966171168
      %v5268 = vunpack.c.0.s8 %v5267
      %v5269 = vlaneseq
      %v5270 = vshrl.u32 %v5269, 7
      %v5271 = vsub.s32 %v5268, %v5270
      %v5272 = vrot.slane %v5244, %v5271
      %v5273 = vcombine.high %v5251, %v5251
      %v5274 = vcombine.high %v5258, %v5258
      %v5275 = vcombine.high %v5265, %v5265
      %v5276 = vcombine.high %v5272, %v5272
      %v5277 = vcombine.high %v3889, %v3889
      %v5279 = vunpack.c.l.s4 1966171168
      %v5280 = vunpack.c.0.s8 %v5279
      %v5281 = vlaneseq
      %v5282 = vshrl.u32 %v5281, 7
      %v5283 = vsub.s32 %v5280, %v5282
      %v5284 = vrot.slane %v3889, %v5283
      %v5286 = vunpack.c.l.s4 1966171168
      %v5287 = vunpack.c.0.s8 %v5286
      %v5288 = vlaneseq
      %v5289 = vshrl.u32 %v5288, 7
      %v5290 = vsub.s32 %v5287, %v5289
      %v5291 = vrot.slane %v5277, %v5290
      %v5292 = vcombine.high %v5284, %v5284
      %v5293 = vcombine.high %v5291, %v5291
      %v5295 = vunpack.c.l.s4 1966171168
      %v5296 = vunpack.c.0.s8 %v5295
      %v5297 = vlaneseq
      %v5298 = vshrl.u32 %v5297, 7
      %v5299 = vsub.s32 %v5296, %v5298
      %v5300 = vrot.slane %v5284, %v5299
      %v5302 = vunpack.c.l.s4 1966171168
      %v5303 = vunpack.c.0.s8 %v5302
      %v5304 = vlaneseq
      %v5305 = vshrl.u32 %v5304, 7
      %v5306 = vsub.s32 %v5303, %v5305
      %v5307 = vrot.slane %v5291, %v5306
      %v5309 = vunpack.c.l.s4 1966171168
      %v5310 = vunpack.c.0.s8 %v5309
      %v5311 = vlaneseq
      %v5312 = vshrl.u32 %v5311, 7
      %v5313 = vsub.s32 %v5310, %v5312
      %v5314 = vrot.slane %v5292, %v5313
      %v5316 = vunpack.c.l.s4 1966171168
      %v5317 = vunpack.c.0.s8 %v5316
      %v5318 = vlaneseq
      %v5319 = vshrl.u32 %v5318, 7
      %v5320 = vsub.s32 %v5317, %v5319
      %v5321 = vrot.slane %v5293, %v5320
      %v5322 = vcombine.high %v5300, %v5300
      %v5323 = vcombine.high %v5307, %v5307
      %v5324 = vcombine.high %v5314, %v5314
      %v5325 = vcombine.high %v5321, %v5321
      %v5326 = vcombine.high %v3892, %v3892
      %v5328 = vunpack.c.l.s4 1966171168
      %v5329 = vunpack.c.0.s8 %v5328
      %v5330 = vlaneseq
      %v5331 = vshrl.u32 %v5330, 7
      %v5332 = vsub.s32 %v5329, %v5331
      %v5333 = vrot.slane %v3892, %v5332
      %v5335 = vunpack.c.l.s4 1966171168
      %v5336 = vunpack.c.0.s8 %v5335
      %v5337 = vlaneseq
      %v5338 = vshrl.u32 %v5337, 7
      %v5339 = vsub.s32 %v5336, %v5338
      %v5340 = vrot.slane %v5326, %v5339
      %v5341 = vcombine.high %v5333, %v5333
      %v5342 = vcombine.high %v5340, %v5340
      %v5344 = vunpack.c.l.s4 1966171168
      %v5345 = vunpack.c.0.s8 %v5344
      %v5346 = vlaneseq
      %v5347 = vshrl.u32 %v5346, 7
      %v5348 = vsub.s32 %v5345, %v5347
      %v5349 = vrot.slane %v5333, %v5348
      %v5351 = vunpack.c.l.s4 1966171168
      %v5352 = vunpack.c.0.s8 %v5351
      %v5353 = vlaneseq
      %v5354 = vshrl.u32 %v5353, 7
      %v5355 = vsub.s32 %v5352, %v5354
      %v5356 = vrot.slane %v5340, %v5355
      %v5358 = vunpack.c.l.s4 1966171168
      %v5359 = vunpack.c.0.s8 %v5358
      %v5360 = vlaneseq
      %v5361 = vshrl.u32 %v5360, 7
      %v5362 = vsub.s32 %v5359, %v5361
      %v5363 = vrot.slane %v5341, %v5362
      %v5365 = vunpack.c.l.s4 1966171168
      %v5366 = vunpack.c.0.s8 %v5365
      %v5367 = vlaneseq
      %v5368 = vshrl.u32 %v5367, 7
      %v5369 = vsub.s32 %v5366, %v5368
      %v5370 = vrot.slane %v5342, %v5369
      %v5371 = vcombine.high %v5349, %v5349
      %v5372 = vcombine.high %v5356, %v5356
      %v5373 = vcombine.high %v5363, %v5363
      %v5374 = vcombine.high %v5370, %v5370
      %v5375 = vlaneseq
      %v5376 = vshrl.u32 %v5375, 7
      %v5377 = vsub.s32 0, %v5376
      %v5378 = vrot.slane %v4614, %v5377
      %v5379 = vlaneseq
      %v5380 = vshrl.u32 %v5379, 7
      %v5381 = vsub.s32 0, %v5380
      %v5382 = vrot.slane %v4628, %v5381
      %v5383 = vlaneseq
      %v5384 = vshrl.u32 %v5383, 7
      %v5385 = vsub.s32 0, %v5384
      %v5386 = vrot.slane %v4636, %v5385
      %v5387 = vlaneseq
      %v5388 = vshrl.u32 %v5387, 7
      %v5389 = vsub.s32 0, %v5388
      %v5390 = vrot.slane %v4638, %v5389
      %v5391 = vlaneseq
      %v5392 = vshrl.u32 %v5391, 7
      %v5393 = vsub.s32 0, %v5392
      %v5394 = vrot.slane %v4621, %v5393
      %v5395 = vlaneseq
      %v5396 = vshrl.u32 %v5395, 7
      %v5397 = vsub.s32 0, %v5396
      %v5398 = vrot.slane %v4635, %v5397
      %v5399 = vlaneseq
      %v5400 = vshrl.u32 %v5399, 7
      %v5401 = vsub.s32 0, %v5400
      %v5402 = vrot.slane %v4637, %v5401
      %v5403 = vlaneseq
      %v5404 = vshrl.u32 %v5403, 7
      %v5405 = vsub.s32 0, %v5404
      %v5406 = vrot.slane %v4639, %v5405
      %v5407 = vlaneseq
      %v5408 = vshrl.u32 %v5407, 7
      %v5409 = vsub.s32 0, %v5408
      %v5410 = vrot.slane %v4663, %v5409
      %v5411 = vlaneseq
      %v5412 = vshrl.u32 %v5411, 7
      %v5413 = vsub.s32 0, %v5412
      %v5414 = vrot.slane %v4677, %v5413
      %v5415 = vlaneseq
      %v5416 = vshrl.u32 %v5415, 7
      %v5417 = vsub.s32 0, %v5416
      %v5418 = vrot.slane %v4685, %v5417
      %v5419 = vlaneseq
      %v5420 = vshrl.u32 %v5419, 7
      %v5421 = vsub.s32 0, %v5420
      %v5422 = vrot.slane %v4687, %v5421
      %v5423 = vlaneseq
      %v5424 = vshrl.u32 %v5423, 7
      %v5425 = vsub.s32 0, %v5424
      %v5426 = vrot.slane %v4670, %v5425
      %v5427 = vlaneseq
      %v5428 = vshrl.u32 %v5427, 7
      %v5429 = vsub.s32 0, %v5428
      %v5430 = vrot.slane %v4684, %v5429
      %v5431 = vlaneseq
      %v5432 = vshrl.u32 %v5431, 7
      %v5433 = vsub.s32 0, %v5432
      %v5434 = vrot.slane %v4686, %v5433
      %v5435 = vlaneseq
      %v5436 = vshrl.u32 %v5435, 7
      %v5437 = vsub.s32 0, %v5436
      %v5438 = vrot.slane %v4688, %v5437
      %v5439 = vlaneseq
      %v5440 = vshrl.u32 %v5439, 7
      %v5441 = vsub.s32 0, %v5440
      %v5442 = vrot.slane %v4712, %v5441
      %v5443 = vlaneseq
      %v5444 = vshrl.u32 %v5443, 7
      %v5445 = vsub.s32 0, %v5444
      %v5446 = vrot.slane %v4726, %v5445
      %v5447 = vlaneseq
      %v5448 = vshrl.u32 %v5447, 7
      %v5449 = vsub.s32 0, %v5448
      %v5450 = vrot.slane %v4734, %v5449
      %v5451 = vlaneseq
      %v5452 = vshrl.u32 %v5451, 7
      %v5453 = vsub.s32 0, %v5452
      %v5454 = vrot.slane %v4736, %v5453
      %v5455 = vlaneseq
      %v5456 = vshrl.u32 %v5455, 7
      %v5457 = vsub.s32 0, %v5456
      %v5458 = vrot.slane %v4719, %v5457
      %v5459 = vlaneseq
      %v5460 = vshrl.u32 %v5459, 7
      %v5461 = vsub.s32 0, %v5460
      %v5462 = vrot.slane %v4733, %v5461
      %v5463 = vlaneseq
      %v5464 = vshrl.u32 %v5463, 7
      %v5465 = vsub.s32 0, %v5464
      %v5466 = vrot.slane %v4735, %v5465
      %v5467 = vlaneseq
      %v5468 = vshrl.u32 %v5467, 7
      %v5469 = vsub.s32 0, %v5468
      %v5470 = vrot.slane %v4737, %v5469
      %v5471 = vlaneseq
      %v5472 = vshrl.u32 %v5471, 7
      %v5473 = vsub.s32 0, %v5472
      %v5474 = vrot.slane %v4761, %v5473
      %v5475 = vlaneseq
      %v5476 = vshrl.u32 %v5475, 7
      %v5477 = vsub.s32 0, %v5476
      %v5478 = vrot.slane %v4775, %v5477
      %v5479 = vlaneseq
      %v5480 = vshrl.u32 %v5479, 7
      %v5481 = vsub.s32 0, %v5480
      %v5482 = vrot.slane %v4783, %v5481
      %v5483 = vlaneseq
      %v5484 = vshrl.u32 %v5483, 7
      %v5485 = vsub.s32 0, %v5484
      %v5486 = vrot.slane %v4785, %v5485
      %v5487 = vlaneseq
      %v5488 = vshrl.u32 %v5487, 7
      %v5489 = vsub.s32 0, %v5488
      %v5490 = vrot.slane %v4768, %v5489
      %v5491 = vlaneseq
      %v5492 = vshrl.u32 %v5491, 7
      %v5493 = vsub.s32 0, %v5492
      %v5494 = vrot.slane %v4782, %v5493
      %v5495 = vlaneseq
      %v5496 = vshrl.u32 %v5495, 7
      %v5497 = vsub.s32 0, %v5496
      %v5498 = vrot.slane %v4784, %v5497
      %v5499 = vlaneseq
      %v5500 = vshrl.u32 %v5499, 7
      %v5501 = vsub.s32 0, %v5500
      %v5502 = vrot.slane %v4786, %v5501
      %v5503 = vlaneseq
      %v5504 = vshrl.u32 %v5503, 7
      %v5505 = vsub.s32 0, %v5504
      %v5506 = vrot.slane %v4810, %v5505
      %v5507 = vlaneseq
      %v5508 = vshrl.u32 %v5507, 7
      %v5509 = vsub.s32 0, %v5508
      %v5510 = vrot.slane %v4824, %v5509
      %v5511 = vlaneseq
      %v5512 = vshrl.u32 %v5511, 7
      %v5513 = vsub.s32 0, %v5512
      %v5514 = vrot.slane %v4832, %v5513
      %v5515 = vlaneseq
      %v5516 = vshrl.u32 %v5515, 7
      %v5517 = vsub.s32 0, %v5516
      %v5518 = vrot.slane %v4834, %v5517
      %v5519 = vlaneseq
      %v5520 = vshrl.u32 %v5519, 7
      %v5521 = vsub.s32 0, %v5520
      %v5522 = vrot.slane %v4817, %v5521
      %v5523 = vlaneseq
      %v5524 = vshrl.u32 %v5523, 7
      %v5525 = vsub.s32 0, %v5524
      %v5526 = vrot.slane %v4831, %v5525
      %v5527 = vlaneseq
      %v5528 = vshrl.u32 %v5527, 7
      %v5529 = vsub.s32 0, %v5528
      %v5530 = vrot.slane %v4833, %v5529
      %v5531 = vlaneseq
      %v5532 = vshrl.u32 %v5531, 7
      %v5533 = vsub.s32 0, %v5532
      %v5534 = vrot.slane %v4835, %v5533
      %v5535 = vlaneseq
      %v5536 = vshrl.u32 %v5535, 7
      %v5537 = vsub.s32 0, %v5536
      %v5538 = vrot.slane %v4859, %v5537
      %v5539 = vlaneseq
      %v5540 = vshrl.u32 %v5539, 7
      %v5541 = vsub.s32 0, %v5540
      %v5542 = vrot.slane %v4873, %v5541
      %v5543 = vlaneseq
      %v5544 = vshrl.u32 %v5543, 7
      %v5545 = vsub.s32 0, %v5544
      %v5546 = vrot.slane %v4881, %v5545
      %v5547 = vlaneseq
      %v5548 = vshrl.u32 %v5547, 7
      %v5549 = vsub.s32 0, %v5548
      %v5550 = vrot.slane %v4883, %v5549
      %v5551 = vlaneseq
      %v5552 = vshrl.u32 %v5551, 7
      %v5553 = vsub.s32 0, %v5552
      %v5554 = vrot.slane %v4866, %v5553
      %v5555 = vlaneseq
      %v5556 = vshrl.u32 %v5555, 7
      %v5557 = vsub.s32 0, %v5556
      %v5558 = vrot.slane %v4880, %v5557
      %v5559 = vlaneseq
      %v5560 = vshrl.u32 %v5559, 7
      %v5561 = vsub.s32 0, %v5560
      %v5562 = vrot.slane %v4882, %v5561
      %v5563 = vlaneseq
      %v5564 = vshrl.u32 %v5563, 7
      %v5565 = vsub.s32 0, %v5564
      %v5566 = vrot.slane %v4884, %v5565
      %v5567 = vlaneseq
      %v5568 = vshrl.u32 %v5567, 7
      %v5569 = vsub.s32 0, %v5568
      %v5570 = vrot.slane %v4908, %v5569
      %v5571 = vlaneseq
      %v5572 = vshrl.u32 %v5571, 7
      %v5573 = vsub.s32 0, %v5572
      %v5574 = vrot.slane %v4922, %v5573
      %v5575 = vlaneseq
      %v5576 = vshrl.u32 %v5575, 7
      %v5577 = vsub.s32 0, %v5576
      %v5578 = vrot.slane %v4930, %v5577
      %v5579 = vlaneseq
      %v5580 = vshrl.u32 %v5579, 7
      %v5581 = vsub.s32 0, %v5580
      %v5582 = vrot.slane %v4932, %v5581
      %v5583 = vlaneseq
      %v5584 = vshrl.u32 %v5583, 7
      %v5585 = vsub.s32 0, %v5584
      %v5586 = vrot.slane %v4915, %v5585
      %v5587 = vlaneseq
      %v5588 = vshrl.u32 %v5587, 7
      %v5589 = vsub.s32 0, %v5588
      %v5590 = vrot.slane %v4929, %v5589
      %v5591 = vlaneseq
      %v5592 = vshrl.u32 %v5591, 7
      %v5593 = vsub.s32 0, %v5592
      %v5594 = vrot.slane %v4931, %v5593
      %v5595 = vlaneseq
      %v5596 = vshrl.u32 %v5595, 7
      %v5597 = vsub.s32 0, %v5596
      %v5598 = vrot.slane %v4933, %v5597
      %v5599 = vlaneseq
      %v5600 = vshrl.u32 %v5599, 7
      %v5601 = vsub.s32 0, %v5600
      %v5602 = vrot.slane %v4957, %v5601
      %v5603 = vlaneseq
      %v5604 = vshrl.u32 %v5603, 7
      %v5605 = vsub.s32 0, %v5604
      %v5606 = vrot.slane %v4971, %v5605
      %v5607 = vlaneseq
      %v5608 = vshrl.u32 %v5607, 7
      %v5609 = vsub.s32 0, %v5608
      %v5610 = vrot.slane %v4979, %v5609
      %v5611 = vlaneseq
      %v5612 = vshrl.u32 %v5611, 7
      %v5613 = vsub.s32 0, %v5612
      %v5614 = vrot.slane %v4981, %v5613
      %v5615 = vlaneseq
      %v5616 = vshrl.u32 %v5615, 7
      %v5617 = vsub.s32 0, %v5616
      %v5618 = vrot.slane %v4964, %v5617
      %v5619 = vlaneseq
      %v5620 = vshrl.u32 %v5619, 7
      %v5621 = vsub.s32 0, %v5620
      %v5622 = vrot.slane %v4978, %v5621
      %v5623 = vlaneseq
      %v5624 = vshrl.u32 %v5623, 7
      %v5625 = vsub.s32 0, %v5624
      %v5626 = vrot.slane %v4980, %v5625
      %v5627 = vlaneseq
      %v5628 = vshrl.u32 %v5627, 7
      %v5629 = vsub.s32 0, %v5628
      %v5630 = vrot.slane %v4982, %v5629
      %v5631 = vlaneseq
      %v5632 = vshrl.u32 %v5631, 7
      %v5633 = vsub.s32 0, %v5632
      %v5634 = vrot.slane %v5006, %v5633
      %v5635 = vlaneseq
      %v5636 = vshrl.u32 %v5635, 7
      %v5637 = vsub.s32 0, %v5636
      %v5638 = vrot.slane %v5020, %v5637
      %v5639 = vlaneseq
      %v5640 = vshrl.u32 %v5639, 7
      %v5641 = vsub.s32 0, %v5640
      %v5642 = vrot.slane %v5028, %v5641
      %v5643 = vlaneseq
      %v5644 = vshrl.u32 %v5643, 7
      %v5645 = vsub.s32 0, %v5644
      %v5646 = vrot.slane %v5030, %v5645
      %v5647 = vlaneseq
      %v5648 = vshrl.u32 %v5647, 7
      %v5649 = vsub.s32 0, %v5648
      %v5650 = vrot.slane %v5013, %v5649
      %v5651 = vlaneseq
      %v5652 = vshrl.u32 %v5651, 7
      %v5653 = vsub.s32 0, %v5652
      %v5654 = vrot.slane %v5027, %v5653
      %v5655 = vlaneseq
      %v5656 = vshrl.u32 %v5655, 7
      %v5657 = vsub.s32 0, %v5656
      %v5658 = vrot.slane %v5029, %v5657
      %v5659 = vlaneseq
      %v5660 = vshrl.u32 %v5659, 7
      %v5661 = vsub.s32 0, %v5660
      %v5662 = vrot.slane %v5031, %v5661
      %v5663 = vlaneseq
      %v5664 = vshrl.u32 %v5663, 7
      %v5665 = vsub.s32 0, %v5664
      %v5666 = vrot.slane %v5055, %v5665
      %v5667 = vlaneseq
      %v5668 = vshrl.u32 %v5667, 7
      %v5669 = vsub.s32 0, %v5668
      %v5670 = vrot.slane %v5069, %v5669
      %v5671 = vlaneseq
      %v5672 = vshrl.u32 %v5671, 7
      %v5673 = vsub.s32 0, %v5672
      %v5674 = vrot.slane %v5077, %v5673
      %v5675 = vlaneseq
      %v5676 = vshrl.u32 %v5675, 7
      %v5677 = vsub.s32 0, %v5676
      %v5678 = vrot.slane %v5079, %v5677
      %v5679 = vlaneseq
      %v5680 = vshrl.u32 %v5679, 7
      %v5681 = vsub.s32 0, %v5680
      %v5682 = vrot.slane %v5062, %v5681
      %v5683 = vlaneseq
      %v5684 = vshrl.u32 %v5683, 7
      %v5685 = vsub.s32 0, %v5684
      %v5686 = vrot.slane %v5076, %v5685
      %v5687 = vlaneseq
      %v5688 = vshrl.u32 %v5687, 7
      %v5689 = vsub.s32 0, %v5688
      %v5690 = vrot.slane %v5078, %v5689
      %v5691 = vlaneseq
      %v5692 = vshrl.u32 %v5691, 7
      %v5693 = vsub.s32 0, %v5692
      %v5694 = vrot.slane %v5080, %v5693
      %v5695 = vlaneseq
      %v5696 = vshrl.u32 %v5695, 7
      %v5697 = vsub.s32 0, %v5696
      %v5698 = vrot.slane %v5104, %v5697
      %v5699 = vlaneseq
      %v5700 = vshrl.u32 %v5699, 7
      %v5701 = vsub.s32 0, %v5700
      %v5702 = vrot.slane %v5118, %v5701
      %v5703 = vlaneseq
      %v5704 = vshrl.u32 %v5703, 7
      %v5705 = vsub.s32 0, %v5704
      %v5706 = vrot.slane %v5126, %v5705
      %v5707 = vlaneseq
      %v5708 = vshrl.u32 %v5707, 7
      %v5709 = vsub.s32 0, %v5708
      %v5710 = vrot.slane %v5128, %v5709
      %v5711 = vlaneseq
      %v5712 = vshrl.u32 %v5711, 7
      %v5713 = vsub.s32 0, %v5712
      %v5714 = vrot.slane %v5111, %v5713
      %v5715 = vlaneseq
      %v5716 = vshrl.u32 %v5715, 7
      %v5717 = vsub.s32 0, %v5716
      %v5718 = vrot.slane %v5125, %v5717
      %v5719 = vlaneseq
      %v5720 = vshrl.u32 %v5719, 7
      %v5721 = vsub.s32 0, %v5720
      %v5722 = vrot.slane %v5127, %v5721
      %v5723 = vlaneseq
      %v5724 = vshrl.u32 %v5723, 7
      %v5725 = vsub.s32 0, %v5724
      %v5726 = vrot.slane %v5129, %v5725
      %v5727 = vlaneseq
      %v5728 = vshrl.u32 %v5727, 7
      %v5729 = vsub.s32 0, %v5728
      %v5730 = vrot.slane %v5153, %v5729
      %v5731 = vlaneseq
      %v5732 = vshrl.u32 %v5731, 7
      %v5733 = vsub.s32 0, %v5732
      %v5734 = vrot.slane %v5167, %v5733
      %v5735 = vlaneseq
      %v5736 = vshrl.u32 %v5735, 7
      %v5737 = vsub.s32 0, %v5736
      %v5738 = vrot.slane %v5175, %v5737
      %v5739 = vlaneseq
      %v5740 = vshrl.u32 %v5739, 7
      %v5741 = vsub.s32 0, %v5740
      %v5742 = vrot.slane %v5177, %v5741
      %v5743 = vlaneseq
      %v5744 = vshrl.u32 %v5743, 7
      %v5745 = vsub.s32 0, %v5744
      %v5746 = vrot.slane %v5160, %v5745
      %v5747 = vlaneseq
      %v5748 = vshrl.u32 %v5747, 7
      %v5749 = vsub.s32 0, %v5748
      %v5750 = vrot.slane %v5174, %v5749
      %v5751 = vlaneseq
      %v5752 = vshrl.u32 %v5751, 7
      %v5753 = vsub.s32 0, %v5752
      %v5754 = vrot.slane %v5176, %v5753
      %v5755 = vlaneseq
      %v5756 = vshrl.u32 %v5755, 7
      %v5757 = vsub.s32 0, %v5756
      %v5758 = vrot.slane %v5178, %v5757
      %v5759 = vlaneseq
      %v5760 = vshrl.u32 %v5759, 7
      %v5761 = vsub.s32 0, %v5760
      %v5762 = vrot.slane %v5202, %v5761
      %v5763 = vlaneseq
      %v5764 = vshrl.u32 %v5763, 7
      %v5765 = vsub.s32 0, %v5764
      %v5766 = vrot.slane %v5216, %v5765
      %v5767 = vlaneseq
      %v5768 = vshrl.u32 %v5767, 7
      %v5769 = vsub.s32 0, %v5768
      %v5770 = vrot.slane %v5224, %v5769
      %v5771 = vlaneseq
      %v5772 = vshrl.u32 %v5771, 7
      %v5773 = vsub.s32 0, %v5772
      %v5774 = vrot.slane %v5226, %v5773
      %v5775 = vlaneseq
      %v5776 = vshrl.u32 %v5775, 7
      %v5777 = vsub.s32 0, %v5776
      %v5778 = vrot.slane %v5209, %v5777
      %v5779 = vlaneseq
      %v5780 = vshrl.u32 %v5779, 7
      %v5781 = vsub.s32 0, %v5780
      %v5782 = vrot.slane %v5223, %v5781
      %v5783 = vlaneseq
      %v5784 = vshrl.u32 %v5783, 7
      %v5785 = vsub.s32 0, %v5784
      %v5786 = vrot.slane %v5225, %v5785
      %v5787 = vlaneseq
      %v5788 = vshrl.u32 %v5787, 7
      %v5789 = vsub.s32 0, %v5788
      %v5790 = vrot.slane %v5227, %v5789
      %v5791 = vlaneseq
      %v5792 = vshrl.u32 %v5791, 7
      %v5793 = vsub.s32 0, %v5792
      %v5794 = vrot.slane %v5251, %v5793
      %v5795 = vlaneseq
      %v5796 = vshrl.u32 %v5795, 7
      %v5797 = vsub.s32 0, %v5796
      %v5798 = vrot.slane %v5265, %v5797
      %v5799 = vlaneseq
      %v5800 = vshrl.u32 %v5799, 7
      %v5801 = vsub.s32 0, %v5800
      %v5802 = vrot.slane %v5273, %v5801
      %v5803 = vlaneseq
      %v5804 = vshrl.u32 %v5803, 7
      %v5805 = vsub.s32 0, %v5804
      %v5806 = vrot.slane %v5275, %v5805
      %v5807 = vlaneseq
      %v5808 = vshrl.u32 %v5807, 7
      %v5809 = vsub.s32 0, %v5808
      %v5810 = vrot.slane %v5258, %v5809
      %v5811 = vlaneseq
      %v5812 = vshrl.u32 %v5811, 7
      %v5813 = vsub.s32 0, %v5812
      %v5814 = vrot.slane %v5272, %v5813
      %v5815 = vlaneseq
      %v5816 = vshrl.u32 %v5815, 7
      %v5817 = vsub.s32 0, %v5816
      %v5818 = vrot.slane %v5274, %v5817
      %v5819 = vlaneseq
      %v5820 = vshrl.u32 %v5819, 7
      %v5821 = vsub.s32 0, %v5820
      %v5822 = vrot.slane %v5276, %v5821
      %v5823 = vlaneseq
      %v5824 = vshrl.u32 %v5823, 7
      %v5825 = vsub.s32 0, %v5824
      %v5826 = vrot.slane %v5300, %v5825
      %v5827 = vlaneseq
      %v5828 = vshrl.u32 %v5827, 7
      %v5829 = vsub.s32 0, %v5828
      %v5830 = vrot.slane %v5314, %v5829
      %v5831 = vlaneseq
      %v5832 = vshrl.u32 %v5831, 7
      %v5833 = vsub.s32 0, %v5832
      %v5834 = vrot.slane %v5322, %v5833
      %v5835 = vlaneseq
      %v5836 = vshrl.u32 %v5835, 7
      %v5837 = vsub.s32 0, %v5836
      %v5838 = vrot.slane %v5324, %v5837
      %v5839 = vlaneseq
      %v5840 = vshrl.u32 %v5839, 7
      %v5841 = vsub.s32 0, %v5840
      %v5842 = vrot.slane %v5307, %v5841
      %v5843 = vlaneseq
      %v5844 = vshrl.u32 %v5843, 7
      %v5845 = vsub.s32 0, %v5844
      %v5846 = vrot.slane %v5321, %v5845
      %v5847 = vlaneseq
      %v5848 = vshrl.u32 %v5847, 7
      %v5849 = vsub.s32 0, %v5848
      %v5850 = vrot.slane %v5323, %v5849
      %v5851 = vlaneseq
      %v5852 = vshrl.u32 %v5851, 7
      %v5853 = vsub.s32 0, %v5852
      %v5854 = vrot.slane %v5325, %v5853
      %v5855 = vlaneseq
      %v5856 = vshrl.u32 %v5855, 7
      %v5857 = vsub.s32 0, %v5856
      %v5858 = vrot.slane %v5349, %v5857
      %v5859 = vlaneseq
      %v5860 = vshrl.u32 %v5859, 7
      %v5861 = vsub.s32 0, %v5860
      %v5862 = vrot.slane %v5363, %v5861
      %v5863 = vlaneseq
      %v5864 = vshrl.u32 %v5863, 7
      %v5865 = vsub.s32 0, %v5864
      %v5866 = vrot.slane %v5371, %v5865
      %v5867 = vlaneseq
      %v5868 = vshrl.u32 %v5867, 7
      %v5869 = vsub.s32 0, %v5868
      %v5870 = vrot.slane %v5373, %v5869
      %v5871 = vlaneseq
      %v5872 = vshrl.u32 %v5871, 7
      %v5873 = vsub.s32 0, %v5872
      %v5874 = vrot.slane %v5356, %v5873
      %v5875 = vlaneseq
      %v5876 = vshrl.u32 %v5875, 7
      %v5877 = vsub.s32 0, %v5876
      %v5878 = vrot.slane %v5370, %v5877
      %v5879 = vlaneseq
      %v5880 = vshrl.u32 %v5879, 7
      %v5881 = vsub.s32 0, %v5880
      %v5882 = vrot.slane %v5372, %v5881
      %v5883 = vlaneseq
      %v5884 = vshrl.u32 %v5883, 7
      %v5885 = vsub.s32 0, %v5884
      %v5886 = vrot.slane %v5374, %v5885
      %v6015 = vadd.f32 %v4065, %v5378
      %v6016 = vadd.f32 %v4068, %v5382
      %v6017 = vadd.f32 %v4073, %v5386
      %v6018 = vadd.f32 %v4076, %v5390
      %v6019 = vadd.f32 %v4081, %v5394
      %v6020 = vadd.f32 %v4084, %v5398
      %v6021 = vadd.f32 %v4089, %v5402
      %v6022 = vadd.f32 %v4092, %v5406
      %v6023 = vadd.f32 %v4097, %v5410
      %v6024 = vadd.f32 %v4100, %v5414
      %v6025 = vadd.f32 %v4105, %v5418
      %v6026 = vadd.f32 %v4108, %v5422
      %v6027 = vadd.f32 %v4113, %v5426
      %v6028 = vadd.f32 %v4116, %v5430
      %v6029 = vadd.f32 %v4121, %v5434
      %v6030 = vadd.f32 %v4124, %v5438
      %v6031 = vadd.f32 %v4129, %v5442
      %v6032 = vadd.f32 %v4132, %v5446
      %v6033 = vadd.f32 %v4137, %v5450
      %v6034 = vadd.f32 %v4140, %v5454
      %v6035 = vadd.f32 %v4145, %v5458
      %v6036 = vadd.f32 %v4148, %v5462
      %v6037 = vadd.f32 %v4153, %v5466
      %v6038 = vadd.f32 %v4156, %v5470
      %v6039 = vadd.f32 %v4161, %v5474
      %v6040 = vadd.f32 %v4164, %v5478
      %v6041 = vadd.f32 %v4169, %v5482
      %v6042 = vadd.f32 %v4172, %v5486
      %v6043 = vadd.f32 %v4177, %v5490
      %v6044 = vadd.f32 %v4180, %v5494
      %v6045 = vadd.f32 %v4185, %v5498
      %v6046 = vadd.f32 %v4188, %v5502
      %v6047 = vadd.f32 %v4193, %v5506
      %v6048 = vadd.f32 %v4196, %v5510
      %v6049 = vadd.f32 %v4201, %v5514
      %v6050 = vadd.f32 %v4204, %v5518
      %v6051 = vadd.f32 %v4209, %v5522
      %v6052 = vadd.f32 %v4212, %v5526
      %v6053 = vadd.f32 %v4217, %v5530
      %v6054 = vadd.f32 %v4220, %v5534
      %v6055 = vadd.f32 %v4225, %v5538
      %v6056 = vadd.f32 %v4228, %v5542
      %v6057 = vadd.f32 %v4233, %v5546
      %v6058 = vadd.f32 %v4236, %v5550
      %v6059 = vadd.f32 %v4241, %v5554
      %v6060 = vadd.f32 %v4244, %v5558
      %v6061 = vadd.f32 %v4249, %v5562
      %v6062 = vadd.f32 %v4252, %v5566
      %v6063 = vadd.f32 %v4257, %v5570
      %v6064 = vadd.f32 %v4260, %v5574
      %v6065 = vadd.f32 %v4265, %v5578
      %v6066 = vadd.f32 %v4268, %v5582
      %v6067 = vadd.f32 %v4273, %v5586
      %v6068 = vadd.f32 %v4276, %v5590
      %v6069 = vadd.f32 %v4281, %v5594
      %v6070 = vadd.f32 %v4284, %v5598
      %v6071 = vadd.f32 %v4289, %v5602
      %v6072 = vadd.f32 %v4292, %v5606
      %v6073 = vadd.f32 %v4297, %v5610
      %v6074 = vadd.f32 %v4300, %v5614
      %v6075 = vadd.f32 %v4305, %v5618
      %v6076 = vadd.f32 %v4308, %v5622
      %v6077 = vadd.f32 %v4313, %v5626
      %v6078 = vadd.f32 %v4316, %v5630
      %v6079 = vadd.f32 %v4321, %v5634
      %v6080 = vadd.f32 %v4324, %v5638
      %v6081 = vadd.f32 %v4329, %v5642
      %v6082 = vadd.f32 %v4332, %v5646
      %v6083 = vadd.f32 %v4337, %v5650
      %v6084 = vadd.f32 %v4340, %v5654
      %v6085 = vadd.f32 %v4345, %v5658
      %v6086 = vadd.f32 %v4348, %v5662
      %v6087 = vadd.f32 %v4353, %v5666
      %v6088 = vadd.f32 %v4356, %v5670
      %v6089 = vadd.f32 %v4361, %v5674
      %v6090 = vadd.f32 %v4364, %v5678
      %v6091 = vadd.f32 %v4369, %v5682
      %v6092 = vadd.f32 %v4372, %v5686
      %v6093 = vadd.f32 %v4377, %v5690
      %v6094 = vadd.f32 %v4380, %v5694
      %v6095 = vadd.f32 %v4385, %v5698
      %v6096 = vadd.f32 %v4388, %v5702
      %v6097 = vadd.f32 %v4393, %v5706
      %v6098 = vadd.f32 %v4396, %v5710
      %v6099 = vadd.f32 %v4401, %v5714
      %v6100 = vadd.f32 %v4404, %v5718
      %v6101 = vadd.f32 %v4409, %v5722
      %v6102 = vadd.f32 %v4412, %v5726
      %v6103 = vadd.f32 %v4417, %v5730
      %v6104 = vadd.f32 %v4420, %v5734
      %v6105 = vadd.f32 %v4425, %v5738
      %v6106 = vadd.f32 %v4428, %v5742
      %v6107 = vadd.f32 %v4433, %v5746
      %v6108 = vadd.f32 %v4436, %v5750
      %v6109 = vadd.f32 %v4441, %v5754
      %v6110 = vadd.f32 %v4444, %v5758
      %v6111 = vadd.f32 %v4449, %v5762
      %v6112 = vadd.f32 %v4452, %v5766
      %v6113 = vadd.f32 %v4457, %v5770
      %v6114 = vadd.f32 %v4460, %v5774
      %v6115 = vadd.f32 %v4465, %v5778
      %v6116 = vadd.f32 %v4468, %v5782
      %v6117 = vadd.f32 %v4473, %v5786
      %v6118 = vadd.f32 %v4476, %v5790
      %v6119 = vadd.f32 %v4481, %v5794
      %v6120 = vadd.f32 %v4484, %v5798
      %v6121 = vadd.f32 %v4489, %v5802
      %v6122 = vadd.f32 %v4492, %v5806
      %v6123 = vadd.f32 %v4497, %v5810
      %v6124 = vadd.f32 %v4500, %v5814
      %v6125 = vadd.f32 %v4505, %v5818
      %v6126 = vadd.f32 %v4508, %v5822
      %v6127 = vadd.f32 %v4513, %v5826
      %v6128 = vadd.f32 %v4516, %v5830
      %v6129 = vadd.f32 %v4521, %v5834
      %v6130 = vadd.f32 %v4524, %v5838
      %v6131 = vadd.f32 %v4529, %v5842
      %v6132 = vadd.f32 %v4532, %v5846
      %v6133 = vadd.f32 %v4537, %v5850
      %v6134 = vadd.f32 %v4540, %v5854
      %v6135 = vadd.f32 %v4545, %v5858
      %v6136 = vadd.f32 %v4548, %v5862
      %v6137 = vadd.f32 %v4553, %v5866
      %v6138 = vadd.f32 %v4556, %v5870
      %v6139 = vadd.f32 %v4561, %v5874
      %v6140 = vadd.f32 %v4564, %v5878
      %v6141 = vadd.f32 %v4569, %v5882
      %v6142 = vadd.f32 %v4572, %v5886
      %v6143 = vmul.f32 %v6015, 0.5
      %v6144 = vmul.f32 %v6016, 0.5
      %v6145 = vmul.f32 %v6017, 0.5
      %v6146 = vmul.f32 %v6018, 0.5
      %v6147 = vmul.f32 %v6019, 0.5
      %v6148 = vmul.f32 %v6020, 0.5
      %v6149 = vmul.f32 %v6021, 0.5
      %v6150 = vmul.f32 %v6022, 0.5
      %v6151 = vmul.f32 %v6023, 0.5
      %v6152 = vmul.f32 %v6024, 0.5
      %v6153 = vmul.f32 %v6025, 0.5
      %v6154 = vmul.f32 %v6026, 0.5
      %v6155 = vmul.f32 %v6027, 0.5
      %v6156 = vmul.f32 %v6028, 0.5
      %v6157 = vmul.f32 %v6029, 0.5
      %v6158 = vmul.f32 %v6030, 0.5
      %v6159 = vmul.f32 %v6031, 0.5
      %v6160 = vmul.f32 %v6032, 0.5
      %v6161 = vmul.f32 %v6033, 0.5
      %v6162 = vmul.f32 %v6034, 0.5
      %v6163 = vmul.f32 %v6035, 0.5
      %v6164 = vmul.f32 %v6036, 0.5
      %v6165 = vmul.f32 %v6037, 0.5
      %v6166 = vmul.f32 %v6038, 0.5
      %v6167 = vmul.f32 %v6039, 0.5
      %v6168 = vmul.f32 %v6040, 0.5
      %v6169 = vmul.f32 %v6041, 0.5
      %v6170 = vmul.f32 %v6042, 0.5
      %v6171 = vmul.f32 %v6043, 0.5
      %v6172 = vmul.f32 %v6044, 0.5
      %v6173 = vmul.f32 %v6045, 0.5
      %v6174 = vmul.f32 %v6046, 0.5
      %v6175 = vmul.f32 %v6047, 0.5
      %v6176 = vmul.f32 %v6048, 0.5
      %v6177 = vmul.f32 %v6049, 0.5
      %v6178 = vmul.f32 %v6050, 0.5
      %v6179 = vmul.f32 %v6051, 0.5
      %v6180 = vmul.f32 %v6052, 0.5
      %v6181 = vmul.f32 %v6053, 0.5
      %v6182 = vmul.f32 %v6054, 0.5
      %v6183 = vmul.f32 %v6055, 0.5
      %v6184 = vmul.f32 %v6056, 0.5
      %v6185 = vmul.f32 %v6057, 0.5
      %v6186 = vmul.f32 %v6058, 0.5
      %v6187 = vmul.f32 %v6059, 0.5
      %v6188 = vmul.f32 %v6060, 0.5
      %v6189 = vmul.f32 %v6061, 0.5
      %v6190 = vmul.f32 %v6062, 0.5
      %v6191 = vmul.f32 %v6063, 0.5
      %v6192 = vmul.f32 %v6064, 0.5
      %v6193 = vmul.f32 %v6065, 0.5
      %v6194 = vmul.f32 %v6066, 0.5
      %v6195 = vmul.f32 %v6067, 0.5
      %v6196 = vmul.f32 %v6068, 0.5
      %v6197 = vmul.f32 %v6069, 0.5
      %v6198 = vmul.f32 %v6070, 0.5
      %v6199 = vmul.f32 %v6071, 0.5
      %v6200 = vmul.f32 %v6072, 0.5
      %v6201 = vmul.f32 %v6073, 0.5
      %v6202 = vmul.f32 %v6074, 0.5
      %v6203 = vmul.f32 %v6075, 0.5
      %v6204 = vmul.f32 %v6076, 0.5
      %v6205 = vmul.f32 %v6077, 0.5
      %v6206 = vmul.f32 %v6078, 0.5
      %v6207 = vmul.f32 %v6079, 0.5
      %v6208 = vmul.f32 %v6080, 0.5
      %v6209 = vmul.f32 %v6081, 0.5
      %v6210 = vmul.f32 %v6082, 0.5
      %v6211 = vmul.f32 %v6083, 0.5
      %v6212 = vmul.f32 %v6084, 0.5
      %v6213 = vmul.f32 %v6085, 0.5
      %v6214 = vmul.f32 %v6086, 0.5
      %v6215 = vmul.f32 %v6087, 0.5
      %v6216 = vmul.f32 %v6088, 0.5
      %v6217 = vmul.f32 %v6089, 0.5
      %v6218 = vmul.f32 %v6090, 0.5
      %v6219 = vmul.f32 %v6091, 0.5
      %v6220 = vmul.f32 %v6092, 0.5
      %v6221 = vmul.f32 %v6093, 0.5
      %v6222 = vmul.f32 %v6094, 0.5
      %v6223 = vmul.f32 %v6095, 0.5
      %v6224 = vmul.f32 %v6096, 0.5
      %v6225 = vmul.f32 %v6097, 0.5
      %v6226 = vmul.f32 %v6098, 0.5
      %v6227 = vmul.f32 %v6099, 0.5
      %v6228 = vmul.f32 %v6100, 0.5
      %v6229 = vmul.f32 %v6101, 0.5
      %v6230 = vmul.f32 %v6102, 0.5
      %v6231 = vmul.f32 %v6103, 0.5
      %v6232 = vmul.f32 %v6104, 0.5
      %v6233 = vmul.f32 %v6105, 0.5
      %v6234 = vmul.f32 %v6106, 0.5
      %v6235 = vmul.f32 %v6107, 0.5
      %v6236 = vmul.f32 %v6108, 0.5
      %v6237 = vmul.f32 %v6109, 0.5
      %v6238 = vmul.f32 %v6110, 0.5
      %v6239 = vmul.f32 %v6111, 0.5
      %v6240 = vmul.f32 %v6112, 0.5
      %v6241 = vmul.f32 %v6113, 0.5
      %v6242 = vmul.f32 %v6114, 0.5
      %v6243 = vmul.f32 %v6115, 0.5
      %v6244 = vmul.f32 %v6116, 0.5
      %v6245 = vmul.f32 %v6117, 0.5
      %v6246 = vmul.f32 %v6118, 0.5
      %v6247 = vmul.f32 %v6119, 0.5
      %v6248 = vmul.f32 %v6120, 0.5
      %v6249 = vmul.f32 %v6121, 0.5
      %v6250 = vmul.f32 %v6122, 0.5
      %v6251 = vmul.f32 %v6123, 0.5
      %v6252 = vmul.f32 %v6124, 0.5
      %v6253 = vmul.f32 %v6125, 0.5
      %v6254 = vmul.f32 %v6126, 0.5
      %v6255 = vmul.f32 %v6127, 0.5
      %v6256 = vmul.f32 %v6128, 0.5
      %v6257 = vmul.f32 %v6129, 0.5
      %v6258 = vmul.f32 %v6130, 0.5
      %v6259 = vmul.f32 %v6131, 0.5
      %v6260 = vmul.f32 %v6132, 0.5
      %v6261 = vmul.f32 %v6133, 0.5
      %v6262 = vmul.f32 %v6134, 0.5
      %v6263 = vmul.f32 %v6135, 0.5
      %v6264 = vmul.f32 %v6136, 0.5
      %v6265 = vmul.f32 %v6137, 0.5
      %v6266 = vmul.f32 %v6138, 0.5
      %v6267 = vmul.f32 %v6139, 0.5
      %v6268 = vmul.f32 %v6140, 0.5
      %v6269 = vmul.f32 %v6141, 0.5
      %v6270 = vmul.f32 %v6142, 0.5
      %v6271 = vmul.f32 %v6015, 0.044715
      %v6272 = vmul.f32 %v6016, 0.044715
      %v6273 = vmul.f32 %v6017, 0.044715
      %v6274 = vmul.f32 %v6018, 0.044715
      %v6275 = vmul.f32 %v6019, 0.044715
      %v6276 = vmul.f32 %v6020, 0.044715
      %v6277 = vmul.f32 %v6021, 0.044715
      %v6278 = vmul.f32 %v6022, 0.044715
      %v6279 = vmul.f32 %v6023, 0.044715
      %v6280 = vmul.f32 %v6024, 0.044715
      %v6281 = vmul.f32 %v6025, 0.044715
      %v6282 = vmul.f32 %v6026, 0.044715
      %v6283 = vmul.f32 %v6027, 0.044715
      %v6284 = vmul.f32 %v6028, 0.044715
      %v6285 = vmul.f32 %v6029, 0.044715
      %v6286 = vmul.f32 %v6030, 0.044715
      %v6287 = vmul.f32 %v6031, 0.044715
      %v6288 = vmul.f32 %v6032, 0.044715
      %v6289 = vmul.f32 %v6033, 0.044715
      %v6290 = vmul.f32 %v6034, 0.044715
      %v6291 = vmul.f32 %v6035, 0.044715
      %v6292 = vmul.f32 %v6036, 0.044715
      %v6293 = vmul.f32 %v6037, 0.044715
      %v6294 = vmul.f32 %v6038, 0.044715
      %v6295 = vmul.f32 %v6039, 0.044715
      %v6296 = vmul.f32 %v6040, 0.044715
      %v6297 = vmul.f32 %v6041, 0.044715
      %v6298 = vmul.f32 %v6042, 0.044715
      %v6299 = vmul.f32 %v6043, 0.044715
      %v6300 = vmul.f32 %v6044, 0.044715
      %v6301 = vmul.f32 %v6045, 0.044715
      %v6302 = vmul.f32 %v6046, 0.044715
      %v6303 = vmul.f32 %v6047, 0.044715
      %v6304 = vmul.f32 %v6048, 0.044715
      %v6305 = vmul.f32 %v6049, 0.044715
      %v6306 = vmul.f32 %v6050, 0.044715
      %v6307 = vmul.f32 %v6051, 0.044715
      %v6308 = vmul.f32 %v6052, 0.044715
      %v6309 = vmul.f32 %v6053, 0.044715
      %v6310 = vmul.f32 %v6054, 0.044715
      %v6311 = vmul.f32 %v6055, 0.044715
      %v6312 = vmul.f32 %v6056, 0.044715
      %v6313 = vmul.f32 %v6057, 0.044715
      %v6314 = vmul.f32 %v6058, 0.044715
      %v6315 = vmul.f32 %v6059, 0.044715
      %v6316 = vmul.f32 %v6060, 0.044715
      %v6317 = vmul.f32 %v6061, 0.044715
      %v6318 = vmul.f32 %v6062, 0.044715
      %v6319 = vmul.f32 %v6063, 0.044715
      %v6320 = vmul.f32 %v6064, 0.044715
      %v6321 = vmul.f32 %v6065, 0.044715
      %v6322 = vmul.f32 %v6066, 0.044715
      %v6323 = vmul.f32 %v6067, 0.044715
      %v6324 = vmul.f32 %v6068, 0.044715
      %v6325 = vmul.f32 %v6069, 0.044715
      %v6326 = vmul.f32 %v6070, 0.044715
      %v6327 = vmul.f32 %v6071, 0.044715
      %v6328 = vmul.f32 %v6072, 0.044715
      %v6329 = vmul.f32 %v6073, 0.044715
      %v6330 = vmul.f32 %v6074, 0.044715
      %v6331 = vmul.f32 %v6075, 0.044715
      %v6332 = vmul.f32 %v6076, 0.044715
      %v6333 = vmul.f32 %v6077, 0.044715
      %v6334 = vmul.f32 %v6078, 0.044715
      %v6335 = vmul.f32 %v6079, 0.044715
      %v6336 = vmul.f32 %v6080, 0.044715
      %v6337 = vmul.f32 %v6081, 0.044715
      %v6338 = vmul.f32 %v6082, 0.044715
      %v6339 = vmul.f32 %v6083, 0.044715
      %v6340 = vmul.f32 %v6084, 0.044715
      %v6341 = vmul.f32 %v6085, 0.044715
      %v6342 = vmul.f32 %v6086, 0.044715
      %v6343 = vmul.f32 %v6087, 0.044715
      %v6344 = vmul.f32 %v6088, 0.044715
      %v6345 = vmul.f32 %v6089, 0.044715
      %v6346 = vmul.f32 %v6090, 0.044715
      %v6347 = vmul.f32 %v6091, 0.044715
      %v6348 = vmul.f32 %v6092, 0.044715
      %v6349 = vmul.f32 %v6093, 0.044715
      %v6350 = vmul.f32 %v6094, 0.044715
      %v6351 = vmul.f32 %v6095, 0.044715
      %v6352 = vmul.f32 %v6096, 0.044715
      %v6353 = vmul.f32 %v6097, 0.044715
      %v6354 = vmul.f32 %v6098, 0.044715
      %v6355 = vmul.f32 %v6099, 0.044715
      %v6356 = vmul.f32 %v6100, 0.044715
      %v6357 = vmul.f32 %v6101, 0.044715
      %v6358 = vmul.f32 %v6102, 0.044715
      %v6359 = vmul.f32 %v6103, 0.044715
      %v6360 = vmul.f32 %v6104, 0.044715
      %v6361 = vmul.f32 %v6105, 0.044715
      %v6362 = vmul.f32 %v6106, 0.044715
      %v6363 = vmul.f32 %v6107, 0.044715
      %v6364 = vmul.f32 %v6108, 0.044715
      %v6365 = vmul.f32 %v6109, 0.044715
      %v6366 = vmul.f32 %v6110, 0.044715
      %v6367 = vmul.f32 %v6111, 0.044715
      %v6368 = vmul.f32 %v6112, 0.044715
      %v6369 = vmul.f32 %v6113, 0.044715
      %v6370 = vmul.f32 %v6114, 0.044715
      %v6371 = vmul.f32 %v6115, 0.044715
      %v6372 = vmul.f32 %v6116, 0.044715
      %v6373 = vmul.f32 %v6117, 0.044715
      %v6374 = vmul.f32 %v6118, 0.044715
      %v6375 = vmul.f32 %v6119, 0.044715
      %v6376 = vmul.f32 %v6120, 0.044715
      %v6377 = vmul.f32 %v6121, 0.044715
      %v6378 = vmul.f32 %v6122, 0.044715
      %v6379 = vmul.f32 %v6123, 0.044715
      %v6380 = vmul.f32 %v6124, 0.044715
      %v6381 = vmul.f32 %v6125, 0.044715
      %v6382 = vmul.f32 %v6126, 0.044715
      %v6383 = vmul.f32 %v6127, 0.044715
      %v6384 = vmul.f32 %v6128, 0.044715
      %v6385 = vmul.f32 %v6129, 0.044715
      %v6386 = vmul.f32 %v6130, 0.044715
      %v6387 = vmul.f32 %v6131, 0.044715
      %v6388 = vmul.f32 %v6132, 0.044715
      %v6389 = vmul.f32 %v6133, 0.044715
      %v6390 = vmul.f32 %v6134, 0.044715
      %v6391 = vmul.f32 %v6135, 0.044715
      %v6392 = vmul.f32 %v6136, 0.044715
      %v6393 = vmul.f32 %v6137, 0.044715
      %v6394 = vmul.f32 %v6138, 0.044715
      %v6395 = vmul.f32 %v6139, 0.044715
      %v6396 = vmul.f32 %v6140, 0.044715
      %v6397 = vmul.f32 %v6141, 0.044715
      %v6398 = vmul.f32 %v6142, 0.044715
      %v6399 = vmul.f32 %v6271, %v6015
      %v6400 = vmul.f32 %v6272, %v6016
      %v6401 = vmul.f32 %v6273, %v6017
      %v6402 = vmul.f32 %v6274, %v6018
      %v6403 = vmul.f32 %v6275, %v6019
      %v6404 = vmul.f32 %v6276, %v6020
      %v6405 = vmul.f32 %v6277, %v6021
      %v6406 = vmul.f32 %v6278, %v6022
      %v6407 = vmul.f32 %v6279, %v6023
      %v6408 = vmul.f32 %v6280, %v6024
      %v6409 = vmul.f32 %v6281, %v6025
      %v6410 = vmul.f32 %v6282, %v6026
      %v6411 = vmul.f32 %v6283, %v6027
      %v6412 = vmul.f32 %v6284, %v6028
      %v6413 = vmul.f32 %v6285, %v6029
      %v6414 = vmul.f32 %v6286, %v6030
      %v6415 = vmul.f32 %v6287, %v6031
      %v6416 = vmul.f32 %v6288, %v6032
      %v6417 = vmul.f32 %v6289, %v6033
      %v6418 = vmul.f32 %v6290, %v6034
      %v6419 = vmul.f32 %v6291, %v6035
      %v6420 = vmul.f32 %v6292, %v6036
      %v6421 = vmul.f32 %v6293, %v6037
      %v6422 = vmul.f32 %v6294, %v6038
      %v6423 = vmul.f32 %v6295, %v6039
      %v6424 = vmul.f32 %v6296, %v6040
      %v6425 = vmul.f32 %v6297, %v6041
      %v6426 = vmul.f32 %v6298, %v6042
      %v6427 = vmul.f32 %v6299, %v6043
      %v6428 = vmul.f32 %v6300, %v6044
      %v6429 = vmul.f32 %v6301, %v6045
      %v6430 = vmul.f32 %v6302, %v6046
      %v6431 = vmul.f32 %v6303, %v6047
      %v6432 = vmul.f32 %v6304, %v6048
      %v6433 = vmul.f32 %v6305, %v6049
      %v6434 = vmul.f32 %v6306, %v6050
      %v6435 = vmul.f32 %v6307, %v6051
      %v6436 = vmul.f32 %v6308, %v6052
      %v6437 = vmul.f32 %v6309, %v6053
      %v6438 = vmul.f32 %v6310, %v6054
      %v6439 = vmul.f32 %v6311, %v6055
      %v6440 = vmul.f32 %v6312, %v6056
      %v6441 = vmul.f32 %v6313, %v6057
      %v6442 = vmul.f32 %v6314, %v6058
      %v6443 = vmul.f32 %v6315, %v6059
      %v6444 = vmul.f32 %v6316, %v6060
      %v6445 = vmul.f32 %v6317, %v6061
      %v6446 = vmul.f32 %v6318, %v6062
      %v6447 = vmul.f32 %v6319, %v6063
      %v6448 = vmul.f32 %v6320, %v6064
      %v6449 = vmul.f32 %v6321, %v6065
      %v6450 = vmul.f32 %v6322, %v6066
      %v6451 = vmul.f32 %v6323, %v6067
      %v6452 = vmul.f32 %v6324, %v6068
      %v6453 = vmul.f32 %v6325, %v6069
      %v6454 = vmul.f32 %v6326, %v6070
      %v6455 = vmul.f32 %v6327, %v6071
      %v6456 = vmul.f32 %v6328, %v6072
      %v6457 = vmul.f32 %v6329, %v6073
      %v6458 = vmul.f32 %v6330, %v6074
      %v6459 = vmul.f32 %v6331, %v6075
      %v6460 = vmul.f32 %v6332, %v6076
      %v6461 = vmul.f32 %v6333, %v6077
      %v6462 = vmul.f32 %v6334, %v6078
      %v6463 = vmul.f32 %v6335, %v6079
      %v6464 = vmul.f32 %v6336, %v6080
      %v6465 = vmul.f32 %v6337, %v6081
      %v6466 = vmul.f32 %v6338, %v6082
      %v6467 = vmul.f32 %v6339, %v6083
      %v6468 = vmul.f32 %v6340, %v6084
      %v6469 = vmul.f32 %v6341, %v6085
      %v6470 = vmul.f32 %v6342, %v6086
      %v6471 = vmul.f32 %v6343, %v6087
      %v6472 = vmul.f32 %v6344, %v6088
      %v6473 = vmul.f32 %v6345, %v6089
      %v6474 = vmul.f32 %v6346, %v6090
      %v6475 = vmul.f32 %v6347, %v6091
      %v6476 = vmul.f32 %v6348, %v6092
      %v6477 = vmul.f32 %v6349, %v6093
      %v6478 = vmul.f32 %v6350, %v6094
      %v6479 = vmul.f32 %v6351, %v6095
      %v6480 = vmul.f32 %v6352, %v6096
      %v6481 = vmul.f32 %v6353, %v6097
      %v6482 = vmul.f32 %v6354, %v6098
      %v6483 = vmul.f32 %v6355, %v6099
      %v6484 = vmul.f32 %v6356, %v6100
      %v6485 = vmul.f32 %v6357, %v6101
      %v6486 = vmul.f32 %v6358, %v6102
      %v6487 = vmul.f32 %v6359, %v6103
      %v6488 = vmul.f32 %v6360, %v6104
      %v6489 = vmul.f32 %v6361, %v6105
      %v6490 = vmul.f32 %v6362, %v6106
      %v6491 = vmul.f32 %v6363, %v6107
      %v6492 = vmul.f32 %v6364, %v6108
      %v6493 = vmul.f32 %v6365, %v6109
      %v6494 = vmul.f32 %v6366, %v6110
      %v6495 = vmul.f32 %v6367, %v6111
      %v6496 = vmul.f32 %v6368, %v6112
      %v6497 = vmul.f32 %v6369, %v6113
      %v6498 = vmul.f32 %v6370, %v6114
      %v6499 = vmul.f32 %v6371, %v6115
      %v6500 = vmul.f32 %v6372, %v6116
      %v6501 = vmul.f32 %v6373, %v6117
      %v6502 = vmul.f32 %v6374, %v6118
      %v6503 = vmul.f32 %v6375, %v6119
      %v6504 = vmul.f32 %v6376, %v6120
      %v6505 = vmul.f32 %v6377, %v6121
      %v6506 = vmul.f32 %v6378, %v6122
      %v6507 = vmul.f32 %v6379, %v6123
      %v6508 = vmul.f32 %v6380, %v6124
      %v6509 = vmul.f32 %v6381, %v6125
      %v6510 = vmul.f32 %v6382, %v6126
      %v6511 = vmul.f32 %v6383, %v6127
      %v6512 = vmul.f32 %v6384, %v6128
      %v6513 = vmul.f32 %v6385, %v6129
      %v6514 = vmul.f32 %v6386, %v6130
      %v6515 = vmul.f32 %v6387, %v6131
      %v6516 = vmul.f32 %v6388, %v6132
      %v6517 = vmul.f32 %v6389, %v6133
      %v6518 = vmul.f32 %v6390, %v6134
      %v6519 = vmul.f32 %v6391, %v6135
      %v6520 = vmul.f32 %v6392, %v6136
      %v6521 = vmul.f32 %v6393, %v6137
      %v6522 = vmul.f32 %v6394, %v6138
      %v6523 = vmul.f32 %v6395, %v6139
      %v6524 = vmul.f32 %v6396, %v6140
      %v6525 = vmul.f32 %v6397, %v6141
      %v6526 = vmul.f32 %v6398, %v6142
      %v6527 = vmul.f32 %v6399, %v6015
      %v6528 = vmul.f32 %v6400, %v6016
      %v6529 = vmul.f32 %v6401, %v6017
      %v6530 = vmul.f32 %v6402, %v6018
      %v6531 = vmul.f32 %v6403, %v6019
      %v6532 = vmul.f32 %v6404, %v6020
      %v6533 = vmul.f32 %v6405, %v6021
      %v6534 = vmul.f32 %v6406, %v6022
      %v6535 = vmul.f32 %v6407, %v6023
      %v6536 = vmul.f32 %v6408, %v6024
      %v6537 = vmul.f32 %v6409, %v6025
      %v6538 = vmul.f32 %v6410, %v6026
      %v6539 = vmul.f32 %v6411, %v6027
      %v6540 = vmul.f32 %v6412, %v6028
      %v6541 = vmul.f32 %v6413, %v6029
      %v6542 = vmul.f32 %v6414, %v6030
      %v6543 = vmul.f32 %v6415, %v6031
      %v6544 = vmul.f32 %v6416, %v6032
      %v6545 = vmul.f32 %v6417, %v6033
      %v6546 = vmul.f32 %v6418, %v6034
      %v6547 = vmul.f32 %v6419, %v6035
      %v6548 = vmul.f32 %v6420, %v6036
      %v6549 = vmul.f32 %v6421, %v6037
      %v6550 = vmul.f32 %v6422, %v6038
      %v6551 = vmul.f32 %v6423, %v6039
      %v6552 = vmul.f32 %v6424, %v6040
      %v6553 = vmul.f32 %v6425, %v6041
      %v6554 = vmul.f32 %v6426, %v6042
      %v6555 = vmul.f32 %v6427, %v6043
      %v6556 = vmul.f32 %v6428, %v6044
      %v6557 = vmul.f32 %v6429, %v6045
      %v6558 = vmul.f32 %v6430, %v6046
      %v6559 = vmul.f32 %v6431, %v6047
      %v6560 = vmul.f32 %v6432, %v6048
      %v6561 = vmul.f32 %v6433, %v6049
      %v6562 = vmul.f32 %v6434, %v6050
      %v6563 = vmul.f32 %v6435, %v6051
      %v6564 = vmul.f32 %v6436, %v6052
      %v6565 = vmul.f32 %v6437, %v6053
      %v6566 = vmul.f32 %v6438, %v6054
      %v6567 = vmul.f32 %v6439, %v6055
      %v6568 = vmul.f32 %v6440, %v6056
      %v6569 = vmul.f32 %v6441, %v6057
      %v6570 = vmul.f32 %v6442, %v6058
      %v6571 = vmul.f32 %v6443, %v6059
      %v6572 = vmul.f32 %v6444, %v6060
      %v6573 = vmul.f32 %v6445, %v6061
      %v6574 = vmul.f32 %v6446, %v6062
      %v6575 = vmul.f32 %v6447, %v6063
      %v6576 = vmul.f32 %v6448, %v6064
      %v6577 = vmul.f32 %v6449, %v6065
      %v6578 = vmul.f32 %v6450, %v6066
      %v6579 = vmul.f32 %v6451, %v6067
      %v6580 = vmul.f32 %v6452, %v6068
      %v6581 = vmul.f32 %v6453, %v6069
      %v6582 = vmul.f32 %v6454, %v6070
      %v6583 = vmul.f32 %v6455, %v6071
      %v6584 = vmul.f32 %v6456, %v6072
      %v6585 = vmul.f32 %v6457, %v6073
      %v6586 = vmul.f32 %v6458, %v6074
      %v6587 = vmul.f32 %v6459, %v6075
      %v6588 = vmul.f32 %v6460, %v6076
      %v6589 = vmul.f32 %v6461, %v6077
      %v6590 = vmul.f32 %v6462, %v6078
      %v6591 = vmul.f32 %v6463, %v6079
      %v6592 = vmul.f32 %v6464, %v6080
      %v6593 = vmul.f32 %v6465, %v6081
      %v6594 = vmul.f32 %v6466, %v6082
      %v6595 = vmul.f32 %v6467, %v6083
      %v6596 = vmul.f32 %v6468, %v6084
      %v6597 = vmul.f32 %v6469, %v6085
      %v6598 = vmul.f32 %v6470, %v6086
      %v6599 = vmul.f32 %v6471, %v6087
      %v6600 = vmul.f32 %v6472, %v6088
      %v6601 = vmul.f32 %v6473, %v6089
      %v6602 = vmul.f32 %v6474, %v6090
      %v6603 = vmul.f32 %v6475, %v6091
      %v6604 = vmul.f32 %v6476, %v6092
      %v6605 = vmul.f32 %v6477, %v6093
      %v6606 = vmul.f32 %v6478, %v6094
      %v6607 = vmul.f32 %v6479, %v6095
      %v6608 = vmul.f32 %v6480, %v6096
      %v6609 = vmul.f32 %v6481, %v6097
      %v6610 = vmul.f32 %v6482, %v6098
      %v6611 = vmul.f32 %v6483, %v6099
      %v6612 = vmul.f32 %v6484, %v6100
      %v6613 = vmul.f32 %v6485, %v6101
      %v6614 = vmul.f32 %v6486, %v6102
      %v6615 = vmul.f32 %v6487, %v6103
      %v6616 = vmul.f32 %v6488, %v6104
      %v6617 = vmul.f32 %v6489, %v6105
      %v6618 = vmul.f32 %v6490, %v6106
      %v6619 = vmul.f32 %v6491, %v6107
      %v6620 = vmul.f32 %v6492, %v6108
      %v6621 = vmul.f32 %v6493, %v6109
      %v6622 = vmul.f32 %v6494, %v6110
      %v6623 = vmul.f32 %v6495, %v6111
      %v6624 = vmul.f32 %v6496, %v6112
      %v6625 = vmul.f32 %v6497, %v6113
      %v6626 = vmul.f32 %v6498, %v6114
      %v6627 = vmul.f32 %v6499, %v6115
      %v6628 = vmul.f32 %v6500, %v6116
      %v6629 = vmul.f32 %v6501, %v6117
      %v6630 = vmul.f32 %v6502, %v6118
      %v6631 = vmul.f32 %v6503, %v6119
      %v6632 = vmul.f32 %v6504, %v6120
      %v6633 = vmul.f32 %v6505, %v6121
      %v6634 = vmul.f32 %v6506, %v6122
      %v6635 = vmul.f32 %v6507, %v6123
      %v6636 = vmul.f32 %v6508, %v6124
      %v6637 = vmul.f32 %v6509, %v6125
      %v6638 = vmul.f32 %v6510, %v6126
      %v6639 = vmul.f32 %v6511, %v6127
      %v6640 = vmul.f32 %v6512, %v6128
      %v6641 = vmul.f32 %v6513, %v6129
      %v6642 = vmul.f32 %v6514, %v6130
      %v6643 = vmul.f32 %v6515, %v6131
      %v6644 = vmul.f32 %v6516, %v6132
      %v6645 = vmul.f32 %v6517, %v6133
      %v6646 = vmul.f32 %v6518, %v6134
      %v6647 = vmul.f32 %v6519, %v6135
      %v6648 = vmul.f32 %v6520, %v6136
      %v6649 = vmul.f32 %v6521, %v6137
      %v6650 = vmul.f32 %v6522, %v6138
      %v6651 = vmul.f32 %v6523, %v6139
      %v6652 = vmul.f32 %v6524, %v6140
      %v6653 = vmul.f32 %v6525, %v6141
      %v6654 = vmul.f32 %v6526, %v6142
      %v6655 = vadd.f32 %v6015, %v6527
      %v6656 = vadd.f32 %v6016, %v6528
      %v6657 = vadd.f32 %v6017, %v6529
      %v6658 = vadd.f32 %v6018, %v6530
      %v6659 = vadd.f32 %v6019, %v6531
      %v6660 = vadd.f32 %v6020, %v6532
      %v6661 = vadd.f32 %v6021, %v6533
      %v6662 = vadd.f32 %v6022, %v6534
      %v6663 = vadd.f32 %v6023, %v6535
      %v6664 = vadd.f32 %v6024, %v6536
      %v6665 = vadd.f32 %v6025, %v6537
      %v6666 = vadd.f32 %v6026, %v6538
      %v6667 = vadd.f32 %v6027, %v6539
      %v6668 = vadd.f32 %v6028, %v6540
      %v6669 = vadd.f32 %v6029, %v6541
      %v6670 = vadd.f32 %v6030, %v6542
      %v6671 = vadd.f32 %v6031, %v6543
      %v6672 = vadd.f32 %v6032, %v6544
      %v6673 = vadd.f32 %v6033, %v6545
      %v6674 = vadd.f32 %v6034, %v6546
      %v6675 = vadd.f32 %v6035, %v6547
      %v6676 = vadd.f32 %v6036, %v6548
      %v6677 = vadd.f32 %v6037, %v6549
      %v6678 = vadd.f32 %v6038, %v6550
      %v6679 = vadd.f32 %v6039, %v6551
      %v6680 = vadd.f32 %v6040, %v6552
      %v6681 = vadd.f32 %v6041, %v6553
      %v6682 = vadd.f32 %v6042, %v6554
      %v6683 = vadd.f32 %v6043, %v6555
      %v6684 = vadd.f32 %v6044, %v6556
      %v6685 = vadd.f32 %v6045, %v6557
      %v6686 = vadd.f32 %v6046, %v6558
      %v6687 = vadd.f32 %v6047, %v6559
      %v6688 = vadd.f32 %v6048, %v6560
      %v6689 = vadd.f32 %v6049, %v6561
      %v6690 = vadd.f32 %v6050, %v6562
      %v6691 = vadd.f32 %v6051, %v6563
      %v6692 = vadd.f32 %v6052, %v6564
      %v6693 = vadd.f32 %v6053, %v6565
      %v6694 = vadd.f32 %v6054, %v6566
      %v6695 = vadd.f32 %v6055, %v6567
      %v6696 = vadd.f32 %v6056, %v6568
      %v6697 = vadd.f32 %v6057, %v6569
      %v6698 = vadd.f32 %v6058, %v6570
      %v6699 = vadd.f32 %v6059, %v6571
      %v6700 = vadd.f32 %v6060, %v6572
      %v6701 = vadd.f32 %v6061, %v6573
      %v6702 = vadd.f32 %v6062, %v6574
      %v6703 = vadd.f32 %v6063, %v6575
      %v6704 = vadd.f32 %v6064, %v6576
      %v6705 = vadd.f32 %v6065, %v6577
      %v6706 = vadd.f32 %v6066, %v6578
      %v6707 = vadd.f32 %v6067, %v6579
      %v6708 = vadd.f32 %v6068, %v6580
      %v6709 = vadd.f32 %v6069, %v6581
      %v6710 = vadd.f32 %v6070, %v6582
      %v6711 = vadd.f32 %v6071, %v6583
      %v6712 = vadd.f32 %v6072, %v6584
      %v6713 = vadd.f32 %v6073, %v6585
      %v6714 = vadd.f32 %v6074, %v6586
      %v6715 = vadd.f32 %v6075, %v6587
      %v6716 = vadd.f32 %v6076, %v6588
      %v6717 = vadd.f32 %v6077, %v6589
      %v6718 = vadd.f32 %v6078, %v6590
      %v6719 = vadd.f32 %v6079, %v6591
      %v6720 = vadd.f32 %v6080, %v6592
      %v6721 = vadd.f32 %v6081, %v6593
      %v6722 = vadd.f32 %v6082, %v6594
      %v6723 = vadd.f32 %v6083, %v6595
      %v6724 = vadd.f32 %v6084, %v6596
      %v6725 = vadd.f32 %v6085, %v6597
      %v6726 = vadd.f32 %v6086, %v6598
      %v6727 = vadd.f32 %v6087, %v6599
      %v6728 = vadd.f32 %v6088, %v6600
      %v6729 = vadd.f32 %v6089, %v6601
      %v6730 = vadd.f32 %v6090, %v6602
      %v6731 = vadd.f32 %v6091, %v6603
      %v6732 = vadd.f32 %v6092, %v6604
      %v6733 = vadd.f32 %v6093, %v6605
      %v6734 = vadd.f32 %v6094, %v6606
      %v6735 = vadd.f32 %v6095, %v6607
      %v6736 = vadd.f32 %v6096, %v6608
      %v6737 = vadd.f32 %v6097, %v6609
      %v6738 = vadd.f32 %v6098, %v6610
      %v6739 = vadd.f32 %v6099, %v6611
      %v6740 = vadd.f32 %v6100, %v6612
      %v6741 = vadd.f32 %v6101, %v6613
      %v6742 = vadd.f32 %v6102, %v6614
      %v6743 = vadd.f32 %v6103, %v6615
      %v6744 = vadd.f32 %v6104, %v6616
      %v6745 = vadd.f32 %v6105, %v6617
      %v6746 = vadd.f32 %v6106, %v6618
      %v6747 = vadd.f32 %v6107, %v6619
      %v6748 = vadd.f32 %v6108, %v6620
      %v6749 = vadd.f32 %v6109, %v6621
      %v6750 = vadd.f32 %v6110, %v6622
      %v6751 = vadd.f32 %v6111, %v6623
      %v6752 = vadd.f32 %v6112, %v6624
      %v6753 = vadd.f32 %v6113, %v6625
      %v6754 = vadd.f32 %v6114, %v6626
      %v6755 = vadd.f32 %v6115, %v6627
      %v6756 = vadd.f32 %v6116, %v6628
      %v6757 = vadd.f32 %v6117, %v6629
      %v6758 = vadd.f32 %v6118, %v6630
      %v6759 = vadd.f32 %v6119, %v6631
      %v6760 = vadd.f32 %v6120, %v6632
      %v6761 = vadd.f32 %v6121, %v6633
      %v6762 = vadd.f32 %v6122, %v6634
      %v6763 = vadd.f32 %v6123, %v6635
      %v6764 = vadd.f32 %v6124, %v6636
      %v6765 = vadd.f32 %v6125, %v6637
      %v6766 = vadd.f32 %v6126, %v6638
      %v6767 = vadd.f32 %v6127, %v6639
      %v6768 = vadd.f32 %v6128, %v6640
      %v6769 = vadd.f32 %v6129, %v6641
      %v6770 = vadd.f32 %v6130, %v6642
      %v6771 = vadd.f32 %v6131, %v6643
      %v6772 = vadd.f32 %v6132, %v6644
      %v6773 = vadd.f32 %v6133, %v6645
      %v6774 = vadd.f32 %v6134, %v6646
      %v6775 = vadd.f32 %v6135, %v6647
      %v6776 = vadd.f32 %v6136, %v6648
      %v6777 = vadd.f32 %v6137, %v6649
      %v6778 = vadd.f32 %v6138, %v6650
      %v6779 = vadd.f32 %v6139, %v6651
      %v6780 = vadd.f32 %v6140, %v6652
      %v6781 = vadd.f32 %v6141, %v6653
      %v6782 = vadd.f32 %v6142, %v6654
      %v6783 = vmul.f32 %v6655, 0.7978846
      %v6784 = vmul.f32 %v6656, 0.7978846
      %v6785 = vmul.f32 %v6657, 0.7978846
      %v6786 = vmul.f32 %v6658, 0.7978846
      %v6787 = vmul.f32 %v6659, 0.7978846
      %v6788 = vmul.f32 %v6660, 0.7978846
      %v6789 = vmul.f32 %v6661, 0.7978846
      %v6790 = vmul.f32 %v6662, 0.7978846
      %v6791 = vmul.f32 %v6663, 0.7978846
      %v6792 = vmul.f32 %v6664, 0.7978846
      %v6793 = vmul.f32 %v6665, 0.7978846
      %v6794 = vmul.f32 %v6666, 0.7978846
      %v6795 = vmul.f32 %v6667, 0.7978846
      %v6796 = vmul.f32 %v6668, 0.7978846
      %v6797 = vmul.f32 %v6669, 0.7978846
      %v6798 = vmul.f32 %v6670, 0.7978846
      %v6799 = vmul.f32 %v6671, 0.7978846
      %v6800 = vmul.f32 %v6672, 0.7978846
      %v6801 = vmul.f32 %v6673, 0.7978846
      %v6802 = vmul.f32 %v6674, 0.7978846
      %v6803 = vmul.f32 %v6675, 0.7978846
      %v6804 = vmul.f32 %v6676, 0.7978846
      %v6805 = vmul.f32 %v6677, 0.7978846
      %v6806 = vmul.f32 %v6678, 0.7978846
      %v6807 = vmul.f32 %v6679, 0.7978846
      %v6808 = vmul.f32 %v6680, 0.7978846
      %v6809 = vmul.f32 %v6681, 0.7978846
      %v6810 = vmul.f32 %v6682, 0.7978846
      %v6811 = vmul.f32 %v6683, 0.7978846
      %v6812 = vmul.f32 %v6684, 0.7978846
      %v6813 = vmul.f32 %v6685, 0.7978846
      %v6814 = vmul.f32 %v6686, 0.7978846
      %v6815 = vmul.f32 %v6687, 0.7978846
      %v6816 = vmul.f32 %v6688, 0.7978846
      %v6817 = vmul.f32 %v6689, 0.7978846
      %v6818 = vmul.f32 %v6690, 0.7978846
      %v6819 = vmul.f32 %v6691, 0.7978846
      %v6820 = vmul.f32 %v6692, 0.7978846
      %v6821 = vmul.f32 %v6693, 0.7978846
      %v6822 = vmul.f32 %v6694, 0.7978846
      %v6823 = vmul.f32 %v6695, 0.7978846
      %v6824 = vmul.f32 %v6696, 0.7978846
      %v6825 = vmul.f32 %v6697, 0.7978846
      %v6826 = vmul.f32 %v6698, 0.7978846
      %v6827 = vmul.f32 %v6699, 0.7978846
      %v6828 = vmul.f32 %v6700, 0.7978846
      %v6829 = vmul.f32 %v6701, 0.7978846
      %v6830 = vmul.f32 %v6702, 0.7978846
      %v6831 = vmul.f32 %v6703, 0.7978846
      %v6832 = vmul.f32 %v6704, 0.7978846
      %v6833 = vmul.f32 %v6705, 0.7978846
      %v6834 = vmul.f32 %v6706, 0.7978846
      %v6835 = vmul.f32 %v6707, 0.7978846
      %v6836 = vmul.f32 %v6708, 0.7978846
      %v6837 = vmul.f32 %v6709, 0.7978846
      %v6838 = vmul.f32 %v6710, 0.7978846
      %v6839 = vmul.f32 %v6711, 0.7978846
      %v6840 = vmul.f32 %v6712, 0.7978846
      %v6841 = vmul.f32 %v6713, 0.7978846
      %v6842 = vmul.f32 %v6714, 0.7978846
      %v6843 = vmul.f32 %v6715, 0.7978846
      %v6844 = vmul.f32 %v6716, 0.7978846
      %v6845 = vmul.f32 %v6717, 0.7978846
      %v6846 = vmul.f32 %v6718, 0.7978846
      %v6847 = vmul.f32 %v6719, 0.7978846
      %v6848 = vmul.f32 %v6720, 0.7978846
      %v6849 = vmul.f32 %v6721, 0.7978846
      %v6850 = vmul.f32 %v6722, 0.7978846
      %v6851 = vmul.f32 %v6723, 0.7978846
      %v6852 = vmul.f32 %v6724, 0.7978846
      %v6853 = vmul.f32 %v6725, 0.7978846
      %v6854 = vmul.f32 %v6726, 0.7978846
      %v6855 = vmul.f32 %v6727, 0.7978846
      %v6856 = vmul.f32 %v6728, 0.7978846
      %v6857 = vmul.f32 %v6729, 0.7978846
      %v6858 = vmul.f32 %v6730, 0.7978846
      %v6859 = vmul.f32 %v6731, 0.7978846
      %v6860 = vmul.f32 %v6732, 0.7978846
      %v6861 = vmul.f32 %v6733, 0.7978846
      %v6862 = vmul.f32 %v6734, 0.7978846
      %v6863 = vmul.f32 %v6735, 0.7978846
      %v6864 = vmul.f32 %v6736, 0.7978846
      %v6865 = vmul.f32 %v6737, 0.7978846
      %v6866 = vmul.f32 %v6738, 0.7978846
      %v6867 = vmul.f32 %v6739, 0.7978846
      %v6868 = vmul.f32 %v6740, 0.7978846
      %v6869 = vmul.f32 %v6741, 0.7978846
      %v6870 = vmul.f32 %v6742, 0.7978846
      %v6871 = vmul.f32 %v6743, 0.7978846
      %v6872 = vmul.f32 %v6744, 0.7978846
      %v6873 = vmul.f32 %v6745, 0.7978846
      %v6874 = vmul.f32 %v6746, 0.7978846
      %v6875 = vmul.f32 %v6747, 0.7978846
      %v6876 = vmul.f32 %v6748, 0.7978846
      %v6877 = vmul.f32 %v6749, 0.7978846
      %v6878 = vmul.f32 %v6750, 0.7978846
      %v6879 = vmul.f32 %v6751, 0.7978846
      %v6880 = vmul.f32 %v6752, 0.7978846
      %v6881 = vmul.f32 %v6753, 0.7978846
      %v6882 = vmul.f32 %v6754, 0.7978846
      %v6883 = vmul.f32 %v6755, 0.7978846
      %v6884 = vmul.f32 %v6756, 0.7978846
      %v6885 = vmul.f32 %v6757, 0.7978846
      %v6886 = vmul.f32 %v6758, 0.7978846
      %v6887 = vmul.f32 %v6759, 0.7978846
      %v6888 = vmul.f32 %v6760, 0.7978846
      %v6889 = vmul.f32 %v6761, 0.7978846
      %v6890 = vmul.f32 %v6762, 0.7978846
      %v6891 = vmul.f32 %v6763, 0.7978846
      %v6892 = vmul.f32 %v6764, 0.7978846
      %v6893 = vmul.f32 %v6765, 0.7978846
      %v6894 = vmul.f32 %v6766, 0.7978846
      %v6895 = vmul.f32 %v6767, 0.7978846
      %v6896 = vmul.f32 %v6768, 0.7978846
      %v6897 = vmul.f32 %v6769, 0.7978846
      %v6898 = vmul.f32 %v6770, 0.7978846
      %v6899 = vmul.f32 %v6771, 0.7978846
      %v6900 = vmul.f32 %v6772, 0.7978846
      %v6901 = vmul.f32 %v6773, 0.7978846
      %v6902 = vmul.f32 %v6774, 0.7978846
      %v6903 = vmul.f32 %v6775, 0.7978846
      %v6904 = vmul.f32 %v6776, 0.7978846
      %v6905 = vmul.f32 %v6777, 0.7978846
      %v6906 = vmul.f32 %v6778, 0.7978846
      %v6907 = vmul.f32 %v6779, 0.7978846
      %v6908 = vmul.f32 %v6780, 0.7978846
      %v6909 = vmul.f32 %v6781, 0.7978846
      %v6910 = vmul.f32 %v6782, 0.7978846
      %v6911 = vtanh.pop %v6783
      %v6912 = vtanh.pop %v6784
      %v6913 = vtanh.pop %v6785
      %v6914 = vtanh.pop %v6786
      %v6915 = vtanh.pop %v6787
      %v6916 = vtanh.pop %v6788
      %v6917 = vtanh.pop %v6789
      %v6918 = vtanh.pop %v6790
      %v6919 = vtanh.pop %v6791
      %v6920 = vtanh.pop %v6792
      %v6921 = vtanh.pop %v6793
      %v6922 = vtanh.pop %v6794
      %v6923 = vtanh.pop %v6795
      %v6924 = vtanh.pop %v6796
      %v6925 = vtanh.pop %v6797
      %v6926 = vtanh.pop %v6798
      %v6927 = vtanh.pop %v6799
      %v6928 = vtanh.pop %v6800
      %v6929 = vtanh.pop %v6801
      %v6930 = vtanh.pop %v6802
      %v6931 = vtanh.pop %v6803
      %v6932 = vtanh.pop %v6804
      %v6933 = vtanh.pop %v6805
      %v6934 = vtanh.pop %v6806
      %v6935 = vtanh.pop %v6807
      %v6936 = vtanh.pop %v6808
      %v6937 = vtanh.pop %v6809
      %v6938 = vtanh.pop %v6810
      %v6939 = vtanh.pop %v6811
      %v6940 = vtanh.pop %v6812
      %v6941 = vtanh.pop %v6813
      %v6942 = vtanh.pop %v6814
      %v6943 = vtanh.pop %v6815
      %v6944 = vtanh.pop %v6816
      %v6945 = vtanh.pop %v6817
      %v6946 = vtanh.pop %v6818
      %v6947 = vtanh.pop %v6819
      %v6948 = vtanh.pop %v6820
      %v6949 = vtanh.pop %v6821
      %v6950 = vtanh.pop %v6822
      %v6951 = vtanh.pop %v6823
      %v6952 = vtanh.pop %v6824
      %v6953 = vtanh.pop %v6825
      %v6954 = vtanh.pop %v6826
      %v6955 = vtanh.pop %v6827
      %v6956 = vtanh.pop %v6828
      %v6957 = vtanh.pop %v6829
      %v6958 = vtanh.pop %v6830
      %v6959 = vtanh.pop %v6831
      %v6960 = vtanh.pop %v6832
      %v6961 = vtanh.pop %v6833
      %v6962 = vtanh.pop %v6834
      %v6963 = vtanh.pop %v6835
      %v6964 = vtanh.pop %v6836
      %v6965 = vtanh.pop %v6837
      %v6966 = vtanh.pop %v6838
      %v6967 = vtanh.pop %v6839
      %v6968 = vtanh.pop %v6840
      %v6969 = vtanh.pop %v6841
      %v6970 = vtanh.pop %v6842
      %v6971 = vtanh.pop %v6843
      %v6972 = vtanh.pop %v6844
      %v6973 = vtanh.pop %v6845
      %v6974 = vtanh.pop %v6846
      %v6975 = vtanh.pop %v6847
      %v6976 = vtanh.pop %v6848
      %v6977 = vtanh.pop %v6849
      %v6978 = vtanh.pop %v6850
      %v6979 = vtanh.pop %v6851
      %v6980 = vtanh.pop %v6852
      %v6981 = vtanh.pop %v6853
      %v6982 = vtanh.pop %v6854
      %v6983 = vtanh.pop %v6855
      %v6984 = vtanh.pop %v6856
      %v6985 = vtanh.pop %v6857
      %v6986 = vtanh.pop %v6858
      %v6987 = vtanh.pop %v6859
      %v6988 = vtanh.pop %v6860
      %v6989 = vtanh.pop %v6861
      %v6990 = vtanh.pop %v6862
      %v6991 = vtanh.pop %v6863
      %v6992 = vtanh.pop %v6864
      %v6993 = vtanh.pop %v6865
      %v6994 = vtanh.pop %v6866
      %v6995 = vtanh.pop %v6867
      %v6996 = vtanh.pop %v6868
      %v6997 = vtanh.pop %v6869
      %v6998 = vtanh.pop %v6870
      %v6999 = vtanh.pop %v6871
      %v7000 = vtanh.pop %v6872
      %v7001 = vtanh.pop %v6873
      %v7002 = vtanh.pop %v6874
      %v7003 = vtanh.pop %v6875
      %v7004 = vtanh.pop %v6876
      %v7005 = vtanh.pop %v6877
      %v7006 = vtanh.pop %v6878
      %v7007 = vtanh.pop %v6879
      %v7008 = vtanh.pop %v6880
      %v7009 = vtanh.pop %v6881
      %v7010 = vtanh.pop %v6882
      %v7011 = vtanh.pop %v6883
      %v7012 = vtanh.pop %v6884
      %v7013 = vtanh.pop %v6885
      %v7014 = vtanh.pop %v6886
      %v7015 = vtanh.pop %v6887
      %v7016 = vtanh.pop %v6888
      %v7017 = vtanh.pop %v6889
      %v7018 = vtanh.pop %v6890
      %v7019 = vtanh.pop %v6891
      %v7020 = vtanh.pop %v6892
      %v7021 = vtanh.pop %v6893
      %v7022 = vtanh.pop %v6894
      %v7023 = vtanh.pop %v6895
      %v7024 = vtanh.pop %v6896
      %v7025 = vtanh.pop %v6897
      %v7026 = vtanh.pop %v6898
      %v7027 = vtanh.pop %v6899
      %v7028 = vtanh.pop %v6900
      %v7029 = vtanh.pop %v6901
      %v7030 = vtanh.pop %v6902
      %v7031 = vtanh.pop %v6903
      %v7032 = vtanh.pop %v6904
      %v7033 = vtanh.pop %v6905
      %v7034 = vtanh.pop %v6906
      %v7035 = vtanh.pop %v6907
      %v7036 = vtanh.pop %v6908
      %v7037 = vtanh.pop %v6909
      %v7038 = vtanh.pop %v6910
      %v7039 = vadd.f32 %v6911, 1.0
      %v7040 = vadd.f32 %v6912, 1.0
      %v7041 = vadd.f32 %v6913, 1.0
      %v7042 = vadd.f32 %v6914, 1.0
      %v7043 = vadd.f32 %v6915, 1.0
      %v7044 = vadd.f32 %v6916, 1.0
      %v7045 = vadd.f32 %v6917, 1.0
      %v7046 = vadd.f32 %v6918, 1.0
      %v7047 = vadd.f32 %v6919, 1.0
      %v7048 = vadd.f32 %v6920, 1.0
      %v7049 = vadd.f32 %v6921, 1.0
      %v7050 = vadd.f32 %v6922, 1.0
      %v7051 = vadd.f32 %v6923, 1.0
      %v7052 = vadd.f32 %v6924, 1.0
      %v7053 = vadd.f32 %v6925, 1.0
      %v7054 = vadd.f32 %v6926, 1.0
      %v7055 = vadd.f32 %v6927, 1.0
      %v7056 = vadd.f32 %v6928, 1.0
      %v7057 = vadd.f32 %v6929, 1.0
      %v7058 = vadd.f32 %v6930, 1.0
      %v7059 = vadd.f32 %v6931, 1.0
      %v7060 = vadd.f32 %v6932, 1.0
      %v7061 = vadd.f32 %v6933, 1.0
      %v7062 = vadd.f32 %v6934, 1.0
      %v7063 = vadd.f32 %v6935, 1.0
      %v7064 = vadd.f32 %v6936, 1.0
      %v7065 = vadd.f32 %v6937, 1.0
      %v7066 = vadd.f32 %v6938, 1.0
      %v7067 = vadd.f32 %v6939, 1.0
      %v7068 = vadd.f32 %v6940, 1.0
      %v7069 = vadd.f32 %v6941, 1.0
      %v7070 = vadd.f32 %v6942, 1.0
      %v7071 = vadd.f32 %v6943, 1.0
      %v7072 = vadd.f32 %v6944, 1.0
      %v7073 = vadd.f32 %v6945, 1.0
      %v7074 = vadd.f32 %v6946, 1.0
      %v7075 = vadd.f32 %v6947, 1.0
      %v7076 = vadd.f32 %v6948, 1.0
      %v7077 = vadd.f32 %v6949, 1.0
      %v7078 = vadd.f32 %v6950, 1.0
      %v7079 = vadd.f32 %v6951, 1.0
      %v7080 = vadd.f32 %v6952, 1.0
      %v7081 = vadd.f32 %v6953, 1.0
      %v7082 = vadd.f32 %v6954, 1.0
      %v7083 = vadd.f32 %v6955, 1.0
      %v7084 = vadd.f32 %v6956, 1.0
      %v7085 = vadd.f32 %v6957, 1.0
      %v7086 = vadd.f32 %v6958, 1.0
      %v7087 = vadd.f32 %v6959, 1.0
      %v7088 = vadd.f32 %v6960, 1.0
      %v7089 = vadd.f32 %v6961, 1.0
      %v7090 = vadd.f32 %v6962, 1.0
      %v7091 = vadd.f32 %v6963, 1.0
      %v7092 = vadd.f32 %v6964, 1.0
      %v7093 = vadd.f32 %v6965, 1.0
      %v7094 = vadd.f32 %v6966, 1.0
      %v7095 = vadd.f32 %v6967, 1.0
      %v7096 = vadd.f32 %v6968, 1.0
      %v7097 = vadd.f32 %v6969, 1.0
      %v7098 = vadd.f32 %v6970, 1.0
      %v7099 = vadd.f32 %v6971, 1.0
      %v7100 = vadd.f32 %v6972, 1.0
      %v7101 = vadd.f32 %v6973, 1.0
      %v7102 = vadd.f32 %v6974, 1.0
      %v7103 = vadd.f32 %v6975, 1.0
      %v7104 = vadd.f32 %v6976, 1.0
      %v7105 = vadd.f32 %v6977, 1.0
      %v7106 = vadd.f32 %v6978, 1.0
      %v7107 = vadd.f32 %v6979, 1.0
      %v7108 = vadd.f32 %v6980, 1.0
      %v7109 = vadd.f32 %v6981, 1.0
      %v7110 = vadd.f32 %v6982, 1.0
      %v7111 = vadd.f32 %v6983, 1.0
      %v7112 = vadd.f32 %v6984, 1.0
      %v7113 = vadd.f32 %v6985, 1.0
      %v7114 = vadd.f32 %v6986, 1.0
      %v7115 = vadd.f32 %v6987, 1.0
      %v7116 = vadd.f32 %v6988, 1.0
      %v7117 = vadd.f32 %v6989, 1.0
      %v7118 = vadd.f32 %v6990, 1.0
      %v7119 = vadd.f32 %v6991, 1.0
      %v7120 = vadd.f32 %v6992, 1.0
      %v7121 = vadd.f32 %v6993, 1.0
      %v7122 = vadd.f32 %v6994, 1.0
      %v7123 = vadd.f32 %v6995, 1.0
      %v7124 = vadd.f32 %v6996, 1.0
      %v7125 = vadd.f32 %v6997, 1.0
      %v7126 = vadd.f32 %v6998, 1.0
      %v7127 = vadd.f32 %v6999, 1.0
      %v7128 = vadd.f32 %v7000, 1.0
      %v7129 = vadd.f32 %v7001, 1.0
      %v7130 = vadd.f32 %v7002, 1.0
      %v7131 = vadd.f32 %v7003, 1.0
      %v7132 = vadd.f32 %v7004, 1.0
      %v7133 = vadd.f32 %v7005, 1.0
      %v7134 = vadd.f32 %v7006, 1.0
      %v7135 = vadd.f32 %v7007, 1.0
      %v7136 = vadd.f32 %v7008, 1.0
      %v7137 = vadd.f32 %v7009, 1.0
      %v7138 = vadd.f32 %v7010, 1.0
      %v7139 = vadd.f32 %v7011, 1.0
      %v7140 = vadd.f32 %v7012, 1.0
      %v7141 = vadd.f32 %v7013, 1.0
      %v7142 = vadd.f32 %v7014, 1.0
      %v7143 = vadd.f32 %v7015, 1.0
      %v7144 = vadd.f32 %v7016, 1.0
      %v7145 = vadd.f32 %v7017, 1.0
      %v7146 = vadd.f32 %v7018, 1.0
      %v7147 = vadd.f32 %v7019, 1.0
      %v7148 = vadd.f32 %v7020, 1.0
      %v7149 = vadd.f32 %v7021, 1.0
      %v7150 = vadd.f32 %v7022, 1.0
      %v7151 = vadd.f32 %v7023, 1.0
      %v7152 = vadd.f32 %v7024, 1.0
      %v7153 = vadd.f32 %v7025, 1.0
      %v7154 = vadd.f32 %v7026, 1.0
      %v7155 = vadd.f32 %v7027, 1.0
      %v7156 = vadd.f32 %v7028, 1.0
      %v7157 = vadd.f32 %v7029, 1.0
      %v7158 = vadd.f32 %v7030, 1.0
      %v7159 = vadd.f32 %v7031, 1.0
      %v7160 = vadd.f32 %v7032, 1.0
      %v7161 = vadd.f32 %v7033, 1.0
      %v7162 = vadd.f32 %v7034, 1.0
      %v7163 = vadd.f32 %v7035, 1.0
      %v7164 = vadd.f32 %v7036, 1.0
      %v7165 = vadd.f32 %v7037, 1.0
      %v7166 = vadd.f32 %v7038, 1.0
      %v7167 = vmul.f32 %v6143, %v7039
      %v7168 = vmul.f32 %v6144, %v7040
      %v7169 = vmul.f32 %v6145, %v7041
      %v7170 = vmul.f32 %v6146, %v7042
      %v7171 = vmul.f32 %v6147, %v7043
      %v7172 = vmul.f32 %v6148, %v7044
      %v7173 = vmul.f32 %v6149, %v7045
      %v7174 = vmul.f32 %v6150, %v7046
      %v7175 = vmul.f32 %v6151, %v7047
      %v7176 = vmul.f32 %v6152, %v7048
      %v7177 = vmul.f32 %v6153, %v7049
      %v7178 = vmul.f32 %v6154, %v7050
      %v7179 = vmul.f32 %v6155, %v7051
      %v7180 = vmul.f32 %v6156, %v7052
      %v7181 = vmul.f32 %v6157, %v7053
      %v7182 = vmul.f32 %v6158, %v7054
      %v7183 = vmul.f32 %v6159, %v7055
      %v7184 = vmul.f32 %v6160, %v7056
      %v7185 = vmul.f32 %v6161, %v7057
      %v7186 = vmul.f32 %v6162, %v7058
      %v7187 = vmul.f32 %v6163, %v7059
      %v7188 = vmul.f32 %v6164, %v7060
      %v7189 = vmul.f32 %v6165, %v7061
      %v7190 = vmul.f32 %v6166, %v7062
      %v7191 = vmul.f32 %v6167, %v7063
      %v7192 = vmul.f32 %v6168, %v7064
      %v7193 = vmul.f32 %v6169, %v7065
      %v7194 = vmul.f32 %v6170, %v7066
      %v7195 = vmul.f32 %v6171, %v7067
      %v7196 = vmul.f32 %v6172, %v7068
      %v7197 = vmul.f32 %v6173, %v7069
      %v7198 = vmul.f32 %v6174, %v7070
      %v7199 = vmul.f32 %v6175, %v7071
      %v7200 = vmul.f32 %v6176, %v7072
      %v7201 = vmul.f32 %v6177, %v7073
      %v7202 = vmul.f32 %v6178, %v7074
      %v7203 = vmul.f32 %v6179, %v7075
      %v7204 = vmul.f32 %v6180, %v7076
      %v7205 = vmul.f32 %v6181, %v7077
      %v7206 = vmul.f32 %v6182, %v7078
      %v7207 = vmul.f32 %v6183, %v7079
      %v7208 = vmul.f32 %v6184, %v7080
      %v7209 = vmul.f32 %v6185, %v7081
      %v7210 = vmul.f32 %v6186, %v7082
      %v7211 = vmul.f32 %v6187, %v7083
      %v7212 = vmul.f32 %v6188, %v7084
      %v7213 = vmul.f32 %v6189, %v7085
      %v7214 = vmul.f32 %v6190, %v7086
      %v7215 = vmul.f32 %v6191, %v7087
      %v7216 = vmul.f32 %v6192, %v7088
      %v7217 = vmul.f32 %v6193, %v7089
      %v7218 = vmul.f32 %v6194, %v7090
      %v7219 = vmul.f32 %v6195, %v7091
      %v7220 = vmul.f32 %v6196, %v7092
      %v7221 = vmul.f32 %v6197, %v7093
      %v7222 = vmul.f32 %v6198, %v7094
      %v7223 = vmul.f32 %v6199, %v7095
      %v7224 = vmul.f32 %v6200, %v7096
      %v7225 = vmul.f32 %v6201, %v7097
      %v7226 = vmul.f32 %v6202, %v7098
      %v7227 = vmul.f32 %v6203, %v7099
      %v7228 = vmul.f32 %v6204, %v7100
      %v7229 = vmul.f32 %v6205, %v7101
      %v7230 = vmul.f32 %v6206, %v7102
      %v7231 = vmul.f32 %v6207, %v7103
      %v7232 = vmul.f32 %v6208, %v7104
      %v7233 = vmul.f32 %v6209, %v7105
      %v7234 = vmul.f32 %v6210, %v7106
      %v7235 = vmul.f32 %v6211, %v7107
      %v7236 = vmul.f32 %v6212, %v7108
      %v7237 = vmul.f32 %v6213, %v7109
      %v7238 = vmul.f32 %v6214, %v7110
      %v7239 = vmul.f32 %v6215, %v7111
      %v7240 = vmul.f32 %v6216, %v7112
      %v7241 = vmul.f32 %v6217, %v7113
      %v7242 = vmul.f32 %v6218, %v7114
      %v7243 = vmul.f32 %v6219, %v7115
      %v7244 = vmul.f32 %v6220, %v7116
      %v7245 = vmul.f32 %v6221, %v7117
      %v7246 = vmul.f32 %v6222, %v7118
      %v7247 = vmul.f32 %v6223, %v7119
      %v7248 = vmul.f32 %v6224, %v7120
      %v7249 = vmul.f32 %v6225, %v7121
      %v7250 = vmul.f32 %v6226, %v7122
      %v7251 = vmul.f32 %v6227, %v7123
      %v7252 = vmul.f32 %v6228, %v7124
      %v7253 = vmul.f32 %v6229, %v7125
      %v7254 = vmul.f32 %v6230, %v7126
      %v7255 = vmul.f32 %v6231, %v7127
      %v7256 = vmul.f32 %v6232, %v7128
      %v7257 = vmul.f32 %v6233, %v7129
      %v7258 = vmul.f32 %v6234, %v7130
      %v7259 = vmul.f32 %v6235, %v7131
      %v7260 = vmul.f32 %v6236, %v7132
      %v7261 = vmul.f32 %v6237, %v7133
      %v7262 = vmul.f32 %v6238, %v7134
      %v7263 = vmul.f32 %v6239, %v7135
      %v7264 = vmul.f32 %v6240, %v7136
      %v7265 = vmul.f32 %v6241, %v7137
      %v7266 = vmul.f32 %v6242, %v7138
      %v7267 = vmul.f32 %v6243, %v7139
      %v7268 = vmul.f32 %v6244, %v7140
      %v7269 = vmul.f32 %v6245, %v7141
      %v7270 = vmul.f32 %v6246, %v7142
      %v7271 = vmul.f32 %v6247, %v7143
      %v7272 = vmul.f32 %v6248, %v7144
      %v7273 = vmul.f32 %v6249, %v7145
      %v7274 = vmul.f32 %v6250, %v7146
      %v7275 = vmul.f32 %v6251, %v7147
      %v7276 = vmul.f32 %v6252, %v7148
      %v7277 = vmul.f32 %v6253, %v7149
      %v7278 = vmul.f32 %v6254, %v7150
      %v7279 = vmul.f32 %v6255, %v7151
      %v7280 = vmul.f32 %v6256, %v7152
      %v7281 = vmul.f32 %v6257, %v7153
      %v7282 = vmul.f32 %v6258, %v7154
      %v7283 = vmul.f32 %v6259, %v7155
      %v7284 = vmul.f32 %v6260, %v7156
      %v7285 = vmul.f32 %v6261, %v7157
      %v7286 = vmul.f32 %v6262, %v7158
      %v7287 = vmul.f32 %v6263, %v7159
      %v7288 = vmul.f32 %v6264, %v7160
      %v7289 = vmul.f32 %v6265, %v7161
      %v7290 = vmul.f32 %v6266, %v7162
      %v7291 = vmul.f32 %v6267, %v7163
      %v7292 = vmul.f32 %v6268, %v7164
      %v7293 = vmul.f32 %v6269, %v7165
      %v7294 = vmul.f32 %v6270, %v7166
      %v7295 = vpack.c.bf16 %v7168, %v7167
      %v7296 = vpack.c.bf16 %v7170, %v7169
      %v7297 = vpack.c.bf16 %v7172, %v7171
      %v7298 = vpack.c.bf16 %v7174, %v7173
      %v7299 = vpack.c.bf16 %v7176, %v7175
      %v7300 = vpack.c.bf16 %v7178, %v7177
      %v7301 = vpack.c.bf16 %v7180, %v7179
      %v7302 = vpack.c.bf16 %v7182, %v7181
      %v7303 = vpack.c.bf16 %v7184, %v7183
      %v7304 = vpack.c.bf16 %v7186, %v7185
      %v7305 = vpack.c.bf16 %v7188, %v7187
      %v7306 = vpack.c.bf16 %v7190, %v7189
      %v7307 = vpack.c.bf16 %v7192, %v7191
      %v7308 = vpack.c.bf16 %v7194, %v7193
      %v7309 = vpack.c.bf16 %v7196, %v7195
      %v7310 = vpack.c.bf16 %v7198, %v7197
      %v7311 = vpack.c.bf16 %v7200, %v7199
      %v7312 = vpack.c.bf16 %v7202, %v7201
      %v7313 = vpack.c.bf16 %v7204, %v7203
      %v7314 = vpack.c.bf16 %v7206, %v7205
      %v7315 = vpack.c.bf16 %v7208, %v7207
      %v7316 = vpack.c.bf16 %v7210, %v7209
      %v7317 = vpack.c.bf16 %v7212, %v7211
      %v7318 = vpack.c.bf16 %v7214, %v7213
      %v7319 = vpack.c.bf16 %v7216, %v7215
      %v7320 = vpack.c.bf16 %v7218, %v7217
      %v7321 = vpack.c.bf16 %v7220, %v7219
      %v7322 = vpack.c.bf16 %v7222, %v7221
      %v7323 = vpack.c.bf16 %v7224, %v7223
      %v7324 = vpack.c.bf16 %v7226, %v7225
      %v7325 = vpack.c.bf16 %v7228, %v7227
      %v7326 = vpack.c.bf16 %v7230, %v7229
      %v7327 = vpack.c.bf16 %v7232, %v7231
      %v7328 = vpack.c.bf16 %v7234, %v7233
      %v7329 = vpack.c.bf16 %v7236, %v7235
      %v7330 = vpack.c.bf16 %v7238, %v7237
      %v7331 = vpack.c.bf16 %v7240, %v7239
      %v7332 = vpack.c.bf16 %v7242, %v7241
      %v7333 = vpack.c.bf16 %v7244, %v7243
      %v7334 = vpack.c.bf16 %v7246, %v7245
      %v7335 = vpack.c.bf16 %v7248, %v7247
      %v7336 = vpack.c.bf16 %v7250, %v7249
      %v7337 = vpack.c.bf16 %v7252, %v7251
      %v7338 = vpack.c.bf16 %v7254, %v7253
      %v7339 = vpack.c.bf16 %v7256, %v7255
      %v7340 = vpack.c.bf16 %v7258, %v7257
      %v7341 = vpack.c.bf16 %v7260, %v7259
      %v7342 = vpack.c.bf16 %v7262, %v7261
      %v7343 = vpack.c.bf16 %v7264, %v7263
      %v7344 = vpack.c.bf16 %v7266, %v7265
      %v7345 = vpack.c.bf16 %v7268, %v7267
      %v7346 = vpack.c.bf16 %v7270, %v7269
      %v7347 = vpack.c.bf16 %v7272, %v7271
      %v7348 = vpack.c.bf16 %v7274, %v7273
      %v7349 = vpack.c.bf16 %v7276, %v7275
      %v7350 = vpack.c.bf16 %v7278, %v7277
      %v7351 = vpack.c.bf16 %v7280, %v7279
      %v7352 = vpack.c.bf16 %v7282, %v7281
      %v7353 = vpack.c.bf16 %v7284, %v7283
      %v7354 = vpack.c.bf16 %v7286, %v7285
      %v7355 = vpack.c.bf16 %v7288, %v7287
      %v7356 = vpack.c.bf16 %v7290, %v7289
      %v7357 = vpack.c.bf16 %v7292, %v7291
      %v7358 = vpack.c.bf16 %v7294, %v7293
      %v7359 = vld [vmem:[%s4] sm:$0xf]
      %v7360 = vld [vmem:[%s4 + $0x4] sm:$0xf]
      %v7361 = vld [vmem:[%s4 + $0x8] sm:$0xf]
      %v7362 = vld [vmem:[%s4 + $0xc] sm:$0xf]
      %v7363 = vld [vmem:[%s4 + $0x10] sm:$0xf]
      %v7364 = vld [vmem:[%s4 + $0x14] sm:$0xf]
      %v7365 = vld [vmem:[%s4 + $0x18] sm:$0xf]
      %v7366 = vld [vmem:[%s4 + $0x1c] sm:$0xf]
      %v7367 = vld [vmem:[%s4 + $0x20] sm:$0xf]
      %v7368 = vld [vmem:[%s4 + $0x24] sm:$0xf]
      %v7369 = vld [vmem:[%s4 + $0x28] sm:$0xf]
      %v7370 = vld [vmem:[%s4 + $0x2c] sm:$0xf]
      %v7371 = vld [vmem:[%s4 + $0x30] sm:$0xf]
      %v7372 = vld [vmem:[%s4 + $0x34] sm:$0xf]
      %v7373 = vld [vmem:[%s4 + $0x38] sm:$0xf]
      %v7374 = vld [vmem:[%s4 + $0x3c] sm:$0xf]
      %v7375 = vld [vmem:[%s7] sm:$0x1]
      %v7377 = vlaneseq
      %v7378 = vshrl.u32 %v7377, 7
      %v7379 = vsub.s32 0, %v7378
      %v7380 = vrot.slane %v7375, %v7379
      %v7398 = vunpack.c.l.b16 %v7359
      %v7399 = vunpack.c.l.b16 %v7360
      %v7400 = vunpack.c.l.b16 %v7361
      %v7401 = vunpack.c.l.b16 %v7362
      %v7402 = vunpack.c.l.b16 %v7363
      %v7403 = vunpack.c.l.b16 %v7364
      %v7404 = vunpack.c.l.b16 %v7365
      %v7405 = vunpack.c.l.b16 %v7366
      %v7406 = vunpack.c.l.b16 %v7367
      %v7407 = vunpack.c.l.b16 %v7368
      %v7408 = vunpack.c.l.b16 %v7369
      %v7409 = vunpack.c.l.b16 %v7370
      %v7410 = vunpack.c.l.b16 %v7371
      %v7411 = vunpack.c.l.b16 %v7372
      %v7412 = vunpack.c.l.b16 %v7373
      %v7413 = vunpack.c.l.b16 %v7374
      %v7414 = vpack.c.b16 %v7399, %v7398
      %v7415 = vpack.c.b16 %v7401, %v7400
      %v7416 = vpack.c.b16 %v7403, %v7402
      %v7417 = vpack.c.b16 %v7405, %v7404
      %v7418 = vpack.c.b16 %v7407, %v7406
      %v7419 = vpack.c.b16 %v7409, %v7408
      %v7420 = vpack.c.b16 %v7411, %v7410
      %v7421 = vpack.c.b16 %v7413, %v7412
      %7430 = vmatprep.subr.bf16.mxu0 0
      %7431 = vmatpush1.bf16.msra.mxu0 %v7421
      %7432 = vmatprep.subr.bf16.mxu0 0
      %7433 = vmatpush1.bf16.msra.mxu0 %v7420
      %7434 = vmatprep.subr.bf16.mxu0 0
      %7435 = vmatpush1.bf16.msra.mxu0 %v7419
      %7436 = vmatprep.subr.bf16.mxu0 0
      %7437 = vmatpush1.bf16.msra.mxu0 %v7418
      %7438 = vmatprep.subr.bf16.mxu0 0
      %7439 = vmatpush1.bf16.msra.mxu0 %v7417
      %7440 = vmatprep.subr.bf16.mxu0 0
      %7441 = vmatpush1.bf16.msra.mxu0 %v7416
      %7442 = vmatprep.subr.bf16.mxu0 0
      %7443 = vmatpush1.bf16.msra.mxu0 %v7415
      %7444 = vmatprep.subr.bf16.mxu0 0
      %7445 = vmatpush1.bf16.msra.mxu0 %v7414
      %7446 = vmatprep.subr.bf16.mxu0 0
      %7447 = vmatpush2.bf16.msra.mxu0 0
      %7448 = vmatprep.subr.bf16.mxu0 0
      %7449 = vmatpush2.bf16.msra.mxu0 0
      %7450 = vmatprep.subr.bf16.mxu0 0
      %7451 = vmatpush2.bf16.msra.mxu0 0
      %7452 = vmatprep.subr.bf16.mxu0 0
      %7453 = vmatpush2.bf16.msra.mxu0 0
      %7454 = vmatprep.subr.bf16.mxu0 0
      %7455 = vmatpush2.bf16.msra.mxu0 0
      %7456 = vmatprep.subr.bf16.mxu0 0
      %7457 = vmatpush2.bf16.msra.mxu0 0
      %7458 = vmatprep.subr.bf16.mxu0 0
      %7459 = vmatpush2.bf16.msra.mxu0 0
      %7460 = vmatprep.subr.bf16.mxu0 0
      %7461 = vmatpush2.bf16.msra.mxu0 0
      %7462 = vmatprep.mubr.bf16.mxu0 0
      %7463 = vmatmul.mubr.bf16.gmra.mxu0 %v7295
      %v7464 = vpop.f32.mrf.mxu0
      %v7465 = vadd.f32 %v7380, %v7464
      %v7466 = vpop.f32.mrf.mxu0
      %v7467 = vpop.f32.mrf.mxu0
      %v7468 = vadd.f32 %v7380, %v7467
      %v7469 = vpop.f32.mrf.mxu0
      %7470 = vmatprep.mubr.bf16.mxu0 0
      %7471 = vmatmul.mubr.bf16.gmra.mxu0 %v7296
      %v7472 = vpop.f32.mrf.mxu0
      %v7473 = vadd.f32 %v7380, %v7472
      %v7474 = vpop.f32.mrf.mxu0
      %v7475 = vpop.f32.mrf.mxu0
      %v7476 = vadd.f32 %v7380, %v7475
      %v7477 = vpop.f32.mrf.mxu0
      %7478 = vmatprep.mubr.bf16.mxu0 0
      %7479 = vmatmul.mubr.bf16.gmra.mxu0 %v7297
      %v7480 = vpop.f32.mrf.mxu0
      %v7481 = vadd.f32 %v7380, %v7480
      %v7482 = vpop.f32.mrf.mxu0
      %v7483 = vpop.f32.mrf.mxu0
      %v7484 = vadd.f32 %v7380, %v7483
      %v7485 = vpop.f32.mrf.mxu0
      %7486 = vmatprep.mubr.bf16.mxu0 0
      %7487 = vmatmul.mubr.bf16.gmra.mxu0 %v7298
      %v7488 = vpop.f32.mrf.mxu0
      %v7489 = vadd.f32 %v7380, %v7488
      %v7490 = vpop.f32.mrf.mxu0
      %v7491 = vpop.f32.mrf.mxu0
      %v7492 = vadd.f32 %v7380, %v7491
      %v7493 = vpop.f32.mrf.mxu0
      %7494 = vmatprep.mubr.bf16.mxu0 0
      %7495 = vmatmul.mubr.bf16.gmra.mxu0 %v7299
      %v7496 = vpop.f32.mrf.mxu0
      %v7497 = vadd.f32 %v7380, %v7496
      %v7498 = vpop.f32.mrf.mxu0
      %v7499 = vpop.f32.mrf.mxu0
      %v7500 = vadd.f32 %v7380, %v7499
      %v7501 = vpop.f32.mrf.mxu0
      %7502 = vmatprep.mubr.bf16.mxu0 0
      %7503 = vmatmul.mubr.bf16.gmra.mxu0 %v7300
      %v7504 = vpop.f32.mrf.mxu0
      %v7505 = vadd.f32 %v7380, %v7504
      %v7506 = vpop.f32.mrf.mxu0
      %v7507 = vpop.f32.mrf.mxu0
      %v7508 = vadd.f32 %v7380, %v7507
      %v7509 = vpop.f32.mrf.mxu0
      %7510 = vmatprep.mubr.bf16.mxu0 0
      %7511 = vmatmul.mubr.bf16.gmra.mxu0 %v7301
      %v7512 = vpop.f32.mrf.mxu0
      %v7513 = vadd.f32 %v7380, %v7512
      %v7514 = vpop.f32.mrf.mxu0
      %v7515 = vpop.f32.mrf.mxu0
      %v7516 = vadd.f32 %v7380, %v7515
      %v7517 = vpop.f32.mrf.mxu0
      %7518 = vmatprep.mubr.bf16.mxu0 0
      %7519 = vmatmul.mubr.bf16.gmra.mxu0 %v7302
      %v7520 = vpop.f32.mrf.mxu0
      %v7521 = vadd.f32 %v7380, %v7520
      %v7522 = vpop.f32.mrf.mxu0
      %v7523 = vpop.f32.mrf.mxu0
      %v7524 = vadd.f32 %v7380, %v7523
      %v7525 = vpop.f32.mrf.mxu0
      %7526 = vmatprep.mubr.bf16.mxu0 0
      %7527 = vmatmul.mubr.bf16.gmra.mxu0 %v7303
      %v7528 = vpop.f32.mrf.mxu0
      %v7529 = vadd.f32 %v7380, %v7528
      %v7530 = vpop.f32.mrf.mxu0
      %v7531 = vpop.f32.mrf.mxu0
      %v7532 = vadd.f32 %v7380, %v7531
      %v7533 = vpop.f32.mrf.mxu0
      %7534 = vmatprep.mubr.bf16.mxu0 0
      %7535 = vmatmul.mubr.bf16.gmra.mxu0 %v7304
      %v7536 = vpop.f32.mrf.mxu0
      %v7537 = vadd.f32 %v7380, %v7536
      %v7538 = vpop.f32.mrf.mxu0
      %v7539 = vpop.f32.mrf.mxu0
      %v7540 = vadd.f32 %v7380, %v7539
      %v7541 = vpop.f32.mrf.mxu0
      %7542 = vmatprep.mubr.bf16.mxu0 0
      %7543 = vmatmul.mubr.bf16.gmra.mxu0 %v7305
      %v7544 = vpop.f32.mrf.mxu0
      %v7545 = vadd.f32 %v7380, %v7544
      %v7546 = vpop.f32.mrf.mxu0
      %v7547 = vpop.f32.mrf.mxu0
      %v7548 = vadd.f32 %v7380, %v7547
      %v7549 = vpop.f32.mrf.mxu0
      %7550 = vmatprep.mubr.bf16.mxu0 0
      %7551 = vmatmul.mubr.bf16.gmra.mxu0 %v7306
      %v7552 = vpop.f32.mrf.mxu0
      %v7553 = vadd.f32 %v7380, %v7552
      %v7554 = vpop.f32.mrf.mxu0
      %v7555 = vpop.f32.mrf.mxu0
      %v7556 = vadd.f32 %v7380, %v7555
      %v7557 = vpop.f32.mrf.mxu0
      %7558 = vmatprep.mubr.bf16.mxu0 0
      %7559 = vmatmul.mubr.bf16.gmra.mxu0 %v7307
      %v7560 = vpop.f32.mrf.mxu0
      %v7561 = vadd.f32 %v7380, %v7560
      %v7562 = vpop.f32.mrf.mxu0
      %v7563 = vpop.f32.mrf.mxu0
      %v7564 = vadd.f32 %v7380, %v7563
      %v7565 = vpop.f32.mrf.mxu0
      %7566 = vmatprep.mubr.bf16.mxu0 0
      %7567 = vmatmul.mubr.bf16.gmra.mxu0 %v7308
      %v7568 = vpop.f32.mrf.mxu0
      %v7569 = vadd.f32 %v7380, %v7568
      %v7570 = vpop.f32.mrf.mxu0
      %v7571 = vpop.f32.mrf.mxu0
      %v7572 = vadd.f32 %v7380, %v7571
      %v7573 = vpop.f32.mrf.mxu0
      %7574 = vmatprep.mubr.bf16.mxu0 0
      %7575 = vmatmul.mubr.bf16.gmra.mxu0 %v7309
      %v7576 = vpop.f32.mrf.mxu0
      %v7577 = vadd.f32 %v7380, %v7576
      %v7578 = vpop.f32.mrf.mxu0
      %v7579 = vpop.f32.mrf.mxu0
      %v7580 = vadd.f32 %v7380, %v7579
      %v7581 = vpop.f32.mrf.mxu0
      %7582 = vmatprep.mubr.bf16.mxu0 0
      %7583 = vmatmul.mubr.bf16.gmra.mxu0 %v7310
      %v7584 = vpop.f32.mrf.mxu0
      %v7585 = vadd.f32 %v7380, %v7584
      %v7586 = vpop.f32.mrf.mxu0
      %v7587 = vpop.f32.mrf.mxu0
      %v7588 = vadd.f32 %v7380, %v7587
      %v7589 = vpop.f32.mrf.mxu0
      %7590 = vmatprep.mubr.bf16.mxu0 0
      %7591 = vmatmul.mubr.bf16.gmra.mxu0 %v7311
      %v7592 = vpop.f32.mrf.mxu0
      %v7593 = vadd.f32 %v7380, %v7592
      %v7594 = vpop.f32.mrf.mxu0
      %v7595 = vpop.f32.mrf.mxu0
      %v7596 = vadd.f32 %v7380, %v7595
      %v7597 = vpop.f32.mrf.mxu0
      %7598 = vmatprep.mubr.bf16.mxu0 0
      %7599 = vmatmul.mubr.bf16.gmra.mxu0 %v7312
      %v7600 = vpop.f32.mrf.mxu0
      %v7601 = vadd.f32 %v7380, %v7600
      %v7602 = vpop.f32.mrf.mxu0
      %v7603 = vpop.f32.mrf.mxu0
      %v7604 = vadd.f32 %v7380, %v7603
      %v7605 = vpop.f32.mrf.mxu0
      %7606 = vmatprep.mubr.bf16.mxu0 0
      %7607 = vmatmul.mubr.bf16.gmra.mxu0 %v7313
      %v7608 = vpop.f32.mrf.mxu0
      %v7609 = vadd.f32 %v7380, %v7608
      %v7610 = vpop.f32.mrf.mxu0
      %v7611 = vpop.f32.mrf.mxu0
      %v7612 = vadd.f32 %v7380, %v7611
      %v7613 = vpop.f32.mrf.mxu0
      %7614 = vmatprep.mubr.bf16.mxu0 0
      %7615 = vmatmul.mubr.bf16.gmra.mxu0 %v7314
      %v7616 = vpop.f32.mrf.mxu0
      %v7617 = vadd.f32 %v7380, %v7616
      %v7618 = vpop.f32.mrf.mxu0
      %v7619 = vpop.f32.mrf.mxu0
      %v7620 = vadd.f32 %v7380, %v7619
      %v7621 = vpop.f32.mrf.mxu0
      %7622 = vmatprep.mubr.bf16.mxu0 0
      %7623 = vmatmul.mubr.bf16.gmra.mxu0 %v7315
      %v7624 = vpop.f32.mrf.mxu0
      %v7625 = vadd.f32 %v7380, %v7624
      %v7626 = vpop.f32.mrf.mxu0
      %v7627 = vpop.f32.mrf.mxu0
      %v7628 = vadd.f32 %v7380, %v7627
      %v7629 = vpop.f32.mrf.mxu0
      %7630 = vmatprep.mubr.bf16.mxu0 0
      %7631 = vmatmul.mubr.bf16.gmra.mxu0 %v7316
      %v7632 = vpop.f32.mrf.mxu0
      %v7633 = vadd.f32 %v7380, %v7632
      %v7634 = vpop.f32.mrf.mxu0
      %v7635 = vpop.f32.mrf.mxu0
      %v7636 = vadd.f32 %v7380, %v7635
      %v7637 = vpop.f32.mrf.mxu0
      %7638 = vmatprep.mubr.bf16.mxu0 0
      %7639 = vmatmul.mubr.bf16.gmra.mxu0 %v7317
      %v7640 = vpop.f32.mrf.mxu0
      %v7641 = vadd.f32 %v7380, %v7640
      %v7642 = vpop.f32.mrf.mxu0
      %v7643 = vpop.f32.mrf.mxu0
      %v7644 = vadd.f32 %v7380, %v7643
      %v7645 = vpop.f32.mrf.mxu0
      %7646 = vmatprep.mubr.bf16.mxu0 0
      %7647 = vmatmul.mubr.bf16.gmra.mxu0 %v7318
      %v7648 = vpop.f32.mrf.mxu0
      %v7649 = vadd.f32 %v7380, %v7648
      %v7650 = vpop.f32.mrf.mxu0
      %v7651 = vpop.f32.mrf.mxu0
      %v7652 = vadd.f32 %v7380, %v7651
      %v7653 = vpop.f32.mrf.mxu0
      %7654 = vmatprep.mubr.bf16.mxu0 0
      %7655 = vmatmul.mubr.bf16.gmra.mxu0 %v7319
      %v7656 = vpop.f32.mrf.mxu0
      %v7657 = vadd.f32 %v7380, %v7656
      %v7658 = vpop.f32.mrf.mxu0
      %v7659 = vpop.f32.mrf.mxu0
      %v7660 = vadd.f32 %v7380, %v7659
      %v7661 = vpop.f32.mrf.mxu0
      %7662 = vmatprep.mubr.bf16.mxu0 0
      %7663 = vmatmul.mubr.bf16.gmra.mxu0 %v7320
      %v7664 = vpop.f32.mrf.mxu0
      %v7665 = vadd.f32 %v7380, %v7664
      %v7666 = vpop.f32.mrf.mxu0
      %v7667 = vpop.f32.mrf.mxu0
      %v7668 = vadd.f32 %v7380, %v7667
      %v7669 = vpop.f32.mrf.mxu0
      %7670 = vmatprep.mubr.bf16.mxu0 0
      %7671 = vmatmul.mubr.bf16.gmra.mxu0 %v7321
      %v7672 = vpop.f32.mrf.mxu0
      %v7673 = vadd.f32 %v7380, %v7672
      %v7674 = vpop.f32.mrf.mxu0
      %v7675 = vpop.f32.mrf.mxu0
      %v7676 = vadd.f32 %v7380, %v7675
      %v7677 = vpop.f32.mrf.mxu0
      %7678 = vmatprep.mubr.bf16.mxu0 0
      %7679 = vmatmul.mubr.bf16.gmra.mxu0 %v7322
      %v7680 = vpop.f32.mrf.mxu0
      %v7681 = vadd.f32 %v7380, %v7680
      %v7682 = vpop.f32.mrf.mxu0
      %v7683 = vpop.f32.mrf.mxu0
      %v7684 = vadd.f32 %v7380, %v7683
      %v7685 = vpop.f32.mrf.mxu0
      %7686 = vmatprep.mubr.bf16.mxu0 0
      %7687 = vmatmul.mubr.bf16.gmra.mxu0 %v7323
      %v7688 = vpop.f32.mrf.mxu0
      %v7689 = vadd.f32 %v7380, %v7688
      %v7690 = vpop.f32.mrf.mxu0
      %v7691 = vpop.f32.mrf.mxu0
      %v7692 = vadd.f32 %v7380, %v7691
      %v7693 = vpop.f32.mrf.mxu0
      %7694 = vmatprep.mubr.bf16.mxu0 0
      %7695 = vmatmul.mubr.bf16.gmra.mxu0 %v7324
      %v7696 = vpop.f32.mrf.mxu0
      %v7697 = vadd.f32 %v7380, %v7696
      %v7698 = vpop.f32.mrf.mxu0
      %v7699 = vpop.f32.mrf.mxu0
      %v7700 = vadd.f32 %v7380, %v7699
      %v7701 = vpop.f32.mrf.mxu0
      %7702 = vmatprep.mubr.bf16.mxu0 0
      %7703 = vmatmul.mubr.bf16.gmra.mxu0 %v7325
      %v7704 = vpop.f32.mrf.mxu0
      %v7705 = vadd.f32 %v7380, %v7704
      %v7706 = vpop.f32.mrf.mxu0
      %v7707 = vpop.f32.mrf.mxu0
      %v7708 = vadd.f32 %v7380, %v7707
      %v7709 = vpop.f32.mrf.mxu0
      %7710 = vmatprep.mubr.bf16.mxu0 0
      %7711 = vmatmul.mubr.bf16.gmra.mxu0 %v7326
      %v7712 = vpop.f32.mrf.mxu0
      %v7713 = vadd.f32 %v7380, %v7712
      %v7714 = vpop.f32.mrf.mxu0
      %v7715 = vpop.f32.mrf.mxu0
      %v7716 = vadd.f32 %v7380, %v7715
      %v7717 = vpop.f32.mrf.mxu0
      %7718 = vmatprep.mubr.bf16.mxu0 0
      %7719 = vmatmul.mubr.bf16.gmra.mxu0 %v7327
      %v7720 = vpop.f32.mrf.mxu0
      %v7721 = vadd.f32 %v7380, %v7720
      %v7722 = vpop.f32.mrf.mxu0
      %v7723 = vpop.f32.mrf.mxu0
      %v7724 = vadd.f32 %v7380, %v7723
      %v7725 = vpop.f32.mrf.mxu0
      %7726 = vmatprep.mubr.bf16.mxu0 0
      %7727 = vmatmul.mubr.bf16.gmra.mxu0 %v7328
      %v7728 = vpop.f32.mrf.mxu0
      %v7729 = vadd.f32 %v7380, %v7728
      %v7730 = vpop.f32.mrf.mxu0
      %v7731 = vpop.f32.mrf.mxu0
      %v7732 = vadd.f32 %v7380, %v7731
      %v7733 = vpop.f32.mrf.mxu0
      %7734 = vmatprep.mubr.bf16.mxu0 0
      %7735 = vmatmul.mubr.bf16.gmra.mxu0 %v7329
      %v7736 = vpop.f32.mrf.mxu0
      %v7737 = vadd.f32 %v7380, %v7736
      %v7738 = vpop.f32.mrf.mxu0
      %v7739 = vpop.f32.mrf.mxu0
      %v7740 = vadd.f32 %v7380, %v7739
      %v7741 = vpop.f32.mrf.mxu0
      %7742 = vmatprep.mubr.bf16.mxu0 0
      %7743 = vmatmul.mubr.bf16.gmra.mxu0 %v7330
      %v7744 = vpop.f32.mrf.mxu0
      %v7745 = vadd.f32 %v7380, %v7744
      %v7746 = vpop.f32.mrf.mxu0
      %v7747 = vpop.f32.mrf.mxu0
      %v7748 = vadd.f32 %v7380, %v7747
      %v7749 = vpop.f32.mrf.mxu0
      %7750 = vmatprep.mubr.bf16.mxu0 0
      %7751 = vmatmul.mubr.bf16.gmra.mxu0 %v7331
      %v7752 = vpop.f32.mrf.mxu0
      %v7753 = vadd.f32 %v7380, %v7752
      %v7754 = vpop.f32.mrf.mxu0
      %v7755 = vpop.f32.mrf.mxu0
      %v7756 = vadd.f32 %v7380, %v7755
      %v7757 = vpop.f32.mrf.mxu0
      %7758 = vmatprep.mubr.bf16.mxu0 0
      %7759 = vmatmul.mubr.bf16.gmra.mxu0 %v7332
      %v7760 = vpop.f32.mrf.mxu0
      %v7761 = vadd.f32 %v7380, %v7760
      %v7762 = vpop.f32.mrf.mxu0
      %v7763 = vpop.f32.mrf.mxu0
      %v7764 = vadd.f32 %v7380, %v7763
      %v7765 = vpop.f32.mrf.mxu0
      %7766 = vmatprep.mubr.bf16.mxu0 0
      %7767 = vmatmul.mubr.bf16.gmra.mxu0 %v7333
      %v7768 = vpop.f32.mrf.mxu0
      %v7769 = vadd.f32 %v7380, %v7768
      %v7770 = vpop.f32.mrf.mxu0
      %v7771 = vpop.f32.mrf.mxu0
      %v7772 = vadd.f32 %v7380, %v7771
      %v7773 = vpop.f32.mrf.mxu0
      %7774 = vmatprep.mubr.bf16.mxu0 0
      %7775 = vmatmul.mubr.bf16.gmra.mxu0 %v7334
      %v7776 = vpop.f32.mrf.mxu0
      %v7777 = vadd.f32 %v7380, %v7776
      %v7778 = vpop.f32.mrf.mxu0
      %v7779 = vpop.f32.mrf.mxu0
      %v7780 = vadd.f32 %v7380, %v7779
      %v7781 = vpop.f32.mrf.mxu0
      %7782 = vmatprep.mubr.bf16.mxu0 0
      %7783 = vmatmul.mubr.bf16.gmra.mxu0 %v7335
      %v7784 = vpop.f32.mrf.mxu0
      %v7785 = vadd.f32 %v7380, %v7784
      %v7786 = vpop.f32.mrf.mxu0
      %v7787 = vpop.f32.mrf.mxu0
      %v7788 = vadd.f32 %v7380, %v7787
      %v7789 = vpop.f32.mrf.mxu0
      %7790 = vmatprep.mubr.bf16.mxu0 0
      %7791 = vmatmul.mubr.bf16.gmra.mxu0 %v7336
      %v7792 = vpop.f32.mrf.mxu0
      %v7793 = vadd.f32 %v7380, %v7792
      %v7794 = vpop.f32.mrf.mxu0
      %v7795 = vpop.f32.mrf.mxu0
      %v7796 = vadd.f32 %v7380, %v7795
      %v7797 = vpop.f32.mrf.mxu0
      %7798 = vmatprep.mubr.bf16.mxu0 0
      %7799 = vmatmul.mubr.bf16.gmra.mxu0 %v7337
      %v7800 = vpop.f32.mrf.mxu0
      %v7801 = vadd.f32 %v7380, %v7800
      %v7802 = vpop.f32.mrf.mxu0
      %v7803 = vpop.f32.mrf.mxu0
      %v7804 = vadd.f32 %v7380, %v7803
      %v7805 = vpop.f32.mrf.mxu0
      %7806 = vmatprep.mubr.bf16.mxu0 0
      %7807 = vmatmul.mubr.bf16.gmra.mxu0 %v7338
      %v7808 = vpop.f32.mrf.mxu0
      %v7809 = vadd.f32 %v7380, %v7808
      %v7810 = vpop.f32.mrf.mxu0
      %v7811 = vpop.f32.mrf.mxu0
      %v7812 = vadd.f32 %v7380, %v7811
      %v7813 = vpop.f32.mrf.mxu0
      %7814 = vmatprep.mubr.bf16.mxu0 0
      %7815 = vmatmul.mubr.bf16.gmra.mxu0 %v7339
      %v7816 = vpop.f32.mrf.mxu0
      %v7817 = vadd.f32 %v7380, %v7816
      %v7818 = vpop.f32.mrf.mxu0
      %v7819 = vpop.f32.mrf.mxu0
      %v7820 = vadd.f32 %v7380, %v7819
      %v7821 = vpop.f32.mrf.mxu0
      %7822 = vmatprep.mubr.bf16.mxu0 0
      %7823 = vmatmul.mubr.bf16.gmra.mxu0 %v7340
      %v7824 = vpop.f32.mrf.mxu0
      %v7825 = vadd.f32 %v7380, %v7824
      %v7826 = vpop.f32.mrf.mxu0
      %v7827 = vpop.f32.mrf.mxu0
      %v7828 = vadd.f32 %v7380, %v7827
      %v7829 = vpop.f32.mrf.mxu0
      %7830 = vmatprep.mubr.bf16.mxu0 0
      %7831 = vmatmul.mubr.bf16.gmra.mxu0 %v7341
      %v7832 = vpop.f32.mrf.mxu0
      %v7833 = vadd.f32 %v7380, %v7832
      %v7834 = vpop.f32.mrf.mxu0
      %v7835 = vpop.f32.mrf.mxu0
      %v7836 = vadd.f32 %v7380, %v7835
      %v7837 = vpop.f32.mrf.mxu0
      %7838 = vmatprep.mubr.bf16.mxu0 0
      %7839 = vmatmul.mubr.bf16.gmra.mxu0 %v7342
      %v7840 = vpop.f32.mrf.mxu0
      %v7841 = vadd.f32 %v7380, %v7840
      %v7842 = vpop.f32.mrf.mxu0
      %v7843 = vpop.f32.mrf.mxu0
      %v7844 = vadd.f32 %v7380, %v7843
      %v7845 = vpop.f32.mrf.mxu0
      %7846 = vmatprep.mubr.bf16.mxu0 0
      %7847 = vmatmul.mubr.bf16.gmra.mxu0 %v7343
      %v7848 = vpop.f32.mrf.mxu0
      %v7849 = vadd.f32 %v7380, %v7848
      %v7850 = vpop.f32.mrf.mxu0
      %v7851 = vpop.f32.mrf.mxu0
      %v7852 = vadd.f32 %v7380, %v7851
      %v7853 = vpop.f32.mrf.mxu0
      %7854 = vmatprep.mubr.bf16.mxu0 0
      %7855 = vmatmul.mubr.bf16.gmra.mxu0 %v7344
      %v7856 = vpop.f32.mrf.mxu0
      %v7857 = vadd.f32 %v7380, %v7856
      %v7858 = vpop.f32.mrf.mxu0
      %v7859 = vpop.f32.mrf.mxu0
      %v7860 = vadd.f32 %v7380, %v7859
      %v7861 = vpop.f32.mrf.mxu0
      %7862 = vmatprep.mubr.bf16.mxu0 0
      %7863 = vmatmul.mubr.bf16.gmra.mxu0 %v7345
      %v7864 = vpop.f32.mrf.mxu0
      %v7865 = vadd.f32 %v7380, %v7864
      %v7866 = vpop.f32.mrf.mxu0
      %v7867 = vpop.f32.mrf.mxu0
      %v7868 = vadd.f32 %v7380, %v7867
      %v7869 = vpop.f32.mrf.mxu0
      %7870 = vmatprep.mubr.bf16.mxu0 0
      %7871 = vmatmul.mubr.bf16.gmra.mxu0 %v7346
      %v7872 = vpop.f32.mrf.mxu0
      %v7873 = vadd.f32 %v7380, %v7872
      %v7874 = vpop.f32.mrf.mxu0
      %v7875 = vpop.f32.mrf.mxu0
      %v7876 = vadd.f32 %v7380, %v7875
      %v7877 = vpop.f32.mrf.mxu0
      %7878 = vmatprep.mubr.bf16.mxu0 0
      %7879 = vmatmul.mubr.bf16.gmra.mxu0 %v7347
      %v7880 = vpop.f32.mrf.mxu0
      %v7881 = vadd.f32 %v7380, %v7880
      %v7882 = vpop.f32.mrf.mxu0
      %v7883 = vpop.f32.mrf.mxu0
      %v7884 = vadd.f32 %v7380, %v7883
      %v7885 = vpop.f32.mrf.mxu0
      %7886 = vmatprep.mubr.bf16.mxu0 0
      %7887 = vmatmul.mubr.bf16.gmra.mxu0 %v7348
      %v7888 = vpop.f32.mrf.mxu0
      %v7889 = vadd.f32 %v7380, %v7888
      %v7890 = vpop.f32.mrf.mxu0
      %v7891 = vpop.f32.mrf.mxu0
      %v7892 = vadd.f32 %v7380, %v7891
      %v7893 = vpop.f32.mrf.mxu0
      %7894 = vmatprep.mubr.bf16.mxu0 0
      %7895 = vmatmul.mubr.bf16.gmra.mxu0 %v7349
      %v7896 = vpop.f32.mrf.mxu0
      %v7897 = vadd.f32 %v7380, %v7896
      %v7898 = vpop.f32.mrf.mxu0
      %v7899 = vpop.f32.mrf.mxu0
      %v7900 = vadd.f32 %v7380, %v7899
      %v7901 = vpop.f32.mrf.mxu0
      %7902 = vmatprep.mubr.bf16.mxu0 0
      %7903 = vmatmul.mubr.bf16.gmra.mxu0 %v7350
      %v7904 = vpop.f32.mrf.mxu0
      %v7905 = vadd.f32 %v7380, %v7904
      %v7906 = vpop.f32.mrf.mxu0
      %v7907 = vpop.f32.mrf.mxu0
      %v7908 = vadd.f32 %v7380, %v7907
      %v7909 = vpop.f32.mrf.mxu0
      %7910 = vmatprep.mubr.bf16.mxu0 0
      %7911 = vmatmul.mubr.bf16.gmra.mxu0 %v7351
      %v7912 = vpop.f32.mrf.mxu0
      %v7913 = vadd.f32 %v7380, %v7912
      %v7914 = vpop.f32.mrf.mxu0
      %v7915 = vpop.f32.mrf.mxu0
      %v7916 = vadd.f32 %v7380, %v7915
      %v7917 = vpop.f32.mrf.mxu0
      %7918 = vmatprep.mubr.bf16.mxu0 0
      %7919 = vmatmul.mubr.bf16.gmra.mxu0 %v7352
      %v7920 = vpop.f32.mrf.mxu0
      %v7921 = vadd.f32 %v7380, %v7920
      %v7922 = vpop.f32.mrf.mxu0
      %v7923 = vpop.f32.mrf.mxu0
      %v7924 = vadd.f32 %v7380, %v7923
      %v7925 = vpop.f32.mrf.mxu0
      %7926 = vmatprep.mubr.bf16.mxu0 0
      %7927 = vmatmul.mubr.bf16.gmra.mxu0 %v7353
      %v7928 = vpop.f32.mrf.mxu0
      %v7929 = vadd.f32 %v7380, %v7928
      %v7930 = vpop.f32.mrf.mxu0
      %v7931 = vpop.f32.mrf.mxu0
      %v7932 = vadd.f32 %v7380, %v7931
      %v7933 = vpop.f32.mrf.mxu0
      %7934 = vmatprep.mubr.bf16.mxu0 0
      %7935 = vmatmul.mubr.bf16.gmra.mxu0 %v7354
      %v7936 = vpop.f32.mrf.mxu0
      %v7937 = vadd.f32 %v7380, %v7936
      %v7938 = vpop.f32.mrf.mxu0
      %v7939 = vpop.f32.mrf.mxu0
      %v7940 = vadd.f32 %v7380, %v7939
      %v7941 = vpop.f32.mrf.mxu0
      %7942 = vmatprep.mubr.bf16.mxu0 0
      %7943 = vmatmul.mubr.bf16.gmra.mxu0 %v7355
      %v7944 = vpop.f32.mrf.mxu0
      %v7945 = vadd.f32 %v7380, %v7944
      %v7946 = vpop.f32.mrf.mxu0
      %v7947 = vpop.f32.mrf.mxu0
      %v7948 = vadd.f32 %v7380, %v7947
      %v7949 = vpop.f32.mrf.mxu0
      %7950 = vmatprep.mubr.bf16.mxu0 0
      %7951 = vmatmul.mubr.bf16.gmra.mxu0 %v7356
      %v7952 = vpop.f32.mrf.mxu0
      %v7953 = vadd.f32 %v7380, %v7952
      %v7954 = vpop.f32.mrf.mxu0
      %v7955 = vpop.f32.mrf.mxu0
      %v7956 = vadd.f32 %v7380, %v7955
      %v7957 = vpop.f32.mrf.mxu0
      %7958 = vmatprep.mubr.bf16.mxu0 0
      %7959 = vmatmul.mubr.bf16.gmra.mxu0 %v7357
      %v7960 = vpop.f32.mrf.mxu0
      %v7961 = vadd.f32 %v7380, %v7960
      %v7962 = vpop.f32.mrf.mxu0
      %v7963 = vpop.f32.mrf.mxu0
      %v7964 = vadd.f32 %v7380, %v7963
      %v7965 = vpop.f32.mrf.mxu0
      %7966 = vmatprep.mubr.bf16.mxu0 0
      %7967 = vmatmul.mubr.bf16.gmra.mxu0 %v7358
      %v7968 = vpop.f32.mrf.mxu0
      %v7969 = vadd.f32 %v7380, %v7968
      %v7970 = vpop.f32.mrf.mxu0
      %v7971 = vpop.f32.mrf.mxu0
      %v7972 = vadd.f32 %v7380, %v7971
      %v7973 = vpop.f32.mrf.mxu0
      %7974 = vdwg.mxu0
      %v7975 = vmul.f32 %v7465, 0.5
      %v7976 = vmul.f32 %v7468, 0.5
      %v7977 = vmul.f32 %v7473, 0.5
      %v7978 = vmul.f32 %v7476, 0.5
      %v7979 = vmul.f32 %v7481, 0.5
      %v7980 = vmul.f32 %v7484, 0.5
      %v7981 = vmul.f32 %v7489, 0.5
      %v7982 = vmul.f32 %v7492, 0.5
      %v7983 = vmul.f32 %v7497, 0.5
      %v7984 = vmul.f32 %v7500, 0.5
      %v7985 = vmul.f32 %v7505, 0.5
      %v7986 = vmul.f32 %v7508, 0.5
      %v7987 = vmul.f32 %v7513, 0.5
      %v7988 = vmul.f32 %v7516, 0.5
      %v7989 = vmul.f32 %v7521, 0.5
      %v7990 = vmul.f32 %v7524, 0.5
      %v7991 = vmul.f32 %v7529, 0.5
      %v7992 = vmul.f32 %v7532, 0.5
      %v7993 = vmul.f32 %v7537, 0.5
      %v7994 = vmul.f32 %v7540, 0.5
      %v7995 = vmul.f32 %v7545, 0.5
      %v7996 = vmul.f32 %v7548, 0.5
      %v7997 = vmul.f32 %v7553, 0.5
      %v7998 = vmul.f32 %v7556, 0.5
      %v7999 = vmul.f32 %v7561, 0.5
      %v8000 = vmul.f32 %v7564, 0.5
      %v8001 = vmul.f32 %v7569, 0.5
      %v8002 = vmul.f32 %v7572, 0.5
      %v8003 = vmul.f32 %v7577, 0.5
      %v8004 = vmul.f32 %v7580, 0.5
      %v8005 = vmul.f32 %v7585, 0.5
      %v8006 = vmul.f32 %v7588, 0.5
      %v8007 = vmul.f32 %v7593, 0.5
      %v8008 = vmul.f32 %v7596, 0.5
      %v8009 = vmul.f32 %v7601, 0.5
      %v8010 = vmul.f32 %v7604, 0.5
      %v8011 = vmul.f32 %v7609, 0.5
      %v8012 = vmul.f32 %v7612, 0.5
      %v8013 = vmul.f32 %v7617, 0.5
      %v8014 = vmul.f32 %v7620, 0.5
      %v8015 = vmul.f32 %v7625, 0.5
      %v8016 = vmul.f32 %v7628, 0.5
      %v8017 = vmul.f32 %v7633, 0.5
      %v8018 = vmul.f32 %v7636, 0.5
      %v8019 = vmul.f32 %v7641, 0.5
      %v8020 = vmul.f32 %v7644, 0.5
      %v8021 = vmul.f32 %v7649, 0.5
      %v8022 = vmul.f32 %v7652, 0.5
      %v8023 = vmul.f32 %v7657, 0.5
      %v8024 = vmul.f32 %v7660, 0.5
      %v8025 = vmul.f32 %v7665, 0.5
      %v8026 = vmul.f32 %v7668, 0.5
      %v8027 = vmul.f32 %v7673, 0.5
      %v8028 = vmul.f32 %v7676, 0.5
      %v8029 = vmul.f32 %v7681, 0.5
      %v8030 = vmul.f32 %v7684, 0.5
      %v8031 = vmul.f32 %v7689, 0.5
      %v8032 = vmul.f32 %v7692, 0.5
      %v8033 = vmul.f32 %v7697, 0.5
      %v8034 = vmul.f32 %v7700, 0.5
      %v8035 = vmul.f32 %v7705, 0.5
      %v8036 = vmul.f32 %v7708, 0.5
      %v8037 = vmul.f32 %v7713, 0.5
      %v8038 = vmul.f32 %v7716, 0.5
      %v8039 = vmul.f32 %v7721, 0.5
      %v8040 = vmul.f32 %v7724, 0.5
      %v8041 = vmul.f32 %v7729, 0.5
      %v8042 = vmul.f32 %v7732, 0.5
      %v8043 = vmul.f32 %v7737, 0.5
      %v8044 = vmul.f32 %v7740, 0.5
      %v8045 = vmul.f32 %v7745, 0.5
      %v8046 = vmul.f32 %v7748, 0.5
      %v8047 = vmul.f32 %v7753, 0.5
      %v8048 = vmul.f32 %v7756, 0.5
      %v8049 = vmul.f32 %v7761, 0.5
      %v8050 = vmul.f32 %v7764, 0.5
      %v8051 = vmul.f32 %v7769, 0.5
      %v8052 = vmul.f32 %v7772, 0.5
      %v8053 = vmul.f32 %v7777, 0.5
      %v8054 = vmul.f32 %v7780, 0.5
      %v8055 = vmul.f32 %v7785, 0.5
      %v8056 = vmul.f32 %v7788, 0.5
      %v8057 = vmul.f32 %v7793, 0.5
      %v8058 = vmul.f32 %v7796, 0.5
      %v8059 = vmul.f32 %v7801, 0.5
      %v8060 = vmul.f32 %v7804, 0.5
      %v8061 = vmul.f32 %v7809, 0.5
      %v8062 = vmul.f32 %v7812, 0.5
      %v8063 = vmul.f32 %v7817, 0.5
      %v8064 = vmul.f32 %v7820, 0.5
      %v8065 = vmul.f32 %v7825, 0.5
      %v8066 = vmul.f32 %v7828, 0.5
      %v8067 = vmul.f32 %v7833, 0.5
      %v8068 = vmul.f32 %v7836, 0.5
      %v8069 = vmul.f32 %v7841, 0.5
      %v8070 = vmul.f32 %v7844, 0.5
      %v8071 = vmul.f32 %v7849, 0.5
      %v8072 = vmul.f32 %v7852, 0.5
      %v8073 = vmul.f32 %v7857, 0.5
      %v8074 = vmul.f32 %v7860, 0.5
      %v8075 = vmul.f32 %v7865, 0.5
      %v8076 = vmul.f32 %v7868, 0.5
      %v8077 = vmul.f32 %v7873, 0.5
      %v8078 = vmul.f32 %v7876, 0.5
      %v8079 = vmul.f32 %v7881, 0.5
      %v8080 = vmul.f32 %v7884, 0.5
      %v8081 = vmul.f32 %v7889, 0.5
      %v8082 = vmul.f32 %v7892, 0.5
      %v8083 = vmul.f32 %v7897, 0.5
      %v8084 = vmul.f32 %v7900, 0.5
      %v8085 = vmul.f32 %v7905, 0.5
      %v8086 = vmul.f32 %v7908, 0.5
      %v8087 = vmul.f32 %v7913, 0.5
      %v8088 = vmul.f32 %v7916, 0.5
      %v8089 = vmul.f32 %v7921, 0.5
      %v8090 = vmul.f32 %v7924, 0.5
      %v8091 = vmul.f32 %v7929, 0.5
      %v8092 = vmul.f32 %v7932, 0.5
      %v8093 = vmul.f32 %v7937, 0.5
      %v8094 = vmul.f32 %v7940, 0.5
      %v8095 = vmul.f32 %v7945, 0.5
      %v8096 = vmul.f32 %v7948, 0.5
      %v8097 = vmul.f32 %v7953, 0.5
      %v8098 = vmul.f32 %v7956, 0.5
      %v8099 = vmul.f32 %v7961, 0.5
      %v8100 = vmul.f32 %v7964, 0.5
      %v8101 = vmul.f32 %v7969, 0.5
      %v8102 = vmul.f32 %v7972, 0.5
      %v8103 = vmul.f32 %v7465, 0.044715
      %v8104 = vmul.f32 %v7468, 0.044715
      %v8105 = vmul.f32 %v7473, 0.044715
      %v8106 = vmul.f32 %v7476, 0.044715
      %v8107 = vmul.f32 %v7481, 0.044715
      %v8108 = vmul.f32 %v7484, 0.044715
      %v8109 = vmul.f32 %v7489, 0.044715
      %v8110 = vmul.f32 %v7492, 0.044715
      %v8111 = vmul.f32 %v7497, 0.044715
      %v8112 = vmul.f32 %v7500, 0.044715
      %v8113 = vmul.f32 %v7505, 0.044715
      %v8114 = vmul.f32 %v7508, 0.044715
      %v8115 = vmul.f32 %v7513, 0.044715
      %v8116 = vmul.f32 %v7516, 0.044715
      %v8117 = vmul.f32 %v7521, 0.044715
      %v8118 = vmul.f32 %v7524, 0.044715
      %v8119 = vmul.f32 %v7529, 0.044715
      %v8120 = vmul.f32 %v7532, 0.044715
      %v8121 = vmul.f32 %v7537, 0.044715
      %v8122 = vmul.f32 %v7540, 0.044715
      %v8123 = vmul.f32 %v7545, 0.044715
      %v8124 = vmul.f32 %v7548, 0.044715
      %v8125 = vmul.f32 %v7553, 0.044715
      %v8126 = vmul.f32 %v7556, 0.044715
      %v8127 = vmul.f32 %v7561, 0.044715
      %v8128 = vmul.f32 %v7564, 0.044715
      %v8129 = vmul.f32 %v7569, 0.044715
      %v8130 = vmul.f32 %v7572, 0.044715
      %v8131 = vmul.f32 %v7577, 0.044715
      %v8132 = vmul.f32 %v7580, 0.044715
      %v8133 = vmul.f32 %v7585, 0.044715
      %v8134 = vmul.f32 %v7588, 0.044715
      %v8135 = vmul.f32 %v7593, 0.044715
      %v8136 = vmul.f32 %v7596, 0.044715
      %v8137 = vmul.f32 %v7601, 0.044715
      %v8138 = vmul.f32 %v7604, 0.044715
      %v8139 = vmul.f32 %v7609, 0.044715
      %v8140 = vmul.f32 %v7612, 0.044715
      %v8141 = vmul.f32 %v7617, 0.044715
      %v8142 = vmul.f32 %v7620, 0.044715
      %v8143 = vmul.f32 %v7625, 0.044715
      %v8144 = vmul.f32 %v7628, 0.044715
      %v8145 = vmul.f32 %v7633, 0.044715
      %v8146 = vmul.f32 %v7636, 0.044715
      %v8147 = vmul.f32 %v7641, 0.044715
      %v8148 = vmul.f32 %v7644, 0.044715
      %v8149 = vmul.f32 %v7649, 0.044715
      %v8150 = vmul.f32 %v7652, 0.044715
      %v8151 = vmul.f32 %v7657, 0.044715
      %v8152 = vmul.f32 %v7660, 0.044715
      %v8153 = vmul.f32 %v7665, 0.044715
      %v8154 = vmul.f32 %v7668, 0.044715
      %v8155 = vmul.f32 %v7673, 0.044715
      %v8156 = vmul.f32 %v7676, 0.044715
      %v8157 = vmul.f32 %v7681, 0.044715
      %v8158 = vmul.f32 %v7684, 0.044715
      %v8159 = vmul.f32 %v7689, 0.044715
      %v8160 = vmul.f32 %v7692, 0.044715
      %v8161 = vmul.f32 %v7697, 0.044715
      %v8162 = vmul.f32 %v7700, 0.044715
      %v8163 = vmul.f32 %v7705, 0.044715
      %v8164 = vmul.f32 %v7708, 0.044715
      %v8165 = vmul.f32 %v7713, 0.044715
      %v8166 = vmul.f32 %v7716, 0.044715
      %v8167 = vmul.f32 %v7721, 0.044715
      %v8168 = vmul.f32 %v7724, 0.044715
      %v8169 = vmul.f32 %v7729, 0.044715
      %v8170 = vmul.f32 %v7732, 0.044715
      %v8171 = vmul.f32 %v7737, 0.044715
      %v8172 = vmul.f32 %v7740, 0.044715
      %v8173 = vmul.f32 %v7745, 0.044715
      %v8174 = vmul.f32 %v7748, 0.044715
      %v8175 = vmul.f32 %v7753, 0.044715
      %v8176 = vmul.f32 %v7756, 0.044715
      %v8177 = vmul.f32 %v7761, 0.044715
      %v8178 = vmul.f32 %v7764, 0.044715
      %v8179 = vmul.f32 %v7769, 0.044715
      %v8180 = vmul.f32 %v7772, 0.044715
      %v8181 = vmul.f32 %v7777, 0.044715
      %v8182 = vmul.f32 %v7780, 0.044715
      %v8183 = vmul.f32 %v7785, 0.044715
      %v8184 = vmul.f32 %v7788, 0.044715
      %v8185 = vmul.f32 %v7793, 0.044715
      %v8186 = vmul.f32 %v7796, 0.044715
      %v8187 = vmul.f32 %v7801, 0.044715
      %v8188 = vmul.f32 %v7804, 0.044715
      %v8189 = vmul.f32 %v7809, 0.044715
      %v8190 = vmul.f32 %v7812, 0.044715
      %v8191 = vmul.f32 %v7817, 0.044715
      %v8192 = vmul.f32 %v7820, 0.044715
      %v8193 = vmul.f32 %v7825, 0.044715
      %v8194 = vmul.f32 %v7828, 0.044715
      %v8195 = vmul.f32 %v7833, 0.044715
      %v8196 = vmul.f32 %v7836, 0.044715
      %v8197 = vmul.f32 %v7841, 0.044715
      %v8198 = vmul.f32 %v7844, 0.044715
      %v8199 = vmul.f32 %v7849, 0.044715
      %v8200 = vmul.f32 %v7852, 0.044715
      %v8201 = vmul.f32 %v7857, 0.044715
      %v8202 = vmul.f32 %v7860, 0.044715
      %v8203 = vmul.f32 %v7865, 0.044715
      %v8204 = vmul.f32 %v7868, 0.044715
      %v8205 = vmul.f32 %v7873, 0.044715
      %v8206 = vmul.f32 %v7876, 0.044715
      %v8207 = vmul.f32 %v7881, 0.044715
      %v8208 = vmul.f32 %v7884, 0.044715
      %v8209 = vmul.f32 %v7889, 0.044715
      %v8210 = vmul.f32 %v7892, 0.044715
      %v8211 = vmul.f32 %v7897, 0.044715
      %v8212 = vmul.f32 %v7900, 0.044715
      %v8213 = vmul.f32 %v7905, 0.044715
      %v8214 = vmul.f32 %v7908, 0.044715
      %v8215 = vmul.f32 %v7913, 0.044715
      %v8216 = vmul.f32 %v7916, 0.044715
      %v8217 = vmul.f32 %v7921, 0.044715
      %v8218 = vmul.f32 %v7924, 0.044715
      %v8219 = vmul.f32 %v7929, 0.044715
      %v8220 = vmul.f32 %v7932, 0.044715
      %v8221 = vmul.f32 %v7937, 0.044715
      %v8222 = vmul.f32 %v7940, 0.044715
      %v8223 = vmul.f32 %v7945, 0.044715
      %v8224 = vmul.f32 %v7948, 0.044715
      %v8225 = vmul.f32 %v7953, 0.044715
      %v8226 = vmul.f32 %v7956, 0.044715
      %v8227 = vmul.f32 %v7961, 0.044715
      %v8228 = vmul.f32 %v7964, 0.044715
      %v8229 = vmul.f32 %v7969, 0.044715
      %v8230 = vmul.f32 %v7972, 0.044715
      %v8231 = vmul.f32 %v8103, %v7465
      %v8232 = vmul.f32 %v8104, %v7468
      %v8233 = vmul.f32 %v8105, %v7473
      %v8234 = vmul.f32 %v8106, %v7476
      %v8235 = vmul.f32 %v8107, %v7481
      %v8236 = vmul.f32 %v8108, %v7484
      %v8237 = vmul.f32 %v8109, %v7489
      %v8238 = vmul.f32 %v8110, %v7492
      %v8239 = vmul.f32 %v8111, %v7497
      %v8240 = vmul.f32 %v8112, %v7500
      %v8241 = vmul.f32 %v8113, %v7505
      %v8242 = vmul.f32 %v8114, %v7508
      %v8243 = vmul.f32 %v8115, %v7513
      %v8244 = vmul.f32 %v8116, %v7516
      %v8245 = vmul.f32 %v8117, %v7521
      %v8246 = vmul.f32 %v8118, %v7524
      %v8247 = vmul.f32 %v8119, %v7529
      %v8248 = vmul.f32 %v8120, %v7532
      %v8249 = vmul.f32 %v8121, %v7537
      %v8250 = vmul.f32 %v8122, %v7540
      %v8251 = vmul.f32 %v8123, %v7545
      %v8252 = vmul.f32 %v8124, %v7548
      %v8253 = vmul.f32 %v8125, %v7553
      %v8254 = vmul.f32 %v8126, %v7556
      %v8255 = vmul.f32 %v8127, %v7561
      %v8256 = vmul.f32 %v8128, %v7564
      %v8257 = vmul.f32 %v8129, %v7569
      %v8258 = vmul.f32 %v8130, %v7572
      %v8259 = vmul.f32 %v8131, %v7577
      %v8260 = vmul.f32 %v8132, %v7580
      %v8261 = vmul.f32 %v8133, %v7585
      %v8262 = vmul.f32 %v8134, %v7588
      %v8263 = vmul.f32 %v8135, %v7593
      %v8264 = vmul.f32 %v8136, %v7596
      %v8265 = vmul.f32 %v8137, %v7601
      %v8266 = vmul.f32 %v8138, %v7604
      %v8267 = vmul.f32 %v8139, %v7609
      %v8268 = vmul.f32 %v8140, %v7612
      %v8269 = vmul.f32 %v8141, %v7617
      %v8270 = vmul.f32 %v8142, %v7620
      %v8271 = vmul.f32 %v8143, %v7625
      %v8272 = vmul.f32 %v8144, %v7628
      %v8273 = vmul.f32 %v8145, %v7633
      %v8274 = vmul.f32 %v8146, %v7636
      %v8275 = vmul.f32 %v8147, %v7641
      %v8276 = vmul.f32 %v8148, %v7644
      %v8277 = vmul.f32 %v8149, %v7649
      %v8278 = vmul.f32 %v8150, %v7652
      %v8279 = vmul.f32 %v8151, %v7657
      %v8280 = vmul.f32 %v8152, %v7660
      %v8281 = vmul.f32 %v8153, %v7665
      %v8282 = vmul.f32 %v8154, %v7668
      %v8283 = vmul.f32 %v8155, %v7673
      %v8284 = vmul.f32 %v8156, %v7676
      %v8285 = vmul.f32 %v8157, %v7681
      %v8286 = vmul.f32 %v8158, %v7684
      %v8287 = vmul.f32 %v8159, %v7689
      %v8288 = vmul.f32 %v8160, %v7692
      %v8289 = vmul.f32 %v8161, %v7697
      %v8290 = vmul.f32 %v8162, %v7700
      %v8291 = vmul.f32 %v8163, %v7705
      %v8292 = vmul.f32 %v8164, %v7708
      %v8293 = vmul.f32 %v8165, %v7713
      %v8294 = vmul.f32 %v8166, %v7716
      %v8295 = vmul.f32 %v8167, %v7721
      %v8296 = vmul.f32 %v8168, %v7724
      %v8297 = vmul.f32 %v8169, %v7729
      %v8298 = vmul.f32 %v8170, %v7732
      %v8299 = vmul.f32 %v8171, %v7737
      %v8300 = vmul.f32 %v8172, %v7740
      %v8301 = vmul.f32 %v8173, %v7745
      %v8302 = vmul.f32 %v8174, %v7748
      %v8303 = vmul.f32 %v8175, %v7753
      %v8304 = vmul.f32 %v8176, %v7756
      %v8305 = vmul.f32 %v8177, %v7761
      %v8306 = vmul.f32 %v8178, %v7764
      %v8307 = vmul.f32 %v8179, %v7769
      %v8308 = vmul.f32 %v8180, %v7772
      %v8309 = vmul.f32 %v8181, %v7777
      %v8310 = vmul.f32 %v8182, %v7780
      %v8311 = vmul.f32 %v8183, %v7785
      %v8312 = vmul.f32 %v8184, %v7788
      %v8313 = vmul.f32 %v8185, %v7793
      %v8314 = vmul.f32 %v8186, %v7796
      %v8315 = vmul.f32 %v8187, %v7801
      %v8316 = vmul.f32 %v8188, %v7804
      %v8317 = vmul.f32 %v8189, %v7809
      %v8318 = vmul.f32 %v8190, %v7812
      %v8319 = vmul.f32 %v8191, %v7817
      %v8320 = vmul.f32 %v8192, %v7820
      %v8321 = vmul.f32 %v8193, %v7825
      %v8322 = vmul.f32 %v8194, %v7828
      %v8323 = vmul.f32 %v8195, %v7833
      %v8324 = vmul.f32 %v8196, %v7836
      %v8325 = vmul.f32 %v8197, %v7841
      %v8326 = vmul.f32 %v8198, %v7844
      %v8327 = vmul.f32 %v8199, %v7849
      %v8328 = vmul.f32 %v8200, %v7852
      %v8329 = vmul.f32 %v8201, %v7857
      %v8330 = vmul.f32 %v8202, %v7860
      %v8331 = vmul.f32 %v8203, %v7865
      %v8332 = vmul.f32 %v8204, %v7868
      %v8333 = vmul.f32 %v8205, %v7873
      %v8334 = vmul.f32 %v8206, %v7876
      %v8335 = vmul.f32 %v8207, %v7881
      %v8336 = vmul.f32 %v8208, %v7884
      %v8337 = vmul.f32 %v8209, %v7889
      %v8338 = vmul.f32 %v8210, %v7892
      %v8339 = vmul.f32 %v8211, %v7897
      %v8340 = vmul.f32 %v8212, %v7900
      %v8341 = vmul.f32 %v8213, %v7905
      %v8342 = vmul.f32 %v8214, %v7908
      %v8343 = vmul.f32 %v8215, %v7913
      %v8344 = vmul.f32 %v8216, %v7916
      %v8345 = vmul.f32 %v8217, %v7921
      %v8346 = vmul.f32 %v8218, %v7924
      %v8347 = vmul.f32 %v8219, %v7929
      %v8348 = vmul.f32 %v8220, %v7932
      %v8349 = vmul.f32 %v8221, %v7937
      %v8350 = vmul.f32 %v8222, %v7940
      %v8351 = vmul.f32 %v8223, %v7945
      %v8352 = vmul.f32 %v8224, %v7948
      %v8353 = vmul.f32 %v8225, %v7953
      %v8354 = vmul.f32 %v8226, %v7956
      %v8355 = vmul.f32 %v8227, %v7961
      %v8356 = vmul.f32 %v8228, %v7964
      %v8357 = vmul.f32 %v8229, %v7969
      %v8358 = vmul.f32 %v8230, %v7972
      %v8359 = vmul.f32 %v8231, %v7465
      %v8360 = vmul.f32 %v8232, %v7468
      %v8361 = vmul.f32 %v8233, %v7473
      %v8362 = vmul.f32 %v8234, %v7476
      %v8363 = vmul.f32 %v8235, %v7481
      %v8364 = vmul.f32 %v8236, %v7484
      %v8365 = vmul.f32 %v8237, %v7489
      %v8366 = vmul.f32 %v8238, %v7492
      %v8367 = vmul.f32 %v8239, %v7497
      %v8368 = vmul.f32 %v8240, %v7500
      %v8369 = vmul.f32 %v8241, %v7505
      %v8370 = vmul.f32 %v8242, %v7508
      %v8371 = vmul.f32 %v8243, %v7513
      %v8372 = vmul.f32 %v8244, %v7516
      %v8373 = vmul.f32 %v8245, %v7521
      %v8374 = vmul.f32 %v8246, %v7524
      %v8375 = vmul.f32 %v8247, %v7529
      %v8376 = vmul.f32 %v8248, %v7532
      %v8377 = vmul.f32 %v8249, %v7537
      %v8378 = vmul.f32 %v8250, %v7540
      %v8379 = vmul.f32 %v8251, %v7545
      %v8380 = vmul.f32 %v8252, %v7548
      %v8381 = vmul.f32 %v8253, %v7553
      %v8382 = vmul.f32 %v8254, %v7556
      %v8383 = vmul.f32 %v8255, %v7561
      %v8384 = vmul.f32 %v8256, %v7564
      %v8385 = vmul.f32 %v8257, %v7569
      %v8386 = vmul.f32 %v8258, %v7572
      %v8387 = vmul.f32 %v8259, %v7577
      %v8388 = vmul.f32 %v8260, %v7580
      %v8389 = vmul.f32 %v8261, %v7585
      %v8390 = vmul.f32 %v8262, %v7588
      %v8391 = vmul.f32 %v8263, %v7593
      %v8392 = vmul.f32 %v8264, %v7596
      %v8393 = vmul.f32 %v8265, %v7601
      %v8394 = vmul.f32 %v8266, %v7604
      %v8395 = vmul.f32 %v8267, %v7609
      %v8396 = vmul.f32 %v8268, %v7612
      %v8397 = vmul.f32 %v8269, %v7617
      %v8398 = vmul.f32 %v8270, %v7620
      %v8399 = vmul.f32 %v8271, %v7625
      %v8400 = vmul.f32 %v8272, %v7628
      %v8401 = vmul.f32 %v8273, %v7633
      %v8402 = vmul.f32 %v8274, %v7636
      %v8403 = vmul.f32 %v8275, %v7641
      %v8404 = vmul.f32 %v8276, %v7644
      %v8405 = vmul.f32 %v8277, %v7649
      %v8406 = vmul.f32 %v8278, %v7652
      %v8407 = vmul.f32 %v8279, %v7657
      %v8408 = vmul.f32 %v8280, %v7660
      %v8409 = vmul.f32 %v8281, %v7665
      %v8410 = vmul.f32 %v8282, %v7668
      %v8411 = vmul.f32 %v8283, %v7673
      %v8412 = vmul.f32 %v8284, %v7676
      %v8413 = vmul.f32 %v8285, %v7681
      %v8414 = vmul.f32 %v8286, %v7684
      %v8415 = vmul.f32 %v8287, %v7689
      %v8416 = vmul.f32 %v8288, %v7692
      %v8417 = vmul.f32 %v8289, %v7697
      %v8418 = vmul.f32 %v8290, %v7700
      %v8419 = vmul.f32 %v8291, %v7705
      %v8420 = vmul.f32 %v8292, %v7708
      %v8421 = vmul.f32 %v8293, %v7713
      %v8422 = vmul.f32 %v8294, %v7716
      %v8423 = vmul.f32 %v8295, %v7721
      %v8424 = vmul.f32 %v8296, %v7724
      %v8425 = vmul.f32 %v8297, %v7729
      %v8426 = vmul.f32 %v8298, %v7732
      %v8427 = vmul.f32 %v8299, %v7737
      %v8428 = vmul.f32 %v8300, %v7740
      %v8429 = vmul.f32 %v8301, %v7745
      %v8430 = vmul.f32 %v8302, %v7748
      %v8431 = vmul.f32 %v8303, %v7753
      %v8432 = vmul.f32 %v8304, %v7756
      %v8433 = vmul.f32 %v8305, %v7761
      %v8434 = vmul.f32 %v8306, %v7764
      %v8435 = vmul.f32 %v8307, %v7769
      %v8436 = vmul.f32 %v8308, %v7772
      %v8437 = vmul.f32 %v8309, %v7777
      %v8438 = vmul.f32 %v8310, %v7780
      %v8439 = vmul.f32 %v8311, %v7785
      %v8440 = vmul.f32 %v8312, %v7788
      %v8441 = vmul.f32 %v8313, %v7793
      %v8442 = vmul.f32 %v8314, %v7796
      %v8443 = vmul.f32 %v8315, %v7801
      %v8444 = vmul.f32 %v8316, %v7804
      %v8445 = vmul.f32 %v8317, %v7809
      %v8446 = vmul.f32 %v8318, %v7812
      %v8447 = vmul.f32 %v8319, %v7817
      %v8448 = vmul.f32 %v8320, %v7820
      %v8449 = vmul.f32 %v8321, %v7825
      %v8450 = vmul.f32 %v8322, %v7828
      %v8451 = vmul.f32 %v8323, %v7833
      %v8452 = vmul.f32 %v8324, %v7836
      %v8453 = vmul.f32 %v8325, %v7841
      %v8454 = vmul.f32 %v8326, %v7844
      %v8455 = vmul.f32 %v8327, %v7849
      %v8456 = vmul.f32 %v8328, %v7852
      %v8457 = vmul.f32 %v8329, %v7857
      %v8458 = vmul.f32 %v8330, %v7860
      %v8459 = vmul.f32 %v8331, %v7865
      %v8460 = vmul.f32 %v8332, %v7868
      %v8461 = vmul.f32 %v8333, %v7873
      %v8462 = vmul.f32 %v8334, %v7876
      %v8463 = vmul.f32 %v8335, %v7881
      %v8464 = vmul.f32 %v8336, %v7884
      %v8465 = vmul.f32 %v8337, %v7889
      %v8466 = vmul.f32 %v8338, %v7892
      %v8467 = vmul.f32 %v8339, %v7897
      %v8468 = vmul.f32 %v8340, %v7900
      %v8469 = vmul.f32 %v8341, %v7905
      %v8470 = vmul.f32 %v8342, %v7908
      %v8471 = vmul.f32 %v8343, %v7913
      %v8472 = vmul.f32 %v8344, %v7916
      %v8473 = vmul.f32 %v8345, %v7921
      %v8474 = vmul.f32 %v8346, %v7924
      %v8475 = vmul.f32 %v8347, %v7929
      %v8476 = vmul.f32 %v8348, %v7932
      %v8477 = vmul.f32 %v8349, %v7937
      %v8478 = vmul.f32 %v8350, %v7940
      %v8479 = vmul.f32 %v8351, %v7945
      %v8480 = vmul.f32 %v8352, %v7948
      %v8481 = vmul.f32 %v8353, %v7953
      %v8482 = vmul.f32 %v8354, %v7956
      %v8483 = vmul.f32 %v8355, %v7961
      %v8484 = vmul.f32 %v8356, %v7964
      %v8485 = vmul.f32 %v8357, %v7969
      %v8486 = vmul.f32 %v8358, %v7972
      %v8487 = vadd.f32 %v7465, %v8359
      %v8488 = vadd.f32 %v7468, %v8360
      %v8489 = vadd.f32 %v7473, %v8361
      %v8490 = vadd.f32 %v7476, %v8362
      %v8491 = vadd.f32 %v7481, %v8363
      %v8492 = vadd.f32 %v7484, %v8364
      %v8493 = vadd.f32 %v7489, %v8365
      %v8494 = vadd.f32 %v7492, %v8366
      %v8495 = vadd.f32 %v7497, %v8367
      %v8496 = vadd.f32 %v7500, %v8368
      %v8497 = vadd.f32 %v7505, %v8369
      %v8498 = vadd.f32 %v7508, %v8370
      %v8499 = vadd.f32 %v7513, %v8371
      %v8500 = vadd.f32 %v7516, %v8372
      %v8501 = vadd.f32 %v7521, %v8373
      %v8502 = vadd.f32 %v7524, %v8374
      %v8503 = vadd.f32 %v7529, %v8375
      %v8504 = vadd.f32 %v7532, %v8376
      %v8505 = vadd.f32 %v7537, %v8377
      %v8506 = vadd.f32 %v7540, %v8378
      %v8507 = vadd.f32 %v7545, %v8379
      %v8508 = vadd.f32 %v7548, %v8380
      %v8509 = vadd.f32 %v7553, %v8381
      %v8510 = vadd.f32 %v7556, %v8382
      %v8511 = vadd.f32 %v7561, %v8383
      %v8512 = vadd.f32 %v7564, %v8384
      %v8513 = vadd.f32 %v7569, %v8385
      %v8514 = vadd.f32 %v7572, %v8386
      %v8515 = vadd.f32 %v7577, %v8387
      %v8516 = vadd.f32 %v7580, %v8388
      %v8517 = vadd.f32 %v7585, %v8389
      %v8518 = vadd.f32 %v7588, %v8390
      %v8519 = vadd.f32 %v7593, %v8391
      %v8520 = vadd.f32 %v7596, %v8392
      %v8521 = vadd.f32 %v7601, %v8393
      %v8522 = vadd.f32 %v7604, %v8394
      %v8523 = vadd.f32 %v7609, %v8395
      %v8524 = vadd.f32 %v7612, %v8396
      %v8525 = vadd.f32 %v7617, %v8397
      %v8526 = vadd.f32 %v7620, %v8398
      %v8527 = vadd.f32 %v7625, %v8399
      %v8528 = vadd.f32 %v7628, %v8400
      %v8529 = vadd.f32 %v7633, %v8401
      %v8530 = vadd.f32 %v7636, %v8402
      %v8531 = vadd.f32 %v7641, %v8403
      %v8532 = vadd.f32 %v7644, %v8404
      %v8533 = vadd.f32 %v7649, %v8405
      %v8534 = vadd.f32 %v7652, %v8406
      %v8535 = vadd.f32 %v7657, %v8407
      %v8536 = vadd.f32 %v7660, %v8408
      %v8537 = vadd.f32 %v7665, %v8409
      %v8538 = vadd.f32 %v7668, %v8410
      %v8539 = vadd.f32 %v7673, %v8411
      %v8540 = vadd.f32 %v7676, %v8412
      %v8541 = vadd.f32 %v7681, %v8413
      %v8542 = vadd.f32 %v7684, %v8414
      %v8543 = vadd.f32 %v7689, %v8415
      %v8544 = vadd.f32 %v7692, %v8416
      %v8545 = vadd.f32 %v7697, %v8417
      %v8546 = vadd.f32 %v7700, %v8418
      %v8547 = vadd.f32 %v7705, %v8419
      %v8548 = vadd.f32 %v7708, %v8420
      %v8549 = vadd.f32 %v7713, %v8421
      %v8550 = vadd.f32 %v7716, %v8422
      %v8551 = vadd.f32 %v7721, %v8423
      %v8552 = vadd.f32 %v7724, %v8424
      %v8553 = vadd.f32 %v7729, %v8425
      %v8554 = vadd.f32 %v7732, %v8426
      %v8555 = vadd.f32 %v7737, %v8427
      %v8556 = vadd.f32 %v7740, %v8428
      %v8557 = vadd.f32 %v7745, %v8429
      %v8558 = vadd.f32 %v7748, %v8430
      %v8559 = vadd.f32 %v7753, %v8431
      %v8560 = vadd.f32 %v7756, %v8432
      %v8561 = vadd.f32 %v7761, %v8433
      %v8562 = vadd.f32 %v7764, %v8434
      %v8563 = vadd.f32 %v7769, %v8435
      %v8564 = vadd.f32 %v7772, %v8436
      %v8565 = vadd.f32 %v7777, %v8437
      %v8566 = vadd.f32 %v7780, %v8438
      %v8567 = vadd.f32 %v7785, %v8439
      %v8568 = vadd.f32 %v7788, %v8440
      %v8569 = vadd.f32 %v7793, %v8441
      %v8570 = vadd.f32 %v7796, %v8442
      %v8571 = vadd.f32 %v7801, %v8443
      %v8572 = vadd.f32 %v7804, %v8444
      %v8573 = vadd.f32 %v7809, %v8445
      %v8574 = vadd.f32 %v7812, %v8446
      %v8575 = vadd.f32 %v7817, %v8447
      %v8576 = vadd.f32 %v7820, %v8448
      %v8577 = vadd.f32 %v7825, %v8449
      %v8578 = vadd.f32 %v7828, %v8450
      %v8579 = vadd.f32 %v7833, %v8451
      %v8580 = vadd.f32 %v7836, %v8452
      %v8581 = vadd.f32 %v7841, %v8453
      %v8582 = vadd.f32 %v7844, %v8454
      %v8583 = vadd.f32 %v7849, %v8455
      %v8584 = vadd.f32 %v7852, %v8456
      %v8585 = vadd.f32 %v7857, %v8457
      %v8586 = vadd.f32 %v7860, %v8458
      %v8587 = vadd.f32 %v7865, %v8459
      %v8588 = vadd.f32 %v7868, %v8460
      %v8589 = vadd.f32 %v7873, %v8461
      %v8590 = vadd.f32 %v7876, %v8462
      %v8591 = vadd.f32 %v7881, %v8463
      %v8592 = vadd.f32 %v7884, %v8464
      %v8593 = vadd.f32 %v7889, %v8465
      %v8594 = vadd.f32 %v7892, %v8466
      %v8595 = vadd.f32 %v7897, %v8467
      %v8596 = vadd.f32 %v7900, %v8468
      %v8597 = vadd.f32 %v7905, %v8469
      %v8598 = vadd.f32 %v7908, %v8470
      %v8599 = vadd.f32 %v7913, %v8471
      %v8600 = vadd.f32 %v7916, %v8472
      %v8601 = vadd.f32 %v7921, %v8473
      %v8602 = vadd.f32 %v7924, %v8474
      %v8603 = vadd.f32 %v7929, %v8475
      %v8604 = vadd.f32 %v7932, %v8476
      %v8605 = vadd.f32 %v7937, %v8477
      %v8606 = vadd.f32 %v7940, %v8478
      %v8607 = vadd.f32 %v7945, %v8479
      %v8608 = vadd.f32 %v7948, %v8480
      %v8609 = vadd.f32 %v7953, %v8481
      %v8610 = vadd.f32 %v7956, %v8482
      %v8611 = vadd.f32 %v7961, %v8483
      %v8612 = vadd.f32 %v7964, %v8484
      %v8613 = vadd.f32 %v7969, %v8485
      %v8614 = vadd.f32 %v7972, %v8486
      %v8615 = vmul.f32 %v8487, 0.7978846
      %v8616 = vmul.f32 %v8488, 0.7978846
      %v8617 = vmul.f32 %v8489, 0.7978846
      %v8618 = vmul.f32 %v8490, 0.7978846
      %v8619 = vmul.f32 %v8491, 0.7978846
      %v8620 = vmul.f32 %v8492, 0.7978846
      %v8621 = vmul.f32 %v8493, 0.7978846
      %v8622 = vmul.f32 %v8494, 0.7978846
      %v8623 = vmul.f32 %v8495, 0.7978846
      %v8624 = vmul.f32 %v8496, 0.7978846
      %v8625 = vmul.f32 %v8497, 0.7978846
      %v8626 = vmul.f32 %v8498, 0.7978846
      %v8627 = vmul.f32 %v8499, 0.7978846
      %v8628 = vmul.f32 %v8500, 0.7978846
      %v8629 = vmul.f32 %v8501, 0.7978846
      %v8630 = vmul.f32 %v8502, 0.7978846
      %v8631 = vmul.f32 %v8503, 0.7978846
      %v8632 = vmul.f32 %v8504, 0.7978846
      %v8633 = vmul.f32 %v8505, 0.7978846
      %v8634 = vmul.f32 %v8506, 0.7978846
      %v8635 = vmul.f32 %v8507, 0.7978846
      %v8636 = vmul.f32 %v8508, 0.7978846
      %v8637 = vmul.f32 %v8509, 0.7978846
      %v8638 = vmul.f32 %v8510, 0.7978846
      %v8639 = vmul.f32 %v8511, 0.7978846
      %v8640 = vmul.f32 %v8512, 0.7978846
      %v8641 = vmul.f32 %v8513, 0.7978846
      %v8642 = vmul.f32 %v8514, 0.7978846
      %v8643 = vmul.f32 %v8515, 0.7978846
      %v8644 = vmul.f32 %v8516, 0.7978846
      %v8645 = vmul.f32 %v8517, 0.7978846
      %v8646 = vmul.f32 %v8518, 0.7978846
      %v8647 = vmul.f32 %v8519, 0.7978846
      %v8648 = vmul.f32 %v8520, 0.7978846
      %v8649 = vmul.f32 %v8521, 0.7978846
      %v8650 = vmul.f32 %v8522, 0.7978846
      %v8651 = vmul.f32 %v8523, 0.7978846
      %v8652 = vmul.f32 %v8524, 0.7978846
      %v8653 = vmul.f32 %v8525, 0.7978846
      %v8654 = vmul.f32 %v8526, 0.7978846
      %v8655 = vmul.f32 %v8527, 0.7978846
      %v8656 = vmul.f32 %v8528, 0.7978846
      %v8657 = vmul.f32 %v8529, 0.7978846
      %v8658 = vmul.f32 %v8530, 0.7978846
      %v8659 = vmul.f32 %v8531, 0.7978846
      %v8660 = vmul.f32 %v8532, 0.7978846
      %v8661 = vmul.f32 %v8533, 0.7978846
      %v8662 = vmul.f32 %v8534, 0.7978846
      %v8663 = vmul.f32 %v8535, 0.7978846
      %v8664 = vmul.f32 %v8536, 0.7978846
      %v8665 = vmul.f32 %v8537, 0.7978846
      %v8666 = vmul.f32 %v8538, 0.7978846
      %v8667 = vmul.f32 %v8539, 0.7978846
      %v8668 = vmul.f32 %v8540, 0.7978846
      %v8669 = vmul.f32 %v8541, 0.7978846
      %v8670 = vmul.f32 %v8542, 0.7978846
      %v8671 = vmul.f32 %v8543, 0.7978846
      %v8672 = vmul.f32 %v8544, 0.7978846
      %v8673 = vmul.f32 %v8545, 0.7978846
      %v8674 = vmul.f32 %v8546, 0.7978846
      %v8675 = vmul.f32 %v8547, 0.7978846
      %v8676 = vmul.f32 %v8548, 0.7978846
      %v8677 = vmul.f32 %v8549, 0.7978846
      %v8678 = vmul.f32 %v8550, 0.7978846
      %v8679 = vmul.f32 %v8551, 0.7978846
      %v8680 = vmul.f32 %v8552, 0.7978846
      %v8681 = vmul.f32 %v8553, 0.7978846
      %v8682 = vmul.f32 %v8554, 0.7978846
      %v8683 = vmul.f32 %v8555, 0.7978846
      %v8684 = vmul.f32 %v8556, 0.7978846
      %v8685 = vmul.f32 %v8557, 0.7978846
      %v8686 = vmul.f32 %v8558, 0.7978846
      %v8687 = vmul.f32 %v8559, 0.7978846
      %v8688 = vmul.f32 %v8560, 0.7978846
      %v8689 = vmul.f32 %v8561, 0.7978846
      %v8690 = vmul.f32 %v8562, 0.7978846
      %v8691 = vmul.f32 %v8563, 0.7978846
      %v8692 = vmul.f32 %v8564, 0.7978846
      %v8693 = vmul.f32 %v8565, 0.7978846
      %v8694 = vmul.f32 %v8566, 0.7978846
      %v8695 = vmul.f32 %v8567, 0.7978846
      %v8696 = vmul.f32 %v8568, 0.7978846
      %v8697 = vmul.f32 %v8569, 0.7978846
      %v8698 = vmul.f32 %v8570, 0.7978846
      %v8699 = vmul.f32 %v8571, 0.7978846
      %v8700 = vmul.f32 %v8572, 0.7978846
      %v8701 = vmul.f32 %v8573, 0.7978846
      %v8702 = vmul.f32 %v8574, 0.7978846
      %v8703 = vmul.f32 %v8575, 0.7978846
      %v8704 = vmul.f32 %v8576, 0.7978846
      %v8705 = vmul.f32 %v8577, 0.7978846
      %v8706 = vmul.f32 %v8578, 0.7978846
      %v8707 = vmul.f32 %v8579, 0.7978846
      %v8708 = vmul.f32 %v8580, 0.7978846
      %v8709 = vmul.f32 %v8581, 0.7978846
      %v8710 = vmul.f32 %v8582, 0.7978846
      %v8711 = vmul.f32 %v8583, 0.7978846
      %v8712 = vmul.f32 %v8584, 0.7978846
      %v8713 = vmul.f32 %v8585, 0.7978846
      %v8714 = vmul.f32 %v8586, 0.7978846
      %v8715 = vmul.f32 %v8587, 0.7978846
      %v8716 = vmul.f32 %v8588, 0.7978846
      %v8717 = vmul.f32 %v8589, 0.7978846
      %v8718 = vmul.f32 %v8590, 0.7978846
      %v8719 = vmul.f32 %v8591, 0.7978846
      %v8720 = vmul.f32 %v8592, 0.7978846
      %v8721 = vmul.f32 %v8593, 0.7978846
      %v8722 = vmul.f32 %v8594, 0.7978846
      %v8723 = vmul.f32 %v8595, 0.7978846
      %v8724 = vmul.f32 %v8596, 0.7978846
      %v8725 = vmul.f32 %v8597, 0.7978846
      %v8726 = vmul.f32 %v8598, 0.7978846
      %v8727 = vmul.f32 %v8599, 0.7978846
      %v8728 = vmul.f32 %v8600, 0.7978846
      %v8729 = vmul.f32 %v8601, 0.7978846
      %v8730 = vmul.f32 %v8602, 0.7978846
      %v8731 = vmul.f32 %v8603, 0.7978846
      %v8732 = vmul.f32 %v8604, 0.7978846
      %v8733 = vmul.f32 %v8605, 0.7978846
      %v8734 = vmul.f32 %v8606, 0.7978846
      %v8735 = vmul.f32 %v8607, 0.7978846
      %v8736 = vmul.f32 %v8608, 0.7978846
      %v8737 = vmul.f32 %v8609, 0.7978846
      %v8738 = vmul.f32 %v8610, 0.7978846
      %v8739 = vmul.f32 %v8611, 0.7978846
      %v8740 = vmul.f32 %v8612, 0.7978846
      %v8741 = vmul.f32 %v8613, 0.7978846
      %v8742 = vmul.f32 %v8614, 0.7978846
      %v8743 = vtanh.pop %v8615
      %v8744 = vtanh.pop %v8616
      %v8745 = vtanh.pop %v8617
      %v8746 = vtanh.pop %v8618
      %v8747 = vtanh.pop %v8619
      %v8748 = vtanh.pop %v8620
      %v8749 = vtanh.pop %v8621
      %v8750 = vtanh.pop %v8622
      %v8751 = vtanh.pop %v8623
      %v8752 = vtanh.pop %v8624
      %v8753 = vtanh.pop %v8625
      %v8754 = vtanh.pop %v8626
      %v8755 = vtanh.pop %v8627
      %v8756 = vtanh.pop %v8628
      %v8757 = vtanh.pop %v8629
      %v8758 = vtanh.pop %v8630
      %v8759 = vtanh.pop %v8631
      %v8760 = vtanh.pop %v8632
      %v8761 = vtanh.pop %v8633
      %v8762 = vtanh.pop %v8634
      %v8763 = vtanh.pop %v8635
      %v8764 = vtanh.pop %v8636
      %v8765 = vtanh.pop %v8637
      %v8766 = vtanh.pop %v8638
      %v8767 = vtanh.pop %v8639
      %v8768 = vtanh.pop %v8640
      %v8769 = vtanh.pop %v8641
      %v8770 = vtanh.pop %v8642
      %v8771 = vtanh.pop %v8643
      %v8772 = vtanh.pop %v8644
      %v8773 = vtanh.pop %v8645
      %v8774 = vtanh.pop %v8646
      %v8775 = vtanh.pop %v8647
      %v8776 = vtanh.pop %v8648
      %v8777 = vtanh.pop %v8649
      %v8778 = vtanh.pop %v8650
      %v8779 = vtanh.pop %v8651
      %v8780 = vtanh.pop %v8652
      %v8781 = vtanh.pop %v8653
      %v8782 = vtanh.pop %v8654
      %v8783 = vtanh.pop %v8655
      %v8784 = vtanh.pop %v8656
      %v8785 = vtanh.pop %v8657
      %v8786 = vtanh.pop %v8658
      %v8787 = vtanh.pop %v8659
      %v8788 = vtanh.pop %v8660
      %v8789 = vtanh.pop %v8661
      %v8790 = vtanh.pop %v8662
      %v8791 = vtanh.pop %v8663
      %v8792 = vtanh.pop %v8664
      %v8793 = vtanh.pop %v8665
      %v8794 = vtanh.pop %v8666
      %v8795 = vtanh.pop %v8667
      %v8796 = vtanh.pop %v8668
      %v8797 = vtanh.pop %v8669
      %v8798 = vtanh.pop %v8670
      %v8799 = vtanh.pop %v8671
      %v8800 = vtanh.pop %v8672
      %v8801 = vtanh.pop %v8673
      %v8802 = vtanh.pop %v8674
      %v8803 = vtanh.pop %v8675
      %v8804 = vtanh.pop %v8676
      %v8805 = vtanh.pop %v8677
      %v8806 = vtanh.pop %v8678
      %v8807 = vtanh.pop %v8679
      %v8808 = vtanh.pop %v8680
      %v8809 = vtanh.pop %v8681
      %v8810 = vtanh.pop %v8682
      %v8811 = vtanh.pop %v8683
      %v8812 = vtanh.pop %v8684
      %v8813 = vtanh.pop %v8685
      %v8814 = vtanh.pop %v8686
      %v8815 = vtanh.pop %v8687
      %v8816 = vtanh.pop %v8688
      %v8817 = vtanh.pop %v8689
      %v8818 = vtanh.pop %v8690
      %v8819 = vtanh.pop %v8691
      %v8820 = vtanh.pop %v8692
      %v8821 = vtanh.pop %v8693
      %v8822 = vtanh.pop %v8694
      %v8823 = vtanh.pop %v8695
      %v8824 = vtanh.pop %v8696
      %v8825 = vtanh.pop %v8697
      %v8826 = vtanh.pop %v8698
      %v8827 = vtanh.pop %v8699
      %v8828 = vtanh.pop %v8700
      %v8829 = vtanh.pop %v8701
      %v8830 = vtanh.pop %v8702
      %v8831 = vtanh.pop %v8703
      %v8832 = vtanh.pop %v8704
      %v8833 = vtanh.pop %v8705
      %v8834 = vtanh.pop %v8706
      %v8835 = vtanh.pop %v8707
      %v8836 = vtanh.pop %v8708
      %v8837 = vtanh.pop %v8709
      %v8838 = vtanh.pop %v8710
      %v8839 = vtanh.pop %v8711
      %v8840 = vtanh.pop %v8712
      %v8841 = vtanh.pop %v8713
      %v8842 = vtanh.pop %v8714
      %v8843 = vtanh.pop %v8715
      %v8844 = vtanh.pop %v8716
      %v8845 = vtanh.pop %v8717
      %v8846 = vtanh.pop %v8718
      %v8847 = vtanh.pop %v8719
      %v8848 = vtanh.pop %v8720
      %v8849 = vtanh.pop %v8721
      %v8850 = vtanh.pop %v8722
      %v8851 = vtanh.pop %v8723
      %v8852 = vtanh.pop %v8724
      %v8853 = vtanh.pop %v8725
      %v8854 = vtanh.pop %v8726
      %v8855 = vtanh.pop %v8727
      %v8856 = vtanh.pop %v8728
      %v8857 = vtanh.pop %v8729
      %v8858 = vtanh.pop %v8730
      %v8859 = vtanh.pop %v8731
      %v8860 = vtanh.pop %v8732
      %v8861 = vtanh.pop %v8733
      %v8862 = vtanh.pop %v8734
      %v8863 = vtanh.pop %v8735
      %v8864 = vtanh.pop %v8736
      %v8865 = vtanh.pop %v8737
      %v8866 = vtanh.pop %v8738
      %v8867 = vtanh.pop %v8739
      %v8868 = vtanh.pop %v8740
      %v8869 = vtanh.pop %v8741
      %v8870 = vtanh.pop %v8742
      %v8871 = vadd.f32 %v8743, 1.0
      %v8872 = vadd.f32 %v8744, 1.0
      %v8873 = vadd.f32 %v8745, 1.0
      %v8874 = vadd.f32 %v8746, 1.0
      %v8875 = vadd.f32 %v8747, 1.0
      %v8876 = vadd.f32 %v8748, 1.0
      %v8877 = vadd.f32 %v8749, 1.0
      %v8878 = vadd.f32 %v8750, 1.0
      %v8879 = vadd.f32 %v8751, 1.0
      %v8880 = vadd.f32 %v8752, 1.0
      %v8881 = vadd.f32 %v8753, 1.0
      %v8882 = vadd.f32 %v8754, 1.0
      %v8883 = vadd.f32 %v8755, 1.0
      %v8884 = vadd.f32 %v8756, 1.0
      %v8885 = vadd.f32 %v8757, 1.0
      %v8886 = vadd.f32 %v8758, 1.0
      %v8887 = vadd.f32 %v8759, 1.0
      %v8888 = vadd.f32 %v8760, 1.0
      %v8889 = vadd.f32 %v8761, 1.0
      %v8890 = vadd.f32 %v8762, 1.0
      %v8891 = vadd.f32 %v8763, 1.0
      %v8892 = vadd.f32 %v8764, 1.0
      %v8893 = vadd.f32 %v8765, 1.0
      %v8894 = vadd.f32 %v8766, 1.0
      %v8895 = vadd.f32 %v8767, 1.0
      %v8896 = vadd.f32 %v8768, 1.0
      %v8897 = vadd.f32 %v8769, 1.0
      %v8898 = vadd.f32 %v8770, 1.0
      %v8899 = vadd.f32 %v8771, 1.0
      %v8900 = vadd.f32 %v8772, 1.0
      %v8901 = vadd.f32 %v8773, 1.0
      %v8902 = vadd.f32 %v8774, 1.0
      %v8903 = vadd.f32 %v8775, 1.0
      %v8904 = vadd.f32 %v8776, 1.0
      %v8905 = vadd.f32 %v8777, 1.0
      %v8906 = vadd.f32 %v8778, 1.0
      %v8907 = vadd.f32 %v8779, 1.0
      %v8908 = vadd.f32 %v8780, 1.0
      %v8909 = vadd.f32 %v8781, 1.0
      %v8910 = vadd.f32 %v8782, 1.0
      %v8911 = vadd.f32 %v8783, 1.0
      %v8912 = vadd.f32 %v8784, 1.0
      %v8913 = vadd.f32 %v8785, 1.0
      %v8914 = vadd.f32 %v8786, 1.0
      %v8915 = vadd.f32 %v8787, 1.0
      %v8916 = vadd.f32 %v8788, 1.0
      %v8917 = vadd.f32 %v8789, 1.0
      %v8918 = vadd.f32 %v8790, 1.0
      %v8919 = vadd.f32 %v8791, 1.0
      %v8920 = vadd.f32 %v8792, 1.0
      %v8921 = vadd.f32 %v8793, 1.0
      %v8922 = vadd.f32 %v8794, 1.0
      %v8923 = vadd.f32 %v8795, 1.0
      %v8924 = vadd.f32 %v8796, 1.0
      %v8925 = vadd.f32 %v8797, 1.0
      %v8926 = vadd.f32 %v8798, 1.0
      %v8927 = vadd.f32 %v8799, 1.0
      %v8928 = vadd.f32 %v8800, 1.0
      %v8929 = vadd.f32 %v8801, 1.0
      %v8930 = vadd.f32 %v8802, 1.0
      %v8931 = vadd.f32 %v8803, 1.0
      %v8932 = vadd.f32 %v8804, 1.0
      %v8933 = vadd.f32 %v8805, 1.0
      %v8934 = vadd.f32 %v8806, 1.0
      %v8935 = vadd.f32 %v8807, 1.0
      %v8936 = vadd.f32 %v8808, 1.0
      %v8937 = vadd.f32 %v8809, 1.0
      %v8938 = vadd.f32 %v8810, 1.0
      %v8939 = vadd.f32 %v8811, 1.0
      %v8940 = vadd.f32 %v8812, 1.0
      %v8941 = vadd.f32 %v8813, 1.0
      %v8942 = vadd.f32 %v8814, 1.0
      %v8943 = vadd.f32 %v8815, 1.0
      %v8944 = vadd.f32 %v8816, 1.0
      %v8945 = vadd.f32 %v8817, 1.0
      %v8946 = vadd.f32 %v8818, 1.0
      %v8947 = vadd.f32 %v8819, 1.0
      %v8948 = vadd.f32 %v8820, 1.0
      %v8949 = vadd.f32 %v8821, 1.0
      %v8950 = vadd.f32 %v8822, 1.0
      %v8951 = vadd.f32 %v8823, 1.0
      %v8952 = vadd.f32 %v8824, 1.0
      %v8953 = vadd.f32 %v8825, 1.0
      %v8954 = vadd.f32 %v8826, 1.0
      %v8955 = vadd.f32 %v8827, 1.0
      %v8956 = vadd.f32 %v8828, 1.0
      %v8957 = vadd.f32 %v8829, 1.0
      %v8958 = vadd.f32 %v8830, 1.0
      %v8959 = vadd.f32 %v8831, 1.0
      %v8960 = vadd.f32 %v8832, 1.0
      %v8961 = vadd.f32 %v8833, 1.0
      %v8962 = vadd.f32 %v8834, 1.0
      %v8963 = vadd.f32 %v8835, 1.0
      %v8964 = vadd.f32 %v8836, 1.0
      %v8965 = vadd.f32 %v8837, 1.0
      %v8966 = vadd.f32 %v8838, 1.0
      %v8967 = vadd.f32 %v8839, 1.0
      %v8968 = vadd.f32 %v8840, 1.0
      %v8969 = vadd.f32 %v8841, 1.0
      %v8970 = vadd.f32 %v8842, 1.0
      %v8971 = vadd.f32 %v8843, 1.0
      %v8972 = vadd.f32 %v8844, 1.0
      %v8973 = vadd.f32 %v8845, 1.0
      %v8974 = vadd.f32 %v8846, 1.0
      %v8975 = vadd.f32 %v8847, 1.0
      %v8976 = vadd.f32 %v8848, 1.0
      %v8977 = vadd.f32 %v8849, 1.0
      %v8978 = vadd.f32 %v8850, 1.0
      %v8979 = vadd.f32 %v8851, 1.0
      %v8980 = vadd.f32 %v8852, 1.0
      %v8981 = vadd.f32 %v8853, 1.0
      %v8982 = vadd.f32 %v8854, 1.0
      %v8983 = vadd.f32 %v8855, 1.0
      %v8984 = vadd.f32 %v8856, 1.0
      %v8985 = vadd.f32 %v8857, 1.0
      %v8986 = vadd.f32 %v8858, 1.0
      %v8987 = vadd.f32 %v8859, 1.0
      %v8988 = vadd.f32 %v8860, 1.0
      %v8989 = vadd.f32 %v8861, 1.0
      %v8990 = vadd.f32 %v8862, 1.0
      %v8991 = vadd.f32 %v8863, 1.0
      %v8992 = vadd.f32 %v8864, 1.0
      %v8993 = vadd.f32 %v8865, 1.0
      %v8994 = vadd.f32 %v8866, 1.0
      %v8995 = vadd.f32 %v8867, 1.0
      %v8996 = vadd.f32 %v8868, 1.0
      %v8997 = vadd.f32 %v8869, 1.0
      %v8998 = vadd.f32 %v8870, 1.0
      %v8999 = vmul.f32 %v7975, %v8871
      %v9000 = vmul.f32 %v7976, %v8872
      %v9001 = vmul.f32 %v7977, %v8873
      %v9002 = vmul.f32 %v7978, %v8874
      %v9003 = vmul.f32 %v7979, %v8875
      %v9004 = vmul.f32 %v7980, %v8876
      %v9005 = vmul.f32 %v7981, %v8877
      %v9006 = vmul.f32 %v7982, %v8878
      %v9007 = vmul.f32 %v7983, %v8879
      %v9008 = vmul.f32 %v7984, %v8880
      %v9009 = vmul.f32 %v7985, %v8881
      %v9010 = vmul.f32 %v7986, %v8882
      %v9011 = vmul.f32 %v7987, %v8883
      %v9012 = vmul.f32 %v7988, %v8884
      %v9013 = vmul.f32 %v7989, %v8885
      %v9014 = vmul.f32 %v7990, %v8886
      %v9015 = vmul.f32 %v7991, %v8887
      %v9016 = vmul.f32 %v7992, %v8888
      %v9017 = vmul.f32 %v7993, %v8889
      %v9018 = vmul.f32 %v7994, %v8890
      %v9019 = vmul.f32 %v7995, %v8891
      %v9020 = vmul.f32 %v7996, %v8892
      %v9021 = vmul.f32 %v7997, %v8893
      %v9022 = vmul.f32 %v7998, %v8894
      %v9023 = vmul.f32 %v7999, %v8895
      %v9024 = vmul.f32 %v8000, %v8896
      %v9025 = vmul.f32 %v8001, %v8897
      %v9026 = vmul.f32 %v8002, %v8898
      %v9027 = vmul.f32 %v8003, %v8899
      %v9028 = vmul.f32 %v8004, %v8900
      %v9029 = vmul.f32 %v8005, %v8901
      %v9030 = vmul.f32 %v8006, %v8902
      %v9031 = vmul.f32 %v8007, %v8903
      %v9032 = vmul.f32 %v8008, %v8904
      %v9033 = vmul.f32 %v8009, %v8905
      %v9034 = vmul.f32 %v8010, %v8906
      %v9035 = vmul.f32 %v8011, %v8907
      %v9036 = vmul.f32 %v8012, %v8908
      %v9037 = vmul.f32 %v8013, %v8909
      %v9038 = vmul.f32 %v8014, %v8910
      %v9039 = vmul.f32 %v8015, %v8911
      %v9040 = vmul.f32 %v8016, %v8912
      %v9041 = vmul.f32 %v8017, %v8913
      %v9042 = vmul.f32 %v8018, %v8914
      %v9043 = vmul.f32 %v8019, %v8915
      %v9044 = vmul.f32 %v8020, %v8916
      %v9045 = vmul.f32 %v8021, %v8917
      %v9046 = vmul.f32 %v8022, %v8918
      %v9047 = vmul.f32 %v8023, %v8919
      %v9048 = vmul.f32 %v8024, %v8920
      %v9049 = vmul.f32 %v8025, %v8921
      %v9050 = vmul.f32 %v8026, %v8922
      %v9051 = vmul.f32 %v8027, %v8923
      %v9052 = vmul.f32 %v8028, %v8924
      %v9053 = vmul.f32 %v8029, %v8925
      %v9054 = vmul.f32 %v8030, %v8926
      %v9055 = vmul.f32 %v8031, %v8927
      %v9056 = vmul.f32 %v8032, %v8928
      %v9057 = vmul.f32 %v8033, %v8929
      %v9058 = vmul.f32 %v8034, %v8930
      %v9059 = vmul.f32 %v8035, %v8931
      %v9060 = vmul.f32 %v8036, %v8932
      %v9061 = vmul.f32 %v8037, %v8933
      %v9062 = vmul.f32 %v8038, %v8934
      %v9063 = vmul.f32 %v8039, %v8935
      %v9064 = vmul.f32 %v8040, %v8936
      %v9065 = vmul.f32 %v8041, %v8937
      %v9066 = vmul.f32 %v8042, %v8938
      %v9067 = vmul.f32 %v8043, %v8939
      %v9068 = vmul.f32 %v8044, %v8940
      %v9069 = vmul.f32 %v8045, %v8941
      %v9070 = vmul.f32 %v8046, %v8942
      %v9071 = vmul.f32 %v8047, %v8943
      %v9072 = vmul.f32 %v8048, %v8944
      %v9073 = vmul.f32 %v8049, %v8945
      %v9074 = vmul.f32 %v8050, %v8946
      %v9075 = vmul.f32 %v8051, %v8947
      %v9076 = vmul.f32 %v8052, %v8948
      %v9077 = vmul.f32 %v8053, %v8949
      %v9078 = vmul.f32 %v8054, %v8950
      %v9079 = vmul.f32 %v8055, %v8951
      %v9080 = vmul.f32 %v8056, %v8952
      %v9081 = vmul.f32 %v8057, %v8953
      %v9082 = vmul.f32 %v8058, %v8954
      %v9083 = vmul.f32 %v8059, %v8955
      %v9084 = vmul.f32 %v8060, %v8956
      %v9085 = vmul.f32 %v8061, %v8957
      %v9086 = vmul.f32 %v8062, %v8958
      %v9087 = vmul.f32 %v8063, %v8959
      %v9088 = vmul.f32 %v8064, %v8960
      %v9089 = vmul.f32 %v8065, %v8961
      %v9090 = vmul.f32 %v8066, %v8962
      %v9091 = vmul.f32 %v8067, %v8963
      %v9092 = vmul.f32 %v8068, %v8964
      %v9093 = vmul.f32 %v8069, %v8965
      %v9094 = vmul.f32 %v8070, %v8966
      %v9095 = vmul.f32 %v8071, %v8967
      %v9096 = vmul.f32 %v8072, %v8968
      %v9097 = vmul.f32 %v8073, %v8969
      %v9098 = vmul.f32 %v8074, %v8970
      %v9099 = vmul.f32 %v8075, %v8971
      %v9100 = vmul.f32 %v8076, %v8972
      %v9101 = vmul.f32 %v8077, %v8973
      %v9102 = vmul.f32 %v8078, %v8974
      %v9103 = vmul.f32 %v8079, %v8975
      %v9104 = vmul.f32 %v8080, %v8976
      %v9105 = vmul.f32 %v8081, %v8977
      %v9106 = vmul.f32 %v8082, %v8978
      %v9107 = vmul.f32 %v8083, %v8979
      %v9108 = vmul.f32 %v8084, %v8980
      %v9109 = vmul.f32 %v8085, %v8981
      %v9110 = vmul.f32 %v8086, %v8982
      %v9111 = vmul.f32 %v8087, %v8983
      %v9112 = vmul.f32 %v8088, %v8984
      %v9113 = vmul.f32 %v8089, %v8985
      %v9114 = vmul.f32 %v8090, %v8986
      %v9115 = vmul.f32 %v8091, %v8987
      %v9116 = vmul.f32 %v8092, %v8988
      %v9117 = vmul.f32 %v8093, %v8989
      %v9118 = vmul.f32 %v8094, %v8990
      %v9119 = vmul.f32 %v8095, %v8991
      %v9120 = vmul.f32 %v8096, %v8992
      %v9121 = vmul.f32 %v8097, %v8993
      %v9122 = vmul.f32 %v8098, %v8994
      %v9123 = vmul.f32 %v8099, %v8995
      %v9124 = vmul.f32 %v8100, %v8996
      %v9125 = vmul.f32 %v8101, %v8997
      %v9126 = vmul.f32 %v8102, %v8998
      %v9127 = vrot.slane %v8999, 4
      %v9128 = vadd.f32 %v8999, %v9127
      %v9129 = vrot.slane %v9128, 2
      %v9130 = vadd.f32 %v9128, %v9129
      %v9131 = vrot.slane %v9130, 1
      %v9132 = vadd.f32 %v9130, %v9131
      %v9133 = vrot.slane %v9000, 4
      %v9134 = vadd.f32 %v9000, %v9133
      %v9135 = vrot.slane %v9134, 2
      %v9136 = vadd.f32 %v9134, %v9135
      %v9137 = vrot.slane %v9136, 1
      %v9138 = vadd.f32 %v9136, %v9137
      %v9139 = vrot.slane %v9001, 4
      %v9140 = vadd.f32 %v9001, %v9139
      %v9141 = vrot.slane %v9140, 2
      %v9142 = vadd.f32 %v9140, %v9141
      %v9143 = vrot.slane %v9142, 1
      %v9144 = vadd.f32 %v9142, %v9143
      %v9145 = vrot.slane %v9002, 4
      %v9146 = vadd.f32 %v9002, %v9145
      %v9147 = vrot.slane %v9146, 2
      %v9148 = vadd.f32 %v9146, %v9147
      %v9149 = vrot.slane %v9148, 1
      %v9150 = vadd.f32 %v9148, %v9149
      %v9151 = vrot.slane %v9003, 4
      %v9152 = vadd.f32 %v9003, %v9151
      %v9153 = vrot.slane %v9152, 2
      %v9154 = vadd.f32 %v9152, %v9153
      %v9155 = vrot.slane %v9154, 1
      %v9156 = vadd.f32 %v9154, %v9155
      %v9157 = vrot.slane %v9004, 4
      %v9158 = vadd.f32 %v9004, %v9157
      %v9159 = vrot.slane %v9158, 2
      %v9160 = vadd.f32 %v9158, %v9159
      %v9161 = vrot.slane %v9160, 1
      %v9162 = vadd.f32 %v9160, %v9161
      %v9163 = vrot.slane %v9005, 4
      %v9164 = vadd.f32 %v9005, %v9163
      %v9165 = vrot.slane %v9164, 2
      %v9166 = vadd.f32 %v9164, %v9165
      %v9167 = vrot.slane %v9166, 1
      %v9168 = vadd.f32 %v9166, %v9167
      %v9169 = vrot.slane %v9006, 4
      %v9170 = vadd.f32 %v9006, %v9169
      %v9171 = vrot.slane %v9170, 2
      %v9172 = vadd.f32 %v9170, %v9171
      %v9173 = vrot.slane %v9172, 1
      %v9174 = vadd.f32 %v9172, %v9173
      %v9175 = vrot.slane %v9007, 4
      %v9176 = vadd.f32 %v9007, %v9175
      %v9177 = vrot.slane %v9176, 2
      %v9178 = vadd.f32 %v9176, %v9177
      %v9179 = vrot.slane %v9178, 1
      %v9180 = vadd.f32 %v9178, %v9179
      %v9181 = vrot.slane %v9008, 4
      %v9182 = vadd.f32 %v9008, %v9181
      %v9183 = vrot.slane %v9182, 2
      %v9184 = vadd.f32 %v9182, %v9183
      %v9185 = vrot.slane %v9184, 1
      %v9186 = vadd.f32 %v9184, %v9185
      %v9187 = vrot.slane %v9009, 4
      %v9188 = vadd.f32 %v9009, %v9187
      %v9189 = vrot.slane %v9188, 2
      %v9190 = vadd.f32 %v9188, %v9189
      %v9191 = vrot.slane %v9190, 1
      %v9192 = vadd.f32 %v9190, %v9191
      %v9193 = vrot.slane %v9010, 4
      %v9194 = vadd.f32 %v9010, %v9193
      %v9195 = vrot.slane %v9194, 2
      %v9196 = vadd.f32 %v9194, %v9195
      %v9197 = vrot.slane %v9196, 1
      %v9198 = vadd.f32 %v9196, %v9197
      %v9199 = vrot.slane %v9011, 4
      %v9200 = vadd.f32 %v9011, %v9199
      %v9201 = vrot.slane %v9200, 2
      %v9202 = vadd.f32 %v9200, %v9201
      %v9203 = vrot.slane %v9202, 1
      %v9204 = vadd.f32 %v9202, %v9203
      %v9205 = vrot.slane %v9012, 4
      %v9206 = vadd.f32 %v9012, %v9205
      %v9207 = vrot.slane %v9206, 2
      %v9208 = vadd.f32 %v9206, %v9207
      %v9209 = vrot.slane %v9208, 1
      %v9210 = vadd.f32 %v9208, %v9209
      %v9211 = vrot.slane %v9013, 4
      %v9212 = vadd.f32 %v9013, %v9211
      %v9213 = vrot.slane %v9212, 2
      %v9214 = vadd.f32 %v9212, %v9213
      %v9215 = vrot.slane %v9214, 1
      %v9216 = vadd.f32 %v9214, %v9215
      %v9217 = vrot.slane %v9014, 4
      %v9218 = vadd.f32 %v9014, %v9217
      %v9219 = vrot.slane %v9218, 2
      %v9220 = vadd.f32 %v9218, %v9219
      %v9221 = vrot.slane %v9220, 1
      %v9222 = vadd.f32 %v9220, %v9221
      %v9223 = vrot.slane %v9015, 4
      %v9224 = vadd.f32 %v9015, %v9223
      %v9225 = vrot.slane %v9224, 2
      %v9226 = vadd.f32 %v9224, %v9225
      %v9227 = vrot.slane %v9226, 1
      %v9228 = vadd.f32 %v9226, %v9227
      %v9229 = vrot.slane %v9016, 4
      %v9230 = vadd.f32 %v9016, %v9229
      %v9231 = vrot.slane %v9230, 2
      %v9232 = vadd.f32 %v9230, %v9231
      %v9233 = vrot.slane %v9232, 1
      %v9234 = vadd.f32 %v9232, %v9233
      %v9235 = vrot.slane %v9017, 4
      %v9236 = vadd.f32 %v9017, %v9235
      %v9237 = vrot.slane %v9236, 2
      %v9238 = vadd.f32 %v9236, %v9237
      %v9239 = vrot.slane %v9238, 1
      %v9240 = vadd.f32 %v9238, %v9239
      %v9241 = vrot.slane %v9018, 4
      %v9242 = vadd.f32 %v9018, %v9241
      %v9243 = vrot.slane %v9242, 2
      %v9244 = vadd.f32 %v9242, %v9243
      %v9245 = vrot.slane %v9244, 1
      %v9246 = vadd.f32 %v9244, %v9245
      %v9247 = vrot.slane %v9019, 4
      %v9248 = vadd.f32 %v9019, %v9247
      %v9249 = vrot.slane %v9248, 2
      %v9250 = vadd.f32 %v9248, %v9249
      %v9251 = vrot.slane %v9250, 1
      %v9252 = vadd.f32 %v9250, %v9251
      %v9253 = vrot.slane %v9020, 4
      %v9254 = vadd.f32 %v9020, %v9253
      %v9255 = vrot.slane %v9254, 2
      %v9256 = vadd.f32 %v9254, %v9255
      %v9257 = vrot.slane %v9256, 1
      %v9258 = vadd.f32 %v9256, %v9257
      %v9259 = vrot.slane %v9021, 4
      %v9260 = vadd.f32 %v9021, %v9259
      %v9261 = vrot.slane %v9260, 2
      %v9262 = vadd.f32 %v9260, %v9261
      %v9263 = vrot.slane %v9262, 1
      %v9264 = vadd.f32 %v9262, %v9263
      %v9265 = vrot.slane %v9022, 4
      %v9266 = vadd.f32 %v9022, %v9265
      %v9267 = vrot.slane %v9266, 2
      %v9268 = vadd.f32 %v9266, %v9267
      %v9269 = vrot.slane %v9268, 1
      %v9270 = vadd.f32 %v9268, %v9269
      %v9271 = vrot.slane %v9023, 4
      %v9272 = vadd.f32 %v9023, %v9271
      %v9273 = vrot.slane %v9272, 2
      %v9274 = vadd.f32 %v9272, %v9273
      %v9275 = vrot.slane %v9274, 1
      %v9276 = vadd.f32 %v9274, %v9275
      %v9277 = vrot.slane %v9024, 4
      %v9278 = vadd.f32 %v9024, %v9277
      %v9279 = vrot.slane %v9278, 2
      %v9280 = vadd.f32 %v9278, %v9279
      %v9281 = vrot.slane %v9280, 1
      %v9282 = vadd.f32 %v9280, %v9281
      %v9283 = vrot.slane %v9025, 4
      %v9284 = vadd.f32 %v9025, %v9283
      %v9285 = vrot.slane %v9284, 2
      %v9286 = vadd.f32 %v9284, %v9285
      %v9287 = vrot.slane %v9286, 1
      %v9288 = vadd.f32 %v9286, %v9287
      %v9289 = vrot.slane %v9026, 4
      %v9290 = vadd.f32 %v9026, %v9289
      %v9291 = vrot.slane %v9290, 2
      %v9292 = vadd.f32 %v9290, %v9291
      %v9293 = vrot.slane %v9292, 1
      %v9294 = vadd.f32 %v9292, %v9293
      %v9295 = vrot.slane %v9027, 4
      %v9296 = vadd.f32 %v9027, %v9295
      %v9297 = vrot.slane %v9296, 2
      %v9298 = vadd.f32 %v9296, %v9297
      %v9299 = vrot.slane %v9298, 1
      %v9300 = vadd.f32 %v9298, %v9299
      %v9301 = vrot.slane %v9028, 4
      %v9302 = vadd.f32 %v9028, %v9301
      %v9303 = vrot.slane %v9302, 2
      %v9304 = vadd.f32 %v9302, %v9303
      %v9305 = vrot.slane %v9304, 1
      %v9306 = vadd.f32 %v9304, %v9305
      %v9307 = vrot.slane %v9029, 4
      %v9308 = vadd.f32 %v9029, %v9307
      %v9309 = vrot.slane %v9308, 2
      %v9310 = vadd.f32 %v9308, %v9309
      %v9311 = vrot.slane %v9310, 1
      %v9312 = vadd.f32 %v9310, %v9311
      %v9313 = vrot.slane %v9030, 4
      %v9314 = vadd.f32 %v9030, %v9313
      %v9315 = vrot.slane %v9314, 2
      %v9316 = vadd.f32 %v9314, %v9315
      %v9317 = vrot.slane %v9316, 1
      %v9318 = vadd.f32 %v9316, %v9317
      %v9319 = vrot.slane %v9031, 4
      %v9320 = vadd.f32 %v9031, %v9319
      %v9321 = vrot.slane %v9320, 2
      %v9322 = vadd.f32 %v9320, %v9321
      %v9323 = vrot.slane %v9322, 1
      %v9324 = vadd.f32 %v9322, %v9323
      %v9325 = vrot.slane %v9032, 4
      %v9326 = vadd.f32 %v9032, %v9325
      %v9327 = vrot.slane %v9326, 2
      %v9328 = vadd.f32 %v9326, %v9327
      %v9329 = vrot.slane %v9328, 1
      %v9330 = vadd.f32 %v9328, %v9329
      %v9331 = vrot.slane %v9033, 4
      %v9332 = vadd.f32 %v9033, %v9331
      %v9333 = vrot.slane %v9332, 2
      %v9334 = vadd.f32 %v9332, %v9333
      %v9335 = vrot.slane %v9334, 1
      %v9336 = vadd.f32 %v9334, %v9335
      %v9337 = vrot.slane %v9034, 4
      %v9338 = vadd.f32 %v9034, %v9337
      %v9339 = vrot.slane %v9338, 2
      %v9340 = vadd.f32 %v9338, %v9339
      %v9341 = vrot.slane %v9340, 1
      %v9342 = vadd.f32 %v9340, %v9341
      %v9343 = vrot.slane %v9035, 4
      %v9344 = vadd.f32 %v9035, %v9343
      %v9345 = vrot.slane %v9344, 2
      %v9346 = vadd.f32 %v9344, %v9345
      %v9347 = vrot.slane %v9346, 1
      %v9348 = vadd.f32 %v9346, %v9347
      %v9349 = vrot.slane %v9036, 4
      %v9350 = vadd.f32 %v9036, %v9349
      %v9351 = vrot.slane %v9350, 2
      %v9352 = vadd.f32 %v9350, %v9351
      %v9353 = vrot.slane %v9352, 1
      %v9354 = vadd.f32 %v9352, %v9353
      %v9355 = vrot.slane %v9037, 4
      %v9356 = vadd.f32 %v9037, %v9355
      %v9357 = vrot.slane %v9356, 2
      %v9358 = vadd.f32 %v9356, %v9357
      %v9359 = vrot.slane %v9358, 1
      %v9360 = vadd.f32 %v9358, %v9359
      %v9361 = vrot.slane %v9038, 4
      %v9362 = vadd.f32 %v9038, %v9361
      %v9363 = vrot.slane %v9362, 2
      %v9364 = vadd.f32 %v9362, %v9363
      %v9365 = vrot.slane %v9364, 1
      %v9366 = vadd.f32 %v9364, %v9365
      %v9367 = vrot.slane %v9039, 4
      %v9368 = vadd.f32 %v9039, %v9367
      %v9369 = vrot.slane %v9368, 2
      %v9370 = vadd.f32 %v9368, %v9369
      %v9371 = vrot.slane %v9370, 1
      %v9372 = vadd.f32 %v9370, %v9371
      %v9373 = vrot.slane %v9040, 4
      %v9374 = vadd.f32 %v9040, %v9373
      %v9375 = vrot.slane %v9374, 2
      %v9376 = vadd.f32 %v9374, %v9375
      %v9377 = vrot.slane %v9376, 1
      %v9378 = vadd.f32 %v9376, %v9377
      %v9379 = vrot.slane %v9041, 4
      %v9380 = vadd.f32 %v9041, %v9379
      %v9381 = vrot.slane %v9380, 2
      %v9382 = vadd.f32 %v9380, %v9381
      %v9383 = vrot.slane %v9382, 1
      %v9384 = vadd.f32 %v9382, %v9383
      %v9385 = vrot.slane %v9042, 4
      %v9386 = vadd.f32 %v9042, %v9385
      %v9387 = vrot.slane %v9386, 2
      %v9388 = vadd.f32 %v9386, %v9387
      %v9389 = vrot.slane %v9388, 1
      %v9390 = vadd.f32 %v9388, %v9389
      %v9391 = vrot.slane %v9043, 4
      %v9392 = vadd.f32 %v9043, %v9391
      %v9393 = vrot.slane %v9392, 2
      %v9394 = vadd.f32 %v9392, %v9393
      %v9395 = vrot.slane %v9394, 1
      %v9396 = vadd.f32 %v9394, %v9395
      %v9397 = vrot.slane %v9044, 4
      %v9398 = vadd.f32 %v9044, %v9397
      %v9399 = vrot.slane %v9398, 2
      %v9400 = vadd.f32 %v9398, %v9399
      %v9401 = vrot.slane %v9400, 1
      %v9402 = vadd.f32 %v9400, %v9401
      %v9403 = vrot.slane %v9045, 4
      %v9404 = vadd.f32 %v9045, %v9403
      %v9405 = vrot.slane %v9404, 2
      %v9406 = vadd.f32 %v9404, %v9405
      %v9407 = vrot.slane %v9406, 1
      %v9408 = vadd.f32 %v9406, %v9407
      %v9409 = vrot.slane %v9046, 4
      %v9410 = vadd.f32 %v9046, %v9409
      %v9411 = vrot.slane %v9410, 2
      %v9412 = vadd.f32 %v9410, %v9411
      %v9413 = vrot.slane %v9412, 1
      %v9414 = vadd.f32 %v9412, %v9413
      %v9415 = vrot.slane %v9047, 4
      %v9416 = vadd.f32 %v9047, %v9415
      %v9417 = vrot.slane %v9416, 2
      %v9418 = vadd.f32 %v9416, %v9417
      %v9419 = vrot.slane %v9418, 1
      %v9420 = vadd.f32 %v9418, %v9419
      %v9421 = vrot.slane %v9048, 4
      %v9422 = vadd.f32 %v9048, %v9421
      %v9423 = vrot.slane %v9422, 2
      %v9424 = vadd.f32 %v9422, %v9423
      %v9425 = vrot.slane %v9424, 1
      %v9426 = vadd.f32 %v9424, %v9425
      %v9427 = vrot.slane %v9049, 4
      %v9428 = vadd.f32 %v9049, %v9427
      %v9429 = vrot.slane %v9428, 2
      %v9430 = vadd.f32 %v9428, %v9429
      %v9431 = vrot.slane %v9430, 1
      %v9432 = vadd.f32 %v9430, %v9431
      %v9433 = vrot.slane %v9050, 4
      %v9434 = vadd.f32 %v9050, %v9433
      %v9435 = vrot.slane %v9434, 2
      %v9436 = vadd.f32 %v9434, %v9435
      %v9437 = vrot.slane %v9436, 1
      %v9438 = vadd.f32 %v9436, %v9437
      %v9439 = vrot.slane %v9051, 4
      %v9440 = vadd.f32 %v9051, %v9439
      %v9441 = vrot.slane %v9440, 2
      %v9442 = vadd.f32 %v9440, %v9441
      %v9443 = vrot.slane %v9442, 1
      %v9444 = vadd.f32 %v9442, %v9443
      %v9445 = vrot.slane %v9052, 4
      %v9446 = vadd.f32 %v9052, %v9445
      %v9447 = vrot.slane %v9446, 2
      %v9448 = vadd.f32 %v9446, %v9447
      %v9449 = vrot.slane %v9448, 1
      %v9450 = vadd.f32 %v9448, %v9449
      %v9451 = vrot.slane %v9053, 4
      %v9452 = vadd.f32 %v9053, %v9451
      %v9453 = vrot.slane %v9452, 2
      %v9454 = vadd.f32 %v9452, %v9453
      %v9455 = vrot.slane %v9454, 1
      %v9456 = vadd.f32 %v9454, %v9455
      %v9457 = vrot.slane %v9054, 4
      %v9458 = vadd.f32 %v9054, %v9457
      %v9459 = vrot.slane %v9458, 2
      %v9460 = vadd.f32 %v9458, %v9459
      %v9461 = vrot.slane %v9460, 1
      %v9462 = vadd.f32 %v9460, %v9461
      %v9463 = vrot.slane %v9055, 4
      %v9464 = vadd.f32 %v9055, %v9463
      %v9465 = vrot.slane %v9464, 2
      %v9466 = vadd.f32 %v9464, %v9465
      %v9467 = vrot.slane %v9466, 1
      %v9468 = vadd.f32 %v9466, %v9467
      %v9469 = vrot.slane %v9056, 4
      %v9470 = vadd.f32 %v9056, %v9469
      %v9471 = vrot.slane %v9470, 2
      %v9472 = vadd.f32 %v9470, %v9471
      %v9473 = vrot.slane %v9472, 1
      %v9474 = vadd.f32 %v9472, %v9473
      %v9475 = vrot.slane %v9057, 4
      %v9476 = vadd.f32 %v9057, %v9475
      %v9477 = vrot.slane %v9476, 2
      %v9478 = vadd.f32 %v9476, %v9477
      %v9479 = vrot.slane %v9478, 1
      %v9480 = vadd.f32 %v9478, %v9479
      %v9481 = vrot.slane %v9058, 4
      %v9482 = vadd.f32 %v9058, %v9481
      %v9483 = vrot.slane %v9482, 2
      %v9484 = vadd.f32 %v9482, %v9483
      %v9485 = vrot.slane %v9484, 1
      %v9486 = vadd.f32 %v9484, %v9485
      %v9487 = vrot.slane %v9059, 4
      %v9488 = vadd.f32 %v9059, %v9487
      %v9489 = vrot.slane %v9488, 2
      %v9490 = vadd.f32 %v9488, %v9489
      %v9491 = vrot.slane %v9490, 1
      %v9492 = vadd.f32 %v9490, %v9491
      %v9493 = vrot.slane %v9060, 4
      %v9494 = vadd.f32 %v9060, %v9493
      %v9495 = vrot.slane %v9494, 2
      %v9496 = vadd.f32 %v9494, %v9495
      %v9497 = vrot.slane %v9496, 1
      %v9498 = vadd.f32 %v9496, %v9497
      %v9499 = vrot.slane %v9061, 4
      %v9500 = vadd.f32 %v9061, %v9499
      %v9501 = vrot.slane %v9500, 2
      %v9502 = vadd.f32 %v9500, %v9501
      %v9503 = vrot.slane %v9502, 1
      %v9504 = vadd.f32 %v9502, %v9503
      %v9505 = vrot.slane %v9062, 4
      %v9506 = vadd.f32 %v9062, %v9505
      %v9507 = vrot.slane %v9506, 2
      %v9508 = vadd.f32 %v9506, %v9507
      %v9509 = vrot.slane %v9508, 1
      %v9510 = vadd.f32 %v9508, %v9509
      %v9511 = vrot.slane %v9063, 4
      %v9512 = vadd.f32 %v9063, %v9511
      %v9513 = vrot.slane %v9512, 2
      %v9514 = vadd.f32 %v9512, %v9513
      %v9515 = vrot.slane %v9514, 1
      %v9516 = vadd.f32 %v9514, %v9515
      %v9517 = vrot.slane %v9064, 4
      %v9518 = vadd.f32 %v9064, %v9517
      %v9519 = vrot.slane %v9518, 2
      %v9520 = vadd.f32 %v9518, %v9519
      %v9521 = vrot.slane %v9520, 1
      %v9522 = vadd.f32 %v9520, %v9521
      %v9523 = vrot.slane %v9065, 4
      %v9524 = vadd.f32 %v9065, %v9523
      %v9525 = vrot.slane %v9524, 2
      %v9526 = vadd.f32 %v9524, %v9525
      %v9527 = vrot.slane %v9526, 1
      %v9528 = vadd.f32 %v9526, %v9527
      %v9529 = vrot.slane %v9066, 4
      %v9530 = vadd.f32 %v9066, %v9529
      %v9531 = vrot.slane %v9530, 2
      %v9532 = vadd.f32 %v9530, %v9531
      %v9533 = vrot.slane %v9532, 1
      %v9534 = vadd.f32 %v9532, %v9533
      %v9535 = vrot.slane %v9067, 4
      %v9536 = vadd.f32 %v9067, %v9535
      %v9537 = vrot.slane %v9536, 2
      %v9538 = vadd.f32 %v9536, %v9537
      %v9539 = vrot.slane %v9538, 1
      %v9540 = vadd.f32 %v9538, %v9539
      %v9541 = vrot.slane %v9068, 4
      %v9542 = vadd.f32 %v9068, %v9541
      %v9543 = vrot.slane %v9542, 2
      %v9544 = vadd.f32 %v9542, %v9543
      %v9545 = vrot.slane %v9544, 1
      %v9546 = vadd.f32 %v9544, %v9545
      %v9547 = vrot.slane %v9069, 4
      %v9548 = vadd.f32 %v9069, %v9547
      %v9549 = vrot.slane %v9548, 2
      %v9550 = vadd.f32 %v9548, %v9549
      %v9551 = vrot.slane %v9550, 1
      %v9552 = vadd.f32 %v9550, %v9551
      %v9553 = vrot.slane %v9070, 4
      %v9554 = vadd.f32 %v9070, %v9553
      %v9555 = vrot.slane %v9554, 2
      %v9556 = vadd.f32 %v9554, %v9555
      %v9557 = vrot.slane %v9556, 1
      %v9558 = vadd.f32 %v9556, %v9557
      %v9559 = vrot.slane %v9071, 4
      %v9560 = vadd.f32 %v9071, %v9559
      %v9561 = vrot.slane %v9560, 2
      %v9562 = vadd.f32 %v9560, %v9561
      %v9563 = vrot.slane %v9562, 1
      %v9564 = vadd.f32 %v9562, %v9563
      %v9565 = vrot.slane %v9072, 4
      %v9566 = vadd.f32 %v9072, %v9565
      %v9567 = vrot.slane %v9566, 2
      %v9568 = vadd.f32 %v9566, %v9567
      %v9569 = vrot.slane %v9568, 1
      %v9570 = vadd.f32 %v9568, %v9569
      %v9571 = vrot.slane %v9073, 4
      %v9572 = vadd.f32 %v9073, %v9571
      %v9573 = vrot.slane %v9572, 2
      %v9574 = vadd.f32 %v9572, %v9573
      %v9575 = vrot.slane %v9574, 1
      %v9576 = vadd.f32 %v9574, %v9575
      %v9577 = vrot.slane %v9074, 4
      %v9578 = vadd.f32 %v9074, %v9577
      %v9579 = vrot.slane %v9578, 2
      %v9580 = vadd.f32 %v9578, %v9579
      %v9581 = vrot.slane %v9580, 1
      %v9582 = vadd.f32 %v9580, %v9581
      %v9583 = vrot.slane %v9075, 4
      %v9584 = vadd.f32 %v9075, %v9583
      %v9585 = vrot.slane %v9584, 2
      %v9586 = vadd.f32 %v9584, %v9585
      %v9587 = vrot.slane %v9586, 1
      %v9588 = vadd.f32 %v9586, %v9587
      %v9589 = vrot.slane %v9076, 4
      %v9590 = vadd.f32 %v9076, %v9589
      %v9591 = vrot.slane %v9590, 2
      %v9592 = vadd.f32 %v9590, %v9591
      %v9593 = vrot.slane %v9592, 1
      %v9594 = vadd.f32 %v9592, %v9593
      %v9595 = vrot.slane %v9077, 4
      %v9596 = vadd.f32 %v9077, %v9595
      %v9597 = vrot.slane %v9596, 2
      %v9598 = vadd.f32 %v9596, %v9597
      %v9599 = vrot.slane %v9598, 1
      %v9600 = vadd.f32 %v9598, %v9599
      %v9601 = vrot.slane %v9078, 4
      %v9602 = vadd.f32 %v9078, %v9601
      %v9603 = vrot.slane %v9602, 2
      %v9604 = vadd.f32 %v9602, %v9603
      %v9605 = vrot.slane %v9604, 1
      %v9606 = vadd.f32 %v9604, %v9605
      %v9607 = vrot.slane %v9079, 4
      %v9608 = vadd.f32 %v9079, %v9607
      %v9609 = vrot.slane %v9608, 2
      %v9610 = vadd.f32 %v9608, %v9609
      %v9611 = vrot.slane %v9610, 1
      %v9612 = vadd.f32 %v9610, %v9611
      %v9613 = vrot.slane %v9080, 4
      %v9614 = vadd.f32 %v9080, %v9613
      %v9615 = vrot.slane %v9614, 2
      %v9616 = vadd.f32 %v9614, %v9615
      %v9617 = vrot.slane %v9616, 1
      %v9618 = vadd.f32 %v9616, %v9617
      %v9619 = vrot.slane %v9081, 4
      %v9620 = vadd.f32 %v9081, %v9619
      %v9621 = vrot.slane %v9620, 2
      %v9622 = vadd.f32 %v9620, %v9621
      %v9623 = vrot.slane %v9622, 1
      %v9624 = vadd.f32 %v9622, %v9623
      %v9625 = vrot.slane %v9082, 4
      %v9626 = vadd.f32 %v9082, %v9625
      %v9627 = vrot.slane %v9626, 2
      %v9628 = vadd.f32 %v9626, %v9627
      %v9629 = vrot.slane %v9628, 1
      %v9630 = vadd.f32 %v9628, %v9629
      %v9631 = vrot.slane %v9083, 4
      %v9632 = vadd.f32 %v9083, %v9631
      %v9633 = vrot.slane %v9632, 2
      %v9634 = vadd.f32 %v9632, %v9633
      %v9635 = vrot.slane %v9634, 1
      %v9636 = vadd.f32 %v9634, %v9635
      %v9637 = vrot.slane %v9084, 4
      %v9638 = vadd.f32 %v9084, %v9637
      %v9639 = vrot.slane %v9638, 2
      %v9640 = vadd.f32 %v9638, %v9639
      %v9641 = vrot.slane %v9640, 1
      %v9642 = vadd.f32 %v9640, %v9641
      %v9643 = vrot.slane %v9085, 4
      %v9644 = vadd.f32 %v9085, %v9643
      %v9645 = vrot.slane %v9644, 2
      %v9646 = vadd.f32 %v9644, %v9645
      %v9647 = vrot.slane %v9646, 1
      %v9648 = vadd.f32 %v9646, %v9647
      %v9649 = vrot.slane %v9086, 4
      %v9650 = vadd.f32 %v9086, %v9649
      %v9651 = vrot.slane %v9650, 2
      %v9652 = vadd.f32 %v9650, %v9651
      %v9653 = vrot.slane %v9652, 1
      %v9654 = vadd.f32 %v9652, %v9653
      %v9655 = vrot.slane %v9087, 4
      %v9656 = vadd.f32 %v9087, %v9655
      %v9657 = vrot.slane %v9656, 2
      %v9658 = vadd.f32 %v9656, %v9657
      %v9659 = vrot.slane %v9658, 1
      %v9660 = vadd.f32 %v9658, %v9659
      %v9661 = vrot.slane %v9088, 4
      %v9662 = vadd.f32 %v9088, %v9661
      %v9663 = vrot.slane %v9662, 2
      %v9664 = vadd.f32 %v9662, %v9663
      %v9665 = vrot.slane %v9664, 1
      %v9666 = vadd.f32 %v9664, %v9665
      %v9667 = vrot.slane %v9089, 4
      %v9668 = vadd.f32 %v9089, %v9667
      %v9669 = vrot.slane %v9668, 2
      %v9670 = vadd.f32 %v9668, %v9669
      %v9671 = vrot.slane %v9670, 1
      %v9672 = vadd.f32 %v9670, %v9671
      %v9673 = vrot.slane %v9090, 4
      %v9674 = vadd.f32 %v9090, %v9673
      %v9675 = vrot.slane %v9674, 2
      %v9676 = vadd.f32 %v9674, %v9675
      %v9677 = vrot.slane %v9676, 1
      %v9678 = vadd.f32 %v9676, %v9677
      %v9679 = vrot.slane %v9091, 4
      %v9680 = vadd.f32 %v9091, %v9679
      %v9681 = vrot.slane %v9680, 2
      %v9682 = vadd.f32 %v9680, %v9681
      %v9683 = vrot.slane %v9682, 1
      %v9684 = vadd.f32 %v9682, %v9683
      %v9685 = vrot.slane %v9092, 4
      %v9686 = vadd.f32 %v9092, %v9685
      %v9687 = vrot.slane %v9686, 2
      %v9688 = vadd.f32 %v9686, %v9687
      %v9689 = vrot.slane %v9688, 1
      %v9690 = vadd.f32 %v9688, %v9689
      %v9691 = vrot.slane %v9093, 4
      %v9692 = vadd.f32 %v9093, %v9691
      %v9693 = vrot.slane %v9692, 2
      %v9694 = vadd.f32 %v9692, %v9693
      %v9695 = vrot.slane %v9694, 1
      %v9696 = vadd.f32 %v9694, %v9695
      %v9697 = vrot.slane %v9094, 4
      %v9698 = vadd.f32 %v9094, %v9697
      %v9699 = vrot.slane %v9698, 2
      %v9700 = vadd.f32 %v9698, %v9699
      %v9701 = vrot.slane %v9700, 1
      %v9702 = vadd.f32 %v9700, %v9701
      %v9703 = vrot.slane %v9095, 4
      %v9704 = vadd.f32 %v9095, %v9703
      %v9705 = vrot.slane %v9704, 2
      %v9706 = vadd.f32 %v9704, %v9705
      %v9707 = vrot.slane %v9706, 1
      %v9708 = vadd.f32 %v9706, %v9707
      %v9709 = vrot.slane %v9096, 4
      %v9710 = vadd.f32 %v9096, %v9709
      %v9711 = vrot.slane %v9710, 2
      %v9712 = vadd.f32 %v9710, %v9711
      %v9713 = vrot.slane %v9712, 1
      %v9714 = vadd.f32 %v9712, %v9713
      %v9715 = vrot.slane %v9097, 4
      %v9716 = vadd.f32 %v9097, %v9715
      %v9717 = vrot.slane %v9716, 2
      %v9718 = vadd.f32 %v9716, %v9717
      %v9719 = vrot.slane %v9718, 1
      %v9720 = vadd.f32 %v9718, %v9719
      %v9721 = vrot.slane %v9098, 4
      %v9722 = vadd.f32 %v9098, %v9721
      %v9723 = vrot.slane %v9722, 2
      %v9724 = vadd.f32 %v9722, %v9723
      %v9725 = vrot.slane %v9724, 1
      %v9726 = vadd.f32 %v9724, %v9725
      %v9727 = vrot.slane %v9099, 4
      %v9728 = vadd.f32 %v9099, %v9727
      %v9729 = vrot.slane %v9728, 2
      %v9730 = vadd.f32 %v9728, %v9729
      %v9731 = vrot.slane %v9730, 1
      %v9732 = vadd.f32 %v9730, %v9731
      %v9733 = vrot.slane %v9100, 4
      %v9734 = vadd.f32 %v9100, %v9733
      %v9735 = vrot.slane %v9734, 2
      %v9736 = vadd.f32 %v9734, %v9735
      %v9737 = vrot.slane %v9736, 1
      %v9738 = vadd.f32 %v9736, %v9737
      %v9739 = vrot.slane %v9101, 4
      %v9740 = vadd.f32 %v9101, %v9739
      %v9741 = vrot.slane %v9740, 2
      %v9742 = vadd.f32 %v9740, %v9741
      %v9743 = vrot.slane %v9742, 1
      %v9744 = vadd.f32 %v9742, %v9743
      %v9745 = vrot.slane %v9102, 4
      %v9746 = vadd.f32 %v9102, %v9745
      %v9747 = vrot.slane %v9746, 2
      %v9748 = vadd.f32 %v9746, %v9747
      %v9749 = vrot.slane %v9748, 1
      %v9750 = vadd.f32 %v9748, %v9749
      %v9751 = vrot.slane %v9103, 4
      %v9752 = vadd.f32 %v9103, %v9751
      %v9753 = vrot.slane %v9752, 2
      %v9754 = vadd.f32 %v9752, %v9753
      %v9755 = vrot.slane %v9754, 1
      %v9756 = vadd.f32 %v9754, %v9755
      %v9757 = vrot.slane %v9104, 4
      %v9758 = vadd.f32 %v9104, %v9757
      %v9759 = vrot.slane %v9758, 2
      %v9760 = vadd.f32 %v9758, %v9759
      %v9761 = vrot.slane %v9760, 1
      %v9762 = vadd.f32 %v9760, %v9761
      %v9763 = vrot.slane %v9105, 4
      %v9764 = vadd.f32 %v9105, %v9763
      %v9765 = vrot.slane %v9764, 2
      %v9766 = vadd.f32 %v9764, %v9765
      %v9767 = vrot.slane %v9766, 1
      %v9768 = vadd.f32 %v9766, %v9767
      %v9769 = vrot.slane %v9106, 4
      %v9770 = vadd.f32 %v9106, %v9769
      %v9771 = vrot.slane %v9770, 2
      %v9772 = vadd.f32 %v9770, %v9771
      %v9773 = vrot.slane %v9772, 1
      %v9774 = vadd.f32 %v9772, %v9773
      %v9775 = vrot.slane %v9107, 4
      %v9776 = vadd.f32 %v9107, %v9775
      %v9777 = vrot.slane %v9776, 2
      %v9778 = vadd.f32 %v9776, %v9777
      %v9779 = vrot.slane %v9778, 1
      %v9780 = vadd.f32 %v9778, %v9779
      %v9781 = vrot.slane %v9108, 4
      %v9782 = vadd.f32 %v9108, %v9781
      %v9783 = vrot.slane %v9782, 2
      %v9784 = vadd.f32 %v9782, %v9783
      %v9785 = vrot.slane %v9784, 1
      %v9786 = vadd.f32 %v9784, %v9785
      %v9787 = vrot.slane %v9109, 4
      %v9788 = vadd.f32 %v9109, %v9787
      %v9789 = vrot.slane %v9788, 2
      %v9790 = vadd.f32 %v9788, %v9789
      %v9791 = vrot.slane %v9790, 1
      %v9792 = vadd.f32 %v9790, %v9791
      %v9793 = vrot.slane %v9110, 4
      %v9794 = vadd.f32 %v9110, %v9793
      %v9795 = vrot.slane %v9794, 2
      %v9796 = vadd.f32 %v9794, %v9795
      %v9797 = vrot.slane %v9796, 1
      %v9798 = vadd.f32 %v9796, %v9797
      %v9799 = vrot.slane %v9111, 4
      %v9800 = vadd.f32 %v9111, %v9799
      %v9801 = vrot.slane %v9800, 2
      %v9802 = vadd.f32 %v9800, %v9801
      %v9803 = vrot.slane %v9802, 1
      %v9804 = vadd.f32 %v9802, %v9803
      %v9805 = vrot.slane %v9112, 4
      %v9806 = vadd.f32 %v9112, %v9805
      %v9807 = vrot.slane %v9806, 2
      %v9808 = vadd.f32 %v9806, %v9807
      %v9809 = vrot.slane %v9808, 1
      %v9810 = vadd.f32 %v9808, %v9809
      %v9811 = vrot.slane %v9113, 4
      %v9812 = vadd.f32 %v9113, %v9811
      %v9813 = vrot.slane %v9812, 2
      %v9814 = vadd.f32 %v9812, %v9813
      %v9815 = vrot.slane %v9814, 1
      %v9816 = vadd.f32 %v9814, %v9815
      %v9817 = vrot.slane %v9114, 4
      %v9818 = vadd.f32 %v9114, %v9817
      %v9819 = vrot.slane %v9818, 2
      %v9820 = vadd.f32 %v9818, %v9819
      %v9821 = vrot.slane %v9820, 1
      %v9822 = vadd.f32 %v9820, %v9821
      %v9823 = vrot.slane %v9115, 4
      %v9824 = vadd.f32 %v9115, %v9823
      %v9825 = vrot.slane %v9824, 2
      %v9826 = vadd.f32 %v9824, %v9825
      %v9827 = vrot.slane %v9826, 1
      %v9828 = vadd.f32 %v9826, %v9827
      %v9829 = vrot.slane %v9116, 4
      %v9830 = vadd.f32 %v9116, %v9829
      %v9831 = vrot.slane %v9830, 2
      %v9832 = vadd.f32 %v9830, %v9831
      %v9833 = vrot.slane %v9832, 1
      %v9834 = vadd.f32 %v9832, %v9833
      %v9835 = vrot.slane %v9117, 4
      %v9836 = vadd.f32 %v9117, %v9835
      %v9837 = vrot.slane %v9836, 2
      %v9838 = vadd.f32 %v9836, %v9837
      %v9839 = vrot.slane %v9838, 1
      %v9840 = vadd.f32 %v9838, %v9839
      %v9841 = vrot.slane %v9118, 4
      %v9842 = vadd.f32 %v9118, %v9841
      %v9843 = vrot.slane %v9842, 2
      %v9844 = vadd.f32 %v9842, %v9843
      %v9845 = vrot.slane %v9844, 1
      %v9846 = vadd.f32 %v9844, %v9845
      %v9847 = vrot.slane %v9119, 4
      %v9848 = vadd.f32 %v9119, %v9847
      %v9849 = vrot.slane %v9848, 2
      %v9850 = vadd.f32 %v9848, %v9849
      %v9851 = vrot.slane %v9850, 1
      %v9852 = vadd.f32 %v9850, %v9851
      %v9853 = vrot.slane %v9120, 4
      %v9854 = vadd.f32 %v9120, %v9853
      %v9855 = vrot.slane %v9854, 2
      %v9856 = vadd.f32 %v9854, %v9855
      %v9857 = vrot.slane %v9856, 1
      %v9858 = vadd.f32 %v9856, %v9857
      %v9859 = vrot.slane %v9121, 4
      %v9860 = vadd.f32 %v9121, %v9859
      %v9861 = vrot.slane %v9860, 2
      %v9862 = vadd.f32 %v9860, %v9861
      %v9863 = vrot.slane %v9862, 1
      %v9864 = vadd.f32 %v9862, %v9863
      %v9865 = vrot.slane %v9122, 4
      %v9866 = vadd.f32 %v9122, %v9865
      %v9867 = vrot.slane %v9866, 2
      %v9868 = vadd.f32 %v9866, %v9867
      %v9869 = vrot.slane %v9868, 1
      %v9870 = vadd.f32 %v9868, %v9869
      %v9871 = vrot.slane %v9123, 4
      %v9872 = vadd.f32 %v9123, %v9871
      %v9873 = vrot.slane %v9872, 2
      %v9874 = vadd.f32 %v9872, %v9873
      %v9875 = vrot.slane %v9874, 1
      %v9876 = vadd.f32 %v9874, %v9875
      %v9877 = vrot.slane %v9124, 4
      %v9878 = vadd.f32 %v9124, %v9877
      %v9879 = vrot.slane %v9878, 2
      %v9880 = vadd.f32 %v9878, %v9879
      %v9881 = vrot.slane %v9880, 1
      %v9882 = vadd.f32 %v9880, %v9881
      %v9883 = vrot.slane %v9125, 4
      %v9884 = vadd.f32 %v9125, %v9883
      %v9885 = vrot.slane %v9884, 2
      %v9886 = vadd.f32 %v9884, %v9885
      %v9887 = vrot.slane %v9886, 1
      %v9888 = vadd.f32 %v9886, %v9887
      %v9889 = vrot.slane %v9126, 4
      %v9890 = vadd.f32 %v9126, %v9889
      %v9891 = vrot.slane %v9890, 2
      %v9892 = vadd.f32 %v9890, %v9891
      %v9893 = vrot.slane %v9892, 1
      %v9894 = vadd.f32 %v9892, %v9893
      %v9895 = vpack.c.bf16 %v9132, %v9132
      %v9896 = vpack.c.bf16 %v9138, %v9138
      %v9897 = vpack.c.bf16 %v9144, %v9144
      %v9898 = vpack.c.bf16 %v9150, %v9150
      %v9899 = vpack.c.bf16 %v9156, %v9156
      %v9900 = vpack.c.bf16 %v9162, %v9162
      %v9901 = vpack.c.bf16 %v9168, %v9168
      %v9902 = vpack.c.bf16 %v9174, %v9174
      %v9903 = vpack.c.bf16 %v9180, %v9180
      %v9904 = vpack.c.bf16 %v9186, %v9186
      %v9905 = vpack.c.bf16 %v9192, %v9192
      %v9906 = vpack.c.bf16 %v9198, %v9198
      %v9907 = vpack.c.bf16 %v9204, %v9204
      %v9908 = vpack.c.bf16 %v9210, %v9210
      %v9909 = vpack.c.bf16 %v9216, %v9216
      %v9910 = vpack.c.bf16 %v9222, %v9222
      %v9911 = vpack.c.bf16 %v9228, %v9228
      %v9912 = vpack.c.bf16 %v9234, %v9234
      %v9913 = vpack.c.bf16 %v9240, %v9240
      %v9914 = vpack.c.bf16 %v9246, %v9246
      %v9915 = vpack.c.bf16 %v9252, %v9252
      %v9916 = vpack.c.bf16 %v9258, %v9258
      %v9917 = vpack.c.bf16 %v9264, %v9264
      %v9918 = vpack.c.bf16 %v9270, %v9270
      %v9919 = vpack.c.bf16 %v9276, %v9276
      %v9920 = vpack.c.bf16 %v9282, %v9282
      %v9921 = vpack.c.bf16 %v9288, %v9288
      %v9922 = vpack.c.bf16 %v9294, %v9294
      %v9923 = vpack.c.bf16 %v9300, %v9300
      %v9924 = vpack.c.bf16 %v9306, %v9306
      %v9925 = vpack.c.bf16 %v9312, %v9312
      %v9926 = vpack.c.bf16 %v9318, %v9318
      %v9927 = vpack.c.bf16 %v9324, %v9324
      %v9928 = vpack.c.bf16 %v9330, %v9330
      %v9929 = vpack.c.bf16 %v9336, %v9336
      %v9930 = vpack.c.bf16 %v9342, %v9342
      %v9931 = vpack.c.bf16 %v9348, %v9348
      %v9932 = vpack.c.bf16 %v9354, %v9354
      %v9933 = vpack.c.bf16 %v9360, %v9360
      %v9934 = vpack.c.bf16 %v9366, %v9366
      %v9935 = vpack.c.bf16 %v9372, %v9372
      %v9936 = vpack.c.bf16 %v9378, %v9378
      %v9937 = vpack.c.bf16 %v9384, %v9384
      %v9938 = vpack.c.bf16 %v9390, %v9390
      %v9939 = vpack.c.bf16 %v9396, %v9396
      %v9940 = vpack.c.bf16 %v9402, %v9402
      %v9941 = vpack.c.bf16 %v9408, %v9408
      %v9942 = vpack.c.bf16 %v9414, %v9414
      %v9943 = vpack.c.bf16 %v9420, %v9420
      %v9944 = vpack.c.bf16 %v9426, %v9426
      %v9945 = vpack.c.bf16 %v9432, %v9432
      %v9946 = vpack.c.bf16 %v9438, %v9438
      %v9947 = vpack.c.bf16 %v9444, %v9444
      %v9948 = vpack.c.bf16 %v9450, %v9450
      %v9949 = vpack.c.bf16 %v9456, %v9456
      %v9950 = vpack.c.bf16 %v9462, %v9462
      %v9951 = vpack.c.bf16 %v9468, %v9468
      %v9952 = vpack.c.bf16 %v9474, %v9474
      %v9953 = vpack.c.bf16 %v9480, %v9480
      %v9954 = vpack.c.bf16 %v9486, %v9486
      %v9955 = vpack.c.bf16 %v9492, %v9492
      %v9956 = vpack.c.bf16 %v9498, %v9498
      %v9957 = vpack.c.bf16 %v9504, %v9504
      %v9958 = vpack.c.bf16 %v9510, %v9510
      %v9959 = vpack.c.bf16 %v9516, %v9516
      %v9960 = vpack.c.bf16 %v9522, %v9522
      %v9961 = vpack.c.bf16 %v9528, %v9528
      %v9962 = vpack.c.bf16 %v9534, %v9534
      %v9963 = vpack.c.bf16 %v9540, %v9540
      %v9964 = vpack.c.bf16 %v9546, %v9546
      %v9965 = vpack.c.bf16 %v9552, %v9552
      %v9966 = vpack.c.bf16 %v9558, %v9558
      %v9967 = vpack.c.bf16 %v9564, %v9564
      %v9968 = vpack.c.bf16 %v9570, %v9570
      %v9969 = vpack.c.bf16 %v9576, %v9576
      %v9970 = vpack.c.bf16 %v9582, %v9582
      %v9971 = vpack.c.bf16 %v9588, %v9588
      %v9972 = vpack.c.bf16 %v9594, %v9594
      %v9973 = vpack.c.bf16 %v9600, %v9600
      %v9974 = vpack.c.bf16 %v9606, %v9606
      %v9975 = vpack.c.bf16 %v9612, %v9612
      %v9976 = vpack.c.bf16 %v9618, %v9618
      %v9977 = vpack.c.bf16 %v9624, %v9624
      %v9978 = vpack.c.bf16 %v9630, %v9630
      %v9979 = vpack.c.bf16 %v9636, %v9636
      %v9980 = vpack.c.bf16 %v9642, %v9642
      %v9981 = vpack.c.bf16 %v9648, %v9648
      %v9982 = vpack.c.bf16 %v9654, %v9654
      %v9983 = vpack.c.bf16 %v9660, %v9660
      %v9984 = vpack.c.bf16 %v9666, %v9666
      %v9985 = vpack.c.bf16 %v9672, %v9672
      %v9986 = vpack.c.bf16 %v9678, %v9678
      %v9987 = vpack.c.bf16 %v9684, %v9684
      %v9988 = vpack.c.bf16 %v9690, %v9690
      %v9989 = vpack.c.bf16 %v9696, %v9696
      %v9990 = vpack.c.bf16 %v9702, %v9702
      %v9991 = vpack.c.bf16 %v9708, %v9708
      %v9992 = vpack.c.bf16 %v9714, %v9714
      %v9993 = vpack.c.bf16 %v9720, %v9720
      %v9994 = vpack.c.bf16 %v9726, %v9726
      %v9995 = vpack.c.bf16 %v9732, %v9732
      %v9996 = vpack.c.bf16 %v9738, %v9738
      %v9997 = vpack.c.bf16 %v9744, %v9744
      %v9998 = vpack.c.bf16 %v9750, %v9750
      %v9999 = vpack.c.bf16 %v9756, %v9756
      %v10000 = vpack.c.bf16 %v9762, %v9762
      %v10001 = vpack.c.bf16 %v9768, %v9768
      %v10002 = vpack.c.bf16 %v9774, %v9774
      %v10003 = vpack.c.bf16 %v9780, %v9780
      %v10004 = vpack.c.bf16 %v9786, %v9786
      %v10005 = vpack.c.bf16 %v9792, %v9792
      %v10006 = vpack.c.bf16 %v9798, %v9798
      %v10007 = vpack.c.bf16 %v9804, %v9804
      %v10008 = vpack.c.bf16 %v9810, %v9810
      %v10009 = vpack.c.bf16 %v9816, %v9816
      %v10010 = vpack.c.bf16 %v9822, %v9822
      %v10011 = vpack.c.bf16 %v9828, %v9828
      %v10012 = vpack.c.bf16 %v9834, %v9834
      %v10013 = vpack.c.bf16 %v9840, %v9840
      %v10014 = vpack.c.bf16 %v9846, %v9846
      %v10015 = vpack.c.bf16 %v9852, %v9852
      %v10016 = vpack.c.bf16 %v9858, %v9858
      %v10017 = vpack.c.bf16 %v9864, %v9864
      %v10018 = vpack.c.bf16 %v9870, %v9870
      %v10019 = vpack.c.bf16 %v9876, %v9876
      %v10020 = vpack.c.bf16 %v9882, %v9882
      %v10021 = vpack.c.bf16 %v9888, %v9888
      %v10022 = vpack.c.bf16 %v9894, %v9894
      %v10023 = vld [vmem:[%s5] sm:$0xf]
      %v10024 = vld [vmem:[%s5 + $0x4] sm:$0xf]
      %v10025 = vld [vmem:[%s5 + $0x8] sm:$0xf]
      %v10026 = vld [vmem:[%s5 + $0xc] sm:$0xf]
      %v10027 = vld [vmem:[%s5 + $0x10] sm:$0xf]
      %v10028 = vld [vmem:[%s5 + $0x14] sm:$0xf]
      %v10029 = vld [vmem:[%s5 + $0x18] sm:$0xf]
      %v10030 = vld [vmem:[%s5 + $0x1c] sm:$0xf]
      %v10031 = vld [vmem:[%s5 + $0x20] sm:$0xf]
      %v10032 = vld [vmem:[%s5 + $0x24] sm:$0xf]
      %v10033 = vld [vmem:[%s5 + $0x28] sm:$0xf]
      %v10034 = vld [vmem:[%s5 + $0x2c] sm:$0xf]
      %v10035 = vld [vmem:[%s5 + $0x30] sm:$0xf]
      %v10036 = vld [vmem:[%s5 + $0x34] sm:$0xf]
      %v10037 = vld [vmem:[%s5 + $0x38] sm:$0xf]
      %v10038 = vld [vmem:[%s5 + $0x3c] sm:$0xf]
      %v10039 = vld [vmem:[%s8] sm:$0x1]
      %v10041 = vlaneseq
      %v10042 = vshrl.u32 %v10041, 7
      %v10043 = vsub.s32 0, %v10042
      %v10044 = vrot.slane %v10039, %v10043
      %v10174 = vunpack.c.l.b16 %v9895
      %v10175 = vunpack.c.l.b16 %v9896
      %v10176 = vunpack.c.l.b16 %v9897
      %v10177 = vunpack.c.l.b16 %v9898
      %v10178 = vunpack.c.l.b16 %v9899
      %v10179 = vunpack.c.l.b16 %v9900
      %v10180 = vunpack.c.l.b16 %v9901
      %v10181 = vunpack.c.l.b16 %v9902
      %v10182 = vunpack.c.l.b16 %v9903
      %v10183 = vunpack.c.l.b16 %v9904
      %v10184 = vunpack.c.l.b16 %v9905
      %v10185 = vunpack.c.l.b16 %v9906
      %v10186 = vunpack.c.l.b16 %v9907
      %v10187 = vunpack.c.l.b16 %v9908
      %v10188 = vunpack.c.l.b16 %v9909
      %v10189 = vunpack.c.l.b16 %v9910
      %v10190 = vunpack.c.l.b16 %v9911
      %v10191 = vunpack.c.l.b16 %v9912
      %v10192 = vunpack.c.l.b16 %v9913
      %v10193 = vunpack.c.l.b16 %v9914
      %v10194 = vunpack.c.l.b16 %v9915
      %v10195 = vunpack.c.l.b16 %v9916
      %v10196 = vunpack.c.l.b16 %v9917
      %v10197 = vunpack.c.l.b16 %v9918
      %v10198 = vunpack.c.l.b16 %v9919
      %v10199 = vunpack.c.l.b16 %v9920
      %v10200 = vunpack.c.l.b16 %v9921
      %v10201 = vunpack.c.l.b16 %v9922
      %v10202 = vunpack.c.l.b16 %v9923
      %v10203 = vunpack.c.l.b16 %v9924
      %v10204 = vunpack.c.l.b16 %v9925
      %v10205 = vunpack.c.l.b16 %v9926
      %v10206 = vunpack.c.l.b16 %v9927
      %v10207 = vunpack.c.l.b16 %v9928
      %v10208 = vunpack.c.l.b16 %v9929
      %v10209 = vunpack.c.l.b16 %v9930
      %v10210 = vunpack.c.l.b16 %v9931
      %v10211 = vunpack.c.l.b16 %v9932
      %v10212 = vunpack.c.l.b16 %v9933
      %v10213 = vunpack.c.l.b16 %v9934
      %v10214 = vunpack.c.l.b16 %v9935
      %v10215 = vunpack.c.l.b16 %v9936
      %v10216 = vunpack.c.l.b16 %v9937
      %v10217 = vunpack.c.l.b16 %v9938
      %v10218 = vunpack.c.l.b16 %v9939
      %v10219 = vunpack.c.l.b16 %v9940
      %v10220 = vunpack.c.l.b16 %v9941
      %v10221 = vunpack.c.l.b16 %v9942
      %v10222 = vunpack.c.l.b16 %v9943
      %v10223 = vunpack.c.l.b16 %v9944
      %v10224 = vunpack.c.l.b16 %v9945
      %v10225 = vunpack.c.l.b16 %v9946
      %v10226 = vunpack.c.l.b16 %v9947
      %v10227 = vunpack.c.l.b16 %v9948
      %v10228 = vunpack.c.l.b16 %v9949
      %v10229 = vunpack.c.l.b16 %v9950
      %v10230 = vunpack.c.l.b16 %v9951
      %v10231 = vunpack.c.l.b16 %v9952
      %v10232 = vunpack.c.l.b16 %v9953
      %v10233 = vunpack.c.l.b16 %v9954
      %v10234 = vunpack.c.l.b16 %v9955
      %v10235 = vunpack.c.l.b16 %v9956
      %v10236 = vunpack.c.l.b16 %v9957
      %v10237 = vunpack.c.l.b16 %v9958
      %v10238 = vunpack.c.l.b16 %v9959
      %v10239 = vunpack.c.l.b16 %v9960
      %v10240 = vunpack.c.l.b16 %v9961
      %v10241 = vunpack.c.l.b16 %v9962
      %v10242 = vunpack.c.l.b16 %v9963
      %v10243 = vunpack.c.l.b16 %v9964
      %v10244 = vunpack.c.l.b16 %v9965
      %v10245 = vunpack.c.l.b16 %v9966
      %v10246 = vunpack.c.l.b16 %v9967
      %v10247 = vunpack.c.l.b16 %v9968
      %v10248 = vunpack.c.l.b16 %v9969
      %v10249 = vunpack.c.l.b16 %v9970
      %v10250 = vunpack.c.l.b16 %v9971
      %v10251 = vunpack.c.l.b16 %v9972
      %v10252 = vunpack.c.l.b16 %v9973
      %v10253 = vunpack.c.l.b16 %v9974
      %v10254 = vunpack.c.l.b16 %v9975
      %v10255 = vunpack.c.l.b16 %v9976
      %v10256 = vunpack.c.l.b16 %v9977
      %v10257 = vunpack.c.l.b16 %v9978
      %v10258 = vunpack.c.l.b16 %v9979
      %v10259 = vunpack.c.l.b16 %v9980
      %v10260 = vunpack.c.l.b16 %v9981
      %v10261 = vunpack.c.l.b16 %v9982
      %v10262 = vunpack.c.l.b16 %v9983
      %v10263 = vunpack.c.l.b16 %v9984
      %v10264 = vunpack.c.l.b16 %v9985
      %v10265 = vunpack.c.l.b16 %v9986
      %v10266 = vunpack.c.l.b16 %v9987
      %v10267 = vunpack.c.l.b16 %v9988
      %v10268 = vunpack.c.l.b16 %v9989
      %v10269 = vunpack.c.l.b16 %v9990
      %v10270 = vunpack.c.l.b16 %v9991
      %v10271 = vunpack.c.l.b16 %v9992
      %v10272 = vunpack.c.l.b16 %v9993
      %v10273 = vunpack.c.l.b16 %v9994
      %v10274 = vunpack.c.l.b16 %v9995
      %v10275 = vunpack.c.l.b16 %v9996
      %v10276 = vunpack.c.l.b16 %v9997
      %v10277 = vunpack.c.l.b16 %v9998
      %v10278 = vunpack.c.l.b16 %v9999
      %v10279 = vunpack.c.l.b16 %v10000
      %v10280 = vunpack.c.l.b16 %v10001
      %v10281 = vunpack.c.l.b16 %v10002
      %v10282 = vunpack.c.l.b16 %v10003
      %v10283 = vunpack.c.l.b16 %v10004
      %v10284 = vunpack.c.l.b16 %v10005
      %v10285 = vunpack.c.l.b16 %v10006
      %v10286 = vunpack.c.l.b16 %v10007
      %v10287 = vunpack.c.l.b16 %v10008
      %v10288 = vunpack.c.l.b16 %v10009
      %v10289 = vunpack.c.l.b16 %v10010
      %v10290 = vunpack.c.l.b16 %v10011
      %v10291 = vunpack.c.l.b16 %v10012
      %v10292 = vunpack.c.l.b16 %v10013
      %v10293 = vunpack.c.l.b16 %v10014
      %v10294 = vunpack.c.l.b16 %v10015
      %v10295 = vunpack.c.l.b16 %v10016
      %v10296 = vunpack.c.l.b16 %v10017
      %v10297 = vunpack.c.l.b16 %v10018
      %v10298 = vunpack.c.l.b16 %v10019
      %v10299 = vunpack.c.l.b16 %v10020
      %v10300 = vunpack.c.l.b16 %v10021
      %v10301 = vunpack.c.l.b16 %v10022
      %vm10302 = vcmask 1041409
      %v10303 = vsel %vm10302, %v10175, %v10174
      %vm10304 = vcmask 1042434
      %v10305 = vsel %vm10304, %v10176, %v10303
      %vm10306 = vcmask 1043459
      %v10307 = vsel %vm10306, %v10177, %v10305
      %vm10308 = vcmask 1044484
      %v10309 = vsel %vm10308, %v10178, %v10307
      %vm10310 = vcmask 1045509
      %v10311 = vsel %vm10310, %v10179, %v10309
      %vm10312 = vcmask 1046534
      %v10313 = vsel %vm10312, %v10180, %v10311
      %vm10314 = vcmask 1047559
      %v10315 = vsel %vm10314, %v10181, %v10313
      %v10316 = vsel %vm10302, %v10183, %v10182
      %v10317 = vsel %vm10304, %v10184, %v10316
      %v10318 = vsel %vm10306, %v10185, %v10317
      %v10319 = vsel %vm10308, %v10186, %v10318
      %v10320 = vsel %vm10310, %v10187, %v10319
      %v10321 = vsel %vm10312, %v10188, %v10320
      %v10322 = vsel %vm10314, %v10189, %v10321
      %v10323 = vsel %vm10302, %v10191, %v10190
      %v10324 = vsel %vm10304, %v10192, %v10323
      %v10325 = vsel %vm10306, %v10193, %v10324
      %v10326 = vsel %vm10308, %v10194, %v10325
      %v10327 = vsel %vm10310, %v10195, %v10326
      %v10328 = vsel %vm10312, %v10196, %v10327
      %v10329 = vsel %vm10314, %v10197, %v10328
      %v10330 = vsel %vm10302, %v10199, %v10198
      %v10331 = vsel %vm10304, %v10200, %v10330
      %v10332 = vsel %vm10306, %v10201, %v10331
      %v10333 = vsel %vm10308, %v10202, %v10332
      %v10334 = vsel %vm10310, %v10203, %v10333
      %v10335 = vsel %vm10312, %v10204, %v10334
      %v10336 = vsel %vm10314, %v10205, %v10335
      %v10337 = vsel %vm10302, %v10207, %v10206
      %v10338 = vsel %vm10304, %v10208, %v10337
      %v10339 = vsel %vm10306, %v10209, %v10338
      %v10340 = vsel %vm10308, %v10210, %v10339
      %v10341 = vsel %vm10310, %v10211, %v10340
      %v10342 = vsel %vm10312, %v10212, %v10341
      %v10343 = vsel %vm10314, %v10213, %v10342
      %v10344 = vsel %vm10302, %v10215, %v10214
      %v10345 = vsel %vm10304, %v10216, %v10344
      %v10346 = vsel %vm10306, %v10217, %v10345
      %v10347 = vsel %vm10308, %v10218, %v10346
      %v10348 = vsel %vm10310, %v10219, %v10347
      %v10349 = vsel %vm10312, %v10220, %v10348
      %v10350 = vsel %vm10314, %v10221, %v10349
      %v10351 = vsel %vm10302, %v10223, %v10222
      %v10352 = vsel %vm10304, %v10224, %v10351
      %v10353 = vsel %vm10306, %v10225, %v10352
      %v10354 = vsel %vm10308, %v10226, %v10353
      %v10355 = vsel %vm10310, %v10227, %v10354
      %v10356 = vsel %vm10312, %v10228, %v10355
      %v10357 = vsel %vm10314, %v10229, %v10356
      %v10358 = vsel %vm10302, %v10231, %v10230
      %v10359 = vsel %vm10304, %v10232, %v10358
      %v10360 = vsel %vm10306, %v10233, %v10359
      %v10361 = vsel %vm10308, %v10234, %v10360
      %v10362 = vsel %vm10310, %v10235, %v10361
      %v10363 = vsel %vm10312, %v10236, %v10362
      %v10364 = vsel %vm10314, %v10237, %v10363
      %v10365 = vsel %vm10302, %v10239, %v10238
      %v10366 = vsel %vm10304, %v10240, %v10365
      %v10367 = vsel %vm10306, %v10241, %v10366
      %v10368 = vsel %vm10308, %v10242, %v10367
      %v10369 = vsel %vm10310, %v10243, %v10368
      %v10370 = vsel %vm10312, %v10244, %v10369
      %v10371 = vsel %vm10314, %v10245, %v10370
      %v10372 = vsel %vm10302, %v10247, %v10246
      %v10373 = vsel %vm10304, %v10248, %v10372
      %v10374 = vsel %vm10306, %v10249, %v10373
      %v10375 = vsel %vm10308, %v10250, %v10374
      %v10376 = vsel %vm10310, %v10251, %v10375
      %v10377 = vsel %vm10312, %v10252, %v10376
      %v10378 = vsel %vm10314, %v10253, %v10377
      %v10379 = vsel %vm10302, %v10255, %v10254
      %v10380 = vsel %vm10304, %v10256, %v10379
      %v10381 = vsel %vm10306, %v10257, %v10380
      %v10382 = vsel %vm10308, %v10258, %v10381
      %v10383 = vsel %vm10310, %v10259, %v10382
      %v10384 = vsel %vm10312, %v10260, %v10383
      %v10385 = vsel %vm10314, %v10261, %v10384
      %v10386 = vsel %vm10302, %v10263, %v10262
      %v10387 = vsel %vm10304, %v10264, %v10386
      %v10388 = vsel %vm10306, %v10265, %v10387
      %v10389 = vsel %vm10308, %v10266, %v10388
      %v10390 = vsel %vm10310, %v10267, %v10389
      %v10391 = vsel %vm10312, %v10268, %v10390
      %v10392 = vsel %vm10314, %v10269, %v10391
      %v10393 = vsel %vm10302, %v10271, %v10270
      %v10394 = vsel %vm10304, %v10272, %v10393
      %v10395 = vsel %vm10306, %v10273, %v10394
      %v10396 = vsel %vm10308, %v10274, %v10395
      %v10397 = vsel %vm10310, %v10275, %v10396
      %v10398 = vsel %vm10312, %v10276, %v10397
      %v10399 = vsel %vm10314, %v10277, %v10398
      %v10400 = vsel %vm10302, %v10279, %v10278
      %v10401 = vsel %vm10304, %v10280, %v10400
      %v10402 = vsel %vm10306, %v10281, %v10401
      %v10403 = vsel %vm10308, %v10282, %v10402
      %v10404 = vsel %vm10310, %v10283, %v10403
      %v10405 = vsel %vm10312, %v10284, %v10404
      %v10406 = vsel %vm10314, %v10285, %v10405
      %v10407 = vsel %vm10302, %v10287, %v10286
      %v10408 = vsel %vm10304, %v10288, %v10407
      %v10409 = vsel %vm10306, %v10289, %v10408
      %v10410 = vsel %vm10308, %v10290, %v10409
      %v10411 = vsel %vm10310, %v10291, %v10410
      %v10412 = vsel %vm10312, %v10292, %v10411
      %v10413 = vsel %vm10314, %v10293, %v10412
      %v10414 = vsel %vm10302, %v10295, %v10294
      %v10415 = vsel %vm10304, %v10296, %v10414
      %v10416 = vsel %vm10306, %v10297, %v10415
      %v10417 = vsel %vm10308, %v10298, %v10416
      %v10418 = vsel %vm10310, %v10299, %v10417
      %v10419 = vsel %vm10312, %v10300, %v10418
      %v10420 = vsel %vm10314, %v10301, %v10419
      %v10421 = vpack.c.b16 %v10322, %v10315
      %v10422 = vpack.c.b16 %v10336, %v10329
      %v10423 = vpack.c.b16 %v10350, %v10343
      %v10424 = vpack.c.b16 %v10364, %v10357
      %v10425 = vpack.c.b16 %v10378, %v10371
      %v10426 = vpack.c.b16 %v10392, %v10385
      %v10427 = vpack.c.b16 %v10406, %v10399
      %v10428 = vpack.c.b16 %v10420, %v10413
      %v10453 = vunpack.c.l.b16 %v10023
      %v10454 = vunpack.c.l.b16 %v10024
      %v10455 = vunpack.c.l.b16 %v10025
      %v10456 = vunpack.c.l.b16 %v10026
      %v10457 = vunpack.c.l.b16 %v10027
      %v10458 = vunpack.c.l.b16 %v10028
      %v10459 = vunpack.c.l.b16 %v10029
      %v10460 = vunpack.c.l.b16 %v10030
      %v10461 = vunpack.c.l.b16 %v10031
      %v10462 = vunpack.c.l.b16 %v10032
      %v10463 = vunpack.c.l.b16 %v10033
      %v10464 = vunpack.c.l.b16 %v10034
      %v10465 = vunpack.c.l.b16 %v10035
      %v10466 = vunpack.c.l.b16 %v10036
      %v10467 = vunpack.c.l.b16 %v10037
      %v10468 = vunpack.c.l.b16 %v10038
      %v10469 = vpack.c.b16 %v10454, %v10453
      %v10470 = vpack.c.b16 %v10456, %v10455
      %v10471 = vpack.c.b16 %v10458, %v10457
      %v10472 = vpack.c.b16 %v10460, %v10459
      %v10473 = vpack.c.b16 %v10462, %v10461
      %v10474 = vpack.c.b16 %v10464, %v10463
      %v10475 = vpack.c.b16 %v10466, %v10465
      %v10476 = vpack.c.b16 %v10468, %v10467
      %10485 = vmatprep.subr.bf16.mxu0 0
      %10486 = vmatpush1.bf16.msra.mxu0 %v10476
      %10487 = vmatprep.subr.bf16.mxu0 0
      %10488 = vmatpush1.bf16.msra.mxu0 %v10475
      %10489 = vmatprep.subr.bf16.mxu0 0
      %10490 = vmatpush1.bf16.msra.mxu0 %v10474
      %10491 = vmatprep.subr.bf16.mxu0 0
      %10492 = vmatpush1.bf16.msra.mxu0 %v10473
      %10493 = vmatprep.subr.bf16.mxu0 0
      %10494 = vmatpush1.bf16.msra.mxu0 %v10472
      %10495 = vmatprep.subr.bf16.mxu0 0
      %10496 = vmatpush1.bf16.msra.mxu0 %v10471
      %10497 = vmatprep.subr.bf16.mxu0 0
      %10498 = vmatpush1.bf16.msra.mxu0 %v10470
      %10499 = vmatprep.subr.bf16.mxu0 0
      %10500 = vmatpush1.bf16.msra.mxu0 %v10469
      %10501 = vmatprep.subr.bf16.mxu0 0
      %10502 = vmatpush2.bf16.msra.mxu0 0
      %10503 = vmatprep.subr.bf16.mxu0 0
      %10504 = vmatpush2.bf16.msra.mxu0 0
      %10505 = vmatprep.subr.bf16.mxu0 0
      %10506 = vmatpush2.bf16.msra.mxu0 0
      %10507 = vmatprep.subr.bf16.mxu0 0
      %10508 = vmatpush2.bf16.msra.mxu0 0
      %10509 = vmatprep.subr.bf16.mxu0 0
      %10510 = vmatpush2.bf16.msra.mxu0 0
      %10511 = vmatprep.subr.bf16.mxu0 0
      %10512 = vmatpush2.bf16.msra.mxu0 0
      %10513 = vmatprep.subr.bf16.mxu0 0
      %10514 = vmatpush2.bf16.msra.mxu0 0
      %10515 = vmatprep.subr.bf16.mxu0 0
      %10516 = vmatpush2.bf16.msra.mxu0 0
      %10517 = vmatprep.mubr.bf16.mxu0 0
      %10518 = vmatmul.mubr.bf16.gmra.mxu0 %v10421
      %v10519 = vpop.f32.mrf.mxu0
      %v10520 = vadd.f32 %v10044, %v10519
      %v10521 = vpop.f32.mrf.mxu0
      %v10522 = vpop.f32.mrf.mxu0
      %v10523 = vadd.f32 %v10044, %v10522
      %v10524 = vpop.f32.mrf.mxu0
      %10525 = vmatprep.mubr.bf16.mxu0 0
      %10526 = vmatmul.mubr.bf16.gmra.mxu0 %v10422
      %v10527 = vpop.f32.mrf.mxu0
      %v10528 = vadd.f32 %v10044, %v10527
      %v10529 = vpop.f32.mrf.mxu0
      %v10530 = vpop.f32.mrf.mxu0
      %v10531 = vadd.f32 %v10044, %v10530
      %v10532 = vpop.f32.mrf.mxu0
      %10533 = vmatprep.mubr.bf16.mxu0 0
      %10534 = vmatmul.mubr.bf16.gmra.mxu0 %v10423
      %v10535 = vpop.f32.mrf.mxu0
      %v10536 = vadd.f32 %v10044, %v10535
      %v10537 = vpop.f32.mrf.mxu0
      %v10538 = vpop.f32.mrf.mxu0
      %v10539 = vadd.f32 %v10044, %v10538
      %v10540 = vpop.f32.mrf.mxu0
      %10541 = vmatprep.mubr.bf16.mxu0 0
      %10542 = vmatmul.mubr.bf16.gmra.mxu0 %v10424
      %v10543 = vpop.f32.mrf.mxu0
      %v10544 = vadd.f32 %v10044, %v10543
      %v10545 = vpop.f32.mrf.mxu0
      %v10546 = vpop.f32.mrf.mxu0
      %v10547 = vadd.f32 %v10044, %v10546
      %v10548 = vpop.f32.mrf.mxu0
      %10549 = vmatprep.mubr.bf16.mxu0 0
      %10550 = vmatmul.mubr.bf16.gmra.mxu0 %v10425
      %v10551 = vpop.f32.mrf.mxu0
      %v10552 = vadd.f32 %v10044, %v10551
      %v10553 = vpop.f32.mrf.mxu0
      %v10554 = vpop.f32.mrf.mxu0
      %v10555 = vadd.f32 %v10044, %v10554
      %v10556 = vpop.f32.mrf.mxu0
      %10557 = vmatprep.mubr.bf16.mxu0 0
      %10558 = vmatmul.mubr.bf16.gmra.mxu0 %v10426
      %v10559 = vpop.f32.mrf.mxu0
      %v10560 = vadd.f32 %v10044, %v10559
      %v10561 = vpop.f32.mrf.mxu0
      %v10562 = vpop.f32.mrf.mxu0
      %v10563 = vadd.f32 %v10044, %v10562
      %v10564 = vpop.f32.mrf.mxu0
      %10565 = vmatprep.mubr.bf16.mxu0 0
      %10566 = vmatmul.mubr.bf16.gmra.mxu0 %v10427
      %v10567 = vpop.f32.mrf.mxu0
      %v10568 = vadd.f32 %v10044, %v10567
      %v10569 = vpop.f32.mrf.mxu0
      %v10570 = vpop.f32.mrf.mxu0
      %v10571 = vadd.f32 %v10044, %v10570
      %v10572 = vpop.f32.mrf.mxu0
      %10573 = vmatprep.mubr.bf16.mxu0 0
      %10574 = vmatmul.mubr.bf16.gmra.mxu0 %v10428
      %v10575 = vpop.f32.mrf.mxu0
      %v10576 = vadd.f32 %v10044, %v10575
      %v10577 = vpop.f32.mrf.mxu0
      %v10578 = vpop.f32.mrf.mxu0
      %v10579 = vadd.f32 %v10044, %v10578
      %v10580 = vpop.f32.mrf.mxu0
      %10581 = vdwg.mxu0
      %v10582 = vxor.u32 %v10520, 2147483648
      %v10583 = vxor.u32 %v10523, 2147483648
      %v10584 = vxor.u32 %v10528, 2147483648
      %v10585 = vxor.u32 %v10531, 2147483648
      %v10586 = vxor.u32 %v10536, 2147483648
      %v10587 = vxor.u32 %v10539, 2147483648
      %v10588 = vxor.u32 %v10544, 2147483648
      %v10589 = vxor.u32 %v10547, 2147483648
      %v10590 = vxor.u32 %v10552, 2147483648
      %v10591 = vxor.u32 %v10555, 2147483648
      %v10592 = vxor.u32 %v10560, 2147483648
      %v10593 = vxor.u32 %v10563, 2147483648
      %v10594 = vxor.u32 %v10568, 2147483648
      %v10595 = vxor.u32 %v10571, 2147483648
      %v10596 = vxor.u32 %v10576, 2147483648
      %v10597 = vxor.u32 %v10579, 2147483648
      %v10598 = vmul.f32 %v10582, 1.442695
      %v10599 = vpow.pop %v10598
      %v10600 = vmul.f32 %v10583, 1.442695
      %v10601 = vpow.pop %v10600
      %v10602 = vmul.f32 %v10584, 1.442695
      %v10603 = vpow.pop %v10602
      %v10604 = vmul.f32 %v10585, 1.442695
      %v10605 = vpow.pop %v10604
      %v10606 = vmul.f32 %v10586, 1.442695
      %v10607 = vpow.pop %v10606
      %v10608 = vmul.f32 %v10587, 1.442695
      %v10609 = vpow.pop %v10608
      %v10610 = vmul.f32 %v10588, 1.442695
      %v10611 = vpow.pop %v10610
      %v10612 = vmul.f32 %v10589, 1.442695
      %v10613 = vpow.pop %v10612
      %v10614 = vmul.f32 %v10590, 1.442695
      %v10615 = vpow.pop %v10614
      %v10616 = vmul.f32 %v10591, 1.442695
      %v10617 = vpow.pop %v10616
      %v10618 = vmul.f32 %v10592, 1.442695
      %v10619 = vpow.pop %v10618
      %v10620 = vmul.f32 %v10593, 1.442695
      %v10621 = vpow.pop %v10620
      %v10622 = vmul.f32 %v10594, 1.442695
      %v10623 = vpow.pop %v10622
      %v10624 = vmul.f32 %v10595, 1.442695
      %v10625 = vpow.pop %v10624
      %v10626 = vmul.f32 %v10596, 1.442695
      %v10627 = vpow.pop %v10626
      %v10628 = vmul.f32 %v10597, 1.442695
      %v10629 = vpow.pop %v10628
      %v10630 = vadd.f32 %v10599, 1.0
      %v10631 = vadd.f32 %v10601, 1.0
      %v10632 = vadd.f32 %v10603, 1.0
      %v10633 = vadd.f32 %v10605, 1.0
      %v10634 = vadd.f32 %v10607, 1.0
      %v10635 = vadd.f32 %v10609, 1.0
      %v10636 = vadd.f32 %v10611, 1.0
      %v10637 = vadd.f32 %v10613, 1.0
      %v10638 = vadd.f32 %v10615, 1.0
      %v10639 = vadd.f32 %v10617, 1.0
      %v10640 = vadd.f32 %v10619, 1.0
      %v10641 = vadd.f32 %v10621, 1.0
      %v10642 = vadd.f32 %v10623, 1.0
      %v10643 = vadd.f32 %v10625, 1.0
      %v10644 = vadd.f32 %v10627, 1.0
      %v10645 = vadd.f32 %v10629, 1.0
      %v10646 = vrcp.pop %v10630
      %v10647 = vmul.f32 1.0, %v10646
      %v10648 = vrcp.pop %v10631
      %v10649 = vmul.f32 1.0, %v10648
      %v10650 = vrcp.pop %v10632
      %v10651 = vmul.f32 1.0, %v10650
      %v10652 = vrcp.pop %v10633
      %v10653 = vmul.f32 1.0, %v10652
      %v10654 = vrcp.pop %v10634
      %v10655 = vmul.f32 1.0, %v10654
      %v10656 = vrcp.pop %v10635
      %v10657 = vmul.f32 1.0, %v10656
      %v10658 = vrcp.pop %v10636
      %v10659 = vmul.f32 1.0, %v10658
      %v10660 = vrcp.pop %v10637
      %v10661 = vmul.f32 1.0, %v10660
      %v10662 = vrcp.pop %v10638
      %v10663 = vmul.f32 1.0, %v10662
      %v10664 = vrcp.pop %v10639
      %v10665 = vmul.f32 1.0, %v10664
      %v10666 = vrcp.pop %v10640
      %v10667 = vmul.f32 1.0, %v10666
      %v10668 = vrcp.pop %v10641
      %v10669 = vmul.f32 1.0, %v10668
      %v10670 = vrcp.pop %v10642
      %v10671 = vmul.f32 1.0, %v10670
      %v10672 = vrcp.pop %v10643
      %v10673 = vmul.f32 1.0, %v10672
      %v10674 = vrcp.pop %v10644
      %v10675 = vmul.f32 1.0, %v10674
      %v10676 = vrcp.pop %v10645
      %v10677 = vmul.f32 1.0, %v10676
      %v10678 = vmul.f32 %v2014, %v10647
      %v10679 = vmul.f32 %v2015, %v10649
      %v10680 = vmul.f32 %v2016, %v10651
      %v10681 = vmul.f32 %v2017, %v10653
      %v10682 = vmul.f32 %v2018, %v10655
      %v10683 = vmul.f32 %v2019, %v10657
      %v10684 = vmul.f32 %v2020, %v10659
      %v10685 = vmul.f32 %v2021, %v10661
      %v10686 = vmul.f32 %v2022, %v10663
      %v10687 = vmul.f32 %v2023, %v10665
      %v10688 = vmul.f32 %v2024, %v10667
      %v10689 = vmul.f32 %v2025, %v10669
      %v10690 = vmul.f32 %v2026, %v10671
      %v10691 = vmul.f32 %v2027, %v10673
      %v10692 = vmul.f32 %v2028, %v10675
      %v10693 = vmul.f32 %v2029, %v10677
      %10694 = vst [vmem:[%s390] sm:$0xff] %v10678
      %10695 = vst [vmem:[%s390 + $0x8] sm:$0xff] %v10679
      %10696 = vst [vmem:[%s390 + $0x10] sm:$0xff] %v10680
      %10697 = vst [vmem:[%s390 + $0x18] sm:$0xff] %v10681
      %10698 = vst [vmem:[%s390 + $0x20] sm:$0xff] %v10682
      %10699 = vst [vmem:[%s390 + $0x28] sm:$0xff] %v10683
      %10700 = vst [vmem:[%s390 + $0x30] sm:$0xff] %v10684
      %10701 = vst [vmem:[%s390 + $0x38] sm:$0xff] %v10685
      %10702 = vst [vmem:[%s390 + $0x40] sm:$0xff] %v10686
      %10703 = vst [vmem:[%s390 + $0x48] sm:$0xff] %v10687
      %10704 = vst [vmem:[%s390 + $0x50] sm:$0xff] %v10688
      %10705 = vst [vmem:[%s390 + $0x58] sm:$0xff] %v10689
      %10706 = vst [vmem:[%s390 + $0x60] sm:$0xff] %v10690
      %10707 = vst [vmem:[%s390 + $0x68] sm:$0xff] %v10691
      %10708 = vst [vmem:[%s390 + $0x70] sm:$0xff] %v10692
      %10709 = vst [vmem:[%s390 + $0x78] sm:$0xff] %v10693
      %s10710 = smul.u32 16, %s25
      %p10711 = scmp.lt.s32.totalorder %s24, 1
      %s10712 = scalar_select %p10711, %s24, 1
      %p10713 = scmp.lt.s32.totalorder %s10710, 15
      %s10714 = scalar_select %p10713, %s10710, 15
      %s10715 = smul.addr %s10712, 16
      %s10716 = sadd.s32 %s10714, %s10715
      %s10717 = smul.addr %s10716, 8
      %s10718 = scalar_lea.vmem %s9, %s10717
      // Predicated region
      $region57: #{dhm_forward.3} parent=55 // pred_check
        %p10719 = pneg %p253
      $region58: #{dhm_forward.3} parent=55 // pred_check_branch
        %10721 = sbr.rel (%p10719) target = $region60
      $region59: #{dhm_forward.3} parent=55 // pred_region
        %s10722 = smul.u32 16, %s25
      $region60: #{dhm_forward.3} parent=55 // pred_fallthru
        _
    $region56: #{dhm_forward.3} parent=5 // pred_fallthru
      _
    %p10723 = scmp.le.s32.totalorder 2, %s15
    // Predicated region
    $region61: #{dhm_forward.3} parent=5 // pred_check
      %p10724 = pneg %p10723
    $region62: #{dhm_forward.3} parent=5 // pred_check_branch
      %10726 = sbr.rel (%p10724) target = $region64
    $region63: #{dhm_forward.3} parent=5 // pred_region
      %s10727 = ssub.s32 %s15, 2
      // Predicated region
      $region65: #{dhm_forward.3} parent=63 // pred_check
        %p10728 = pneg %p259
      $region66: #{dhm_forward.3} parent=63 // pred_check_branch
        %10730 = sbr.rel (%p10728) target = $region68
      $region67: #{dhm_forward.3} parent=63 // pred_region
        %s10731 = smul.u32 16, %s27
        %p10732 = scmp.lt.s32.totalorder %s26, 1
        %s10733 = scalar_select %p10732, %s26, 1
        %p10734 = scmp.lt.s32.totalorder %s10731, 15
        %s10735 = scalar_select %p10734, %s10731, 15
        %s10736 = smul.addr %s10733, 16
        %s10737 = sadd.s32 %s10735, %s10736
        %s10738 = smul.addr %s10737, 8
        %s10739 = scalar_lea.vmem %s9, %s10738
      $region68: #{dhm_forward.3} parent=63 // pred_fallthru
        _
    $region64: #{dhm_forward.3} parent=5 // pred_fallthru
      _
  $region6: #{dhm_forward.3} parent=0 // loop_footer
    %s19 = sadd.s32 1, %s15
  $region7: #{dhm_forward.3} parent=0 // loop_footer_branch
    %14 = sbr.rel target = $region3
  $region8: #{dhm_forward.3} parent=0 // loop_exit
    _

</llo_original>
